<compile_context>
chip_gen: v5e
topology: v5e:2x2
jax: 0.10.0
libtpu: 0.0.40
codegen_flags: <defaults>
</compile_context>

<pallas_src>
import functools
import math

import jax
import jax.numpy as jnp
from jax.experimental import pallas as pl
from jax.experimental.pallas import tpu as pltpu

# ------------------------- model hyper-parameters -------------------------
IN_SIZE = 2
OBS_LEN = 8
PRED_LEN = 12
EMBED = 32
HEADS = 4
ENC_LAYERS = 1
INT_LAYERS = [1, 1]
FWD_EXP = 2
NUM_MODES = 100               # GGCA channel count / number of motion modes
GGCA_H = OBS_LEN + PRED_LEN   # 20
GGCA_W = IN_SIZE              # 2
NUM_GROUPS = 5
GGCA_REDUCTION = 16

LANE = 128


def _round_up(x, m):
    return ((x + m - 1) // m) * m


def _const_spec(w):
    """Full-extent BlockSpec that always maps to block (0, 0, ...)."""
    nd = w.ndim
    return pl.BlockSpec(w.shape, lambda i, _nd=nd: (0,) * _nd)


# ====================== shared in-kernel building blocks ======================

def _layer_norm(x, g, b, eps=1e-5):
    mu = jnp.mean(x, axis=-1, keepdims=True)
    var = jnp.mean(jnp.square(x - mu), axis=-1, keepdims=True)
    return (x - mu) * jax.lax.rsqrt(var + eps) * g + b


def _layer_core(x, kv, attend,
                wq, bq, wkv, bkv, wo, bo,
                ln1g, ln1b, fw1, fb1, fw2, fb2, ln2g, ln2b, *, heads):
    """Post-LN transformer layer on one batch element.

    x: (Lq, E) queries; kv: (Lk, E) key/value source; attend: (1, Lk) bool (True = attend).
    """
    E = x.shape[-1]
    Dh = E // heads
    scale = 1.0 / math.sqrt(Dh)

    # Q separate, K/V fused into one (E, 2E) matmul.
    q = jnp.dot(x, wq, preferred_element_type=jnp.float32) + bq          # (Lq, E)
    kvp = jnp.dot(kv, wkv, preferred_element_type=jnp.float32) + bkv     # (Lk, 2E)

    # Heads handled with static lane slices inside the kernel (no HBM split/merge).
    head_outs = []
    for h in range(heads):
        qh = q[:, h * Dh:(h + 1) * Dh]                                   # (Lq, Dh)
        kh = kvp[:, h * Dh:(h + 1) * Dh]                                 # (Lk, Dh)
        vh = kvp[:, E + h * Dh:E + (h + 1) * Dh]                         # (Lk, Dh)
        s = jax.lax.dot_general(qh, kh, (((1,), (1,)), ((), ())),
                                preferred_element_type=jnp.float32) * scale   # (Lq, Lk)
        s = jnp.where(attend, s, jnp.float32(-1e9))
        s = s - jnp.max(s, axis=-1, keepdims=True)
        p = jnp.exp(s)
        p = p / jnp.sum(p, axis=-1, keepdims=True)
        head_outs.append(jnp.dot(p, vh, preferred_element_type=jnp.float32))  # (Lq, Dh)
    ctx = jnp.concatenate(head_outs, axis=-1)                            # (Lq, E)

    attn = jnp.dot(ctx, wo, preferred_element_type=jnp.float32) + bo     # (Lq, E)

    x1 = _layer_norm(x + attn, ln1g, ln1b)
    hmid = jnp.maximum(
        jnp.dot(x1, fw1, preferred_element_type=jnp.float32) + fb1, 0.0)
    ff = jnp.dot(hmid, fw2, preferred_element_type=jnp.float32) + fb2
    return _layer_norm(x1 + ff, ln2g, ln2b)


# ===================== fused mode-encoder pallas kernel ======================
# Per batch element: GGCA -> embedding -> masked self-attention encoder -> cls head.

def _mode_encoder_kernel(*refs, n_layers, heads, k_real):
    x_ref, gm1_ref, gb1_ref, gm2_ref, gb2_ref, emb_w_ref, emb_b_ref = refs[:7]
    layer_refs = refs[7:7 + 14 * n_layers]
    cls_w_ref, cls_b_ref, feat_ref, scores_ref = refs[7 + 14 * n_layers:]

    _, Wd, Cp, H = x_ref.shape

    m1t = gm1_ref[...]          # (Jp, Cp)  grouped conv1^T (BN folded)
    b1c = gb1_ref[...]          # (Jp, 1)
    m2t = gm2_ref[...]          # (Cp, Jp)  grouped conv2^T
    b2c = gb2_ref[...]          # (Cp, 1)

    def shared_conv(t):         # t: (Cp, X) -> (Cp, X)   (two 1x1 grouped convs + ReLU)
        z = jnp.maximum(
            jnp.dot(m1t, t, preferred_element_type=jnp.float32) + b1c, 0.0)   # (Jp, X)
        return jnp.dot(m2t, z, preferred_element_type=jnp.float32) + b2c      # (Cp, X)

    # ---------------- GGCA ----------------
    xs = [x_ref[0, w] for w in range(Wd)]                # W slabs of (Cp, H)

    h_sum = xs[0]
    h_max = xs[0]
    for w in range(1, Wd):
        h_sum = h_sum + xs[w]
        h_max = jnp.maximum(h_max, xs[w])
    h_avg = h_sum * (1.0 / Wd)
    att_h = jax.nn.sigmoid(shared_conv(h_avg) + shared_conv(h_max))       # (Cp, H)

    # ------------- gated output + embedding (fused, per-w contributions) -------------
    feat = None
    for w in range(Wd):
        xw = xs[w]                                                        # (Cp, H)
        w_avg = jnp.mean(xw, axis=1, keepdims=True)                       # (Cp, 1)
        w_max = jnp.max(xw, axis=1, keepdims=True)                        # (Cp, 1)
        att_w = jax.nn.sigmoid(shared_conv(w_avg) + shared_conv(w_max))   # (Cp, 1)
        gw = xw * att_h * att_w                                           # (Cp, H)
        contrib = jnp.dot(gw, emb_w_ref[w],
                          preferred_element_type=jnp.float32)             # (Cp, E)
        feat = contrib if feat is None else feat + contrib
    feat = feat + emb_b_ref[...]                                          # (Cp, E)

    # ---------------- encoder self-attention over (padded) modes ----------------
    attend = jax.lax.broadcasted_iota(jnp.int32, (1, Cp), 1) < k_real     # (1, Cp) bool
    for l in range(n_layers):
        lw = [r[...] for r in layer_refs[l * 14:(l + 1) * 14]]
        feat = _layer_core(feat, feat, attend, *lw, heads=heads)
    feat_ref[0] = feat

    # ---------------- cls head (lane-dense (1, Cp) store) ----------------
    scores_ref[0] = (
        jax.lax.dot_general(cls_w_ref[...], feat, (((1,), (1,)), ((), ())),
                            preferred_element_type=jnp.float32)
        + cls_b_ref[...])                                                 # (1, Cp)


def _ggca_gating_weights(gp, C, Cp):
    """Block-diagonal (per-group) 1x1-conv matrices, transposed ('nn' matmul form),
    with eval-mode BatchNorm folded into the first conv."""
    G = NUM_GROUPS
    gc = C // G
    w1, b1 = gp['w1'], gp['b1']                     # (gcr, gc), (gcr, 1)
    w2, b2 = gp['w2'], gp['b2']                     # (gc, gcr), (gc, 1)
    gcr = w1.shape[0]
    s = gp['gamma'][:, 0] * jax.lax.rsqrt(gp['var'][:, 0] + 1e-5)   # (gcr,)
    shift = gp['beta'][:, 0] - gp['mean'][:, 0] * s                 # (gcr,)
    w1_eff = w1 * s[:, None]                                        # (gcr, gc)
    b1_eff = b1[:, 0] * s + shift                                   # (gcr,)

    eye = jnp.eye(G, dtype=jnp.float32)
    J = G * gcr
    Jp = _round_up(max(J, 8), 8)
    # m1T[g*gcr+r, g'*gc+l] = (g==g') * w1_eff[r, l]
    m1t = jnp.einsum('gG,rl->grGl', eye, w1_eff).reshape(J, C)
    # m2T[g*gc+l, g'*gcr+r] = (g==g') * w2[l, r]
    m2t = jnp.einsum('gG,lr->glGr', eye, w2).reshape(C, J)

    m1t = jnp.pad(m1t, ((0, Jp - J), (0, Cp - C)))
    m2t = jnp.pad(m2t, ((0, Cp - C), (0, Jp - J)))
    b1c = jnp.pad(jnp.tile(b1_eff, G), (0, Jp - J)).reshape(Jp, 1)
    b2c = jnp.pad(jnp.tile(b2[:, 0], G), (0, Cp - C)).reshape(Cp, 1)
    return m1t, b1c, m2t, b2c


def _flatten_layer_params(lp):
    ap = lp['attn']
    return (ap['wq'], ap['bq'].reshape(1, -1), ap['wkv'], ap['bkv'].reshape(1, -1),
            ap['wo'], ap['bo'].reshape(1, -1),
            lp['ln1_g'].reshape(1, -1), lp['ln1_b'].reshape(1, -1),
            lp['ff_w1'], lp['ff_b1'].reshape(1, -1),
            lp['ff_w2'], lp['ff_b2'].reshape(1, -1),
            lp['ln2_g'].reshape(1, -1), lp['ln2_b'].reshape(1, -1))


def mode_encoder_forward(params, x_cl, heads, k_real):
    """x_cl: (B, W, Kp, H) mode-major GGCA input (pad modes zero)."""
    B, Wd, Cp, H = x_cl.shape
    E = params['embed_w'].shape[-1]

    gm1t, gb1c, gm2t, gb2c = _ggca_gating_weights(params['ggca'], k_real, Cp)
    emb_w_r = params['embed_w'].reshape(H, Wd, E).transpose(1, 0, 2)      # (W, H, E)
    emb_b = params['embed_b'].reshape(1, E)
    layer_ws = []
    for lp in params['encoder']:
        layer_ws += list(_flatten_layer_params(lp))
    cls_w = params['cls_w'].reshape(E, 1).T                               # (1, E)
    cls_b = params['cls_b'].reshape(1, 1)

    weights = [gm1t, gb1c, gm2t, gb2c, emb_w_r, emb_b] + layer_ws + [cls_w, cls_b]
    in_specs = ([pl.BlockSpec((1, Wd, Cp, H), lambda i: (i, 0, 0, 0))]
                + [_const_spec(w) for w in weights])

    kernel = functools.partial(_mode_encoder_kernel,
                               n_layers=len(params['encoder']), heads=heads, k_real=k_real)
    feat, scores = pl.pallas_call(
        kernel,
        out_shape=(jax.ShapeDtypeStruct((B, Cp, E), jnp.float32),
                   jax.ShapeDtypeStruct((B, 1, Cp), jnp.float32)),
        grid=(B,),
        in_specs=in_specs,
        out_specs=(pl.BlockSpec((1, Cp, E), lambda i: (i, 0, 0)),
                   pl.BlockSpec((1, 1, Cp), lambda i: (i, 0, 0))),
        compiler_params=pltpu.CompilerParams(dimension_semantics=("parallel",)),
    )(x_cl, *weights)
    return feat, scores


# ===================== fused social-decoder pallas kernel ====================
# Per batch element: neighbour embedding -> cross-attention layer(s) -> reg head.

def _social_decoder_kernel(*refs, n_layers, heads):
    q_ref, nei_ref, mask_ref, nei_w_ref, nei_b_ref = refs[:5]
    layer_refs = refs[5:5 + 14 * n_layers]
    reg_w_ref, reg_b_ref, out_ref = refs[5 + 14 * n_layers:]

    nei_emb = (jnp.dot(nei_ref[0], nei_w_ref[...], preferred_element_type=jnp.float32)
               + nei_b_ref[...])                                          # (N, E)
    attend = mask_ref[0] > 0.0                                            # (1, N)

    x = q_ref[0]                                                          # (Lq, E)
    for l in range(n_layers):
        lw = [r[...] for r in layer_refs[l * 14:(l + 1) * 14]]
        x = _layer_core(x, nei_emb, attend, *lw, heads=heads)

    out_ref[0] = (jnp.dot(x, reg_w_ref[...], preferred_element_type=jnp.float32)
                  + reg_b_ref[...])                                       # (Lq, out_dim)


def social_decoder_forward(params, q_feat, neis_obs, mask, heads):
    """q_feat: (B, Lq, E); neis_obs: (B, N, obs_len, in); mask: (B, N, N)."""
    B, Lq, E = q_feat.shape
    N = neis_obs.shape[1]
    neis = neis_obs.reshape(B, N, -1)
    Fn = neis.shape[-1]
    key_mask = mask[:, 0:1, :].astype(jnp.float32)                        # (B, 1, N)

    nei_w = params['nei_w']
    nei_b = params['nei_b'].reshape(1, -1)
    layer_ws = []
    for lp in params['decoder']:
        layer_ws += list(_flatten_layer_params(lp))
    reg_w = params['reg_w']
    reg_b = params['reg_b'].reshape(1, -1)
    out_dim = reg_w.shape[-1]

    weights = [nei_w, nei_b] + layer_ws + [reg_w, reg_b]
    in_specs = ([pl.BlockSpec((1, Lq, E), lambda i: (i, 0, 0)),
                 pl.BlockSpec((1, N, Fn), lambda i: (i, 0, 0)),
                 pl.BlockSpec((1, 1, N), lambda i: (i, 0, 0))]
                + [_const_spec(w) for w in weights])

    kernel = functools.partial(_social_decoder_kernel,
                               n_layers=len(params['decoder']), heads=heads)
    return pl.pallas_call(
        kernel,
        out_shape=jax.ShapeDtypeStruct((B, Lq, out_dim), jnp.float32),
        grid=(B,),
        in_specs=in_specs,
        out_specs=pl.BlockSpec((1, Lq, out_dim), lambda i: (i, 0, 0)),
        compiler_params=pltpu.CompilerParams(dimension_semantics=("parallel",)),
    )(q_feat, neis, key_mask, *weights)


# ============================ TrajectoryModel =============================

def trajectory_model_forward(params, ped_obs, neis_obs, motion_modes, mask,
                             closest_mode_indices, heads=HEADS, test=False, num_k=20):
    B, obs_len, in_size = ped_obs.shape
    K, pred_len, _ = motion_modes.shape
    Kp = _round_up(K, LANE)                          # pad modes 100 -> 128 for (8,128) alignment
    H = obs_len + pred_len
    W = in_size

    # Mode-major GGCA input x[b, w, c, h] = ped_seq[b, c, h, w]
    #   h <  obs_len : ped_obs[b, h, w]       (broadcast over modes c)
    #   h >= obs_len : motion_modes[c, h-obs, w]  (broadcast over batch b)
    ped_t = jnp.transpose(ped_obs, (0, 2, 1))                              # (B, W, obs)
    ped_part = jnp.broadcast_to(ped_t[:, :, None, :], (B, W, K, obs_len))
    modes_t = jnp.transpose(motion_modes, (2, 0, 1))                       # (W, K, pred)
    mode_part = jnp.broadcast_to(modes_t[None], (B, W, K, pred_len))
    x_cl = jnp.concatenate([ped_part, mode_part], axis=-1)                 # (B, W, K, H)
    x_cl = jnp.pad(x_cl, ((0, 0), (0, 0), (0, Kp - K), (0, 0)))            # (B, W, Kp, H)

    # Fused: GGCA -> embedding -> encoder -> cls head   (one pallas_call)
    ped_feat, scores3 = mode_encoder_forward(params, x_cl, heads, K)
    scores = scores3[:, 0, :K]                                             # (B, K)

    if not test:
        closest_feat = ped_feat[jnp.arange(B), closest_mode_indices][:, None, :]   # (B, 1, E)
        pred = social_decoder_forward(params, closest_feat, neis_obs, mask, heads) # (B, 1, out)
        return pred[:, 0, :], scores
    else:
        _, top_k_indices = jax.lax.top_k(scores, num_k)                    # (B, num_k)
        top_k_feat = jnp.take_along_axis(ped_feat, top_k_indices[:, :, None], axis=1)
        preds = social_decoder_forward(params, top_k_feat, neis_obs, mask, heads)
        return preds, scores


# ============================= param init =================================

def init_linear(key, fan_in, fan_out):
    k1, k2 = jax.random.split(key)
    bound = 1.0 / math.sqrt(fan_in)
    w = jax.random.uniform(k1, (fan_in, fan_out), jnp.float32, -bound, bound)
    b = jax.random.uniform(k2, (fan_out,), jnp.float32, -bound, bound)
    return w, b


def init_attn(key, E):
    kq, kk, kv, ko = jax.random.split(key, 4)
    wq, bq = init_linear(kq, E, E)
    wk, bk = init_linear(kk, E, E)
    wv, bv = init_linear(kv, E, E)
    wo, bo = init_linear(ko, E, E)
    return {
        'wq': wq, 'bq': bq,
        'wkv': jnp.concatenate([wk, wv], axis=1),    # fused K/V projection (E, 2E)
        'bkv': jnp.concatenate([bk, bv], axis=0),
        'wo': wo, 'bo': bo,
    }


def init_layer(key, E, fwd):
    k1, k2, k3 = jax.random.split(key, 3)
    lp = {'attn': init_attn(k1, E)}
    lp['ff_w1'], lp['ff_b1'] = init_linear(k2, E, E * fwd)
    lp['ff_w2'], lp['ff_b2'] = init_linear(k3, E * fwd, E)
    lp['ln1_g'] = jnp.ones((E,), jnp.float32)
    lp['ln1_b'] = jnp.zeros((E,), jnp.float32)
    lp['ln2_g'] = jnp.ones((E,), jnp.float32)
    lp['ln2_b'] = jnp.zeros((E,), jnp.float32)
    return lp


def init_ggca(key):
    gc = NUM_MODES // NUM_GROUPS          # 20
    gcr = max(gc // GGCA_REDUCTION, 1)    # 1
    k1, k2, k3, k4 = jax.random.split(key, 4)
    b1w = 1.0 / math.sqrt(gc)
    b2w = 1.0 / math.sqrt(gcr)
    return {
        'w1': jax.random.uniform(k1, (gcr, gc), jnp.float32, -b1w, b1w),
        'b1': jax.random.uniform(k2, (gcr, 1), jnp.float32, -b1w, b1w),
        'gamma': jnp.ones((gcr, 1), jnp.float32),
        'beta': jnp.zeros((gcr, 1), jnp.float32),
        'mean': jnp.zeros((gcr, 1), jnp.float32),
        'var': jnp.ones((gcr, 1), jnp.float32),
        'w2': jax.random.uniform(k3, (gc, gcr), jnp.float32, -b2w, b2w),
        'b2': jax.random.uniform(k4, (gc, 1), jnp.float32, -b2w, b2w),
    }


def init_params(key):
    keys = iter(jax.random.split(key, 32))
    p = {}
    p['embed_w'], p['embed_b'] = init_linear(next(keys), IN_SIZE * (OBS_LEN + PRED_LEN), EMBED)
    p['cls_w'], p['cls_b'] = init_linear(next(keys), EMBED, 1)
    p['nei_w'], p['nei_b'] = init_linear(next(keys), IN_SIZE * OBS_LEN, EMBED)
    p['reg_w'], p['reg_b'] = init_linear(next(keys), EMBED, IN_SIZE * PRED_LEN)
    p['ggca'] = init_ggca(next(keys))
    p['encoder'] = [init_layer(next(keys), EMBED, FWD_EXP) for _ in range(ENC_LAYERS)]
    p['decoder'] = [init_layer(next(keys), EMBED, FWD_EXP) for _ in range(INT_LAYERS[1])]
    return p


# ================================ main ====================================

if __name__ == "__main__":
    key = jax.random.PRNGKey(0)
    kp, k1, k2, k3 = jax.random.split(key, 4)
    params = init_params(kp)

    B, N_NEI = 2, 4
    ped_obs = jax.random.normal(k1, (B, OBS_LEN, IN_SIZE), jnp.float32)
    neis_obs = jax.random.normal(k2, (B, N_NEI, OBS_LEN, IN_SIZE), jnp.float32)
    motion_modes = jax.random.normal(k3, (NUM_MODES, PRED_LEN, IN_SIZE), jnp.float32)
    mask = jnp.ones((B, N_NEI, N_NEI), jnp.float32)
    closest_mode_indices = jnp.array([3, 7], dtype=jnp.int32)

    fwd_train = jax.jit(functools.partial(trajectory_model_forward, heads=HEADS, test=False))
    fwd_test = jax.jit(functools.partial(trajectory_model_forward, heads=HEADS, test=True, num_k=20))

    pred_traj, scores = fwd_train(params, ped_obs, neis_obs, motion_modes, mask,
                                  closest_mode_indices)
    pred_trajs, scores_t = fwd_test(params, ped_obs, neis_obs, motion_modes, mask,
                                    closest_mode_indices)

    jax.block_until_ready((pred_traj, scores, pred_trajs, scores_t))

    assert pred_traj.shape == (B, IN_SIZE * PRED_LEN)
    assert scores.shape == (B, NUM_MODES)
    assert pred_trajs.shape == (B, 20, IN_SIZE * PRED_LEN)
    assert scores_t.shape == (B, NUM_MODES)

    print("KERNEL_OK")
</pallas_src>

<mosaic_0001>
module attributes {stable_mosaic.version = 11 : i64} {
  func.func @_mode_encoder_kernel(%arg0: i32, %arg1: memref<1x2x128x20xf32, #tpu.memory_space<vmem>>, %arg2: memref<8x128xf32, #tpu.memory_space<vmem>>, %arg3: memref<8x1xf32, #tpu.memory_space<vmem>>, %arg4: memref<128x8xf32, #tpu.memory_space<vmem>>, %arg5: memref<128x1xf32, #tpu.memory_space<vmem>>, %arg6: memref<2x20x32xf32, #tpu.memory_space<vmem>>, %arg7: memref<1x32xf32, #tpu.memory_space<vmem>>, %arg8: memref<32x32xf32, #tpu.memory_space<vmem>>, %arg9: memref<1x32xf32, #tpu.memory_space<vmem>>, %arg10: memref<32x64xf32, #tpu.memory_space<vmem>>, %arg11: memref<1x64xf32, #tpu.memory_space<vmem>>, %arg12: memref<32x32xf32, #tpu.memory_space<vmem>>, %arg13: memref<1x32xf32, #tpu.memory_space<vmem>>, %arg14: memref<1x32xf32, #tpu.memory_space<vmem>>, %arg15: memref<1x32xf32, #tpu.memory_space<vmem>>, %arg16: memref<32x64xf32, #tpu.memory_space<vmem>>, %arg17: memref<1x64xf32, #tpu.memory_space<vmem>>, %arg18: memref<64x32xf32, #tpu.memory_space<vmem>>, %arg19: memref<1x32xf32, #tpu.memory_space<vmem>>, %arg20: memref<1x32xf32, #tpu.memory_space<vmem>>, %arg21: memref<1x32xf32, #tpu.memory_space<vmem>>, %arg22: memref<1x32xf32, #tpu.memory_space<vmem>>, %arg23: memref<1x1xf32, #tpu.memory_space<vmem>>, %arg24: memref<1x128x32xf32, #tpu.memory_space<vmem>>, %arg25: memref<1x1x128xf32, #tpu.memory_space<vmem>>) attributes {dimension_semantics = [#tpu.dimension_semantics<parallel>], iteration_bounds = array<i64: 2>, scalar_prefetch = 0 : i64, scratch_operands = 0 : i64, tpu.core_type = #tpu.core_type<tc>, window_params = [{transform_indices = @transform_0, window_bounds = array<i64: 1, 2, 128, 20>}, {pipeline_mode = #tpu.pipeline_mode<synchronous>, transform_indices = @transform_1, window_bounds = array<i64: 8, 128>}, {pipeline_mode = #tpu.pipeline_mode<synchronous>, transform_indices = @transform_2, window_bounds = array<i64: 8, 1>}, {pipeline_mode = #tpu.pipeline_mode<synchronous>, transform_indices = @transform_3, window_bounds = array<i64: 128, 8>}, {pipeline_mode = #tpu.pipeline_mode<synchronous>, transform_indices = @transform_4, window_bounds = array<i64: 128, 1>}, {pipeline_mode = #tpu.pipeline_mode<synchronous>, transform_indices = @transform_5, window_bounds = array<i64: 2, 20, 32>}, {pipeline_mode = #tpu.pipeline_mode<synchronous>, transform_indices = @transform_6, window_bounds = array<i64: 1, 32>}, {pipeline_mode = #tpu.pipeline_mode<synchronous>, transform_indices = @transform_7, window_bounds = array<i64: 32, 32>}, {pipeline_mode = #tpu.pipeline_mode<synchronous>, transform_indices = @transform_8, window_bounds = array<i64: 1, 32>}, {pipeline_mode = #tpu.pipeline_mode<synchronous>, transform_indices = @transform_9, window_bounds = array<i64: 32, 64>}, {pipeline_mode = #tpu.pipeline_mode<synchronous>, transform_indices = @transform_10, window_bounds = array<i64: 1, 64>}, {pipeline_mode = #tpu.pipeline_mode<synchronous>, transform_indices = @transform_11, window_bounds = array<i64: 32, 32>}, {pipeline_mode = #tpu.pipeline_mode<synchronous>, transform_indices = @transform_12, window_bounds = array<i64: 1, 32>}, {pipeline_mode = #tpu.pipeline_mode<synchronous>, transform_indices = @transform_13, window_bounds = array<i64: 1, 32>}, {pipeline_mode = #tpu.pipeline_mode<synchronous>, transform_indices = @transform_14, window_bounds = array<i64: 1, 32>}, {pipeline_mode = #tpu.pipeline_mode<synchronous>, transform_indices = @transform_15, window_bounds = array<i64: 32, 64>}, {pipeline_mode = #tpu.pipeline_mode<synchronous>, transform_indices = @transform_16, window_bounds = array<i64: 1, 64>}, {pipeline_mode = #tpu.pipeline_mode<synchronous>, transform_indices = @transform_17, window_bounds = array<i64: 64, 32>}, {pipeline_mode = #tpu.pipeline_mode<synchronous>, transform_indices = @transform_18, window_bounds = array<i64: 1, 32>}, {pipeline_mode = #tpu.pipeline_mode<synchronous>, transform_indices = @transform_19, window_bounds = array<i64: 1, 32>}, {pipeline_mode = #tpu.pipeline_mode<synchronous>, transform_indices = @transform_20, window_bounds = array<i64: 1, 32>}, {pipeline_mode = #tpu.pipeline_mode<synchronous>, transform_indices = @transform_21, window_bounds = array<i64: 1, 32>}, {pipeline_mode = #tpu.pipeline_mode<synchronous>, transform_indices = @transform_22, window_bounds = array<i64: 1, 1>}, {transform_indices = @transform_23, window_bounds = array<i64: 1, 128, 32>}, {transform_indices = @transform_24, window_bounds = array<i64: 1, 1, 128>}]} {
    %c0 = arith.constant 0 : index
    %c0_0 = arith.constant 0 : index
    %0 = vector.load %arg2[%c0, %c0_0] : memref<8x128xf32, #tpu.memory_space<vmem>>, vector<8x128xf32>
    %c0_1 = arith.constant 0 : index
    %c0_2 = arith.constant 0 : index
    %1 = vector.load %arg3[%c0_1, %c0_2] : memref<8x1xf32, #tpu.memory_space<vmem>>, vector<8x1xf32>
    %c0_3 = arith.constant 0 : index
    %c0_4 = arith.constant 0 : index
    %2 = vector.load %arg4[%c0_3, %c0_4] : memref<128x8xf32, #tpu.memory_space<vmem>>, vector<128x8xf32>
    %c0_5 = arith.constant 0 : index
    %c0_6 = arith.constant 0 : index
    %3 = vector.load %arg5[%c0_5, %c0_6] : memref<128x1xf32, #tpu.memory_space<vmem>>, vector<128x1xf32>
    %c0_7 = arith.constant 0 : index
    %c0_8 = arith.constant 0 : index
    %c0_9 = arith.constant 0 : index
    %c0_10 = arith.constant 0 : index
    %4 = vector.load %arg1[%c0_7, %c0_8, %c0_9, %c0_10] : memref<1x2x128x20xf32, #tpu.memory_space<vmem>>, vector<1x1x128x20xf32>
    %5 = vector.shape_cast %4 : vector<1x1x128x20xf32> to vector<128x20xf32>
    %c0_11 = arith.constant 0 : index
    %c1 = arith.constant 1 : index
    %c0_12 = arith.constant 0 : index
    %c0_13 = arith.constant 0 : index
    %6 = vector.load %arg1[%c0_11, %c1, %c0_12, %c0_13] : memref<1x2x128x20xf32, #tpu.memory_space<vmem>>, vector<1x1x128x20xf32>
    %7 = vector.shape_cast %6 : vector<1x1x128x20xf32> to vector<128x20xf32>
    %8 = arith.addf %5, %7 : vector<128x20xf32>
    %9 = arith.maximumf %5, %7 : vector<128x20xf32>
    %cst = arith.constant 5.000000e-01 : f32
    %10 = vector.broadcast %cst : f32 to vector<128x20xf32>
    %11 = arith.mulf %8, %10 : vector<128x20xf32>
    %cst_14 = arith.constant dense<0.000000e+00> : vector<8x20xf32>
    %12 = tpu.matmul %0, %11, %cst_14 {dimension_numbers = #tpu.dot_dimension_numbers<[1], [0], [0], [1], [0, 0, 1, 1], [], []>} : vector<8x128xf32>, vector<128x20xf32>, vector<8x20xf32> -> vector<8x20xf32>
    %13 = vector.broadcast %1 : vector<8x1xf32> to vector<8x20xf32>
    %14 = arith.addf %12, %13 : vector<8x20xf32>
    %cst_15 = arith.constant 0.000000e+00 : f32
    %15 = vector.broadcast %cst_15 : f32 to vector<8x20xf32>
    %16 = arith.maximumf %14, %15 : vector<8x20xf32>
    %cst_16 = arith.constant dense<0.000000e+00> : vector<128x20xf32>
    %17 = tpu.matmul %2, %16, %cst_16 {dimension_numbers = #tpu.dot_dimension_numbers<[1], [0], [0], [1], [0, 0, 1, 1], [], []>} : vector<128x8xf32>, vector<8x20xf32>, vector<128x20xf32> -> vector<128x20xf32>
    %18 = vector.broadcast %3 : vector<128x1xf32> to vector<128x20xf32>
    %19 = arith.addf %17, %18 : vector<128x20xf32>
    %cst_17 = arith.constant dense<0.000000e+00> : vector<8x20xf32>
    %20 = tpu.matmul %0, %9, %cst_17 {dimension_numbers = #tpu.dot_dimension_numbers<[1], [0], [0], [1], [0, 0, 1, 1], [], []>} : vector<8x128xf32>, vector<128x20xf32>, vector<8x20xf32> -> vector<8x20xf32>
    %21 = vector.broadcast %1 : vector<8x1xf32> to vector<8x20xf32>
    %22 = arith.addf %20, %21 : vector<8x20xf32>
    %cst_18 = arith.constant 0.000000e+00 : f32
    %23 = vector.broadcast %cst_18 : f32 to vector<8x20xf32>
    %24 = arith.maximumf %22, %23 : vector<8x20xf32>
    %cst_19 = arith.constant dense<0.000000e+00> : vector<128x20xf32>
    %25 = tpu.matmul %2, %24, %cst_19 {dimension_numbers = #tpu.dot_dimension_numbers<[1], [0], [0], [1], [0, 0, 1, 1], [], []>} : vector<128x8xf32>, vector<8x20xf32>, vector<128x20xf32> -> vector<128x20xf32>
    %26 = vector.broadcast %3 : vector<128x1xf32> to vector<128x20xf32>
    %27 = arith.addf %25, %26 : vector<128x20xf32>
    %28 = arith.addf %19, %27 : vector<128x20xf32>
    %29 = arith.negf %28 : vector<128x20xf32>
    %30 = math.exp %29 : vector<128x20xf32>
    %cst_20 = arith.constant 1.000000e+00 : f32
    %31 = vector.broadcast %cst_20 : f32 to vector<128x20xf32>
    %32 = arith.addf %31, %30 : vector<128x20xf32>
    %33 = arith.divf %31, %32 : vector<128x20xf32>
    %cst_21 = arith.constant dense<0.000000e+00> : vector<128xf32>
    %34 = vector.multi_reduction <add>, %5, %cst_21 [1] : vector<128x20xf32> to vector<128xf32>
    %35 = vector.shape_cast %34 : vector<128xf32> to vector<128x1xf32>
    %cst_22 = arith.constant 2.000000e+01 : f32
    %36 = vector.broadcast %cst_22 : f32 to vector<128x1xf32>
    %37 = arith.divf %35, %36 : vector<128x1xf32>
    %cst_23 = arith.constant dense<0xFF800000> : vector<128xf32>
    %38 = vector.multi_reduction <maximumf>, %5, %cst_23 [1] : vector<128x20xf32> to vector<128xf32>
    %39 = vector.shape_cast %38 : vector<128xf32> to vector<128x1xf32>
    %cst_24 = arith.constant dense<0.000000e+00> : vector<8x1xf32>
    %40 = tpu.matmul %0, %37, %cst_24 {dimension_numbers = #tpu.dot_dimension_numbers<[1], [0], [0], [1], [0, 0, 1, 1], [], []>} : vector<8x128xf32>, vector<128x1xf32>, vector<8x1xf32> -> vector<8x1xf32>
    %41 = arith.addf %40, %1 : vector<8x1xf32>
    %cst_25 = arith.constant 0.000000e+00 : f32
    %42 = vector.broadcast %cst_25 : f32 to vector<8x1xf32>
    %43 = arith.maximumf %41, %42 : vector<8x1xf32>
    %cst_26 = arith.constant dense<0.000000e+00> : vector<128x1xf32>
    %44 = tpu.matmul %2, %43, %cst_26 {dimension_numbers = #tpu.dot_dimension_numbers<[1], [0], [0], [1], [0, 0, 1, 1], [], []>} : vector<128x8xf32>, vector<8x1xf32>, vector<128x1xf32> -> vector<128x1xf32>
    %45 = arith.addf %44, %3 : vector<128x1xf32>
    %cst_27 = arith.constant dense<0.000000e+00> : vector<8x1xf32>
    %46 = tpu.matmul %0, %39, %cst_27 {dimension_numbers = #tpu.dot_dimension_numbers<[1], [0], [0], [1], [0, 0, 1, 1], [], []>} : vector<8x128xf32>, vector<128x1xf32>, vector<8x1xf32> -> vector<8x1xf32>
    %47 = arith.addf %46, %1 : vector<8x1xf32>
    %cst_28 = arith.constant 0.000000e+00 : f32
    %48 = vector.broadcast %cst_28 : f32 to vector<8x1xf32>
    %49 = arith.maximumf %47, %48 : vector<8x1xf32>
    %cst_29 = arith.constant dense<0.000000e+00> : vector<128x1xf32>
    %50 = tpu.matmul %2, %49, %cst_29 {dimension_numbers = #tpu.dot_dimension_numbers<[1], [0], [0], [1], [0, 0, 1, 1], [], []>} : vector<128x8xf32>, vector<8x1xf32>, vector<128x1xf32> -> vector<128x1xf32>
    %51 = arith.addf %50, %3 : vector<128x1xf32>
    %52 = arith.addf %45, %51 : vector<128x1xf32>
    %53 = arith.negf %52 : vector<128x1xf32>
    %54 = math.exp %53 : vector<128x1xf32>
    %cst_30 = arith.constant 1.000000e+00 : f32
    %55 = vector.broadcast %cst_30 : f32 to vector<128x1xf32>
    %56 = arith.addf %55, %54 : vector<128x1xf32>
    %57 = arith.divf %55, %56 : vector<128x1xf32>
    %58 = arith.mulf %5, %33 : vector<128x20xf32>
    %59 = vector.broadcast %57 : vector<128x1xf32> to vector<128x20xf32>
    %60 = arith.mulf %58, %59 : vector<128x20xf32>
    %c0_31 = arith.constant 0 : index
    %c0_32 = arith.constant 0 : index
    %c0_33 = arith.constant 0 : index
    %61 = vector.load %arg6[%c0_31, %c0_32, %c0_33] : memref<2x20x32xf32, #tpu.memory_space<vmem>>, vector<1x20x32xf32>
    %62 = vector.shape_cast %61 : vector<1x20x32xf32> to vector<20x32xf32>
    %cst_34 = arith.constant dense<0.000000e+00> : vector<128x32xf32>
    %63 = tpu.matmul %60, %62, %cst_34 {dimension_numbers = #tpu.dot_dimension_numbers<[1], [0], [0], [1], [0, 0, 1, 1], [], []>} : vector<128x20xf32>, vector<20x32xf32>, vector<128x32xf32> -> vector<128x32xf32>
    %cst_35 = arith.constant dense<0.000000e+00> : vector<128xf32>
    %64 = vector.multi_reduction <add>, %7, %cst_35 [1] : vector<128x20xf32> to vector<128xf32>
    %65 = vector.shape_cast %64 : vector<128xf32> to vector<128x1xf32>
    %cst_36 = arith.constant 2.000000e+01 : f32
    %66 = vector.broadcast %cst_36 : f32 to vector<128x1xf32>
    %67 = arith.divf %65, %66 : vector<128x1xf32>
    %cst_37 = arith.constant dense<0xFF800000> : vector<128xf32>
    %68 = vector.multi_reduction <maximumf>, %7, %cst_37 [1] : vector<128x20xf32> to vector<128xf32>
    %69 = vector.shape_cast %68 : vector<128xf32> to vector<128x1xf32>
    %cst_38 = arith.constant dense<0.000000e+00> : vector<8x1xf32>
    %70 = tpu.matmul %0, %67, %cst_38 {dimension_numbers = #tpu.dot_dimension_numbers<[1], [0], [0], [1], [0, 0, 1, 1], [], []>} : vector<8x128xf32>, vector<128x1xf32>, vector<8x1xf32> -> vector<8x1xf32>
    %71 = arith.addf %70, %1 : vector<8x1xf32>
    %cst_39 = arith.constant 0.000000e+00 : f32
    %72 = vector.broadcast %cst_39 : f32 to vector<8x1xf32>
    %73 = arith.maximumf %71, %72 : vector<8x1xf32>
    %cst_40 = arith.constant dense<0.000000e+00> : vector<128x1xf32>
    %74 = tpu.matmul %2, %73, %cst_40 {dimension_numbers = #tpu.dot_dimension_numbers<[1], [0], [0], [1], [0, 0, 1, 1], [], []>} : vector<128x8xf32>, vector<8x1xf32>, vector<128x1xf32> -> vector<128x1xf32>
    %75 = arith.addf %74, %3 : vector<128x1xf32>
    %cst_41 = arith.constant dense<0.000000e+00> : vector<8x1xf32>
    %76 = tpu.matmul %0, %69, %cst_41 {dimension_numbers = #tpu.dot_dimension_numbers<[1], [0], [0], [1], [0, 0, 1, 1], [], []>} : vector<8x128xf32>, vector<128x1xf32>, vector<8x1xf32> -> vector<8x1xf32>
    %77 = arith.addf %76, %1 : vector<8x1xf32>
    %cst_42 = arith.constant 0.000000e+00 : f32
    %78 = vector.broadcast %cst_42 : f32 to vector<8x1xf32>
    %79 = arith.maximumf %77, %78 : vector<8x1xf32>
    %cst_43 = arith.constant dense<0.000000e+00> : vector<128x1xf32>
    %80 = tpu.matmul %2, %79, %cst_43 {dimension_numbers = #tpu.dot_dimension_numbers<[1], [0], [0], [1], [0, 0, 1, 1], [], []>} : vector<128x8xf32>, vector<8x1xf32>, vector<128x1xf32> -> vector<128x1xf32>
    %81 = arith.addf %80, %3 : vector<128x1xf32>
    %82 = arith.addf %75, %81 : vector<128x1xf32>
    %83 = arith.negf %82 : vector<128x1xf32>
    %84 = math.exp %83 : vector<128x1xf32>
    %cst_44 = arith.constant 1.000000e+00 : f32
    %85 = vector.broadcast %cst_44 : f32 to vector<128x1xf32>
    %86 = arith.addf %85, %84 : vector<128x1xf32>
    %87 = arith.divf %85, %86 : vector<128x1xf32>
    %88 = arith.mulf %7, %33 : vector<128x20xf32>
    %89 = vector.broadcast %87 : vector<128x1xf32> to vector<128x20xf32>
    %90 = arith.mulf %88, %89 : vector<128x20xf32>
    %c1_45 = arith.constant 1 : index
    %c0_46 = arith.constant 0 : index
    %c0_47 = arith.constant 0 : index
    %91 = vector.load %arg6[%c1_45, %c0_46, %c0_47] : memref<2x20x32xf32, #tpu.memory_space<vmem>>, vector<1x20x32xf32>
    %92 = vector.shape_cast %91 : vector<1x20x32xf32> to vector<20x32xf32>
    %cst_48 = arith.constant dense<0.000000e+00> : vector<128x32xf32>
    %93 = tpu.matmul %90, %92, %cst_48 {dimension_numbers = #tpu.dot_dimension_numbers<[1], [0], [0], [1], [0, 0, 1, 1], [], []>} : vector<128x20xf32>, vector<20x32xf32>, vector<128x32xf32> -> vector<128x32xf32>
    %94 = arith.addf %63, %93 : vector<128x32xf32>
    %c0_49 = arith.constant 0 : index
    %c0_50 = arith.constant 0 : index
    %95 = vector.load %arg7[%c0_49, %c0_50] : memref<1x32xf32, #tpu.memory_space<vmem>>, vector<1x32xf32>
    %96 = vector.broadcast %95 : vector<1x32xf32> to vector<128x32xf32>
    %97 = arith.addf %94, %96 : vector<128x32xf32>
    %98 = tpu.iota {dimensions = array<i32: 1>} : vector<1x128xi32>
    %c100_i32 = arith.constant 100 : i32
    %99 = vector.broadcast %c100_i32 : i32 to vector<1x128xi32>
    %100 = arith.cmpi slt, %98, %99 : vector<1x128xi32>
    %c0_51 = arith.constant 0 : index
    %c0_52 = arith.constant 0 : index
    %101 = vector.load %arg8[%c0_51, %c0_52] : memref<32x32xf32, #tpu.memory_space<vmem>>, vector<32x32xf32>
    %c0_53 = arith.constant 0 : index
    %c0_54 = arith.constant 0 : index
    %102 = vector.load %arg9[%c0_53, %c0_54] : memref<1x32xf32, #tpu.memory_space<vmem>>, vector<1x32xf32>
    %c0_55 = arith.constant 0 : index
    %c0_56 = arith.constant 0 : index
    %103 = vector.load %arg10[%c0_55, %c0_56] : memref<32x64xf32, #tpu.memory_space<vmem>>, vector<32x64xf32>
    %c0_57 = arith.constant 0 : index
    %c0_58 = arith.constant 0 : index
    %104 = vector.load %arg11[%c0_57, %c0_58] : memref<1x64xf32, #tpu.memory_space<vmem>>, vector<1x64xf32>
    %c0_59 = arith.constant 0 : index
    %c0_60 = arith.constant 0 : index
    %105 = vector.load %arg12[%c0_59, %c0_60] : memref<32x32xf32, #tpu.memory_space<vmem>>, vector<32x32xf32>
    %c0_61 = arith.constant 0 : index
    %c0_62 = arith.constant 0 : index
    %106 = vector.load %arg13[%c0_61, %c0_62] : memref<1x32xf32, #tpu.memory_space<vmem>>, vector<1x32xf32>
    %c0_63 = arith.constant 0 : index
    %c0_64 = arith.constant 0 : index
    %107 = vector.load %arg14[%c0_63, %c0_64] : memref<1x32xf32, #tpu.memory_space<vmem>>, vector<1x32xf32>
    %c0_65 = arith.constant 0 : index
    %c0_66 = arith.constant 0 : index
    %108 = vector.load %arg15[%c0_65, %c0_66] : memref<1x32xf32, #tpu.memory_space<vmem>>, vector<1x32xf32>
    %c0_67 = arith.constant 0 : index
    %c0_68 = arith.constant 0 : index
    %109 = vector.load %arg16[%c0_67, %c0_68] : memref<32x64xf32, #tpu.memory_space<vmem>>, vector<32x64xf32>
    %c0_69 = arith.constant 0 : index
    %c0_70 = arith.constant 0 : index
    %110 = vector.load %arg17[%c0_69, %c0_70] : memref<1x64xf32, #tpu.memory_space<vmem>>, vector<1x64xf32>
    %c0_71 = arith.constant 0 : index
    %c0_72 = arith.constant 0 : index
    %111 = vector.load %arg18[%c0_71, %c0_72] : memref<64x32xf32, #tpu.memory_space<vmem>>, vector<64x32xf32>
    %c0_73 = arith.constant 0 : index
    %c0_74 = arith.constant 0 : index
    %112 = vector.load %arg19[%c0_73, %c0_74] : memref<1x32xf32, #tpu.memory_space<vmem>>, vector<1x32xf32>
    %c0_75 = arith.constant 0 : index
    %c0_76 = arith.constant 0 : index
    %113 = vector.load %arg20[%c0_75, %c0_76] : memref<1x32xf32, #tpu.memory_space<vmem>>, vector<1x32xf32>
    %c0_77 = arith.constant 0 : index
    %c0_78 = arith.constant 0 : index
    %114 = vector.load %arg21[%c0_77, %c0_78] : memref<1x32xf32, #tpu.memory_space<vmem>>, vector<1x32xf32>
    %cst_79 = arith.constant dense<0.000000e+00> : vector<128x32xf32>
    %115 = tpu.matmul %97, %101, %cst_79 {dimension_numbers = #tpu.dot_dimension_numbers<[1], [0], [0], [1], [0, 0, 1, 1], [], []>} : vector<128x32xf32>, vector<32x32xf32>, vector<128x32xf32> -> vector<128x32xf32>
    %116 = vector.broadcast %102 : vector<1x32xf32> to vector<128x32xf32>
    %117 = arith.addf %115, %116 : vector<128x32xf32>
    %cst_80 = arith.constant dense<0.000000e+00> : vector<128x64xf32>
    %118 = tpu.matmul %97, %103, %cst_80 {dimension_numbers = #tpu.dot_dimension_numbers<[1], [0], [0], [1], [0, 0, 1, 1], [], []>} : vector<128x32xf32>, vector<32x64xf32>, vector<128x64xf32> -> vector<128x64xf32>
    %119 = vector.broadcast %104 : vector<1x64xf32> to vector<128x64xf32>
    %120 = arith.addf %118, %119 : vector<128x64xf32>
    %121 = vector.extract_strided_slice %117 {offsets = [0, 0], sizes = [128, 8], strides = [1, 1]} : vector<128x32xf32> to vector<128x8xf32>
    %122 = vector.extract_strided_slice %120 {offsets = [0, 0], sizes = [128, 8], strides = [1, 1]} : vector<128x64xf32> to vector<128x8xf32>
    %123 = vector.extract_strided_slice %120 {offsets = [0, 32], sizes = [128, 8], strides = [1, 1]} : vector<128x64xf32> to vector<128x8xf32>
    %cst_81 = arith.constant dense<0.000000e+00> : vector<128x128xf32>
    %124 = tpu.matmul %121, %122, %cst_81 {dimension_numbers = #tpu.dot_dimension_numbers<[1], [1], [0], [0], [0, 0, 1, 0], [], []>} : vector<128x8xf32>, vector<128x8xf32>, vector<128x128xf32> -> vector<128x128xf32>
    %cst_82 = arith.constant 0.353553385 : f32
    %125 = vector.broadcast %cst_82 : f32 to vector<128x128xf32>
    %126 = arith.mulf %124, %125 : vector<128x128xf32>
    %cst_83 = arith.constant -1.000000e+09 : f32
    %127 = vector.shape_cast %100 : vector<1x128xi1> to vector<1x128xi1>
    %128 = vector.broadcast %127 : vector<1x128xi1> to vector<128x128xi1>
    %129 = vector.broadcast %cst_83 : f32 to vector<128x128xf32>
    %130 = arith.select %128, %126, %129 : vector<128x128xi1>, vector<128x128xf32>
    %cst_84 = arith.constant dense<0xFF800000> : vector<128xf32>
    %131 = vector.multi_reduction <maximumf>, %130, %cst_84 [1] : vector<128x128xf32> to vector<128xf32>
    %132 = vector.shape_cast %131 : vector<128xf32> to vector<128x1xf32>
    %133 = vector.broadcast %132 : vector<128x1xf32> to vector<128x128xf32>
    %134 = arith.subf %130, %133 : vector<128x128xf32>
    %135 = math.exp %134 : vector<128x128xf32>
    %cst_85 = arith.constant dense<0.000000e+00> : vector<128xf32>
    %136 = vector.multi_reduction <add>, %135, %cst_85 [1] : vector<128x128xf32> to vector<128xf32>
    %137 = vector.shape_cast %136 : vector<128xf32> to vector<128x1xf32>
    %138 = vector.broadcast %137 : vector<128x1xf32> to vector<128x128xf32>
    %139 = arith.divf %135, %138 : vector<128x128xf32>
    %cst_86 = arith.constant dense<0.000000e+00> : vector<128x8xf32>
    %140 = tpu.matmul %139, %123, %cst_86 {dimension_numbers = #tpu.dot_dimension_numbers<[1], [0], [0], [1], [0, 0, 1, 1], [], []>} : vector<128x128xf32>, vector<128x8xf32>, vector<128x8xf32> -> vector<128x8xf32>
    %141 = vector.extract_strided_slice %117 {offsets = [0, 8], sizes = [128, 8], strides = [1, 1]} : vector<128x32xf32> to vector<128x8xf32>
    %142 = vector.extract_strided_slice %120 {offsets = [0, 8], sizes = [128, 8], strides = [1, 1]} : vector<128x64xf32> to vector<128x8xf32>
    %143 = vector.extract_strided_slice %120 {offsets = [0, 40], sizes = [128, 8], strides = [1, 1]} : vector<128x64xf32> to vector<128x8xf32>
    %cst_87 = arith.constant dense<0.000000e+00> : vector<128x128xf32>
    %144 = tpu.matmul %141, %142, %cst_87 {dimension_numbers = #tpu.dot_dimension_numbers<[1], [1], [0], [0], [0, 0, 1, 0], [], []>} : vector<128x8xf32>, vector<128x8xf32>, vector<128x128xf32> -> vector<128x128xf32>
    %cst_88 = arith.constant 0.353553385 : f32
    %145 = vector.broadcast %cst_88 : f32 to vector<128x128xf32>
    %146 = arith.mulf %144, %145 : vector<128x128xf32>
    %cst_89 = arith.constant -1.000000e+09 : f32
    %147 = vector.shape_cast %100 : vector<1x128xi1> to vector<1x128xi1>
    %148 = vector.broadcast %147 : vector<1x128xi1> to vector<128x128xi1>
    %149 = vector.broadcast %cst_89 : f32 to vector<128x128xf32>
    %150 = arith.select %148, %146, %149 : vector<128x128xi1>, vector<128x128xf32>
    %cst_90 = arith.constant dense<0xFF800000> : vector<128xf32>
    %151 = vector.multi_reduction <maximumf>, %150, %cst_90 [1] : vector<128x128xf32> to vector<128xf32>
    %152 = vector.shape_cast %151 : vector<128xf32> to vector<128x1xf32>
    %153 = vector.broadcast %152 : vector<128x1xf32> to vector<128x128xf32>
    %154 = arith.subf %150, %153 : vector<128x128xf32>
    %155 = math.exp %154 : vector<128x128xf32>
    %cst_91 = arith.constant dense<0.000000e+00> : vector<128xf32>
    %156 = vector.multi_reduction <add>, %155, %cst_91 [1] : vector<128x128xf32> to vector<128xf32>
    %157 = vector.shape_cast %156 : vector<128xf32> to vector<128x1xf32>
    %158 = vector.broadcast %157 : vector<128x1xf32> to vector<128x128xf32>
    %159 = arith.divf %155, %158 : vector<128x128xf32>
    %cst_92 = arith.constant dense<0.000000e+00> : vector<128x8xf32>
    %160 = tpu.matmul %159, %143, %cst_92 {dimension_numbers = #tpu.dot_dimension_numbers<[1], [0], [0], [1], [0, 0, 1, 1], [], []>} : vector<128x128xf32>, vector<128x8xf32>, vector<128x8xf32> -> vector<128x8xf32>
    %161 = vector.extract_strided_slice %117 {offsets = [0, 16], sizes = [128, 8], strides = [1, 1]} : vector<128x32xf32> to vector<128x8xf32>
    %162 = vector.extract_strided_slice %120 {offsets = [0, 16], sizes = [128, 8], strides = [1, 1]} : vector<128x64xf32> to vector<128x8xf32>
    %163 = vector.extract_strided_slice %120 {offsets = [0, 48], sizes = [128, 8], strides = [1, 1]} : vector<128x64xf32> to vector<128x8xf32>
    %cst_93 = arith.constant dense<0.000000e+00> : vector<128x128xf32>
    %164 = tpu.matmul %161, %162, %cst_93 {dimension_numbers = #tpu.dot_dimension_numbers<[1], [1], [0], [0], [0, 0, 1, 0], [], []>} : vector<128x8xf32>, vector<128x8xf32>, vector<128x128xf32> -> vector<128x128xf32>
    %cst_94 = arith.constant 0.353553385 : f32
    %165 = vector.broadcast %cst_94 : f32 to vector<128x128xf32>
    %166 = arith.mulf %164, %165 : vector<128x128xf32>
    %cst_95 = arith.constant -1.000000e+09 : f32
    %167 = vector.shape_cast %100 : vector<1x128xi1> to vector<1x128xi1>
    %168 = vector.broadcast %167 : vector<1x128xi1> to vector<128x128xi1>
    %169 = vector.broadcast %cst_95 : f32 to vector<128x128xf32>
    %170 = arith.select %168, %166, %169 : vector<128x128xi1>, vector<128x128xf32>
    %cst_96 = arith.constant dense<0xFF800000> : vector<128xf32>
    %171 = vector.multi_reduction <maximumf>, %170, %cst_96 [1] : vector<128x128xf32> to vector<128xf32>
    %172 = vector.shape_cast %171 : vector<128xf32> to vector<128x1xf32>
    %173 = vector.broadcast %172 : vector<128x1xf32> to vector<128x128xf32>
    %174 = arith.subf %170, %173 : vector<128x128xf32>
    %175 = math.exp %174 : vector<128x128xf32>
    %cst_97 = arith.constant dense<0.000000e+00> : vector<128xf32>
    %176 = vector.multi_reduction <add>, %175, %cst_97 [1] : vector<128x128xf32> to vector<128xf32>
    %177 = vector.shape_cast %176 : vector<128xf32> to vector<128x1xf32>
    %178 = vector.broadcast %177 : vector<128x1xf32> to vector<128x128xf32>
    %179 = arith.divf %175, %178 : vector<128x128xf32>
    %cst_98 = arith.constant dense<0.000000e+00> : vector<128x8xf32>
    %180 = tpu.matmul %179, %163, %cst_98 {dimension_numbers = #tpu.dot_dimension_numbers<[1], [0], [0], [1], [0, 0, 1, 1], [], []>} : vector<128x128xf32>, vector<128x8xf32>, vector<128x8xf32> -> vector<128x8xf32>
    %181 = vector.extract_strided_slice %117 {offsets = [0, 24], sizes = [128, 8], strides = [1, 1]} : vector<128x32xf32> to vector<128x8xf32>
    %182 = vector.extract_strided_slice %120 {offsets = [0, 24], sizes = [128, 8], strides = [1, 1]} : vector<128x64xf32> to vector<128x8xf32>
    %183 = vector.extract_strided_slice %120 {offsets = [0, 56], sizes = [128, 8], strides = [1, 1]} : vector<128x64xf32> to vector<128x8xf32>
    %cst_99 = arith.constant dense<0.000000e+00> : vector<128x128xf32>
    %184 = tpu.matmul %181, %182, %cst_99 {dimension_numbers = #tpu.dot_dimension_numbers<[1], [1], [0], [0], [0, 0, 1, 0], [], []>} : vector<128x8xf32>, vector<128x8xf32>, vector<128x128xf32> -> vector<128x128xf32>
    %cst_100 = arith.constant 0.353553385 : f32
    %185 = vector.broadcast %cst_100 : f32 to vector<128x128xf32>
    %186 = arith.mulf %184, %185 : vector<128x128xf32>
    %cst_101 = arith.constant -1.000000e+09 : f32
    %187 = vector.shape_cast %100 : vector<1x128xi1> to vector<1x128xi1>
    %188 = vector.broadcast %187 : vector<1x128xi1> to vector<128x128xi1>
    %189 = vector.broadcast %cst_101 : f32 to vector<128x128xf32>
    %190 = arith.select %188, %186, %189 : vector<128x128xi1>, vector<128x128xf32>
    %cst_102 = arith.constant dense<0xFF800000> : vector<128xf32>
    %191 = vector.multi_reduction <maximumf>, %190, %cst_102 [1] : vector<128x128xf32> to vector<128xf32>
    %192 = vector.shape_cast %191 : vector<128xf32> to vector<128x1xf32>
    %193 = vector.broadcast %192 : vector<128x1xf32> to vector<128x128xf32>
    %194 = arith.subf %190, %193 : vector<128x128xf32>
    %195 = math.exp %194 : vector<128x128xf32>
    %cst_103 = arith.constant dense<0.000000e+00> : vector<128xf32>
    %196 = vector.multi_reduction <add>, %195, %cst_103 [1] : vector<128x128xf32> to vector<128xf32>
    %197 = vector.shape_cast %196 : vector<128xf32> to vector<128x1xf32>
    %198 = vector.broadcast %197 : vector<128x1xf32> to vector<128x128xf32>
    %199 = arith.divf %195, %198 : vector<128x128xf32>
    %cst_104 = arith.constant dense<0.000000e+00> : vector<128x8xf32>
    %200 = tpu.matmul %199, %183, %cst_104 {dimension_numbers = #tpu.dot_dimension_numbers<[1], [0], [0], [1], [0, 0, 1, 1], [], []>} : vector<128x128xf32>, vector<128x8xf32>, vector<128x8xf32> -> vector<128x8xf32>
    %201 = tpu.concatenate %140, %160, %180, %200 in 1 : vector<128x8xf32>, vector<128x8xf32>, vector<128x8xf32>, vector<128x8xf32> -> vector<128x32xf32>
    %cst_105 = arith.constant dense<0.000000e+00> : vector<128x32xf32>
    %202 = tpu.matmul %201, %105, %cst_105 {dimension_numbers = #tpu.dot_dimension_numbers<[1], [0], [0], [1], [0, 0, 1, 1], [], []>} : vector<128x32xf32>, vector<32x32xf32>, vector<128x32xf32> -> vector<128x32xf32>
    %203 = vector.broadcast %106 : vector<1x32xf32> to vector<128x32xf32>
    %204 = arith.addf %202, %203 : vector<128x32xf32>
    %205 = arith.addf %97, %204 : vector<128x32xf32>
    %cst_106 = arith.constant dense<0.000000e+00> : vector<128xf32>
    %206 = vector.multi_reduction <add>, %205, %cst_106 [1] : vector<128x32xf32> to vector<128xf32>
    %207 = vector.shape_cast %206 : vector<128xf32> to vector<128x1xf32>
    %cst_107 = arith.constant 3.200000e+01 : f32
    %208 = vector.broadcast %cst_107 : f32 to vector<128x1xf32>
    %209 = arith.divf %207, %208 : vector<128x1xf32>
    %210 = vector.broadcast %209 : vector<128x1xf32> to vector<128x32xf32>
    %211 = arith.subf %205, %210 : vector<128x32xf32>
    %212 = arith.mulf %211, %211 : vector<128x32xf32>
    %cst_108 = arith.constant dense<0.000000e+00> : vector<128xf32>
    %213 = vector.multi_reduction <add>, %212, %cst_108 [1] : vector<128x32xf32> to vector<128xf32>
    %214 = vector.shape_cast %213 : vector<128xf32> to vector<128x1xf32>
    %cst_109 = arith.constant 3.200000e+01 : f32
    %215 = vector.broadcast %cst_109 : f32 to vector<128x1xf32>
    %216 = arith.divf %214, %215 : vector<128x1xf32>
    %217 = vector.broadcast %209 : vector<128x1xf32> to vector<128x32xf32>
    %218 = arith.subf %205, %217 : vector<128x32xf32>
    %cst_110 = arith.constant 9.99999974E-6 : f32
    %219 = vector.broadcast %cst_110 : f32 to vector<128x1xf32>
    %220 = arith.addf %216, %219 : vector<128x1xf32>
    %221 = math.rsqrt %220 : vector<128x1xf32>
    %222 = vector.broadcast %221 : vector<128x1xf32> to vector<128x32xf32>
    %223 = arith.mulf %218, %222 : vector<128x32xf32>
    %224 = vector.broadcast %107 : vector<1x32xf32> to vector<128x32xf32>
    %225 = arith.mulf %223, %224 : vector<128x32xf32>
    %226 = vector.broadcast %108 : vector<1x32xf32> to vector<128x32xf32>
    %227 = arith.addf %225, %226 : vector<128x32xf32>
    %cst_111 = arith.constant dense<0.000000e+00> : vector<128x64xf32>
    %228 = tpu.matmul %227, %109, %cst_111 {dimension_numbers = #tpu.dot_dimension_numbers<[1], [0], [0], [1], [0, 0, 1, 1], [], []>} : vector<128x32xf32>, vector<32x64xf32>, vector<128x64xf32> -> vector<128x64xf32>
    %229 = vector.broadcast %110 : vector<1x64xf32> to vector<128x64xf32>
    %230 = arith.addf %228, %229 : vector<128x64xf32>
    %cst_112 = arith.constant 0.000000e+00 : f32
    %231 = vector.broadcast %cst_112 : f32 to vector<128x64xf32>
    %232 = arith.maximumf %230, %231 : vector<128x64xf32>
    %cst_113 = arith.constant dense<0.000000e+00> : vector<128x32xf32>
    %233 = tpu.matmul %232, %111, %cst_113 {dimension_numbers = #tpu.dot_dimension_numbers<[1], [0], [0], [1], [0, 0, 1, 1], [], []>} : vector<128x64xf32>, vector<64x32xf32>, vector<128x32xf32> -> vector<128x32xf32>
    %234 = vector.broadcast %112 : vector<1x32xf32> to vector<128x32xf32>
    %235 = arith.addf %233, %234 : vector<128x32xf32>
    %236 = arith.addf %227, %235 : vector<128x32xf32>
    %cst_114 = arith.constant dense<0.000000e+00> : vector<128xf32>
    %237 = vector.multi_reduction <add>, %236, %cst_114 [1] : vector<128x32xf32> to vector<128xf32>
    %238 = vector.shape_cast %237 : vector<128xf32> to vector<128x1xf32>
    %cst_115 = arith.constant 3.200000e+01 : f32
    %239 = vector.broadcast %cst_115 : f32 to vector<128x1xf32>
    %240 = arith.divf %238, %239 : vector<128x1xf32>
    %241 = vector.broadcast %240 : vector<128x1xf32> to vector<128x32xf32>
    %242 = arith.subf %236, %241 : vector<128x32xf32>
    %243 = arith.mulf %242, %242 : vector<128x32xf32>
    %cst_116 = arith.constant dense<0.000000e+00> : vector<128xf32>
    %244 = vector.multi_reduction <add>, %243, %cst_116 [1] : vector<128x32xf32> to vector<128xf32>
    %245 = vector.shape_cast %244 : vector<128xf32> to vector<128x1xf32>
    %cst_117 = arith.constant 3.200000e+01 : f32
    %246 = vector.broadcast %cst_117 : f32 to vector<128x1xf32>
    %247 = arith.divf %245, %246 : vector<128x1xf32>
    %248 = vector.broadcast %240 : vector<128x1xf32> to vector<128x32xf32>
    %249 = arith.subf %236, %248 : vector<128x32xf32>
    %cst_118 = arith.constant 9.99999974E-6 : f32
    %250 = vector.broadcast %cst_118 : f32 to vector<128x1xf32>
    %251 = arith.addf %247, %250 : vector<128x1xf32>
    %252 = math.rsqrt %251 : vector<128x1xf32>
    %253 = vector.broadcast %252 : vector<128x1xf32> to vector<128x32xf32>
    %254 = arith.mulf %249, %253 : vector<128x32xf32>
    %255 = vector.broadcast %113 : vector<1x32xf32> to vector<128x32xf32>
    %256 = arith.mulf %254, %255 : vector<128x32xf32>
    %257 = vector.broadcast %114 : vector<1x32xf32> to vector<128x32xf32>
    %258 = arith.addf %256, %257 : vector<128x32xf32>
    %c0_119 = arith.constant 0 : index
    %c0_120 = arith.constant 0 : index
    %c0_121 = arith.constant 0 : index
    %259 = vector.load %arg24[%c0_119, %c0_120, %c0_121] : memref<1x128x32xf32, #tpu.memory_space<vmem>>, vector<1x128x32xf32>
    %260 = vector.shape_cast %259 : vector<1x128x32xf32> to vector<128x32xf32>
    %261 = vector.shape_cast %258 : vector<128x32xf32> to vector<1x128x32xf32>
    tpu.vector_store %arg24[%c0_119, %c0_120, %c0_121], %261 {strides = array<i32>} : memref<1x128x32xf32, #tpu.memory_space<vmem>>, vector<1x128x32xf32>,
    %c0_122 = arith.constant 0 : index
    %c0_123 = arith.constant 0 : index
    %262 = vector.load %arg22[%c0_122, %c0_123] : memref<1x32xf32, #tpu.memory_space<vmem>>, vector<1x32xf32>
    %cst_124 = arith.constant dense<0.000000e+00> : vector<1x128xf32>
    %263 = tpu.matmul %262, %258, %cst_124 {dimension_numbers = #tpu.dot_dimension_numbers<[1], [1], [0], [0], [0, 0, 1, 0], [], []>} : vector<1x32xf32>, vector<128x32xf32>, vector<1x128xf32> -> vector<1x128xf32>
    %c0_125 = arith.constant 0 : index
    %c0_126 = arith.constant 0 : index
    %264 = vector.load %arg23[%c0_125, %c0_126] : memref<1x1xf32, #tpu.memory_space<vmem>>, vector<1x1xf32>
    %265 = vector.broadcast %264 : vector<1x1xf32> to vector<1x128xf32>
    %266 = arith.addf %263, %265 : vector<1x128xf32>
    %c0_127 = arith.constant 0 : index
    %c0_128 = arith.constant 0 : index
    %c0_129 = arith.constant 0 : index
    %267 = vector.load %arg25[%c0_127, %c0_128, %c0_129] : memref<1x1x128xf32, #tpu.memory_space<vmem>>, vector<1x1x128xf32>
    %268 = vector.shape_cast %267 : vector<1x1x128xf32> to vector<1x128xf32>
    %269 = vector.shape_cast %266 : vector<1x128xf32> to vector<1x1x128xf32>
    tpu.vector_store %arg25[%c0_127, %c0_128, %c0_129], %269 {strides = array<i32>} : memref<1x1x128xf32, #tpu.memory_space<vmem>>, vector<1x1x128xf32>,
    return
  }
  func.func @transform_0(%arg0: i32) -> (i32, i32, i32, i32) {
    %c0_i32 = arith.constant 0 : i32
    %c0_i32_0 = arith.constant 0 : i32
    %c0_i32_1 = arith.constant 0 : i32
    %c0_i32_2 = arith.constant 0 : i32
    return %arg0, %c0_i32, %c0_i32_0, %c0_i32_1 : i32, i32, i32, i32
  }
  func.func @transform_1(%arg0: i32) -> (i32, i32) {
    %c0_i32 = arith.constant 0 : i32
    %c0_i32_0 = arith.constant 0 : i32
    %c0_i32_1 = arith.constant 0 : i32
    return %c0_i32, %c0_i32_0 : i32, i32
  }
  func.func @transform_2(%arg0: i32) -> (i32, i32) {
    %c0_i32 = arith.constant 0 : i32
    %c0_i32_0 = arith.constant 0 : i32
    %c0_i32_1 = arith.constant 0 : i32
    return %c0_i32, %c0_i32_0 : i32, i32
  }
  func.func @transform_3(%arg0: i32) -> (i32, i32) {
    %c0_i32 = arith.constant 0 : i32
    %c0_i32_0 = arith.constant 0 : i32
    %c0_i32_1 = arith.constant 0 : i32
    return %c0_i32, %c0_i32_0 : i32, i32
  }
  func.func @transform_4(%arg0: i32) -> (i32, i32) {
    %c0_i32 = arith.constant 0 : i32
    %c0_i32_0 = arith.constant 0 : i32
    %c0_i32_1 = arith.constant 0 : i32
    return %c0_i32, %c0_i32_0 : i32, i32
  }
  func.func @transform_5(%arg0: i32) -> (i32, i32, i32) {
    %c0_i32 = arith.constant 0 : i32
    %c0_i32_0 = arith.constant 0 : i32
    %c0_i32_1 = arith.constant 0 : i32
    %c0_i32_2 = arith.constant 0 : i32
    return %c0_i32, %c0_i32_0, %c0_i32_1 : i32, i32, i32
  }
  func.func @transform_6(%arg0: i32) -> (i32, i32) {
    %c0_i32 = arith.constant 0 : i32
    %c0_i32_0 = arith.constant 0 : i32
    %c0_i32_1 = arith.constant 0 : i32
    return %c0_i32, %c0_i32_0 : i32, i32
  }
  func.func @transform_7(%arg0: i32) -> (i32, i32) {
    %c0_i32 = arith.constant 0 : i32
    %c0_i32_0 = arith.constant 0 : i32
    %c0_i32_1 = arith.constant 0 : i32
    return %c0_i32, %c0_i32_0 : i32, i32
  }
  func.func @transform_8(%arg0: i32) -> (i32, i32) {
    %c0_i32 = arith.constant 0 : i32
    %c0_i32_0 = arith.constant 0 : i32
    %c0_i32_1 = arith.constant 0 : i32
    return %c0_i32, %c0_i32_0 : i32, i32
  }
  func.func @transform_9(%arg0: i32) -> (i32, i32) {
    %c0_i32 = arith.constant 0 : i32
    %c0_i32_0 = arith.constant 0 : i32
    %c0_i32_1 = arith.constant 0 : i32
    return %c0_i32, %c0_i32_0 : i32, i32
  }
  func.func @transform_10(%arg0: i32) -> (i32, i32) {
    %c0_i32 = arith.constant 0 : i32
    %c0_i32_0 = arith.constant 0 : i32
    %c0_i32_1 = arith.constant 0 : i32
    return %c0_i32, %c0_i32_0 : i32, i32
  }
  func.func @transform_11(%arg0: i32) -> (i32, i32) {
    %c0_i32 = arith.constant 0 : i32
    %c0_i32_0 = arith.constant 0 : i32
    %c0_i32_1 = arith.constant 0 : i32
    return %c0_i32, %c0_i32_0 : i32, i32
  }
  func.func @transform_12(%arg0: i32) -> (i32, i32) {
    %c0_i32 = arith.constant 0 : i32
    %c0_i32_0 = arith.constant 0 : i32
    %c0_i32_1 = arith.constant 0 : i32
    return %c0_i32, %c0_i32_0 : i32, i32
  }
  func.func @transform_13(%arg0: i32) -> (i32, i32) {
    %c0_i32 = arith.constant 0 : i32
    %c0_i32_0 = arith.constant 0 : i32
    %c0_i32_1 = arith.constant 0 : i32
    return %c0_i32, %c0_i32_0 : i32, i32
  }
  func.func @transform_14(%arg0: i32) -> (i32, i32) {
    %c0_i32 = arith.constant 0 : i32
    %c0_i32_0 = arith.constant 0 : i32
    %c0_i32_1 = arith.constant 0 : i32
    return %c0_i32, %c0_i32_0 : i32, i32
  }
  func.func @transform_15(%arg0: i32) -> (i32, i32) {
    %c0_i32 = arith.constant 0 : i32
    %c0_i32_0 = arith.constant 0 : i32
    %c0_i32_1 = arith.constant 0 : i32
    return %c0_i32, %c0_i32_0 : i32, i32
  }
  func.func @transform_16(%arg0: i32) -> (i32, i32) {
    %c0_i32 = arith.constant 0 : i32
    %c0_i32_0 = arith.constant 0 : i32
    %c0_i32_1 = arith.constant 0 : i32
    return %c0_i32, %c0_i32_0 : i32, i32
  }
  func.func @transform_17(%arg0: i32) -> (i32, i32) {
    %c0_i32 = arith.constant 0 : i32
    %c0_i32_0 = arith.constant 0 : i32
    %c0_i32_1 = arith.constant 0 : i32
    return %c0_i32, %c0_i32_0 : i32, i32
  }
  func.func @transform_18(%arg0: i32) -> (i32, i32) {
    %c0_i32 = arith.constant 0 : i32
    %c0_i32_0 = arith.constant 0 : i32
    %c0_i32_1 = arith.constant 0 : i32
    return %c0_i32, %c0_i32_0 : i32, i32
  }
  func.func @transform_19(%arg0: i32) -> (i32, i32) {
    %c0_i32 = arith.constant 0 : i32
    %c0_i32_0 = arith.constant 0 : i32
    %c0_i32_1 = arith.constant 0 : i32
    return %c0_i32, %c0_i32_0 : i32, i32
  }
  func.func @transform_20(%arg0: i32) -> (i32, i32) {
    %c0_i32 = arith.constant 0 : i32
    %c0_i32_0 = arith.constant 0 : i32
    %c0_i32_1 = arith.constant 0 : i32
    return %c0_i32, %c0_i32_0 : i32, i32
  }
  func.func @transform_21(%arg0: i32) -> (i32, i32) {
    %c0_i32 = arith.constant 0 : i32
    %c0_i32_0 = arith.constant 0 : i32
    %c0_i32_1 = arith.constant 0 : i32
    return %c0_i32, %c0_i32_0 : i32, i32
  }
  func.func @transform_22(%arg0: i32) -> (i32, i32) {
    %c0_i32 = arith.constant 0 : i32
    %c0_i32_0 = arith.constant 0 : i32
    %c0_i32_1 = arith.constant 0 : i32
    return %c0_i32, %c0_i32_0 : i32, i32
  }
  func.func @transform_23(%arg0: i32) -> (i32, i32, i32) {
    %c0_i32 = arith.constant 0 : i32
    %c0_i32_0 = arith.constant 0 : i32
    %c0_i32_1 = arith.constant 0 : i32
    return %arg0, %c0_i32, %c0_i32_0 : i32, i32, i32
  }
  func.func @transform_24(%arg0: i32) -> (i32, i32, i32) {
    %c0_i32 = arith.constant 0 : i32
    %c0_i32_0 = arith.constant 0 : i32
    %c0_i32_1 = arith.constant 0 : i32
    return %arg0, %c0_i32, %c0_i32_0 : i32, i32, i32
  }
}

module attributes {stable_mosaic.version = 11 : i64} {
  func.func @_social_decoder_kernel(%arg0: i32, %arg1: memref<1x1x32xf32, #tpu.memory_space<vmem>>, %arg2: memref<1x4x16xf32, #tpu.memory_space<vmem>>, %arg3: memref<1x1x4xf32, #tpu.memory_space<vmem>>, %arg4: memref<16x32xf32, #tpu.memory_space<vmem>>, %arg5: memref<1x32xf32, #tpu.memory_space<vmem>>, %arg6: memref<32x32xf32, #tpu.memory_space<vmem>>, %arg7: memref<1x32xf32, #tpu.memory_space<vmem>>, %arg8: memref<32x64xf32, #tpu.memory_space<vmem>>, %arg9: memref<1x64xf32, #tpu.memory_space<vmem>>, %arg10: memref<32x32xf32, #tpu.memory_space<vmem>>, %arg11: memref<1x32xf32, #tpu.memory_space<vmem>>, %arg12: memref<1x32xf32, #tpu.memory_space<vmem>>, %arg13: memref<1x32xf32, #tpu.memory_space<vmem>>, %arg14: memref<32x64xf32, #tpu.memory_space<vmem>>, %arg15: memref<1x64xf32, #tpu.memory_space<vmem>>, %arg16: memref<64x32xf32, #tpu.memory_space<vmem>>, %arg17: memref<1x32xf32, #tpu.memory_space<vmem>>, %arg18: memref<1x32xf32, #tpu.memory_space<vmem>>, %arg19: memref<1x32xf32, #tpu.memory_space<vmem>>, %arg20: memref<32x24xf32, #tpu.memory_space<vmem>>, %arg21: memref<1x24xf32, #tpu.memory_space<vmem>>, %arg22: memref<1x1x24xf32, #tpu.memory_space<vmem>>) attributes {dimension_semantics = [#tpu.dimension_semantics<parallel>], iteration_bounds = array<i64: 2>, scalar_prefetch = 0 : i64, scratch_operands = 0 : i64, tpu.core_type = #tpu.core_type<tc>, window_params = [{transform_indices = @transform_0, window_bounds = array<i64: 1, 1, 32>}, {transform_indices = @transform_1, window_bounds = array<i64: 1, 4, 16>}, {transform_indices = @transform_2, window_bounds = array<i64: 1, 1, 4>}, {pipeline_mode = #tpu.pipeline_mode<synchronous>, transform_indices = @transform_3, window_bounds = array<i64: 16, 32>}, {pipeline_mode = #tpu.pipeline_mode<synchronous>, transform_indices = @transform_4, window_bounds = array<i64: 1, 32>}, {pipeline_mode = #tpu.pipeline_mode<synchronous>, transform_indices = @transform_5, window_bounds = array<i64: 32, 32>}, {pipeline_mode = #tpu.pipeline_mode<synchronous>, transform_indices = @transform_6, window_bounds = array<i64: 1, 32>}, {pipeline_mode = #tpu.pipeline_mode<synchronous>, transform_indices = @transform_7, window_bounds = array<i64: 32, 64>}, {pipeline_mode = #tpu.pipeline_mode<synchronous>, transform_indices = @transform_8, window_bounds = array<i64: 1, 64>}, {pipeline_mode = #tpu.pipeline_mode<synchronous>, transform_indices = @transform_9, window_bounds = array<i64: 32, 32>}, {pipeline_mode = #tpu.pipeline_mode<synchronous>, transform_indices = @transform_10, window_bounds = array<i64: 1, 32>}, {pipeline_mode = #tpu.pipeline_mode<synchronous>, transform_indices = @transform_11, window_bounds = array<i64: 1, 32>}, {pipeline_mode = #tpu.pipeline_mode<synchronous>, transform_indices = @transform_12, window_bounds = array<i64: 1, 32>}, {pipeline_mode = #tpu.pipeline_mode<synchronous>, transform_indices = @transform_13, window_bounds = array<i64: 32, 64>}, {pipeline_mode = #tpu.pipeline_mode<synchronous>, transform_indices = @transform_14, window_bounds = array<i64: 1, 64>}, {pipeline_mode = #tpu.pipeline_mode<synchronous>, transform_indices = @transform_15, window_bounds = array<i64: 64, 32>}, {pipeline_mode = #tpu.pipeline_mode<synchronous>, transform_indices = @transform_16, window_bounds = array<i64: 1, 32>}, {pipeline_mode = #tpu.pipeline_mode<synchronous>, transform_indices = @transform_17, window_bounds = array<i64: 1, 32>}, {pipeline_mode = #tpu.pipeline_mode<synchronous>, transform_indices = @transform_18, window_bounds = array<i64: 1, 32>}, {pipeline_mode = #tpu.pipeline_mode<synchronous>, transform_indices = @transform_19, window_bounds = array<i64: 32, 24>}, {pipeline_mode = #tpu.pipeline_mode<synchronous>, transform_indices = @transform_20, window_bounds = array<i64: 1, 24>}, {transform_indices = @transform_21, window_bounds = array<i64: 1, 1, 24>}]} {
    %c0 = arith.constant 0 : index
    %c0_0 = arith.constant 0 : index
    %c0_1 = arith.constant 0 : index
    %0 = vector.load %arg2[%c0, %c0_0, %c0_1] : memref<1x4x16xf32, #tpu.memory_space<vmem>>, vector<1x4x16xf32>
    %1 = vector.shape_cast %0 : vector<1x4x16xf32> to vector<4x16xf32>
    %c0_2 = arith.constant 0 : index
    %c0_3 = arith.constant 0 : index
    %2 = vector.load %arg4[%c0_2, %c0_3] : memref<16x32xf32, #tpu.memory_space<vmem>>, vector<16x32xf32>
    %cst = arith.constant dense<0.000000e+00> : vector<4x32xf32>
    %3 = tpu.matmul %1, %2, %cst {dimension_numbers = #tpu.dot_dimension_numbers<[1], [0], [0], [1], [0, 0, 1, 1], [], []>} : vector<4x16xf32>, vector<16x32xf32>, vector<4x32xf32> -> vector<4x32xf32>
    %c0_4 = arith.constant 0 : index
    %c0_5 = arith.constant 0 : index
    %4 = vector.load %arg5[%c0_4, %c0_5] : memref<1x32xf32, #tpu.memory_space<vmem>>, vector<1x32xf32>
    %5 = vector.broadcast %4 : vector<1x32xf32> to vector<4x32xf32>
    %6 = arith.addf %3, %5 : vector<4x32xf32>
    %c0_6 = arith.constant 0 : index
    %c0_7 = arith.constant 0 : index
    %c0_8 = arith.constant 0 : index
    %7 = vector.load %arg3[%c0_6, %c0_7, %c0_8] : memref<1x1x4xf32, #tpu.memory_space<vmem>>, vector<1x1x4xf32>
    %8 = vector.shape_cast %7 : vector<1x1x4xf32> to vector<1x4xf32>
    %cst_9 = arith.constant 0.000000e+00 : f32
    %9 = vector.broadcast %cst_9 : f32 to vector<1x4xf32>
    %10 = arith.cmpf ogt, %8, %9 : vector<1x4xf32>
    %c0_10 = arith.constant 0 : index
    %c0_11 = arith.constant 0 : index
    %c0_12 = arith.constant 0 : index
    %11 = vector.load %arg1[%c0_10, %c0_11, %c0_12] : memref<1x1x32xf32, #tpu.memory_space<vmem>>, vector<1x1x32xf32>
    %12 = vector.shape_cast %11 : vector<1x1x32xf32> to vector<1x32xf32>
    %c0_13 = arith.constant 0 : index
    %c0_14 = arith.constant 0 : index
    %13 = vector.load %arg6[%c0_13, %c0_14] : memref<32x32xf32, #tpu.memory_space<vmem>>, vector<32x32xf32>
    %c0_15 = arith.constant 0 : index
    %c0_16 = arith.constant 0 : index
    %14 = vector.load %arg7[%c0_15, %c0_16] : memref<1x32xf32, #tpu.memory_space<vmem>>, vector<1x32xf32>
    %c0_17 = arith.constant 0 : index
    %c0_18 = arith.constant 0 : index
    %15 = vector.load %arg8[%c0_17, %c0_18] : memref<32x64xf32, #tpu.memory_space<vmem>>, vector<32x64xf32>
    %c0_19 = arith.constant 0 : index
    %c0_20 = arith.constant 0 : index
    %16 = vector.load %arg9[%c0_19, %c0_20] : memref<1x64xf32, #tpu.memory_space<vmem>>, vector<1x64xf32>
    %c0_21 = arith.constant 0 : index
    %c0_22 = arith.constant 0 : index
    %17 = vector.load %arg10[%c0_21, %c0_22] : memref<32x32xf32, #tpu.memory_space<vmem>>, vector<32x32xf32>
    %c0_23 = arith.constant 0 : index
    %c0_24 = arith.constant 0 : index
    %18 = vector.load %arg11[%c0_23, %c0_24] : memref<1x32xf32, #tpu.memory_space<vmem>>, vector<1x32xf32>
    %c0_25 = arith.constant 0 : index
    %c0_26 = arith.constant 0 : index
    %19 = vector.load %arg12[%c0_25, %c0_26] : memref<1x32xf32, #tpu.memory_space<vmem>>, vector<1x32xf32>
    %c0_27 = arith.constant 0 : index
    %c0_28 = arith.constant 0 : index
    %20 = vector.load %arg13[%c0_27, %c0_28] : memref<1x32xf32, #tpu.memory_space<vmem>>, vector<1x32xf32>
    %c0_29 = arith.constant 0 : index
    %c0_30 = arith.constant 0 : index
    %21 = vector.load %arg14[%c0_29, %c0_30] : memref<32x64xf32, #tpu.memory_space<vmem>>, vector<32x64xf32>
    %c0_31 = arith.constant 0 : index
    %c0_32 = arith.constant 0 : index
    %22 = vector.load %arg15[%c0_31, %c0_32] : memref<1x64xf32, #tpu.memory_space<vmem>>, vector<1x64xf32>
    %c0_33 = arith.constant 0 : index
    %c0_34 = arith.constant 0 : index
    %23 = vector.load %arg16[%c0_33, %c0_34] : memref<64x32xf32, #tpu.memory_space<vmem>>, vector<64x32xf32>
    %c0_35 = arith.constant 0 : index
    %c0_36 = arith.constant 0 : index
    %24 = vector.load %arg17[%c0_35, %c0_36] : memref<1x32xf32, #tpu.memory_space<vmem>>, vector<1x32xf32>
    %c0_37 = arith.constant 0 : index
    %c0_38 = arith.constant 0 : index
    %25 = vector.load %arg18[%c0_37, %c0_38] : memref<1x32xf32, #tpu.memory_space<vmem>>, vector<1x32xf32>
    %c0_39 = arith.constant 0 : index
    %c0_40 = arith.constant 0 : index
    %26 = vector.load %arg19[%c0_39, %c0_40] : memref<1x32xf32, #tpu.memory_space<vmem>>, vector<1x32xf32>
    %cst_41 = arith.constant dense<0.000000e+00> : vector<1x32xf32>
    %27 = tpu.matmul %12, %13, %cst_41 {dimension_numbers = #tpu.dot_dimension_numbers<[1], [0], [0], [1], [0, 0, 1, 1], [], []>} : vector<1x32xf32>, vector<32x32xf32>, vector<1x32xf32> -> vector<1x32xf32>
    %28 = arith.addf %27, %14 : vector<1x32xf32>
    %cst_42 = arith.constant dense<0.000000e+00> : vector<4x64xf32>
    %29 = tpu.matmul %6, %15, %cst_42 {dimension_numbers = #tpu.dot_dimension_numbers<[1], [0], [0], [1], [0, 0, 1, 1], [], []>} : vector<4x32xf32>, vector<32x64xf32>, vector<4x64xf32> -> vector<4x64xf32>
    %30 = vector.broadcast %16 : vector<1x64xf32> to vector<4x64xf32>
    %31 = arith.addf %29, %30 : vector<4x64xf32>
    %32 = vector.extract_strided_slice %28 {offsets = [0, 0], sizes = [1, 8], strides = [1, 1]} : vector<1x32xf32> to vector<1x8xf32>
    %33 = vector.extract_strided_slice %31 {offsets = [0, 0], sizes = [4, 8], strides = [1, 1]} : vector<4x64xf32> to vector<4x8xf32>
    %34 = vector.extract_strided_slice %31 {offsets = [0, 32], sizes = [4, 8], strides = [1, 1]} : vector<4x64xf32> to vector<4x8xf32>
    %cst_43 = arith.constant dense<0.000000e+00> : vector<1x4xf32>
    %35 = tpu.matmul %32, %33, %cst_43 {dimension_numbers = #tpu.dot_dimension_numbers<[1], [1], [0], [0], [0, 0, 1, 0], [], []>} : vector<1x8xf32>, vector<4x8xf32>, vector<1x4xf32> -> vector<1x4xf32>
    %cst_44 = arith.constant 0.353553385 : f32
    %36 = vector.broadcast %cst_44 : f32 to vector<1x4xf32>
    %37 = arith.mulf %35, %36 : vector<1x4xf32>
    %cst_45 = arith.constant -1.000000e+09 : f32
    %38 = vector.broadcast %cst_45 : f32 to vector<1x4xf32>
    %39 = arith.select %10, %37, %38 : vector<1x4xi1>, vector<1x4xf32>
    %cst_46 = arith.constant dense<0xFF800000> : vector<1xf32>
    %40 = vector.multi_reduction <maximumf>, %39, %cst_46 [1] : vector<1x4xf32> to vector<1xf32>
    %41 = vector.shape_cast %40 : vector<1xf32> to vector<1x1xf32>
    %42 = vector.broadcast %41 : vector<1x1xf32> to vector<1x4xf32>
    %43 = arith.subf %39, %42 : vector<1x4xf32>
    %44 = math.exp %43 : vector<1x4xf32>
    %cst_47 = arith.constant dense<0.000000e+00> : vector<1xf32>
    %45 = vector.multi_reduction <add>, %44, %cst_47 [1] : vector<1x4xf32> to vector<1xf32>
    %46 = vector.shape_cast %45 : vector<1xf32> to vector<1x1xf32>
    %47 = vector.broadcast %46 : vector<1x1xf32> to vector<1x4xf32>
    %48 = arith.divf %44, %47 : vector<1x4xf32>
    %cst_48 = arith.constant dense<0.000000e+00> : vector<1x8xf32>
    %49 = tpu.matmul %48, %34, %cst_48 {dimension_numbers = #tpu.dot_dimension_numbers<[1], [0], [0], [1], [0, 0, 1, 1], [], []>} : vector<1x4xf32>, vector<4x8xf32>, vector<1x8xf32> -> vector<1x8xf32>
    %50 = vector.extract_strided_slice %28 {offsets = [0, 8], sizes = [1, 8], strides = [1, 1]} : vector<1x32xf32> to vector<1x8xf32>
    %51 = vector.extract_strided_slice %31 {offsets = [0, 8], sizes = [4, 8], strides = [1, 1]} : vector<4x64xf32> to vector<4x8xf32>
    %52 = vector.extract_strided_slice %31 {offsets = [0, 40], sizes = [4, 8], strides = [1, 1]} : vector<4x64xf32> to vector<4x8xf32>
    %cst_49 = arith.constant dense<0.000000e+00> : vector<1x4xf32>
    %53 = tpu.matmul %50, %51, %cst_49 {dimension_numbers = #tpu.dot_dimension_numbers<[1], [1], [0], [0], [0, 0, 1, 0], [], []>} : vector<1x8xf32>, vector<4x8xf32>, vector<1x4xf32> -> vector<1x4xf32>
    %cst_50 = arith.constant 0.353553385 : f32
    %54 = vector.broadcast %cst_50 : f32 to vector<1x4xf32>
    %55 = arith.mulf %53, %54 : vector<1x4xf32>
    %cst_51 = arith.constant -1.000000e+09 : f32
    %56 = vector.broadcast %cst_51 : f32 to vector<1x4xf32>
    %57 = arith.select %10, %55, %56 : vector<1x4xi1>, vector<1x4xf32>
    %cst_52 = arith.constant dense<0xFF800000> : vector<1xf32>
    %58 = vector.multi_reduction <maximumf>, %57, %cst_52 [1] : vector<1x4xf32> to vector<1xf32>
    %59 = vector.shape_cast %58 : vector<1xf32> to vector<1x1xf32>
    %60 = vector.broadcast %59 : vector<1x1xf32> to vector<1x4xf32>
    %61 = arith.subf %57, %60 : vector<1x4xf32>
    %62 = math.exp %61 : vector<1x4xf32>
    %cst_53 = arith.constant dense<0.000000e+00> : vector<1xf32>
    %63 = vector.multi_reduction <add>, %62, %cst_53 [1] : vector<1x4xf32> to vector<1xf32>
    %64 = vector.shape_cast %63 : vector<1xf32> to vector<1x1xf32>
    %65 = vector.broadcast %64 : vector<1x1xf32> to vector<1x4xf32>
    %66 = arith.divf %62, %65 : vector<1x4xf32>
    %cst_54 = arith.constant dense<0.000000e+00> : vector<1x8xf32>
    %67 = tpu.matmul %66, %52, %cst_54 {dimension_numbers = #tpu.dot_dimension_numbers<[1], [0], [0], [1], [0, 0, 1, 1], [], []>} : vector<1x4xf32>, vector<4x8xf32>, vector<1x8xf32> -> vector<1x8xf32>
    %68 = vector.extract_strided_slice %28 {offsets = [0, 16], sizes = [1, 8], strides = [1, 1]} : vector<1x32xf32> to vector<1x8xf32>
    %69 = vector.extract_strided_slice %31 {offsets = [0, 16], sizes = [4, 8], strides = [1, 1]} : vector<4x64xf32> to vector<4x8xf32>
    %70 = vector.extract_strided_slice %31 {offsets = [0, 48], sizes = [4, 8], strides = [1, 1]} : vector<4x64xf32> to vector<4x8xf32>
    %cst_55 = arith.constant dense<0.000000e+00> : vector<1x4xf32>
    %71 = tpu.matmul %68, %69, %cst_55 {dimension_numbers = #tpu.dot_dimension_numbers<[1], [1], [0], [0], [0, 0, 1, 0], [], []>} : vector<1x8xf32>, vector<4x8xf32>, vector<1x4xf32> -> vector<1x4xf32>
    %cst_56 = arith.constant 0.353553385 : f32
    %72 = vector.broadcast %cst_56 : f32 to vector<1x4xf32>
    %73 = arith.mulf %71, %72 : vector<1x4xf32>
    %cst_57 = arith.constant -1.000000e+09 : f32
    %74 = vector.broadcast %cst_57 : f32 to vector<1x4xf32>
    %75 = arith.select %10, %73, %74 : vector<1x4xi1>, vector<1x4xf32>
    %cst_58 = arith.constant dense<0xFF800000> : vector<1xf32>
    %76 = vector.multi_reduction <maximumf>, %75, %cst_58 [1] : vector<1x4xf32> to vector<1xf32>
    %77 = vector.shape_cast %76 : vector<1xf32> to vector<1x1xf32>
    %78 = vector.broadcast %77 : vector<1x1xf32> to vector<1x4xf32>
    %79 = arith.subf %75, %78 : vector<1x4xf32>
    %80 = math.exp %79 : vector<1x4xf32>
    %cst_59 = arith.constant dense<0.000000e+00> : vector<1xf32>
    %81 = vector.multi_reduction <add>, %80, %cst_59 [1] : vector<1x4xf32> to vector<1xf32>
    %82 = vector.shape_cast %81 : vector<1xf32> to vector<1x1xf32>
    %83 = vector.broadcast %82 : vector<1x1xf32> to vector<1x4xf32>
    %84 = arith.divf %80, %83 : vector<1x4xf32>
    %cst_60 = arith.constant dense<0.000000e+00> : vector<1x8xf32>
    %85 = tpu.matmul %84, %70, %cst_60 {dimension_numbers = #tpu.dot_dimension_numbers<[1], [0], [0], [1], [0, 0, 1, 1], [], []>} : vector<1x4xf32>, vector<4x8xf32>, vector<1x8xf32> -> vector<1x8xf32>
    %86 = vector.extract_strided_slice %28 {offsets = [0, 24], sizes = [1, 8], strides = [1, 1]} : vector<1x32xf32> to vector<1x8xf32>
    %87 = vector.extract_strided_slice %31 {offsets = [0, 24], sizes = [4, 8], strides = [1, 1]} : vector<4x64xf32> to vector<4x8xf32>
    %88 = vector.extract_strided_slice %31 {offsets = [0, 56], sizes = [4, 8], strides = [1, 1]} : vector<4x64xf32> to vector<4x8xf32>
    %cst_61 = arith.constant dense<0.000000e+00> : vector<1x4xf32>
    %89 = tpu.matmul %86, %87, %cst_61 {dimension_numbers = #tpu.dot_dimension_numbers<[1], [1], [0], [0], [0, 0, 1, 0], [], []>} : vector<1x8xf32>, vector<4x8xf32>, vector<1x4xf32> -> vector<1x4xf32>
    %cst_62 = arith.constant 0.353553385 : f32
    %90 = vector.broadcast %cst_62 : f32 to vector<1x4xf32>
    %91 = arith.mulf %89, %90 : vector<1x4xf32>
    %cst_63 = arith.constant -1.000000e+09 : f32
    %92 = vector.broadcast %cst_63 : f32 to vector<1x4xf32>
    %93 = arith.select %10, %91, %92 : vector<1x4xi1>, vector<1x4xf32>
    %cst_64 = arith.constant dense<0xFF800000> : vector<1xf32>
    %94 = vector.multi_reduction <maximumf>, %93, %cst_64 [1] : vector<1x4xf32> to vector<1xf32>
    %95 = vector.shape_cast %94 : vector<1xf32> to vector<1x1xf32>
    %96 = vector.broadcast %95 : vector<1x1xf32> to vector<1x4xf32>
    %97 = arith.subf %93, %96 : vector<1x4xf32>
    %98 = math.exp %97 : vector<1x4xf32>
    %cst_65 = arith.constant dense<0.000000e+00> : vector<1xf32>
    %99 = vector.multi_reduction <add>, %98, %cst_65 [1] : vector<1x4xf32> to vector<1xf32>
    %100 = vector.shape_cast %99 : vector<1xf32> to vector<1x1xf32>
    %101 = vector.broadcast %100 : vector<1x1xf32> to vector<1x4xf32>
    %102 = arith.divf %98, %101 : vector<1x4xf32>
    %cst_66 = arith.constant dense<0.000000e+00> : vector<1x8xf32>
    %103 = tpu.matmul %102, %88, %cst_66 {dimension_numbers = #tpu.dot_dimension_numbers<[1], [0], [0], [1], [0, 0, 1, 1], [], []>} : vector<1x4xf32>, vector<4x8xf32>, vector<1x8xf32> -> vector<1x8xf32>
    %104 = tpu.concatenate %49, %67, %85, %103 in 1 : vector<1x8xf32>, vector<1x8xf32>, vector<1x8xf32>, vector<1x8xf32> -> vector<1x32xf32>
    %cst_67 = arith.constant dense<0.000000e+00> : vector<1x32xf32>
    %105 = tpu.matmul %104, %17, %cst_67 {dimension_numbers = #tpu.dot_dimension_numbers<[1], [0], [0], [1], [0, 0, 1, 1], [], []>} : vector<1x32xf32>, vector<32x32xf32>, vector<1x32xf32> -> vector<1x32xf32>
    %106 = arith.addf %105, %18 : vector<1x32xf32>
    %107 = arith.addf %12, %106 : vector<1x32xf32>
    %cst_68 = arith.constant dense<0.000000e+00> : vector<1xf32>
    %108 = vector.multi_reduction <add>, %107, %cst_68 [1] : vector<1x32xf32> to vector<1xf32>
    %109 = vector.shape_cast %108 : vector<1xf32> to vector<1x1xf32>
    %cst_69 = arith.constant 3.200000e+01 : f32
    %110 = vector.broadcast %cst_69 : f32 to vector<1x1xf32>
    %111 = arith.divf %109, %110 : vector<1x1xf32>
    %112 = vector.broadcast %111 : vector<1x1xf32> to vector<1x32xf32>
    %113 = arith.subf %107, %112 : vector<1x32xf32>
    %114 = arith.mulf %113, %113 : vector<1x32xf32>
    %cst_70 = arith.constant dense<0.000000e+00> : vector<1xf32>
    %115 = vector.multi_reduction <add>, %114, %cst_70 [1] : vector<1x32xf32> to vector<1xf32>
    %116 = vector.shape_cast %115 : vector<1xf32> to vector<1x1xf32>
    %cst_71 = arith.constant 3.200000e+01 : f32
    %117 = vector.broadcast %cst_71 : f32 to vector<1x1xf32>
    %118 = arith.divf %116, %117 : vector<1x1xf32>
    %119 = vector.broadcast %111 : vector<1x1xf32> to vector<1x32xf32>
    %120 = arith.subf %107, %119 : vector<1x32xf32>
    %cst_72 = arith.constant 9.99999974E-6 : f32
    %121 = vector.broadcast %cst_72 : f32 to vector<1x1xf32>
    %122 = arith.addf %118, %121 : vector<1x1xf32>
    %123 = math.rsqrt %122 : vector<1x1xf32>
    %124 = vector.broadcast %123 : vector<1x1xf32> to vector<1x32xf32>
    %125 = arith.mulf %120, %124 : vector<1x32xf32>
    %126 = arith.mulf %125, %19 : vector<1x32xf32>
    %127 = arith.addf %126, %20 : vector<1x32xf32>
    %cst_73 = arith.constant dense<0.000000e+00> : vector<1x64xf32>
    %128 = tpu.matmul %127, %21, %cst_73 {dimension_numbers = #tpu.dot_dimension_numbers<[1], [0], [0], [1], [0, 0, 1, 1], [], []>} : vector<1x32xf32>, vector<32x64xf32>, vector<1x64xf32> -> vector<1x64xf32>
    %129 = arith.addf %128, %22 : vector<1x64xf32>
    %cst_74 = arith.constant 0.000000e+00 : f32
    %130 = vector.broadcast %cst_74 : f32 to vector<1x64xf32>
    %131 = arith.maximumf %129, %130 : vector<1x64xf32>
    %cst_75 = arith.constant dense<0.000000e+00> : vector<1x32xf32>
    %132 = tpu.matmul %131, %23, %cst_75 {dimension_numbers = #tpu.dot_dimension_numbers<[1], [0], [0], [1], [0, 0, 1, 1], [], []>} : vector<1x64xf32>, vector<64x32xf32>, vector<1x32xf32> -> vector<1x32xf32>
    %133 = arith.addf %132, %24 : vector<1x32xf32>
    %134 = arith.addf %127, %133 : vector<1x32xf32>
    %cst_76 = arith.constant dense<0.000000e+00> : vector<1xf32>
    %135 = vector.multi_reduction <add>, %134, %cst_76 [1] : vector<1x32xf32> to vector<1xf32>
    %136 = vector.shape_cast %135 : vector<1xf32> to vector<1x1xf32>
    %cst_77 = arith.constant 3.200000e+01 : f32
    %137 = vector.broadcast %cst_77 : f32 to vector<1x1xf32>
    %138 = arith.divf %136, %137 : vector<1x1xf32>
    %139 = vector.broadcast %138 : vector<1x1xf32> to vector<1x32xf32>
    %140 = arith.subf %134, %139 : vector<1x32xf32>
    %141 = arith.mulf %140, %140 : vector<1x32xf32>
    %cst_78 = arith.constant dense<0.000000e+00> : vector<1xf32>
    %142 = vector.multi_reduction <add>, %141, %cst_78 [1] : vector<1x32xf32> to vector<1xf32>
    %143 = vector.shape_cast %142 : vector<1xf32> to vector<1x1xf32>
    %cst_79 = arith.constant 3.200000e+01 : f32
    %144 = vector.broadcast %cst_79 : f32 to vector<1x1xf32>
    %145 = arith.divf %143, %144 : vector<1x1xf32>
    %146 = vector.broadcast %138 : vector<1x1xf32> to vector<1x32xf32>
    %147 = arith.subf %134, %146 : vector<1x32xf32>
    %cst_80 = arith.constant 9.99999974E-6 : f32
    %148 = vector.broadcast %cst_80 : f32 to vector<1x1xf32>
    %149 = arith.addf %145, %148 : vector<1x1xf32>
    %150 = math.rsqrt %149 : vector<1x1xf32>
    %151 = vector.broadcast %150 : vector<1x1xf32> to vector<1x32xf32>
    %152 = arith.mulf %147, %151 : vector<1x32xf32>
    %153 = arith.mulf %152, %25 : vector<1x32xf32>
    %154 = arith.addf %153, %26 : vector<1x32xf32>
    %c0_81 = arith.constant 0 : index
    %c0_82 = arith.constant 0 : index
    %155 = vector.load %arg20[%c0_81, %c0_82] : memref<32x24xf32, #tpu.memory_space<vmem>>, vector<32x24xf32>
    %cst_83 = arith.constant dense<0.000000e+00> : vector<1x24xf32>
    %156 = tpu.matmul %154, %155, %cst_83 {dimension_numbers = #tpu.dot_dimension_numbers<[1], [0], [0], [1], [0, 0, 1, 1], [], []>} : vector<1x32xf32>, vector<32x24xf32>, vector<1x24xf32> -> vector<1x24xf32>
    %c0_84 = arith.constant 0 : index
    %c0_85 = arith.constant 0 : index
    %157 = vector.load %arg21[%c0_84, %c0_85] : memref<1x24xf32, #tpu.memory_space<vmem>>, vector<1x24xf32>
    %158 = arith.addf %156, %157 : vector<1x24xf32>
    %c0_86 = arith.constant 0 : index
    %c0_87 = arith.constant 0 : index
    %c0_88 = arith.constant 0 : index
    %159 = vector.load %arg22[%c0_86, %c0_87, %c0_88] : memref<1x1x24xf32, #tpu.memory_space<vmem>>, vector<1x1x24xf32>
    %160 = vector.shape_cast %159 : vector<1x1x24xf32> to vector<1x24xf32>
    %161 = vector.shape_cast %158 : vector<1x24xf32> to vector<1x1x24xf32>
    tpu.vector_store %arg22[%c0_86, %c0_87, %c0_88], %161 {strides = array<i32>} : memref<1x1x24xf32, #tpu.memory_space<vmem>>, vector<1x1x24xf32>,
    return
  }
  func.func @transform_0(%arg0: i32) -> (i32, i32, i32) {
    %c0_i32 = arith.constant 0 : i32
    %c0_i32_0 = arith.constant 0 : i32
    %c0_i32_1 = arith.constant 0 : i32
    return %arg0, %c0_i32, %c0_i32_0 : i32, i32, i32
  }
  func.func @transform_1(%arg0: i32) -> (i32, i32, i32) {
    %c0_i32 = arith.constant 0 : i32
    %c0_i32_0 = arith.constant 0 : i32
    %c0_i32_1 = arith.constant 0 : i32
    return %arg0, %c0_i32, %c0_i32_0 : i32, i32, i32
  }
  func.func @transform_2(%arg0: i32) -> (i32, i32, i32) {
    %c0_i32 = arith.constant 0 : i32
    %c0_i32_0 = arith.constant 0 : i32
    %c0_i32_1 = arith.constant 0 : i32
    return %arg0, %c0_i32, %c0_i32_0 : i32, i32, i32
  }
  func.func @transform_3(%arg0: i32) -> (i32, i32) {
    %c0_i32 = arith.constant 0 : i32
    %c0_i32_0 = arith.constant 0 : i32
    %c0_i32_1 = arith.constant 0 : i32
    return %c0_i32, %c0_i32_0 : i32, i32
  }
  func.func @transform_4(%arg0: i32) -> (i32, i32) {
    %c0_i32 = arith.constant 0 : i32
    %c0_i32_0 = arith.constant 0 : i32
    %c0_i32_1 = arith.constant 0 : i32
    return %c0_i32, %c0_i32_0 : i32, i32
  }
  func.func @transform_5(%arg0: i32) -> (i32, i32) {
    %c0_i32 = arith.constant 0 : i32
    %c0_i32_0 = arith.constant 0 : i32
    %c0_i32_1 = arith.constant 0 : i32
    return %c0_i32, %c0_i32_0 : i32, i32
  }
  func.func @transform_6(%arg0: i32) -> (i32, i32) {
    %c0_i32 = arith.constant 0 : i32
    %c0_i32_0 = arith.constant 0 : i32
    %c0_i32_1 = arith.constant 0 : i32
    return %c0_i32, %c0_i32_0 : i32, i32
  }
  func.func @transform_7(%arg0: i32) -> (i32, i32) {
    %c0_i32 = arith.constant 0 : i32
    %c0_i32_0 = arith.constant 0 : i32
    %c0_i32_1 = arith.constant 0 : i32
    return %c0_i32, %c0_i32_0 : i32, i32
  }
  func.func @transform_8(%arg0: i32) -> (i32, i32) {
    %c0_i32 = arith.constant 0 : i32
    %c0_i32_0 = arith.constant 0 : i32
    %c0_i32_1 = arith.constant 0 : i32
    return %c0_i32, %c0_i32_0 : i32, i32
  }
  func.func @transform_9(%arg0: i32) -> (i32, i32) {
    %c0_i32 = arith.constant 0 : i32
    %c0_i32_0 = arith.constant 0 : i32
    %c0_i32_1 = arith.constant 0 : i32
    return %c0_i32, %c0_i32_0 : i32, i32
  }
  func.func @transform_10(%arg0: i32) -> (i32, i32) {
    %c0_i32 = arith.constant 0 : i32
    %c0_i32_0 = arith.constant 0 : i32
    %c0_i32_1 = arith.constant 0 : i32
    return %c0_i32, %c0_i32_0 : i32, i32
  }
  func.func @transform_11(%arg0: i32) -> (i32, i32) {
    %c0_i32 = arith.constant 0 : i32
    %c0_i32_0 = arith.constant 0 : i32
    %c0_i32_1 = arith.constant 0 : i32
    return %c0_i32, %c0_i32_0 : i32, i32
  }
  func.func @transform_12(%arg0: i32) -> (i32, i32) {
    %c0_i32 = arith.constant 0 : i32
    %c0_i32_0 = arith.constant 0 : i32
    %c0_i32_1 = arith.constant 0 : i32
    return %c0_i32, %c0_i32_0 : i32, i32
  }
  func.func @transform_13(%arg0: i32) -> (i32, i32) {
    %c0_i32 = arith.constant 0 : i32
    %c0_i32_0 = arith.constant 0 : i32
    %c0_i32_1 = arith.constant 0 : i32
    return %c0_i32, %c0_i32_0 : i32, i32
  }
  func.func @transform_14(%arg0: i32) -> (i32, i32) {
    %c0_i32 = arith.constant 0 : i32
    %c0_i32_0 = arith.constant 0 : i32
    %c0_i32_1 = arith.constant 0 : i32
    return %c0_i32, %c0_i32_0 : i32, i32
  }
  func.func @transform_15(%arg0: i32) -> (i32, i32) {
    %c0_i32 = arith.constant 0 : i32
    %c0_i32_0 = arith.constant 0 : i32
    %c0_i32_1 = arith.constant 0 : i32
    return %c0_i32, %c0_i32_0 : i32, i32
  }
  func.func @transform_16(%arg0: i32) -> (i32, i32) {
    %c0_i32 = arith.constant 0 : i32
    %c0_i32_0 = arith.constant 0 : i32
    %c0_i32_1 = arith.constant 0 : i32
    return %c0_i32, %c0_i32_0 : i32, i32
  }
  func.func @transform_17(%arg0: i32) -> (i32, i32) {
    %c0_i32 = arith.constant 0 : i32
    %c0_i32_0 = arith.constant 0 : i32
    %c0_i32_1 = arith.constant 0 : i32
    return %c0_i32, %c0_i32_0 : i32, i32
  }
  func.func @transform_18(%arg0: i32) -> (i32, i32) {
    %c0_i32 = arith.constant 0 : i32
    %c0_i32_0 = arith.constant 0 : i32
    %c0_i32_1 = arith.constant 0 : i32
    return %c0_i32, %c0_i32_0 : i32, i32
  }
  func.func @transform_19(%arg0: i32) -> (i32, i32) {
    %c0_i32 = arith.constant 0 : i32
    %c0_i32_0 = arith.constant 0 : i32
    %c0_i32_1 = arith.constant 0 : i32
    return %c0_i32, %c0_i32_0 : i32, i32
  }
  func.func @transform_20(%arg0: i32) -> (i32, i32) {
    %c0_i32 = arith.constant 0 : i32
    %c0_i32_0 = arith.constant 0 : i32
    %c0_i32_1 = arith.constant 0 : i32
    return %c0_i32, %c0_i32_0 : i32, i32
  }
  func.func @transform_21(%arg0: i32) -> (i32, i32, i32) {
    %c0_i32 = arith.constant 0 : i32
    %c0_i32_0 = arith.constant 0 : i32
    %c0_i32_1 = arith.constant 0 : i32
    return %arg0, %c0_i32, %c0_i32_0 : i32, i32, i32
  }
}

</mosaic_0001>

<llo_original>
// kernel: tile.16
$region0: #{tile.16}
  #allocation0 [shape = 's32[1]{0}', space=sflag, size = 0x4, scoped, tag = 'scoped memory for tile.16']
  %s0 = inlined_call_operand.vmem [shape: f32[20], index: 0, kind: input, shape index: {}]
  %s1 = inlined_call_operand.vmem [shape: f32[5,20], index: 1, kind: output, shape index: {}]
  // Predicated region
  $region2: #{tile.16} parent=0 // pred_check
    _
  $region3: #{tile.16} parent=0 // pred_check_branch
    %3 = sbr.rel (0) target = $region5
  $region4: #{tile.16} parent=0 // pred_region
    _
  $region5: #{tile.16} parent=0 // pred_fallthru
    _
  %v4 = vld [vmem:[%s0] ss:$0 sm:$0xff]
  %5 = vst [vmem:[%s1] sm:$0xff] %v4

// kernel: tile.17
$region0: #{tile.17}
  %s0 = inlined_call_operand.vmem [shape: f32[5,20], index: 0, kind: input, shape index: {}]
  %s1 = inlined_call_operand.vmem [shape: f32[100], index: 1, kind: output, shape index: {}]
  $region1: #{tile.17} parent=0
    #allocation0 [shape = 'u8[4096]{0}', space=vmem, size = 0x1000, scoped, tag = 'scoped mem for output reshape']
    %v2 = vld [vmem:[%s0] sm:$0x1]
    %vm3 = vcmask 162816
    %4 = vst.msk [vmem:[#allocation0] sm:$0x1] %vm3, %v2
    %s5 = scalar_lea.vmem %s0, 4
    %v6 = vld [vmem:[%s5] sm:$0x1]
    %7 = vrot.lane.b32.xlu0 %v6, 80
    %v8 = vpop.permute.xlu0 %7
    %vm9 = vcmask 818816
    %10 = vst.msk [vmem:[#allocation0] sm:$0x1] %vm9, %v8
    %s11 = scalar_lea.vmem %s0, 3
    %v12 = vld [vmem:[%s11] sm:$0x1]
    %13 = vrot.lane.b32.xlu0 %v12, 60
    %v14 = vpop.permute.xlu0 %13
    %vm15 = vcmask 654816
    %16 = vst.msk [vmem:[#allocation0] sm:$0x1] %vm15, %v14
    %s17 = scalar_lea.vmem %s0, 2
    %v18 = vld [vmem:[%s17] sm:$0x1]
    %19 = vrot.lane.b32.xlu0 %v18, 40
    %v20 = vpop.permute.xlu0 %19
    %vm21 = vcmask 490816
    %22 = vst.msk [vmem:[#allocation0] sm:$0x1] %vm21, %v20
    %s23 = scalar_lea.vmem %s0, 1
    %v24 = vld [vmem:[%s23] sm:$0x1]
    %25 = vrot.lane.b32.xlu0 %v24, 20
    %v26 = vpop.permute.xlu0 %25
    %vm27 = vcmask 326816
    %28 = vst.msk [vmem:[#allocation0] sm:$0x1] %vm27, %v26
    %s30 = ssub.s32 2, 1
    %v31 = vld [vmem:[#allocation0] sm:%s30]
    %s33 = ssub.s32 2, 1
    %34 = vst [vmem:[%s1] sm:%s33] %v31

// kernel: trajectory_model_forward.3
$region0: #{trajectory_model_forward.3}
  #allocation0 [shape = 'u32[]', space=smem, size = 0x4, offset = 0x4, fixed_abs, tag = 'smem constant byte address 0x4 - core index']
  #allocation1 [shape = 'u32[72,128]{1,0:T(1,128)}', space=vmem, size = 0x9000, scoped, tag = 'internal scratch']
  %s0 = inlined_call_operand.vmem [shape: f32[2,1,32], index: 0, kind: input, shape index: {}]
  %s1 = inlined_call_operand.vmem [shape: f32[2,4,16], index: 1, kind: input, shape index: {}]
  %s2 = inlined_call_operand.vmem [shape: f32[2,1,4], index: 2, kind: input, shape index: {}]
  %s3 = inlined_call_operand.vmem [shape: f32[16,32], index: 3, kind: input, shape index: {}]
  %s4 = inlined_call_operand.vmem [shape: f32[1,32], index: 4, kind: input, shape index: {}]
  %s5 = inlined_call_operand.vmem [shape: f32[32,32], index: 5, kind: input, shape index: {}]
  %s6 = inlined_call_operand.vmem [shape: f32[1,32], index: 6, kind: input, shape index: {}]
  %s7 = inlined_call_operand.vmem [shape: f32[32,64], index: 7, kind: input, shape index: {}]
  %s8 = inlined_call_operand.vmem [shape: f32[1,64], index: 8, kind: input, shape index: {}]
  %s9 = inlined_call_operand.vmem [shape: f32[32,32], index: 9, kind: input, shape index: {}]
  %s10 = inlined_call_operand.vmem [shape: f32[1,32], index: 10, kind: input, shape index: {}]
  %s11 = inlined_call_operand.vmem [shape: f32[1,32], index: 11, kind: input, shape index: {}]
  %s12 = inlined_call_operand.vmem [shape: f32[1,32], index: 12, kind: input, shape index: {}]
  %s13 = inlined_call_operand.vmem [shape: f32[32,64], index: 13, kind: input, shape index: {}]
  %s14 = inlined_call_operand.vmem [shape: f32[1,64], index: 14, kind: input, shape index: {}]
  %s15 = inlined_call_operand.vmem [shape: f32[64,32], index: 15, kind: input, shape index: {}]
  %s16 = inlined_call_operand.vmem [shape: f32[1,32], index: 16, kind: input, shape index: {}]
  %s17 = inlined_call_operand.vmem [shape: f32[1,32], index: 17, kind: input, shape index: {}]
  %s18 = inlined_call_operand.vmem [shape: f32[1,32], index: 18, kind: input, shape index: {}]
  %s19 = inlined_call_operand.vmem [shape: f32[32,24], index: 19, kind: input, shape index: {}]
  %s20 = inlined_call_operand.vmem [shape: f32[1,24], index: 20, kind: input, shape index: {}]
  %s21 = inlined_call_operand.hbm [shape: f32[2,1,24], index: 21, kind: output, shape index: {}]
  %s22 = sld [smem:[#allocation0]]
  $region117: #{trajectory_model_forward.3} parent=0
    _
  %s24 = ssub.s32 1, %s22
  %s25 = scalar_select 0, %s24, %s22
  $region1: #{trajectory_model_forward.3} parent=0
    #allocation2 [shape = 'u8[1024]{0}', space=vmem, size = 0x400, scoped, tag = 'output window, operand 0']
    #allocation3 [shape = 's32[2]{0}', space=sflag, size = 0x8, scoped, tag = 'scoped memory for trajectory_model_forward.3']
    %26 = vsyncpa [#allocation3], 0
    %s27 = scalar_lea.sflag [#allocation3], 1
    %28 = vsyncpa %s27, 0
    loop: start=0, step=1, limit=4
    $region2: #{trajectory_model_forward.3} parent=1 // loop_pre_header
      _
    $region3: #{trajectory_model_forward.3} parent=1 // loop_header
      %s30 = sphi 0, %s34
      %p31 = scmp.ge.s32.totalorder %s30, 4
      %s40 = sphi 0, %s42
      %s43 = sphi 0, %s40
      %s44 = sphi 0, %s43
      %s60 = sphi 0, %s44
      %s66 = sphi 0, %s68
      %s69 = sphi 0, %s66
      %s70 = sphi 0, %s69
      %s86 = sphi 0, %s70
      %s92 = sphi 0, %s94
      %s95 = sphi 0, %s92
      %s96 = sphi 0, %s95
      %s112 = sphi 0, %s96
      %s116 = sphi 0, %s116
      %s118 = sphi 0, %s116
      %s119 = sphi 0, %s118
      %s133 = sphi 0, %s119
      %s137 = sphi 0, %s137
      %s139 = sphi 0, %s137
      %s140 = sphi 0, %s139
      %s154 = sphi 0, %s140
      %s158 = sphi 0, %s158
      %s160 = sphi 0, %s158
      %s161 = sphi 0, %s160
      %s175 = sphi 0, %s161
      %s179 = sphi 0, %s179
      %s181 = sphi 0, %s179
      %s182 = sphi 0, %s181
      %s196 = sphi 0, %s182
      %s200 = sphi 0, %s200
      %s202 = sphi 0, %s200
      %s203 = sphi 0, %s202
      %s217 = sphi 0, %s203
      %s221 = sphi 0, %s221
      %s223 = sphi 0, %s221
      %s224 = sphi 0, %s223
      %s238 = sphi 0, %s224
      %s242 = sphi 0, %s242
      %s244 = sphi 0, %s242
      %s245 = sphi 0, %s244
      %s259 = sphi 0, %s245
      %s263 = sphi 0, %s263
      %s265 = sphi 0, %s263
      %s266 = sphi 0, %s265
      %s280 = sphi 0, %s266
      %s284 = sphi 0, %s284
      %s286 = sphi 0, %s284
      %s287 = sphi 0, %s286
      %s301 = sphi 0, %s287
      %s305 = sphi 0, %s305
      %s307 = sphi 0, %s305
      %s308 = sphi 0, %s307
      %s322 = sphi 0, %s308
      %s326 = sphi 0, %s326
      %s328 = sphi 0, %s326
      %s329 = sphi 0, %s328
      %s343 = sphi 0, %s329
      %s347 = sphi 0, %s347
      %s349 = sphi 0, %s347
      %s350 = sphi 0, %s349
      %s364 = sphi 0, %s350
      %s368 = sphi 0, %s368
      %s370 = sphi 0, %s368
      %s371 = sphi 0, %s370
      %s385 = sphi 0, %s371
      %s389 = sphi 0, %s389
      %s391 = sphi 0, %s389
      %s392 = sphi 0, %s391
      %s406 = sphi 0, %s392
      %s410 = sphi 0, %s410
      %s412 = sphi 0, %s410
      %s413 = sphi 0, %s412
      %s427 = sphi 0, %s413
      %s431 = sphi 0, %s431
      %s433 = sphi 0, %s431
      %s434 = sphi 0, %s433
      %s448 = sphi 0, %s434
      %s452 = sphi 0, %s452
      %s454 = sphi 0, %s452
      %s455 = sphi 0, %s454
      %s469 = sphi 0, %s455
      %s473 = sphi 0, %s473
      %s475 = sphi 0, %s473
      %s476 = sphi 0, %s475
      %s490 = sphi 0, %s476
      %s496 = sphi 0, %s498
      %s499 = sphi 0, %s496
      %s500 = sphi 0, %s499
      %s516 = sphi 0, %s500
    $region4: #{trajectory_model_forward.3} parent=1 // loop_header_branch
      %33 = sbr.rel (%p31) target = $region8
    $region5: #{trajectory_model_forward.3} parent=1 // loop_body
      %s35 = ssub.s32 %s30, 1
      %s36 = ssub.s32 %s30, 2
      %s37 = sadd.s32 %s30, 1
      %s38 = ssub.s32 %s30, %s37
      %p39 = scmp.eq.s32.totalorder %s38, 0
      %s41 = sadd.s32 %s40, 1
      %s42 = scalar_select %p39, %s40, %s41
      %p45 = pneg %p39
      %p46 = scmp.eq.s32.totalorder %s30, 1
      %p47 = por %p45, %p46
      %p48 = scmp.ne.s32.totalorder %s40, %s43
      %p49 = scmp.eq.s32.totalorder %s30, 0
      %p50 = por %p48, %p49
      %p51 = scmp.ne.s32.totalorder %s40, %s43
      %p52 = scmp.eq.s32.totalorder %s35, 1
      %p53 = por %p51, %p52
      %p54 = scmp.ne.s32.totalorder %s43, %s44
      %p55 = scmp.eq.s32.totalorder %s35, 0
      %p56 = por %p54, %p55
      %p57 = scmp.ne.s32.totalorder %s43, %s44
      %p58 = scmp.eq.s32.totalorder %s36, 1
      %p59 = por %p57, %p58
      %p61 = scmp.ne.s32.totalorder %s44, %s60
      %p62 = scmp.eq.s32.totalorder %s36, 0
      %p63 = por %p61, %p62
      %s64 = ssub.s32 %s30, %s37
      %p65 = scmp.eq.s32.totalorder %s64, 0
      %s67 = sadd.s32 %s66, 1
      %s68 = scalar_select %p65, %s66, %s67
      %p71 = pneg %p65
      %p72 = scmp.eq.s32.totalorder %s30, 1
      %p73 = por %p71, %p72
      %p74 = scmp.ne.s32.totalorder %s66, %s69
      %p75 = scmp.eq.s32.totalorder %s30, 0
      %p76 = por %p74, %p75
      %p77 = scmp.ne.s32.totalorder %s66, %s69
      %p78 = scmp.eq.s32.totalorder %s35, 1
      %p79 = por %p77, %p78
      %p80 = scmp.ne.s32.totalorder %s69, %s70
      %p81 = scmp.eq.s32.totalorder %s35, 0
      %p82 = por %p80, %p81
      %p83 = scmp.ne.s32.totalorder %s69, %s70
      %p84 = scmp.eq.s32.totalorder %s36, 1
      %p85 = por %p83, %p84
      %p87 = scmp.ne.s32.totalorder %s70, %s86
      %p88 = scmp.eq.s32.totalorder %s36, 0
      %p89 = por %p87, %p88
      %s90 = ssub.s32 %s30, %s37
      %p91 = scmp.eq.s32.totalorder %s90, 0
      %s93 = sadd.s32 %s92, 1
      %s94 = scalar_select %p91, %s92, %s93
      %p97 = pneg %p91
      %p98 = scmp.eq.s32.totalorder %s30, 1
      %p99 = por %p97, %p98
      %p100 = scmp.ne.s32.totalorder %s92, %s95
      %p101 = scmp.eq.s32.totalorder %s30, 0
      %p102 = por %p100, %p101
      %p103 = scmp.ne.s32.totalorder %s92, %s95
      %p104 = scmp.eq.s32.totalorder %s35, 1
      %p105 = por %p103, %p104
      %p106 = scmp.ne.s32.totalorder %s95, %s96
      %p107 = scmp.eq.s32.totalorder %s35, 0
      %p108 = por %p106, %p107
      %p109 = scmp.ne.s32.totalorder %s95, %s96
      %p110 = scmp.eq.s32.totalorder %s36, 1
      %p111 = por %p109, %p110
      %p113 = scmp.ne.s32.totalorder %s96, %s112
      %p114 = scmp.eq.s32.totalorder %s36, 0
      %p115 = por %p113, %p114
      %s117 = sadd.s32 %s116, 1
      %p120 = scmp.eq.s32.totalorder %s30, 1
      %p121 = scmp.ne.s32.totalorder %s116, %s118
      %p122 = scmp.eq.s32.totalorder %s30, 0
      %p123 = por %p121, %p122
      %p124 = scmp.ne.s32.totalorder %s116, %s118
      %p125 = scmp.eq.s32.totalorder %s35, 1
      %p126 = por %p124, %p125
      %p127 = scmp.ne.s32.totalorder %s118, %s119
      %p128 = scmp.eq.s32.totalorder %s35, 0
      %p129 = por %p127, %p128
      %p130 = scmp.ne.s32.totalorder %s118, %s119
      %p131 = scmp.eq.s32.totalorder %s36, 1
      %p132 = por %p130, %p131
      %p134 = scmp.ne.s32.totalorder %s119, %s133
      %p135 = scmp.eq.s32.totalorder %s36, 0
      %p136 = por %p134, %p135
      %s138 = sadd.s32 %s137, 1
      %p141 = scmp.eq.s32.totalorder %s30, 1
      %p142 = scmp.ne.s32.totalorder %s137, %s139
      %p143 = scmp.eq.s32.totalorder %s30, 0
      %p144 = por %p142, %p143
      %p145 = scmp.ne.s32.totalorder %s137, %s139
      %p146 = scmp.eq.s32.totalorder %s35, 1
      %p147 = por %p145, %p146
      %p148 = scmp.ne.s32.totalorder %s139, %s140
      %p149 = scmp.eq.s32.totalorder %s35, 0
      %p150 = por %p148, %p149
      %p151 = scmp.ne.s32.totalorder %s139, %s140
      %p152 = scmp.eq.s32.totalorder %s36, 1
      %p153 = por %p151, %p152
      %p155 = scmp.ne.s32.totalorder %s140, %s154
      %p156 = scmp.eq.s32.totalorder %s36, 0
      %p157 = por %p155, %p156
      %s159 = sadd.s32 %s158, 1
      %p162 = scmp.eq.s32.totalorder %s30, 1
      %p163 = scmp.ne.s32.totalorder %s158, %s160
      %p164 = scmp.eq.s32.totalorder %s30, 0
      %p165 = por %p163, %p164
      %p166 = scmp.ne.s32.totalorder %s158, %s160
      %p167 = scmp.eq.s32.totalorder %s35, 1
      %p168 = por %p166, %p167
      %p169 = scmp.ne.s32.totalorder %s160, %s161
      %p170 = scmp.eq.s32.totalorder %s35, 0
      %p171 = por %p169, %p170
      %p172 = scmp.ne.s32.totalorder %s160, %s161
      %p173 = scmp.eq.s32.totalorder %s36, 1
      %p174 = por %p172, %p173
      %p176 = scmp.ne.s32.totalorder %s161, %s175
      %p177 = scmp.eq.s32.totalorder %s36, 0
      %p178 = por %p176, %p177
      %s180 = sadd.s32 %s179, 1
      %p183 = scmp.eq.s32.totalorder %s30, 1
      %p184 = scmp.ne.s32.totalorder %s179, %s181
      %p185 = scmp.eq.s32.totalorder %s30, 0
      %p186 = por %p184, %p185
      %p187 = scmp.ne.s32.totalorder %s179, %s181
      %p188 = scmp.eq.s32.totalorder %s35, 1
      %p189 = por %p187, %p188
      %p190 = scmp.ne.s32.totalorder %s181, %s182
      %p191 = scmp.eq.s32.totalorder %s35, 0
      %p192 = por %p190, %p191
      %p193 = scmp.ne.s32.totalorder %s181, %s182
      %p194 = scmp.eq.s32.totalorder %s36, 1
      %p195 = por %p193, %p194
      %p197 = scmp.ne.s32.totalorder %s182, %s196
      %p198 = scmp.eq.s32.totalorder %s36, 0
      %p199 = por %p197, %p198
      %s201 = sadd.s32 %s200, 1
      %p204 = scmp.eq.s32.totalorder %s30, 1
      %p205 = scmp.ne.s32.totalorder %s200, %s202
      %p206 = scmp.eq.s32.totalorder %s30, 0
      %p207 = por %p205, %p206
      %p208 = scmp.ne.s32.totalorder %s200, %s202
      %p209 = scmp.eq.s32.totalorder %s35, 1
      %p210 = por %p208, %p209
      %p211 = scmp.ne.s32.totalorder %s202, %s203
      %p212 = scmp.eq.s32.totalorder %s35, 0
      %p213 = por %p211, %p212
      %p214 = scmp.ne.s32.totalorder %s202, %s203
      %p215 = scmp.eq.s32.totalorder %s36, 1
      %p216 = por %p214, %p215
      %p218 = scmp.ne.s32.totalorder %s203, %s217
      %p219 = scmp.eq.s32.totalorder %s36, 0
      %p220 = por %p218, %p219
      %s222 = sadd.s32 %s221, 1
      %p225 = scmp.eq.s32.totalorder %s30, 1
      %p226 = scmp.ne.s32.totalorder %s221, %s223
      %p227 = scmp.eq.s32.totalorder %s30, 0
      %p228 = por %p226, %p227
      %p229 = scmp.ne.s32.totalorder %s221, %s223
      %p230 = scmp.eq.s32.totalorder %s35, 1
      %p231 = por %p229, %p230
      %p232 = scmp.ne.s32.totalorder %s223, %s224
      %p233 = scmp.eq.s32.totalorder %s35, 0
      %p234 = por %p232, %p233
      %p235 = scmp.ne.s32.totalorder %s223, %s224
      %p236 = scmp.eq.s32.totalorder %s36, 1
      %p237 = por %p235, %p236
      %p239 = scmp.ne.s32.totalorder %s224, %s238
      %p240 = scmp.eq.s32.totalorder %s36, 0
      %p241 = por %p239, %p240
      %s243 = sadd.s32 %s242, 1
      %p246 = scmp.eq.s32.totalorder %s30, 1
      %p247 = scmp.ne.s32.totalorder %s242, %s244
      %p248 = scmp.eq.s32.totalorder %s30, 0
      %p249 = por %p247, %p248
      %p250 = scmp.ne.s32.totalorder %s242, %s244
      %p251 = scmp.eq.s32.totalorder %s35, 1
      %p252 = por %p250, %p251
      %p253 = scmp.ne.s32.totalorder %s244, %s245
      %p254 = scmp.eq.s32.totalorder %s35, 0
      %p255 = por %p253, %p254
      %p256 = scmp.ne.s32.totalorder %s244, %s245
      %p257 = scmp.eq.s32.totalorder %s36, 1
      %p258 = por %p256, %p257
      %p260 = scmp.ne.s32.totalorder %s245, %s259
      %p261 = scmp.eq.s32.totalorder %s36, 0
      %p262 = por %p260, %p261
      %s264 = sadd.s32 %s263, 1
      %p267 = scmp.eq.s32.totalorder %s30, 1
      %p268 = scmp.ne.s32.totalorder %s263, %s265
      %p269 = scmp.eq.s32.totalorder %s30, 0
      %p270 = por %p268, %p269
      %p271 = scmp.ne.s32.totalorder %s263, %s265
      %p272 = scmp.eq.s32.totalorder %s35, 1
      %p273 = por %p271, %p272
      %p274 = scmp.ne.s32.totalorder %s265, %s266
      %p275 = scmp.eq.s32.totalorder %s35, 0
      %p276 = por %p274, %p275
      %p277 = scmp.ne.s32.totalorder %s265, %s266
      %p278 = scmp.eq.s32.totalorder %s36, 1
      %p279 = por %p277, %p278
      %p281 = scmp.ne.s32.totalorder %s266, %s280
      %p282 = scmp.eq.s32.totalorder %s36, 0
      %p283 = por %p281, %p282
      %s285 = sadd.s32 %s284, 1
      %p288 = scmp.eq.s32.totalorder %s30, 1
      %p289 = scmp.ne.s32.totalorder %s284, %s286
      %p290 = scmp.eq.s32.totalorder %s30, 0
      %p291 = por %p289, %p290
      %p292 = scmp.ne.s32.totalorder %s284, %s286
      %p293 = scmp.eq.s32.totalorder %s35, 1
      %p294 = por %p292, %p293
      %p295 = scmp.ne.s32.totalorder %s286, %s287
      %p296 = scmp.eq.s32.totalorder %s35, 0
      %p297 = por %p295, %p296
      %p298 = scmp.ne.s32.totalorder %s286, %s287
      %p299 = scmp.eq.s32.totalorder %s36, 1
      %p300 = por %p298, %p299
      %p302 = scmp.ne.s32.totalorder %s287, %s301
      %p303 = scmp.eq.s32.totalorder %s36, 0
      %p304 = por %p302, %p303
      %s306 = sadd.s32 %s305, 1
      %p309 = scmp.eq.s32.totalorder %s30, 1
      %p310 = scmp.ne.s32.totalorder %s305, %s307
      %p311 = scmp.eq.s32.totalorder %s30, 0
      %p312 = por %p310, %p311
      %p313 = scmp.ne.s32.totalorder %s305, %s307
      %p314 = scmp.eq.s32.totalorder %s35, 1
      %p315 = por %p313, %p314
      %p316 = scmp.ne.s32.totalorder %s307, %s308
      %p317 = scmp.eq.s32.totalorder %s35, 0
      %p318 = por %p316, %p317
      %p319 = scmp.ne.s32.totalorder %s307, %s308
      %p320 = scmp.eq.s32.totalorder %s36, 1
      %p321 = por %p319, %p320
      %p323 = scmp.ne.s32.totalorder %s308, %s322
      %p324 = scmp.eq.s32.totalorder %s36, 0
      %p325 = por %p323, %p324
      %s327 = sadd.s32 %s326, 1
      %p330 = scmp.eq.s32.totalorder %s30, 1
      %p331 = scmp.ne.s32.totalorder %s326, %s328
      %p332 = scmp.eq.s32.totalorder %s30, 0
      %p333 = por %p331, %p332
      %p334 = scmp.ne.s32.totalorder %s326, %s328
      %p335 = scmp.eq.s32.totalorder %s35, 1
      %p336 = por %p334, %p335
      %p337 = scmp.ne.s32.totalorder %s328, %s329
      %p338 = scmp.eq.s32.totalorder %s35, 0
      %p339 = por %p337, %p338
      %p340 = scmp.ne.s32.totalorder %s328, %s329
      %p341 = scmp.eq.s32.totalorder %s36, 1
      %p342 = por %p340, %p341
      %p344 = scmp.ne.s32.totalorder %s329, %s343
      %p345 = scmp.eq.s32.totalorder %s36, 0
      %p346 = por %p344, %p345
      %s348 = sadd.s32 %s347, 1
      %p351 = scmp.eq.s32.totalorder %s30, 1
      %p352 = scmp.ne.s32.totalorder %s347, %s349
      %p353 = scmp.eq.s32.totalorder %s30, 0
      %p354 = por %p352, %p353
      %p355 = scmp.ne.s32.totalorder %s347, %s349
      %p356 = scmp.eq.s32.totalorder %s35, 1
      %p357 = por %p355, %p356
      %p358 = scmp.ne.s32.totalorder %s349, %s350
      %p359 = scmp.eq.s32.totalorder %s35, 0
      %p360 = por %p358, %p359
      %p361 = scmp.ne.s32.totalorder %s349, %s350
      %p362 = scmp.eq.s32.totalorder %s36, 1
      %p363 = por %p361, %p362
      %p365 = scmp.ne.s32.totalorder %s350, %s364
      %p366 = scmp.eq.s32.totalorder %s36, 0
      %p367 = por %p365, %p366
      %s369 = sadd.s32 %s368, 1
      %p372 = scmp.eq.s32.totalorder %s30, 1
      %p373 = scmp.ne.s32.totalorder %s368, %s370
      %p374 = scmp.eq.s32.totalorder %s30, 0
      %p375 = por %p373, %p374
      %p376 = scmp.ne.s32.totalorder %s368, %s370
      %p377 = scmp.eq.s32.totalorder %s35, 1
      %p378 = por %p376, %p377
      %p379 = scmp.ne.s32.totalorder %s370, %s371
      %p380 = scmp.eq.s32.totalorder %s35, 0
      %p381 = por %p379, %p380
      %p382 = scmp.ne.s32.totalorder %s370, %s371
      %p383 = scmp.eq.s32.totalorder %s36, 1
      %p384 = por %p382, %p383
      %p386 = scmp.ne.s32.totalorder %s371, %s385
      %p387 = scmp.eq.s32.totalorder %s36, 0
      %p388 = por %p386, %p387
      %s390 = sadd.s32 %s389, 1
      %p393 = scmp.eq.s32.totalorder %s30, 1
      %p394 = scmp.ne.s32.totalorder %s389, %s391
      %p395 = scmp.eq.s32.totalorder %s30, 0
      %p396 = por %p394, %p395
      %p397 = scmp.ne.s32.totalorder %s389, %s391
      %p398 = scmp.eq.s32.totalorder %s35, 1
      %p399 = por %p397, %p398
      %p400 = scmp.ne.s32.totalorder %s391, %s392
      %p401 = scmp.eq.s32.totalorder %s35, 0
      %p402 = por %p400, %p401
      %p403 = scmp.ne.s32.totalorder %s391, %s392
      %p404 = scmp.eq.s32.totalorder %s36, 1
      %p405 = por %p403, %p404
      %p407 = scmp.ne.s32.totalorder %s392, %s406
      %p408 = scmp.eq.s32.totalorder %s36, 0
      %p409 = por %p407, %p408
      %s411 = sadd.s32 %s410, 1
      %p414 = scmp.eq.s32.totalorder %s30, 1
      %p415 = scmp.ne.s32.totalorder %s410, %s412
      %p416 = scmp.eq.s32.totalorder %s30, 0
      %p417 = por %p415, %p416
      %p418 = scmp.ne.s32.totalorder %s410, %s412
      %p419 = scmp.eq.s32.totalorder %s35, 1
      %p420 = por %p418, %p419
      %p421 = scmp.ne.s32.totalorder %s412, %s413
      %p422 = scmp.eq.s32.totalorder %s35, 0
      %p423 = por %p421, %p422
      %p424 = scmp.ne.s32.totalorder %s412, %s413
      %p425 = scmp.eq.s32.totalorder %s36, 1
      %p426 = por %p424, %p425
      %p428 = scmp.ne.s32.totalorder %s413, %s427
      %p429 = scmp.eq.s32.totalorder %s36, 0
      %p430 = por %p428, %p429
      %s432 = sadd.s32 %s431, 1
      %p435 = scmp.eq.s32.totalorder %s30, 1
      %p436 = scmp.ne.s32.totalorder %s431, %s433
      %p437 = scmp.eq.s32.totalorder %s30, 0
      %p438 = por %p436, %p437
      %p439 = scmp.ne.s32.totalorder %s431, %s433
      %p440 = scmp.eq.s32.totalorder %s35, 1
      %p441 = por %p439, %p440
      %p442 = scmp.ne.s32.totalorder %s433, %s434
      %p443 = scmp.eq.s32.totalorder %s35, 0
      %p444 = por %p442, %p443
      %p445 = scmp.ne.s32.totalorder %s433, %s434
      %p446 = scmp.eq.s32.totalorder %s36, 1
      %p447 = por %p445, %p446
      %p449 = scmp.ne.s32.totalorder %s434, %s448
      %p450 = scmp.eq.s32.totalorder %s36, 0
      %p451 = por %p449, %p450
      %s453 = sadd.s32 %s452, 1
      %p456 = scmp.eq.s32.totalorder %s30, 1
      %p457 = scmp.ne.s32.totalorder %s452, %s454
      %p458 = scmp.eq.s32.totalorder %s30, 0
      %p459 = por %p457, %p458
      %p460 = scmp.ne.s32.totalorder %s452, %s454
      %p461 = scmp.eq.s32.totalorder %s35, 1
      %p462 = por %p460, %p461
      %p463 = scmp.ne.s32.totalorder %s454, %s455
      %p464 = scmp.eq.s32.totalorder %s35, 0
      %p465 = por %p463, %p464
      %p466 = scmp.ne.s32.totalorder %s454, %s455
      %p467 = scmp.eq.s32.totalorder %s36, 1
      %p468 = por %p466, %p467
      %p470 = scmp.ne.s32.totalorder %s455, %s469
      %p471 = scmp.eq.s32.totalorder %s36, 0
      %p472 = por %p470, %p471
      %s474 = sadd.s32 %s473, 1
      %p477 = scmp.eq.s32.totalorder %s30, 1
      %p478 = scmp.ne.s32.totalorder %s473, %s475
      %p479 = scmp.eq.s32.totalorder %s30, 0
      %p480 = por %p478, %p479
      %p481 = scmp.ne.s32.totalorder %s473, %s475
      %p482 = scmp.eq.s32.totalorder %s35, 1
      %p483 = por %p481, %p482
      %p484 = scmp.ne.s32.totalorder %s475, %s476
      %p485 = scmp.eq.s32.totalorder %s35, 0
      %p486 = por %p484, %p485
      %p487 = scmp.ne.s32.totalorder %s475, %s476
      %p488 = scmp.eq.s32.totalorder %s36, 1
      %p489 = por %p487, %p488
      %p491 = scmp.ne.s32.totalorder %s476, %s490
      %p492 = scmp.eq.s32.totalorder %s36, 0
      %p493 = por %p491, %p492
      %s494 = ssub.s32 %s30, %s37
      %p495 = scmp.eq.s32.totalorder %s494, 0
      %s497 = sadd.s32 %s496, 1
      %s498 = scalar_select %p495, %s496, %s497
      %p501 = pneg %p495
      %p502 = scmp.eq.s32.totalorder %s30, 1
      %p503 = por %p501, %p502
      %p504 = scmp.ne.s32.totalorder %s496, %s499
      %p505 = scmp.eq.s32.totalorder %s30, 0
      %p506 = por %p504, %p505
      %p507 = scmp.ne.s32.totalorder %s496, %s499
      %p508 = scmp.eq.s32.totalorder %s35, 1
      %p509 = por %p507, %p508
      %p510 = scmp.ne.s32.totalorder %s499, %s500
      %p511 = scmp.eq.s32.totalorder %s35, 0
      %p512 = por %p510, %p511
      %p513 = scmp.ne.s32.totalorder %s499, %s500
      %p514 = scmp.eq.s32.totalorder %s36, 1
      %p515 = por %p513, %p514
      %p517 = scmp.ne.s32.totalorder %s500, %s516
      %p518 = scmp.eq.s32.totalorder %s36, 0
      %p519 = por %p517, %p518
      %p520 = scmp.le.s32.totalorder 1, %s30
      %p521 = scmp.lt.s32.totalorder %s30, 3
      %p522 = pnand %p520, %p521
      %p523 = pneg %p522
      // Predicated region
      $region9: #{trajectory_model_forward.3} parent=5 // pred_check
        _
      $region10: #{trajectory_model_forward.3} parent=5 // pred_check_branch
        %525 = sbr.rel (%p522) target = $region12
      $region11: #{trajectory_model_forward.3} parent=5 // pred_region
        %s526 = ssub.s32 %s30, 1
        // Predicated region
        $region13: #{trajectory_model_forward.3} parent=11 // pred_check
          %p527 = pneg %p129
        $region14: #{trajectory_model_forward.3} parent=11 // pred_check_branch
          %529 = sbr.rel (%p527) target = $region16
        $region15: #{trajectory_model_forward.3} parent=11 // pred_region
          _
        $region16: #{trajectory_model_forward.3} parent=11 // pred_fallthru
          _
        // Predicated region
        $region17: #{trajectory_model_forward.3} parent=11 // pred_check
          %p530 = pneg %p150
        $region18: #{trajectory_model_forward.3} parent=11 // pred_check_branch
          %532 = sbr.rel (%p530) target = $region20
        $region19: #{trajectory_model_forward.3} parent=11 // pred_region
          _
        $region20: #{trajectory_model_forward.3} parent=11 // pred_fallthru
          _
        // Predicated region
        $region21: #{trajectory_model_forward.3} parent=11 // pred_check
          %p533 = pneg %p171
        $region22: #{trajectory_model_forward.3} parent=11 // pred_check_branch
          %535 = sbr.rel (%p533) target = $region24
        $region23: #{trajectory_model_forward.3} parent=11 // pred_region
          _
        $region24: #{trajectory_model_forward.3} parent=11 // pred_fallthru
          _
        // Predicated region
        $region25: #{trajectory_model_forward.3} parent=11 // pred_check
          %p536 = pneg %p192
        $region26: #{trajectory_model_forward.3} parent=11 // pred_check_branch
          %538 = sbr.rel (%p536) target = $region28
        $region27: #{trajectory_model_forward.3} parent=11 // pred_region
          _
        $region28: #{trajectory_model_forward.3} parent=11 // pred_fallthru
          _
        // Predicated region
        $region29: #{trajectory_model_forward.3} parent=11 // pred_check
          %p539 = pneg %p213
        $region30: #{trajectory_model_forward.3} parent=11 // pred_check_branch
          %541 = sbr.rel (%p539) target = $region32
        $region31: #{trajectory_model_forward.3} parent=11 // pred_region
          _
        $region32: #{trajectory_model_forward.3} parent=11 // pred_fallthru
          _
        // Predicated region
        $region33: #{trajectory_model_forward.3} parent=11 // pred_check
          %p542 = pneg %p234
        $region34: #{trajectory_model_forward.3} parent=11 // pred_check_branch
          %544 = sbr.rel (%p542) target = $region36
        $region35: #{trajectory_model_forward.3} parent=11 // pred_region
          _
        $region36: #{trajectory_model_forward.3} parent=11 // pred_fallthru
          _
        // Predicated region
        $region37: #{trajectory_model_forward.3} parent=11 // pred_check
          %p545 = pneg %p255
        $region38: #{trajectory_model_forward.3} parent=11 // pred_check_branch
          %547 = sbr.rel (%p545) target = $region40
        $region39: #{trajectory_model_forward.3} parent=11 // pred_region
          _
        $region40: #{trajectory_model_forward.3} parent=11 // pred_fallthru
          _
        // Predicated region
        $region41: #{trajectory_model_forward.3} parent=11 // pred_check
          %p548 = pneg %p276
        $region42: #{trajectory_model_forward.3} parent=11 // pred_check_branch
          %550 = sbr.rel (%p548) target = $region44
        $region43: #{trajectory_model_forward.3} parent=11 // pred_region
          _
        $region44: #{trajectory_model_forward.3} parent=11 // pred_fallthru
          _
        // Predicated region
        $region45: #{trajectory_model_forward.3} parent=11 // pred_check
          %p551 = pneg %p297
        $region46: #{trajectory_model_forward.3} parent=11 // pred_check_branch
          %553 = sbr.rel (%p551) target = $region48
        $region47: #{trajectory_model_forward.3} parent=11 // pred_region
          _
        $region48: #{trajectory_model_forward.3} parent=11 // pred_fallthru
          _
        // Predicated region
        $region49: #{trajectory_model_forward.3} parent=11 // pred_check
          %p554 = pneg %p318
        $region50: #{trajectory_model_forward.3} parent=11 // pred_check_branch
          %556 = sbr.rel (%p554) target = $region52
        $region51: #{trajectory_model_forward.3} parent=11 // pred_region
          _
        $region52: #{trajectory_model_forward.3} parent=11 // pred_fallthru
          _
        // Predicated region
        $region53: #{trajectory_model_forward.3} parent=11 // pred_check
          %p557 = pneg %p339
        $region54: #{trajectory_model_forward.3} parent=11 // pred_check_branch
          %559 = sbr.rel (%p557) target = $region56
        $region55: #{trajectory_model_forward.3} parent=11 // pred_region
          _
        $region56: #{trajectory_model_forward.3} parent=11 // pred_fallthru
          _
        // Predicated region
        $region57: #{trajectory_model_forward.3} parent=11 // pred_check
          %p560 = pneg %p360
        $region58: #{trajectory_model_forward.3} parent=11 // pred_check_branch
          %562 = sbr.rel (%p560) target = $region60
        $region59: #{trajectory_model_forward.3} parent=11 // pred_region
          _
        $region60: #{trajectory_model_forward.3} parent=11 // pred_fallthru
          _
        // Predicated region
        $region61: #{trajectory_model_forward.3} parent=11 // pred_check
          %p563 = pneg %p381
        $region62: #{trajectory_model_forward.3} parent=11 // pred_check_branch
          %565 = sbr.rel (%p563) target = $region64
        $region63: #{trajectory_model_forward.3} parent=11 // pred_region
          _
        $region64: #{trajectory_model_forward.3} parent=11 // pred_fallthru
          _
        // Predicated region
        $region65: #{trajectory_model_forward.3} parent=11 // pred_check
          %p566 = pneg %p402
        $region66: #{trajectory_model_forward.3} parent=11 // pred_check_branch
          %568 = sbr.rel (%p566) target = $region68
        $region67: #{trajectory_model_forward.3} parent=11 // pred_region
          _
        $region68: #{trajectory_model_forward.3} parent=11 // pred_fallthru
          _
        // Predicated region
        $region69: #{trajectory_model_forward.3} parent=11 // pred_check
          %p569 = pneg %p423
        $region70: #{trajectory_model_forward.3} parent=11 // pred_check_branch
          %571 = sbr.rel (%p569) target = $region72
        $region71: #{trajectory_model_forward.3} parent=11 // pred_region
          _
        $region72: #{trajectory_model_forward.3} parent=11 // pred_fallthru
          _
        // Predicated region
        $region73: #{trajectory_model_forward.3} parent=11 // pred_check
          %p572 = pneg %p444
        $region74: #{trajectory_model_forward.3} parent=11 // pred_check_branch
          %574 = sbr.rel (%p572) target = $region76
        $region75: #{trajectory_model_forward.3} parent=11 // pred_region
          _
        $region76: #{trajectory_model_forward.3} parent=11 // pred_fallthru
          _
        // Predicated region
        $region77: #{trajectory_model_forward.3} parent=11 // pred_check
          %p575 = pneg %p465
        $region78: #{trajectory_model_forward.3} parent=11 // pred_check_branch
          %577 = sbr.rel (%p575) target = $region80
        $region79: #{trajectory_model_forward.3} parent=11 // pred_region
          _
        $region80: #{trajectory_model_forward.3} parent=11 // pred_fallthru
          _
        // Predicated region
        $region81: #{trajectory_model_forward.3} parent=11 // pred_check
          %p578 = pneg %p486
        $region82: #{trajectory_model_forward.3} parent=11 // pred_check_branch
          %580 = sbr.rel (%p578) target = $region84
        $region83: #{trajectory_model_forward.3} parent=11 // pred_region
          _
        $region84: #{trajectory_model_forward.3} parent=11 // pred_fallthru
          _
      $region12: #{trajectory_model_forward.3} parent=5 // pred_fallthru
        _
      %p581 = scmp.lt.s32.totalorder %s30, 2
      // Predicated region
      $region85: #{trajectory_model_forward.3} parent=5 // pred_check
        %p582 = pneg %p581
      $region86: #{trajectory_model_forward.3} parent=5 // pred_check_branch
        %584 = sbr.rel (%p582) target = $region88
      $region87: #{trajectory_model_forward.3} parent=5 // pred_region
        // Predicated region
        $region89: #{trajectory_model_forward.3} parent=87 // pred_check
          %p585 = pneg %p50
        $region90: #{trajectory_model_forward.3} parent=87 // pred_check_branch
          %587 = sbr.rel (%p585) target = $region92
        $region91: #{trajectory_model_forward.3} parent=87 // pred_region
          %p588 = scmp.lt.s32.totalorder %s30, 1
          %s589 = scalar_select %p588, %s30, 1
          %s590 = scalar_lea.vmem %s0, %s589
        $region92: #{trajectory_model_forward.3} parent=87 // pred_fallthru
          _
        // Predicated region
        $region93: #{trajectory_model_forward.3} parent=87 // pred_check
          %p591 = pneg %p76
        $region94: #{trajectory_model_forward.3} parent=87 // pred_check_branch
          %593 = sbr.rel (%p591) target = $region96
        $region95: #{trajectory_model_forward.3} parent=87 // pred_region
          %p594 = scmp.lt.s32.totalorder %s30, 1
          %s595 = scalar_select %p594, %s30, 1
          %s596 = smul.addr %s595, 4
          %s597 = scalar_lea.vmem %s1, %s596
        $region96: #{trajectory_model_forward.3} parent=87 // pred_fallthru
          _
        // Predicated region
        $region97: #{trajectory_model_forward.3} parent=87 // pred_check
          %p598 = pneg %p102
        $region98: #{trajectory_model_forward.3} parent=87 // pred_check_branch
          %600 = sbr.rel (%p598) target = $region100
        $region99: #{trajectory_model_forward.3} parent=87 // pred_region
          %p601 = scmp.lt.s32.totalorder %s30, 1
          %s602 = scalar_select %p601, %s30, 1
          %s603 = scalar_lea.vmem %s2, %s602
        $region100: #{trajectory_model_forward.3} parent=87 // pred_fallthru
          _
      $region88: #{trajectory_model_forward.3} parent=5 // pred_fallthru
        _
      %p604 = scmp.le.s32.totalorder 1, %s30
      %p605 = scmp.lt.s32.totalorder %s30, 3
      %p606 = pnand %p604, %p605
      %p607 = pneg %p606
      // Predicated region
      $region101: #{trajectory_model_forward.3} parent=5 // pred_check
        _
      $region102: #{trajectory_model_forward.3} parent=5 // pred_check_branch
        %609 = sbr.rel (%p606) target = $region104
      $region103: #{trajectory_model_forward.3} parent=5 // pred_region
        %s610 = ssub.s32 %s30, 1
        %p611 = scmp.lt.s32.totalorder %s35, 1
        %s612 = scalar_select %p611, %s35, 1
        %s613 = scalar_lea.vmem %s0, %s612
        %p614 = pneg %p56
        %p615 = pneg %p53
        %p616 = scmp.lt.s32.totalorder %s35, 1
        %s617 = scalar_select %p616, %s35, 1
        %s618 = smul.addr %s617, 4
        %s619 = scalar_lea.vmem %s1, %s618
        %p620 = pneg %p82
        %p621 = pneg %p79
        %p622 = scmp.lt.s32.totalorder %s35, 1
        %s623 = scalar_select %p622, %s35, 1
        %s624 = scalar_lea.vmem %s2, %s623
        %p625 = pneg %p108
        %p626 = pneg %p105
        %p627 = pneg %p129
        %p628 = pneg %p126
        %p629 = pneg %p150
        %p630 = pneg %p147
        %p631 = pneg %p171
        %p632 = pneg %p168
        %p633 = pneg %p192
        %p634 = pneg %p189
        %p635 = pneg %p213
        %p636 = pneg %p210
        %p637 = pneg %p234
        %p638 = pneg %p231
        %p639 = pneg %p255
        %p640 = pneg %p252
        %p641 = pneg %p276
        %p642 = pneg %p273
        %p643 = pneg %p297
        %p644 = pneg %p294
        %p645 = pneg %p318
        %p646 = pneg %p315
        %p647 = pneg %p339
        %p648 = pneg %p336
        %p649 = pneg %p360
        %p650 = pneg %p357
        %p651 = pneg %p381
        %p652 = pneg %p378
        %p653 = pneg %p402
        %p654 = pneg %p399
        %p655 = pneg %p423
        %p656 = pneg %p420
        %p657 = pneg %p444
        %p658 = pneg %p441
        %p659 = pneg %p465
        %p660 = pneg %p462
        %p661 = pneg %p486
        %p662 = pneg %p483
        %p663 = pneg %p512
        %p664 = pneg %p509
        %s665 = sand.u32 %s499, 1
        %s666 = scalar_lea.sflag [#allocation3], %s665
        %s667 = sand.u32 %s499, 1
        %s668 = scalar_lea.vmem [#allocation2], %s667
        %p669 = scmp.lt.s32.totalorder %s35, 1
        %s670 = scalar_select %p669, %s35, 1
        %s671 = scalar_lea.vmem %s0, %s670
        %p672 = scmp.lt.s32.totalorder %s35, 1
        %s673 = scalar_select %p672, %s35, 1
        %s674 = smul.addr %s673, 4
        %s675 = scalar_lea.vmem %s1, %s674
        %p676 = scmp.lt.s32.totalorder %s35, 1
        %s677 = scalar_select %p676, %s35, 1
        %s678 = scalar_lea.vmem %s2, %s677
        %v679 = vld [vmem:[%s675] sm:$0xf]
        %v680 = vld [vmem:[%s3] sm:$0xff]
        %v681 = vld [vmem:[%s3 + $0x8] sm:$0xff]
        %v682 = vld [vmem:[%s4] sm:$0x1]
        %v684 = vperm.slane %v682, 0
        %vm686 = vcmask 130048
        %v688 = vsel %vm686, %v679, 0
        %690 = vmatpush.msra.mxu0 0.0
        %691 = vmatpush.msra.mxu0 0.0
        %692 = vmatpush.msra.mxu0 0.0
        %693 = vmatpush.msra.mxu0 0.0
        %694 = vmatpush.msra.mxu0 0.0
        %695 = vmatpush.msra.mxu0 0.0
        %696 = vmatpush.msra.mxu0 0.0
        %697 = vmatpush.msra.mxu0 0.0
        %698 = vmatpush.msra.mxu0 0.0
        %699 = vmatpush.msra.mxu0 0.0
        %700 = vmatpush.msra.mxu0 0.0
        %701 = vmatpush.msra.mxu0 0.0
        %702 = vmatpush.msra.mxu0 0.0
        %703 = vmatpush.msra.mxu0 0.0
        %704 = vmatpush.msra.mxu0 %v681
        %705 = vmatpush.msra.mxu0 %v680
        %706 = vmatmul.f32.gmra.mxu0 %v688
        %v707 = vpop.f32.mrf.mxu0
        %v708 = vadd.f32 %v684, %v707
        %709 = vdwg.mxu0
        %v710 = vld [vmem:[%s678] sm:$0x1]
        %vm711 = vcmp.gt.f32.partialorder %v710, 0.0
        %v712 = vld [vmem:[%s671] sm:$0x1]
        %v713 = vld [vmem:[%s5] sm:$0xff]
        %v714 = vld [vmem:[%s5 + $0x8] sm:$0xff]
        %v715 = vld [vmem:[%s5 + $0x10] sm:$0xff]
        %v716 = vld [vmem:[%s5 + $0x18] sm:$0xff]
        %v717 = vld [vmem:[%s6] sm:$0x1]
        %v718 = vld [vmem:[%s7] sm:$0xff]
        %v719 = vld [vmem:[%s7 + $0x8] sm:$0xff]
        %v720 = vld [vmem:[%s7 + $0x10] sm:$0xff]
        %v721 = vld [vmem:[%s7 + $0x18] sm:$0xff]
        %v722 = vld [vmem:[%s8] sm:$0x1]
        %v723 = vld [vmem:[%s9] sm:$0xff]
        %v724 = vld [vmem:[%s9 + $0x8] sm:$0xff]
        %v725 = vld [vmem:[%s9 + $0x10] sm:$0xff]
        %v726 = vld [vmem:[%s9 + $0x18] sm:$0xff]
        %v727 = vld [vmem:[%s10] sm:$0x1]
        %v728 = vld [vmem:[%s11] sm:$0x1]
        %v729 = vld [vmem:[%s12] sm:$0x1]
        %v730 = vld [vmem:[%s13] sm:$0xff]
        %v731 = vld [vmem:[%s13 + $0x8] sm:$0xff]
        %v732 = vld [vmem:[%s13 + $0x10] sm:$0xff]
        %v733 = vld [vmem:[%s13 + $0x18] sm:$0xff]
        %v734 = vld [vmem:[%s14] sm:$0x1]
        %v735 = vld [vmem:[%s15] sm:$0xff]
        %v736 = vld [vmem:[%s15 + $0x8] sm:$0xff]
        %v737 = vld [vmem:[%s15 + $0x10] sm:$0xff]
        %v738 = vld [vmem:[%s15 + $0x18] sm:$0xff]
        %v739 = vld [vmem:[%s15 + $0x20] sm:$0xff]
        %v740 = vld [vmem:[%s15 + $0x28] sm:$0xff]
        %v741 = vld [vmem:[%s15 + $0x30] sm:$0xff]
        %v742 = vld [vmem:[%s15 + $0x38] sm:$0xff]
        %v743 = vld [vmem:[%s16] sm:$0x1]
        %v744 = vld [vmem:[%s17] sm:$0x1]
        %v745 = vld [vmem:[%s18] sm:$0x1]
        %vm746 = vcmask 261120
        %v748 = vsel %vm746, %v712, 0
        %750 = vmatpush.msra.mxu0 0.0
        %751 = vmatpush.msra.mxu0 0.0
        %752 = vmatpush.msra.mxu0 0.0
        %753 = vmatpush.msra.mxu0 0.0
        %754 = vmatpush.msra.mxu0 0.0
        %755 = vmatpush.msra.mxu0 0.0
        %756 = vmatpush.msra.mxu0 0.0
        %757 = vmatpush.msra.mxu0 0.0
        %758 = vmatpush.msra.mxu0 0.0
        %759 = vmatpush.msra.mxu0 0.0
        %760 = vmatpush.msra.mxu0 0.0
        %761 = vmatpush.msra.mxu0 0.0
        %762 = vmatpush.msra.mxu0 %v716
        %763 = vmatpush.msra.mxu0 %v715
        %764 = vmatpush.msra.mxu0 %v714
        %765 = vmatpush.msra.mxu0 %v713
        %766 = vmatmul.f32.gmra.mxu0 %v748
        %v767 = vpop.f32.mrf.mxu0
        %v768 = vadd.f32 %v717, %v767
        %769 = vdwg.mxu0
        %v771 = vperm.slane %v722, 0
        %v774 = vsel %vm746, %v708, 0
        %776 = vmatpush.msra.mxu0 0.0
        %777 = vmatpush.msra.mxu0 0.0
        %778 = vmatpush.msra.mxu0 0.0
        %779 = vmatpush.msra.mxu0 0.0
        %780 = vmatpush.msra.mxu0 0.0
        %781 = vmatpush.msra.mxu0 0.0
        %782 = vmatpush.msra.mxu0 0.0
        %783 = vmatpush.msra.mxu0 0.0
        %784 = vmatpush.msra.mxu0 0.0
        %785 = vmatpush.msra.mxu0 0.0
        %786 = vmatpush.msra.mxu0 0.0
        %787 = vmatpush.msra.mxu0 0.0
        %788 = vmatpush.msra.mxu0 %v721
        %789 = vmatpush.msra.mxu0 %v720
        %790 = vmatpush.msra.mxu0 %v719
        %791 = vmatpush.msra.mxu0 %v718
        %792 = vmatmul.f32.gmra.mxu0 %v774
        %v793 = vpop.f32.mrf.mxu0
        %v794 = vadd.f32 %v771, %v793
        %795 = vdwg.mxu0
        %vm796 = vcmask 64512
        %v798 = vsel %vm796, %v768, 0
        %v801 = vsel %vm796, %v794, 0
        %803 = vmatpush.xpose.msra.mxu0 0.0
        %804 = vmatpush.xpose.msra.mxu0 0.0
        %805 = vmatpush.xpose.msra.mxu0 0.0
        %806 = vmatpush.xpose.msra.mxu0 0.0
        %807 = vmatpush.xpose.msra.mxu0 0.0
        %808 = vmatpush.xpose.msra.mxu0 0.0
        %809 = vmatpush.xpose.msra.mxu0 0.0
        %810 = vmatpush.xpose.msra.mxu0 0.0
        %811 = vmatpush.xpose.msra.mxu0 0.0
        %812 = vmatpush.xpose.msra.mxu0 0.0
        %813 = vmatpush.xpose.msra.mxu0 0.0
        %814 = vmatpush.xpose.msra.mxu0 0.0
        %815 = vmatpush.xpose.msra.mxu0 0.0
        %816 = vmatpush.xpose.msra.mxu0 0.0
        %817 = vmatpush.xpose.msra.mxu0 0.0
        %818 = vmatpush.xpose.msra.mxu0 %v801
        %819 = vmatmul.f32.gmra.mxu0 %v798
        %v820 = vpop.f32.mrf.mxu0
        %v821 = vadd.f32 0.0, %v820
        %822 = vdwg.mxu0
        %v823 = vmul.f32 %v821, 0.35355338
        %v824 = vsel %vm711, %v823, -1e+09
        %vm825 = vcmask 24576
        %v826 = vsel %vm825, %v824, -inf
        %827 = vmax.xlane.f32.xlu0 %v826
        %v828 = vpop.xlane.xlu0 %827
        %v829 = vsub.f32 %v824, %v828
        %v830 = vmul.f32 %v829, 1.442695
        %v831 = vpow.pop %v830
        %v832 = vsel %vm825, %v831, 0.0
        %833 = vadd.xlane.f32.xlu0 %v832
        %v834 = vpop.xlane.xlu0 %833
        %v835 = vrcp.pop %v834
        %v836 = vmul.f32 %v834, %v835
        %v837 = vsub.f32 1.0, %v836
        %v838 = vmul.f32 %v835, %v837
        %v839 = vadd.f32 %v835, %v838
        %vm840 = vweird.f32 %v834
        %vm841 = vweird.f32 %v835
        %vm842 = vmor %vm840, %vm841
        %v843 = vsel %vm842, %v835, %v839
        %v844 = vand.u32 2147483647, %v834
        %vm845 = vcmp.eq.f32.partialorder %v844, 8.507059e+37
        %v846 = vand.u32 %v834, 2147483648
        %v847 = vor.u32 1.1754944e-38, %v846
        %v848 = vsel %vm845, %v847, %v843
        %v849 = vmul.f32 %v831, %v848
        %850 = vrot.lane.b32.xlu0 %v794, 96
        %v851 = vpop.permute.xlu0 %850
        %vm852 = vcmask 31744
        %v854 = vsel %vm852, %v849, 0
        %vm856 = vcmask 1043456
        %v857 = vsel %vm856, %v851, 0
        %859 = vmatpush.msra.mxu0 0.0
        %860 = vmatpush.msra.mxu0 0.0
        %861 = vmatpush.msra.mxu0 0.0
        %862 = vmatpush.msra.mxu0 0.0
        %863 = vmatpush.msra.mxu0 0.0
        %864 = vmatpush.msra.mxu0 0.0
        %865 = vmatpush.msra.mxu0 0.0
        %866 = vmatpush.msra.mxu0 0.0
        %867 = vmatpush.msra.mxu0 0.0
        %868 = vmatpush.msra.mxu0 0.0
        %869 = vmatpush.msra.mxu0 0.0
        %870 = vmatpush.msra.mxu0 0.0
        %871 = vmatpush.msra.mxu0 0.0
        %872 = vmatpush.msra.mxu0 0.0
        %873 = vmatpush.msra.mxu0 0.0
        %874 = vmatpush.msra.mxu0 %v857
        %875 = vmatmul.f32.gmra.mxu0 %v854
        %v876 = vpop.f32.mrf.mxu0
        %v877 = vadd.f32 0.0, %v876
        %878 = vdwg.mxu0
        %879 = vrot.lane.b32.xlu0 %v768, 120
        %v880 = vpop.permute.xlu0 %879
        %881 = vrot.lane.b32.xlu0 %v794, 120
        %v882 = vpop.permute.xlu0 %881
        %v883 = vsel %vm796, %v880, 0
        %v885 = vsel %vm796, %v882, 0
        %887 = vmatpush.xpose.msra.mxu0 0.0
        %888 = vmatpush.xpose.msra.mxu0 0.0
        %889 = vmatpush.xpose.msra.mxu0 0.0
        %890 = vmatpush.xpose.msra.mxu0 0.0
        %891 = vmatpush.xpose.msra.mxu0 0.0
        %892 = vmatpush.xpose.msra.mxu0 0.0
        %893 = vmatpush.xpose.msra.mxu0 0.0
        %894 = vmatpush.xpose.msra.mxu0 0.0
        %895 = vmatpush.xpose.msra.mxu0 0.0
        %896 = vmatpush.xpose.msra.mxu0 0.0
        %897 = vmatpush.xpose.msra.mxu0 0.0
        %898 = vmatpush.xpose.msra.mxu0 0.0
        %899 = vmatpush.xpose.msra.mxu0 0.0
        %900 = vmatpush.xpose.msra.mxu0 0.0
        %901 = vmatpush.xpose.msra.mxu0 0.0
        %902 = vmatpush.xpose.msra.mxu0 %v885
        %903 = vmatmul.f32.gmra.mxu0 %v883
        %v904 = vpop.f32.mrf.mxu0
        %v905 = vadd.f32 0.0, %v904
        %906 = vdwg.mxu0
        %v907 = vmul.f32 %v905, 0.35355338
        %v908 = vsel %vm711, %v907, -1e+09
        %v909 = vsel %vm825, %v908, -inf
        %910 = vmax.xlane.f32.xlu0 %v909
        %v911 = vpop.xlane.xlu0 %910
        %v912 = vsub.f32 %v908, %v911
        %v913 = vmul.f32 %v912, 1.442695
        %v914 = vpow.pop %v913
        %v915 = vsel %vm825, %v914, 0.0
        %916 = vadd.xlane.f32.xlu0 %v915
        %v917 = vpop.xlane.xlu0 %916
        %v918 = vrcp.pop %v917
        %v919 = vmul.f32 %v917, %v918
        %v920 = vsub.f32 1.0, %v919
        %v921 = vmul.f32 %v918, %v920
        %v922 = vadd.f32 %v918, %v921
        %vm923 = vweird.f32 %v917
        %vm924 = vweird.f32 %v918
        %vm925 = vmor %vm923, %vm924
        %v926 = vsel %vm925, %v918, %v922
        %v927 = vand.u32 2147483647, %v917
        %vm928 = vcmp.eq.f32.partialorder %v927, 8.507059e+37
        %v929 = vand.u32 %v917, 2147483648
        %v930 = vor.u32 1.1754944e-38, %v929
        %v931 = vsel %vm928, %v930, %v926
        %v932 = vmul.f32 %v914, %v931
        %933 = vrot.lane.b32.xlu0 %v794, 88
        %v934 = vpop.permute.xlu0 %933
        %v936 = vsel %vm852, %v932, 0
        %v938 = vsel %vm856, %v934, 0
        %940 = vmatpush.msra.mxu0 0.0
        %941 = vmatpush.msra.mxu0 0.0
        %942 = vmatpush.msra.mxu0 0.0
        %943 = vmatpush.msra.mxu0 0.0
        %944 = vmatpush.msra.mxu0 0.0
        %945 = vmatpush.msra.mxu0 0.0
        %946 = vmatpush.msra.mxu0 0.0
        %947 = vmatpush.msra.mxu0 0.0
        %948 = vmatpush.msra.mxu0 0.0
        %949 = vmatpush.msra.mxu0 0.0
        %950 = vmatpush.msra.mxu0 0.0
        %951 = vmatpush.msra.mxu0 0.0
        %952 = vmatpush.msra.mxu0 0.0
        %953 = vmatpush.msra.mxu0 0.0
        %954 = vmatpush.msra.mxu0 0.0
        %955 = vmatpush.msra.mxu0 %v938
        %956 = vmatmul.f32.gmra.mxu0 %v936
        %v957 = vpop.f32.mrf.mxu0
        %v958 = vadd.f32 0.0, %v957
        %959 = vdwg.mxu0
        %960 = vrot.lane.b32.xlu0 %v768, 112
        %v961 = vpop.permute.xlu0 %960
        %962 = vrot.lane.b32.xlu0 %v794, 112
        %v963 = vpop.permute.xlu0 %962
        %v964 = vsel %vm796, %v961, 0
        %v966 = vsel %vm796, %v963, 0
        %968 = vmatpush.xpose.msra.mxu0 0.0
        %969 = vmatpush.xpose.msra.mxu0 0.0
        %970 = vmatpush.xpose.msra.mxu0 0.0
        %971 = vmatpush.xpose.msra.mxu0 0.0
        %972 = vmatpush.xpose.msra.mxu0 0.0
        %973 = vmatpush.xpose.msra.mxu0 0.0
        %974 = vmatpush.xpose.msra.mxu0 0.0
        %975 = vmatpush.xpose.msra.mxu0 0.0
        %976 = vmatpush.xpose.msra.mxu0 0.0
        %977 = vmatpush.xpose.msra.mxu0 0.0
        %978 = vmatpush.xpose.msra.mxu0 0.0
        %979 = vmatpush.xpose.msra.mxu0 0.0
        %980 = vmatpush.xpose.msra.mxu0 0.0
        %981 = vmatpush.xpose.msra.mxu0 0.0
        %982 = vmatpush.xpose.msra.mxu0 0.0
        %983 = vmatpush.xpose.msra.mxu0 %v966
        %984 = vmatmul.f32.gmra.mxu0 %v964
        %v985 = vpop.f32.mrf.mxu0
        %v986 = vadd.f32 0.0, %v985
        %987 = vdwg.mxu0
        %v988 = vmul.f32 %v986, 0.35355338
        %v989 = vsel %vm711, %v988, -1e+09
        %v990 = vsel %vm825, %v989, -inf
        %991 = vmax.xlane.f32.xlu0 %v990
        %v992 = vpop.xlane.xlu0 %991
        %v993 = vsub.f32 %v989, %v992
        %v994 = vmul.f32 %v993, 1.442695
        %v995 = vpow.pop %v994
        %v996 = vsel %vm825, %v995, 0.0
        %997 = vadd.xlane.f32.xlu0 %v996
        %v998 = vpop.xlane.xlu0 %997
        %v999 = vrcp.pop %v998
        %v1000 = vmul.f32 %v998, %v999
        %v1001 = vsub.f32 1.0, %v1000
        %v1002 = vmul.f32 %v999, %v1001
        %v1003 = vadd.f32 %v999, %v1002
        %vm1004 = vweird.f32 %v998
        %vm1005 = vweird.f32 %v999
        %vm1006 = vmor %vm1004, %vm1005
        %v1007 = vsel %vm1006, %v999, %v1003
        %v1008 = vand.u32 2147483647, %v998
        %vm1009 = vcmp.eq.f32.partialorder %v1008, 8.507059e+37
        %v1010 = vand.u32 %v998, 2147483648
        %v1011 = vor.u32 1.1754944e-38, %v1010
        %v1012 = vsel %vm1009, %v1011, %v1007
        %v1013 = vmul.f32 %v995, %v1012
        %1014 = vrot.lane.b32.xlu0 %v794, 80
        %v1015 = vpop.permute.xlu0 %1014
        %v1017 = vsel %vm852, %v1013, 0
        %v1019 = vsel %vm856, %v1015, 0
        %1021 = vmatpush.msra.mxu0 0.0
        %1022 = vmatpush.msra.mxu0 0.0
        %1023 = vmatpush.msra.mxu0 0.0
        %1024 = vmatpush.msra.mxu0 0.0
        %1025 = vmatpush.msra.mxu0 0.0
        %1026 = vmatpush.msra.mxu0 0.0
        %1027 = vmatpush.msra.mxu0 0.0
        %1028 = vmatpush.msra.mxu0 0.0
        %1029 = vmatpush.msra.mxu0 0.0
        %1030 = vmatpush.msra.mxu0 0.0
        %1031 = vmatpush.msra.mxu0 0.0
        %1032 = vmatpush.msra.mxu0 0.0
        %1033 = vmatpush.msra.mxu0 0.0
        %1034 = vmatpush.msra.mxu0 0.0
        %1035 = vmatpush.msra.mxu0 0.0
        %1036 = vmatpush.msra.mxu0 %v1019
        %1037 = vmatmul.f32.gmra.mxu0 %v1017
        %v1038 = vpop.f32.mrf.mxu0
        %v1039 = vadd.f32 0.0, %v1038
        %1040 = vdwg.mxu0
        %1041 = vrot.lane.b32.xlu0 %v768, 104
        %v1042 = vpop.permute.xlu0 %1041
        %1043 = vrot.lane.b32.xlu0 %v794, 104
        %v1044 = vpop.permute.xlu0 %1043
        %v1045 = vsel %vm796, %v1042, 0
        %v1047 = vsel %vm796, %v1044, 0
        %1049 = vmatpush.xpose.msra.mxu0 0.0
        %1050 = vmatpush.xpose.msra.mxu0 0.0
        %1051 = vmatpush.xpose.msra.mxu0 0.0
        %1052 = vmatpush.xpose.msra.mxu0 0.0
        %1053 = vmatpush.xpose.msra.mxu0 0.0
        %1054 = vmatpush.xpose.msra.mxu0 0.0
        %1055 = vmatpush.xpose.msra.mxu0 0.0
        %1056 = vmatpush.xpose.msra.mxu0 0.0
        %1057 = vmatpush.xpose.msra.mxu0 0.0
        %1058 = vmatpush.xpose.msra.mxu0 0.0
        %1059 = vmatpush.xpose.msra.mxu0 0.0
        %1060 = vmatpush.xpose.msra.mxu0 0.0
        %1061 = vmatpush.xpose.msra.mxu0 0.0
        %1062 = vmatpush.xpose.msra.mxu0 0.0
        %1063 = vmatpush.xpose.msra.mxu0 0.0
        %1064 = vmatpush.xpose.msra.mxu0 %v1047
        %1065 = vmatmul.f32.gmra.mxu0 %v1045
        %v1066 = vpop.f32.mrf.mxu0
        %v1067 = vadd.f32 0.0, %v1066
        %1068 = vdwg.mxu0
        %v1069 = vmul.f32 %v1067, 0.35355338
        %v1070 = vsel %vm711, %v1069, -1e+09
        %v1071 = vsel %vm825, %v1070, -inf
        %1072 = vmax.xlane.f32.xlu0 %v1071
        %v1073 = vpop.xlane.xlu0 %1072
        %v1074 = vsub.f32 %v1070, %v1073
        %v1075 = vmul.f32 %v1074, 1.442695
        %v1076 = vpow.pop %v1075
        %v1077 = vsel %vm825, %v1076, 0.0
        %1078 = vadd.xlane.f32.xlu0 %v1077
        %v1079 = vpop.xlane.xlu0 %1078
        %v1080 = vrcp.pop %v1079
        %v1081 = vmul.f32 %v1079, %v1080
        %v1082 = vsub.f32 1.0, %v1081
        %v1083 = vmul.f32 %v1080, %v1082
        %v1084 = vadd.f32 %v1080, %v1083
        %vm1085 = vweird.f32 %v1079
        %vm1086 = vweird.f32 %v1080
        %vm1087 = vmor %vm1085, %vm1086
        %v1088 = vsel %vm1087, %v1080, %v1084
        %v1089 = vand.u32 2147483647, %v1079
        %vm1090 = vcmp.eq.f32.partialorder %v1089, 8.507059e+37
        %v1091 = vand.u32 %v1079, 2147483648
        %v1092 = vor.u32 1.1754944e-38, %v1091
        %v1093 = vsel %vm1090, %v1092, %v1088
        %v1094 = vmul.f32 %v1076, %v1093
        %1095 = vrot.lane.b32.xlu0 %v794, 72
        %v1096 = vpop.permute.xlu0 %1095
        %v1098 = vsel %vm852, %v1094, 0
        %v1100 = vsel %vm856, %v1096, 0
        %1102 = vmatpush.msra.mxu0 0.0
        %1103 = vmatpush.msra.mxu0 0.0
        %1104 = vmatpush.msra.mxu0 0.0
        %1105 = vmatpush.msra.mxu0 0.0
        %1106 = vmatpush.msra.mxu0 0.0
        %1107 = vmatpush.msra.mxu0 0.0
        %1108 = vmatpush.msra.mxu0 0.0
        %1109 = vmatpush.msra.mxu0 0.0
        %1110 = vmatpush.msra.mxu0 0.0
        %1111 = vmatpush.msra.mxu0 0.0
        %1112 = vmatpush.msra.mxu0 0.0
        %1113 = vmatpush.msra.mxu0 0.0
        %1114 = vmatpush.msra.mxu0 0.0
        %1115 = vmatpush.msra.mxu0 0.0
        %1116 = vmatpush.msra.mxu0 0.0
        %1117 = vmatpush.msra.mxu0 %v1100
        %1118 = vmatmul.f32.gmra.mxu0 %v1098
        %v1119 = vpop.f32.mrf.mxu0
        %v1120 = vadd.f32 0.0, %v1119
        %1121 = vdwg.mxu0
        %1123 = vrot.lane.b32.xlu0 %v958, 8
        %v1124 = vpop.permute.xlu0 %1123
        %1127 = vrot.lane.b32.xlu0 %v1039, 16
        %v1128 = vpop.permute.xlu0 %1127
        %1131 = vrot.lane.b32.xlu0 %v1120, 24
        %v1132 = vpop.permute.xlu0 %1131
        %v1134 = vsel %vm796, %v877, %v1124
        %v1135 = vsel %vm686, %v1134, %v1128
        %vm1136 = vcmask 195584
        %v1137 = vsel %vm1136, %v1135, %v1132
        %v1139 = vsel %vm746, %v1137, 0
        %1141 = vmatpush.msra.mxu0 0.0
        %1142 = vmatpush.msra.mxu0 0.0
        %1143 = vmatpush.msra.mxu0 0.0
        %1144 = vmatpush.msra.mxu0 0.0
        %1145 = vmatpush.msra.mxu0 0.0
        %1146 = vmatpush.msra.mxu0 0.0
        %1147 = vmatpush.msra.mxu0 0.0
        %1148 = vmatpush.msra.mxu0 0.0
        %1149 = vmatpush.msra.mxu0 0.0
        %1150 = vmatpush.msra.mxu0 0.0
        %1151 = vmatpush.msra.mxu0 0.0
        %1152 = vmatpush.msra.mxu0 0.0
        %1153 = vmatpush.msra.mxu0 %v726
        %1154 = vmatpush.msra.mxu0 %v725
        %1155 = vmatpush.msra.mxu0 %v724
        %1156 = vmatpush.msra.mxu0 %v723
        %1157 = vmatmul.f32.gmra.mxu0 %v1139
        %v1158 = vpop.f32.mrf.mxu0
        %v1159 = vadd.f32 %v727, %v1158
        %1160 = vdwg.mxu0
        %v1161 = vadd.f32 %v712, %v1159
        %vm1162 = vcmask 253952
        %v1163 = vsel %vm1162, %v1161, 0.0
        %1164 = vadd.xlane.f32.xlu0 %v1163
        %v1165 = vpop.xlane.xlu0 %1164
        %v1166 = vrcp.pop 32.0
        %v1167 = vmul.f32 32.0, %v1166
        %v1168 = vsub.f32 1.0, %v1167
        %v1169 = vmul.f32 %v1166, %v1168
        %v1170 = vadd.f32 %v1166, %v1169
        %vm1171 = vweird.f32 %v1166
        %v1172 = vsel %vm1171, %v1166, %v1170
        %v1173 = vmul.f32 %v1165, %v1172
        %v1174 = vsub.f32 %v1161, %v1173
        %v1175 = vmul.f32 %v1174, %v1174
        %v1176 = vsel %vm1162, %v1175, 0.0
        %1177 = vadd.xlane.f32.xlu0 %v1176
        %v1178 = vpop.xlane.xlu0 %1177
        %v1179 = vmul.f32 %v1178, %v1172
        %v1180 = vadd.f32 %v1179, 1e-05
        %v1181 = vrsqrt.pop %v1180
        %v1182 = vmul.f32 %v1181, %v1180
        %v1183 = vmul.f32 %v1182, %v1181
        %v1184 = vmul.f32 0.5, %v1183
        %v1185 = vsub.f32 1.5, %v1184
        %v1186 = vmul.f32 %v1181, %v1185
        %vm1187 = vweird.f32 %v1180
        %vm1188 = vweird.f32 %v1181
        %vm1189 = vmor %vm1187, %vm1188
        %v1190 = vsel %vm1189, %v1181, %v1186
        %v1191 = vmul.f32 %v1174, %v1190
        %v1192 = vmul.f32 %v1191, %v728
        %v1193 = vadd.f32 %v1192, %v729
        %v1195 = vsel %vm746, %v1193, 0
        %1197 = vmatpush.msra.mxu0 0.0
        %1198 = vmatpush.msra.mxu0 0.0
        %1199 = vmatpush.msra.mxu0 0.0
        %1200 = vmatpush.msra.mxu0 0.0
        %1201 = vmatpush.msra.mxu0 0.0
        %1202 = vmatpush.msra.mxu0 0.0
        %1203 = vmatpush.msra.mxu0 0.0
        %1204 = vmatpush.msra.mxu0 0.0
        %1205 = vmatpush.msra.mxu0 0.0
        %1206 = vmatpush.msra.mxu0 0.0
        %1207 = vmatpush.msra.mxu0 0.0
        %1208 = vmatpush.msra.mxu0 0.0
        %1209 = vmatpush.msra.mxu0 %v733
        %1210 = vmatpush.msra.mxu0 %v732
        %1211 = vmatpush.msra.mxu0 %v731
        %1212 = vmatpush.msra.mxu0 %v730
        %1213 = vmatmul.f32.gmra.mxu0 %v1195
        %v1214 = vpop.f32.mrf.mxu0
        %v1215 = vadd.f32 %v734, %v1214
        %1216 = vdwg.mxu0
        %v1217 = vmax.f32 %v1215, 0.0
        %vm1218 = vcmask 523264
        %v1220 = vsel %vm1218, %v1217, 0
        %1222 = vmatpush.msra.mxu0 0.0
        %1223 = vmatpush.msra.mxu0 0.0
        %1224 = vmatpush.msra.mxu0 0.0
        %1225 = vmatpush.msra.mxu0 0.0
        %1226 = vmatpush.msra.mxu0 0.0
        %1227 = vmatpush.msra.mxu0 0.0
        %1228 = vmatpush.msra.mxu0 0.0
        %1229 = vmatpush.msra.mxu0 0.0
        %1230 = vmatpush.msra.mxu0 %v742
        %1231 = vmatpush.msra.mxu0 %v741
        %1232 = vmatpush.msra.mxu0 %v740
        %1233 = vmatpush.msra.mxu0 %v739
        %1234 = vmatpush.msra.mxu0 %v738
        %1235 = vmatpush.msra.mxu0 %v737
        %1236 = vmatpush.msra.mxu0 %v736
        %1237 = vmatpush.msra.mxu0 %v735
        %1238 = vmatmul.f32.gmra.mxu0 %v1220
        %v1239 = vpop.f32.mrf.mxu0
        %v1240 = vadd.f32 %v743, %v1239
        %1241 = vdwg.mxu0
        %v1242 = vadd.f32 %v1193, %v1240
        %v1243 = vsel %vm1162, %v1242, 0.0
        %1244 = vadd.xlane.f32.xlu0 %v1243
        %v1245 = vpop.xlane.xlu0 %1244
        %v1246 = vmul.f32 %v1245, %v1172
        %v1247 = vsub.f32 %v1242, %v1246
        %v1248 = vmul.f32 %v1247, %v1247
        %v1249 = vsel %vm1162, %v1248, 0.0
        %1250 = vadd.xlane.f32.xlu0 %v1249
        %v1251 = vpop.xlane.xlu0 %1250
        %v1252 = vmul.f32 %v1251, %v1172
        %v1253 = vadd.f32 %v1252, 1e-05
        %v1254 = vrsqrt.pop %v1253
        %v1255 = vmul.f32 %v1254, %v1253
        %v1256 = vmul.f32 %v1255, %v1254
        %v1257 = vmul.f32 0.5, %v1256
        %v1258 = vsub.f32 1.5, %v1257
        %v1259 = vmul.f32 %v1254, %v1258
        %vm1260 = vweird.f32 %v1253
        %vm1261 = vweird.f32 %v1254
        %vm1262 = vmor %vm1260, %vm1261
        %v1263 = vsel %vm1262, %v1254, %v1259
        %v1264 = vmul.f32 %v1247, %v1263
        %v1265 = vmul.f32 %v1264, %v744
        %v1266 = vadd.f32 %v1265, %v745
        %v1267 = vld [vmem:[%s19] sm:$0xff]
        %v1268 = vld [vmem:[%s19 + $0x8] sm:$0xff]
        %v1269 = vld [vmem:[%s19 + $0x10] sm:$0xff]
        %v1270 = vld [vmem:[%s19 + $0x18] sm:$0xff]
        %v1271 = vld [vmem:[%s20] sm:$0x1]
        %v1273 = vsel %vm746, %v1266, 0
        %1275 = vmatpush.msra.mxu0 0.0
        %1276 = vmatpush.msra.mxu0 0.0
        %1277 = vmatpush.msra.mxu0 0.0
        %1278 = vmatpush.msra.mxu0 0.0
        %1279 = vmatpush.msra.mxu0 0.0
        %1280 = vmatpush.msra.mxu0 0.0
        %1281 = vmatpush.msra.mxu0 0.0
        %1282 = vmatpush.msra.mxu0 0.0
        %1283 = vmatpush.msra.mxu0 0.0
        %1284 = vmatpush.msra.mxu0 0.0
        %1285 = vmatpush.msra.mxu0 0.0
        %1286 = vmatpush.msra.mxu0 0.0
        %1287 = vmatpush.msra.mxu0 %v1270
        %1288 = vmatpush.msra.mxu0 %v1269
        %1289 = vmatpush.msra.mxu0 %v1268
        %1290 = vmatpush.msra.mxu0 %v1267
        %1291 = vmatmul.f32.gmra.mxu0 %v1273
        %v1292 = vpop.f32.mrf.mxu0
        %v1293 = vadd.f32 %v1271, %v1292
        %1294 = vdwg.mxu0
        %vm1295 = vcmask 188416
        %1296 = vst.msk [vmem:[%s668] sm:$0x1] %vm1295, %v1293
        %s1297 = sand.u32 %s499, 1
        %s1298 = scalar_lea.sflag [#allocation3], %s1297
        %s1299 = sand.u32 %s499, 1
        %s1300 = scalar_lea.vmem [#allocation2], %s1299
        // Predicated region
        $region105: #{trajectory_model_forward.3} parent=103 // pred_check
          %p1301 = pneg %p509
        $region106: #{trajectory_model_forward.3} parent=103 // pred_check_branch
          %1303 = sbr.rel (%p1301) target = $region108
        $region107: #{trajectory_model_forward.3} parent=103 // pred_region
          %1305 = vsyncadd %s1298, 0
          %s1306 = scalar_lea.hbm %s21, %s35
          %s1308 = sshll.u32 %s1300, 4
          %s1309 = int_to_ptr.vmem [resolvable:$true] %s1308
          %s1310 = sshll.u32 %s1306, 4
          %s1311 = int_to_ptr.hbm [resolvable:$true] %s1310
          %1313 = dma.vmem_to_hbm [thread:$0]  %s1309, 16, %s1311, %s1298
        $region108: #{trajectory_model_forward.3} parent=103 // pred_fallthru
          _
      $region104: #{trajectory_model_forward.3} parent=5 // pred_fallthru
        _
      %p1314 = scmp.le.s32.totalorder 2, %s30
      // Predicated region
      $region109: #{trajectory_model_forward.3} parent=5 // pred_check
        %p1315 = pneg %p1314
      $region110: #{trajectory_model_forward.3} parent=5 // pred_check_branch
        %1317 = sbr.rel (%p1315) target = $region112
      $region111: #{trajectory_model_forward.3} parent=5 // pred_region
        %s1318 = ssub.s32 %s30, 2
        // Predicated region
        $region113: #{trajectory_model_forward.3} parent=111 // pred_check
          %p1319 = pneg %p515
        $region114: #{trajectory_model_forward.3} parent=111 // pred_check_branch
          %1321 = sbr.rel (%p1319) target = $region116
        $region115: #{trajectory_model_forward.3} parent=111 // pred_region
          %s1322 = sand.u32 %s500, 1
          %s1323 = scalar_lea.sflag [#allocation3], %s1322
          %s1324 = sand.u32 %s500, 1
          %s1325 = scalar_lea.vmem [#allocation2], %s1324
          %1327 = dma.done %s1323, 16
        $region116: #{trajectory_model_forward.3} parent=111 // pred_fallthru
          _
      $region112: #{trajectory_model_forward.3} parent=5 // pred_fallthru
        _
    $region6: #{trajectory_model_forward.3} parent=1 // loop_footer
      %s34 = sadd.s32 1, %s30
    $region7: #{trajectory_model_forward.3} parent=1 // loop_footer_branch
      %29 = sbr.rel target = $region3
    $region8: #{trajectory_model_forward.3} parent=1 // loop_exit
      _
    %1328 = vsyncpa [#allocation3], 1
    %s1329 = scalar_lea.sflag [#allocation3], 1
    %1330 = vsyncpa %s1329, 1

// kernel: trajectory_model_forward.2
$region0: #{trajectory_model_forward.2}
  #allocation0 [shape = 'u32[]', space=smem, size = 0x4, offset = 0x4, fixed_abs, tag = 'smem constant byte address 0x4 - core index']
  #allocation1 [shape = 'u32[72,128]{1,0:T(1,128)}', space=vmem, size = 0x9000, scoped, tag = 'internal scratch']
  #allocation2 [shape = 'f32[1,1]{1,0:T(1,128)S(1)}', space=vmem, size = 0x200, scoped, tag = 'scoped memory for trajectory_model_forward.2']
  %s0 = inlined_call_operand.vmem [shape: f32[2,2,128,20], index: 0, kind: input, shape index: {}]
  %s1 = inlined_call_operand.vmem [shape: f32[8,128], index: 1, kind: input, shape index: {}]
  %s2 = inlined_call_operand.vmem [shape: f32[8,1], index: 2, kind: input, shape index: {}]
  %s3 = inlined_call_operand.vmem [shape: f32[128,8], index: 3, kind: input, shape index: {}]
  %s4 = inlined_call_operand.vmem [shape: f32[128,1], index: 4, kind: input, shape index: {}]
  %s5 = inlined_call_operand.vmem [shape: f32[2,20,32], index: 5, kind: input, shape index: {}]
  %s6 = inlined_call_operand.vmem [shape: f32[1,32], index: 6, kind: input, shape index: {}]
  %s7 = inlined_call_operand.vmem [shape: f32[32,32], index: 7, kind: input, shape index: {}]
  %s8 = inlined_call_operand.vmem [shape: f32[1,32], index: 8, kind: input, shape index: {}]
  %s9 = inlined_call_operand.vmem [shape: f32[32,64], index: 9, kind: input, shape index: {}]
  %s10 = inlined_call_operand.vmem [shape: f32[1,64], index: 10, kind: input, shape index: {}]
  %s11 = inlined_call_operand.vmem [shape: f32[32,32], index: 11, kind: input, shape index: {}]
  %s12 = inlined_call_operand.vmem [shape: f32[1,32], index: 12, kind: input, shape index: {}]
  %s13 = inlined_call_operand.vmem [shape: f32[1,32], index: 13, kind: input, shape index: {}]
  %s14 = inlined_call_operand.vmem [shape: f32[1,32], index: 14, kind: input, shape index: {}]
  %s15 = inlined_call_operand.vmem [shape: f32[32,64], index: 15, kind: input, shape index: {}]
  %s16 = inlined_call_operand.vmem [shape: f32[1,64], index: 16, kind: input, shape index: {}]
  %s17 = inlined_call_operand.vmem [shape: f32[64,32], index: 17, kind: input, shape index: {}]
  %s18 = inlined_call_operand.vmem [shape: f32[1,32], index: 18, kind: input, shape index: {}]
  %s19 = inlined_call_operand.vmem [shape: f32[1,32], index: 19, kind: input, shape index: {}]
  %s20 = inlined_call_operand.vmem [shape: f32[1,32], index: 20, kind: input, shape index: {}]
  %s21 = inlined_call_operand.vmem [shape: f32[1,32], index: 21, kind: input, shape index: {}]
  %s22 = inlined_call_operand.<no memory space> [shape: f32[1,1], index: 22, kind: input, shape index: {}]
  %s23 = inlined_call_operand.vmem [shape: f32[2,128,32], index: 23, kind: output, shape index: {0}]
  %s24 = inlined_call_operand.hbm [shape: f32[2,1,128], index: 24, kind: output, shape index: {1}]
  %25 = xla_tuple %s23, %s24
  %s26 = sld [smem:[#allocation0]]
  $region133: #{trajectory_model_forward.2} parent=0
    _
  %s28 = ssub.s32 1, %s26
  %s29 = scalar_select 0, %s28, %s26
  %v30 = vstv %s22
  %31 = vst [vmem:[#allocation2] sm:$0x1] %v30
  $region1: #{trajectory_model_forward.2} parent=0
    #allocation3 [shape = 'u8[1024]{0}', space=vmem, size = 0x400, scoped, tag = 'output window, operand 1']
    #allocation4 [shape = 's32[2]{0}', space=sflag, size = 0x8, scoped, tag = 'scoped memory for trajectory_model_forward.2']
    %32 = vsyncpa [#allocation4], 0
    %s33 = scalar_lea.sflag [#allocation4], 1
    %34 = vsyncpa %s33, 0
    loop: start=0, step=1, limit=4
    $region2: #{trajectory_model_forward.2} parent=1 // loop_pre_header
      _
    $region3: #{trajectory_model_forward.2} parent=1 // loop_header
      %s36 = sphi 0, %s40
      %p37 = scmp.ge.s32.totalorder %s36, 4
      %s46 = sphi 0, %s48
      %s49 = sphi 0, %s46
      %s50 = sphi 0, %s49
      %s66 = sphi 0, %s50
      %s70 = sphi 0, %s70
      %s72 = sphi 0, %s70
      %s73 = sphi 0, %s72
      %s87 = sphi 0, %s73
      %s91 = sphi 0, %s91
      %s93 = sphi 0, %s91
      %s94 = sphi 0, %s93
      %s108 = sphi 0, %s94
      %s112 = sphi 0, %s112
      %s114 = sphi 0, %s112
      %s115 = sphi 0, %s114
      %s129 = sphi 0, %s115
      %s133 = sphi 0, %s133
      %s135 = sphi 0, %s133
      %s136 = sphi 0, %s135
      %s150 = sphi 0, %s136
      %s154 = sphi 0, %s154
      %s156 = sphi 0, %s154
      %s157 = sphi 0, %s156
      %s171 = sphi 0, %s157
      %s175 = sphi 0, %s175
      %s177 = sphi 0, %s175
      %s178 = sphi 0, %s177
      %s192 = sphi 0, %s178
      %s196 = sphi 0, %s196
      %s198 = sphi 0, %s196
      %s199 = sphi 0, %s198
      %s213 = sphi 0, %s199
      %s217 = sphi 0, %s217
      %s219 = sphi 0, %s217
      %s220 = sphi 0, %s219
      %s234 = sphi 0, %s220
      %s238 = sphi 0, %s238
      %s240 = sphi 0, %s238
      %s241 = sphi 0, %s240
      %s255 = sphi 0, %s241
      %s259 = sphi 0, %s259
      %s261 = sphi 0, %s259
      %s262 = sphi 0, %s261
      %s276 = sphi 0, %s262
      %s280 = sphi 0, %s280
      %s282 = sphi 0, %s280
      %s283 = sphi 0, %s282
      %s297 = sphi 0, %s283
      %s301 = sphi 0, %s301
      %s303 = sphi 0, %s301
      %s304 = sphi 0, %s303
      %s318 = sphi 0, %s304
      %s322 = sphi 0, %s322
      %s324 = sphi 0, %s322
      %s325 = sphi 0, %s324
      %s339 = sphi 0, %s325
      %s343 = sphi 0, %s343
      %s345 = sphi 0, %s343
      %s346 = sphi 0, %s345
      %s360 = sphi 0, %s346
      %s364 = sphi 0, %s364
      %s366 = sphi 0, %s364
      %s367 = sphi 0, %s366
      %s381 = sphi 0, %s367
      %s385 = sphi 0, %s385
      %s387 = sphi 0, %s385
      %s388 = sphi 0, %s387
      %s402 = sphi 0, %s388
      %s406 = sphi 0, %s406
      %s408 = sphi 0, %s406
      %s409 = sphi 0, %s408
      %s423 = sphi 0, %s409
      %s427 = sphi 0, %s427
      %s429 = sphi 0, %s427
      %s430 = sphi 0, %s429
      %s444 = sphi 0, %s430
      %s448 = sphi 0, %s448
      %s450 = sphi 0, %s448
      %s451 = sphi 0, %s450
      %s465 = sphi 0, %s451
      %s469 = sphi 0, %s469
      %s471 = sphi 0, %s469
      %s472 = sphi 0, %s471
      %s486 = sphi 0, %s472
      %s490 = sphi 0, %s490
      %s492 = sphi 0, %s490
      %s493 = sphi 0, %s492
      %s507 = sphi 0, %s493
      %s511 = sphi 0, %s511
      %s513 = sphi 0, %s511
      %s514 = sphi 0, %s513
      %s528 = sphi 0, %s514
      %s534 = sphi 0, %s536
      %s537 = sphi 0, %s534
      %s538 = sphi 0, %s537
      %s554 = sphi 0, %s538
      %s560 = sphi 0, %s562
      %s563 = sphi 0, %s560
      %s564 = sphi 0, %s563
      %s580 = sphi 0, %s564
    $region4: #{trajectory_model_forward.2} parent=1 // loop_header_branch
      %39 = sbr.rel (%p37) target = $region8
    $region5: #{trajectory_model_forward.2} parent=1 // loop_body
      %s41 = ssub.s32 %s36, 1
      %s42 = ssub.s32 %s36, 2
      %s43 = sadd.s32 %s36, 1
      %s44 = ssub.s32 %s36, %s43
      %p45 = scmp.eq.s32.totalorder %s44, 0
      %s47 = sadd.s32 %s46, 1
      %s48 = scalar_select %p45, %s46, %s47
      %p51 = pneg %p45
      %p52 = scmp.eq.s32.totalorder %s36, 1
      %p53 = por %p51, %p52
      %p54 = scmp.ne.s32.totalorder %s46, %s49
      %p55 = scmp.eq.s32.totalorder %s36, 0
      %p56 = por %p54, %p55
      %p57 = scmp.ne.s32.totalorder %s46, %s49
      %p58 = scmp.eq.s32.totalorder %s41, 1
      %p59 = por %p57, %p58
      %p60 = scmp.ne.s32.totalorder %s49, %s50
      %p61 = scmp.eq.s32.totalorder %s41, 0
      %p62 = por %p60, %p61
      %p63 = scmp.ne.s32.totalorder %s49, %s50
      %p64 = scmp.eq.s32.totalorder %s42, 1
      %p65 = por %p63, %p64
      %p67 = scmp.ne.s32.totalorder %s50, %s66
      %p68 = scmp.eq.s32.totalorder %s42, 0
      %p69 = por %p67, %p68
      %s71 = sadd.s32 %s70, 1
      %p74 = scmp.eq.s32.totalorder %s36, 1
      %p75 = scmp.ne.s32.totalorder %s70, %s72
      %p76 = scmp.eq.s32.totalorder %s36, 0
      %p77 = por %p75, %p76
      %p78 = scmp.ne.s32.totalorder %s70, %s72
      %p79 = scmp.eq.s32.totalorder %s41, 1
      %p80 = por %p78, %p79
      %p81 = scmp.ne.s32.totalorder %s72, %s73
      %p82 = scmp.eq.s32.totalorder %s41, 0
      %p83 = por %p81, %p82
      %p84 = scmp.ne.s32.totalorder %s72, %s73
      %p85 = scmp.eq.s32.totalorder %s42, 1
      %p86 = por %p84, %p85
      %p88 = scmp.ne.s32.totalorder %s73, %s87
      %p89 = scmp.eq.s32.totalorder %s42, 0
      %p90 = por %p88, %p89
      %s92 = sadd.s32 %s91, 1
      %p95 = scmp.eq.s32.totalorder %s36, 1
      %p96 = scmp.ne.s32.totalorder %s91, %s93
      %p97 = scmp.eq.s32.totalorder %s36, 0
      %p98 = por %p96, %p97
      %p99 = scmp.ne.s32.totalorder %s91, %s93
      %p100 = scmp.eq.s32.totalorder %s41, 1
      %p101 = por %p99, %p100
      %p102 = scmp.ne.s32.totalorder %s93, %s94
      %p103 = scmp.eq.s32.totalorder %s41, 0
      %p104 = por %p102, %p103
      %p105 = scmp.ne.s32.totalorder %s93, %s94
      %p106 = scmp.eq.s32.totalorder %s42, 1
      %p107 = por %p105, %p106
      %p109 = scmp.ne.s32.totalorder %s94, %s108
      %p110 = scmp.eq.s32.totalorder %s42, 0
      %p111 = por %p109, %p110
      %s113 = sadd.s32 %s112, 1
      %p116 = scmp.eq.s32.totalorder %s36, 1
      %p117 = scmp.ne.s32.totalorder %s112, %s114
      %p118 = scmp.eq.s32.totalorder %s36, 0
      %p119 = por %p117, %p118
      %p120 = scmp.ne.s32.totalorder %s112, %s114
      %p121 = scmp.eq.s32.totalorder %s41, 1
      %p122 = por %p120, %p121
      %p123 = scmp.ne.s32.totalorder %s114, %s115
      %p124 = scmp.eq.s32.totalorder %s41, 0
      %p125 = por %p123, %p124
      %p126 = scmp.ne.s32.totalorder %s114, %s115
      %p127 = scmp.eq.s32.totalorder %s42, 1
      %p128 = por %p126, %p127
      %p130 = scmp.ne.s32.totalorder %s115, %s129
      %p131 = scmp.eq.s32.totalorder %s42, 0
      %p132 = por %p130, %p131
      %s134 = sadd.s32 %s133, 1
      %p137 = scmp.eq.s32.totalorder %s36, 1
      %p138 = scmp.ne.s32.totalorder %s133, %s135
      %p139 = scmp.eq.s32.totalorder %s36, 0
      %p140 = por %p138, %p139
      %p141 = scmp.ne.s32.totalorder %s133, %s135
      %p142 = scmp.eq.s32.totalorder %s41, 1
      %p143 = por %p141, %p142
      %p144 = scmp.ne.s32.totalorder %s135, %s136
      %p145 = scmp.eq.s32.totalorder %s41, 0
      %p146 = por %p144, %p145
      %p147 = scmp.ne.s32.totalorder %s135, %s136
      %p148 = scmp.eq.s32.totalorder %s42, 1
      %p149 = por %p147, %p148
      %p151 = scmp.ne.s32.totalorder %s136, %s150
      %p152 = scmp.eq.s32.totalorder %s42, 0
      %p153 = por %p151, %p152
      %s155 = sadd.s32 %s154, 1
      %p158 = scmp.eq.s32.totalorder %s36, 1
      %p159 = scmp.ne.s32.totalorder %s154, %s156
      %p160 = scmp.eq.s32.totalorder %s36, 0
      %p161 = por %p159, %p160
      %p162 = scmp.ne.s32.totalorder %s154, %s156
      %p163 = scmp.eq.s32.totalorder %s41, 1
      %p164 = por %p162, %p163
      %p165 = scmp.ne.s32.totalorder %s156, %s157
      %p166 = scmp.eq.s32.totalorder %s41, 0
      %p167 = por %p165, %p166
      %p168 = scmp.ne.s32.totalorder %s156, %s157
      %p169 = scmp.eq.s32.totalorder %s42, 1
      %p170 = por %p168, %p169
      %p172 = scmp.ne.s32.totalorder %s157, %s171
      %p173 = scmp.eq.s32.totalorder %s42, 0
      %p174 = por %p172, %p173
      %s176 = sadd.s32 %s175, 1
      %p179 = scmp.eq.s32.totalorder %s36, 1
      %p180 = scmp.ne.s32.totalorder %s175, %s177
      %p181 = scmp.eq.s32.totalorder %s36, 0
      %p182 = por %p180, %p181
      %p183 = scmp.ne.s32.totalorder %s175, %s177
      %p184 = scmp.eq.s32.totalorder %s41, 1
      %p185 = por %p183, %p184
      %p186 = scmp.ne.s32.totalorder %s177, %s178
      %p187 = scmp.eq.s32.totalorder %s41, 0
      %p188 = por %p186, %p187
      %p189 = scmp.ne.s32.totalorder %s177, %s178
      %p190 = scmp.eq.s32.totalorder %s42, 1
      %p191 = por %p189, %p190
      %p193 = scmp.ne.s32.totalorder %s178, %s192
      %p194 = scmp.eq.s32.totalorder %s42, 0
      %p195 = por %p193, %p194
      %s197 = sadd.s32 %s196, 1
      %p200 = scmp.eq.s32.totalorder %s36, 1
      %p201 = scmp.ne.s32.totalorder %s196, %s198
      %p202 = scmp.eq.s32.totalorder %s36, 0
      %p203 = por %p201, %p202
      %p204 = scmp.ne.s32.totalorder %s196, %s198
      %p205 = scmp.eq.s32.totalorder %s41, 1
      %p206 = por %p204, %p205
      %p207 = scmp.ne.s32.totalorder %s198, %s199
      %p208 = scmp.eq.s32.totalorder %s41, 0
      %p209 = por %p207, %p208
      %p210 = scmp.ne.s32.totalorder %s198, %s199
      %p211 = scmp.eq.s32.totalorder %s42, 1
      %p212 = por %p210, %p211
      %p214 = scmp.ne.s32.totalorder %s199, %s213
      %p215 = scmp.eq.s32.totalorder %s42, 0
      %p216 = por %p214, %p215
      %s218 = sadd.s32 %s217, 1
      %p221 = scmp.eq.s32.totalorder %s36, 1
      %p222 = scmp.ne.s32.totalorder %s217, %s219
      %p223 = scmp.eq.s32.totalorder %s36, 0
      %p224 = por %p222, %p223
      %p225 = scmp.ne.s32.totalorder %s217, %s219
      %p226 = scmp.eq.s32.totalorder %s41, 1
      %p227 = por %p225, %p226
      %p228 = scmp.ne.s32.totalorder %s219, %s220
      %p229 = scmp.eq.s32.totalorder %s41, 0
      %p230 = por %p228, %p229
      %p231 = scmp.ne.s32.totalorder %s219, %s220
      %p232 = scmp.eq.s32.totalorder %s42, 1
      %p233 = por %p231, %p232
      %p235 = scmp.ne.s32.totalorder %s220, %s234
      %p236 = scmp.eq.s32.totalorder %s42, 0
      %p237 = por %p235, %p236
      %s239 = sadd.s32 %s238, 1
      %p242 = scmp.eq.s32.totalorder %s36, 1
      %p243 = scmp.ne.s32.totalorder %s238, %s240
      %p244 = scmp.eq.s32.totalorder %s36, 0
      %p245 = por %p243, %p244
      %p246 = scmp.ne.s32.totalorder %s238, %s240
      %p247 = scmp.eq.s32.totalorder %s41, 1
      %p248 = por %p246, %p247
      %p249 = scmp.ne.s32.totalorder %s240, %s241
      %p250 = scmp.eq.s32.totalorder %s41, 0
      %p251 = por %p249, %p250
      %p252 = scmp.ne.s32.totalorder %s240, %s241
      %p253 = scmp.eq.s32.totalorder %s42, 1
      %p254 = por %p252, %p253
      %p256 = scmp.ne.s32.totalorder %s241, %s255
      %p257 = scmp.eq.s32.totalorder %s42, 0
      %p258 = por %p256, %p257
      %s260 = sadd.s32 %s259, 1
      %p263 = scmp.eq.s32.totalorder %s36, 1
      %p264 = scmp.ne.s32.totalorder %s259, %s261
      %p265 = scmp.eq.s32.totalorder %s36, 0
      %p266 = por %p264, %p265
      %p267 = scmp.ne.s32.totalorder %s259, %s261
      %p268 = scmp.eq.s32.totalorder %s41, 1
      %p269 = por %p267, %p268
      %p270 = scmp.ne.s32.totalorder %s261, %s262
      %p271 = scmp.eq.s32.totalorder %s41, 0
      %p272 = por %p270, %p271
      %p273 = scmp.ne.s32.totalorder %s261, %s262
      %p274 = scmp.eq.s32.totalorder %s42, 1
      %p275 = por %p273, %p274
      %p277 = scmp.ne.s32.totalorder %s262, %s276
      %p278 = scmp.eq.s32.totalorder %s42, 0
      %p279 = por %p277, %p278
      %s281 = sadd.s32 %s280, 1
      %p284 = scmp.eq.s32.totalorder %s36, 1
      %p285 = scmp.ne.s32.totalorder %s280, %s282
      %p286 = scmp.eq.s32.totalorder %s36, 0
      %p287 = por %p285, %p286
      %p288 = scmp.ne.s32.totalorder %s280, %s282
      %p289 = scmp.eq.s32.totalorder %s41, 1
      %p290 = por %p288, %p289
      %p291 = scmp.ne.s32.totalorder %s282, %s283
      %p292 = scmp.eq.s32.totalorder %s41, 0
      %p293 = por %p291, %p292
      %p294 = scmp.ne.s32.totalorder %s282, %s283
      %p295 = scmp.eq.s32.totalorder %s42, 1
      %p296 = por %p294, %p295
      %p298 = scmp.ne.s32.totalorder %s283, %s297
      %p299 = scmp.eq.s32.totalorder %s42, 0
      %p300 = por %p298, %p299
      %s302 = sadd.s32 %s301, 1
      %p305 = scmp.eq.s32.totalorder %s36, 1
      %p306 = scmp.ne.s32.totalorder %s301, %s303
      %p307 = scmp.eq.s32.totalorder %s36, 0
      %p308 = por %p306, %p307
      %p309 = scmp.ne.s32.totalorder %s301, %s303
      %p310 = scmp.eq.s32.totalorder %s41, 1
      %p311 = por %p309, %p310
      %p312 = scmp.ne.s32.totalorder %s303, %s304
      %p313 = scmp.eq.s32.totalorder %s41, 0
      %p314 = por %p312, %p313
      %p315 = scmp.ne.s32.totalorder %s303, %s304
      %p316 = scmp.eq.s32.totalorder %s42, 1
      %p317 = por %p315, %p316
      %p319 = scmp.ne.s32.totalorder %s304, %s318
      %p320 = scmp.eq.s32.totalorder %s42, 0
      %p321 = por %p319, %p320
      %s323 = sadd.s32 %s322, 1
      %p326 = scmp.eq.s32.totalorder %s36, 1
      %p327 = scmp.ne.s32.totalorder %s322, %s324
      %p328 = scmp.eq.s32.totalorder %s36, 0
      %p329 = por %p327, %p328
      %p330 = scmp.ne.s32.totalorder %s322, %s324
      %p331 = scmp.eq.s32.totalorder %s41, 1
      %p332 = por %p330, %p331
      %p333 = scmp.ne.s32.totalorder %s324, %s325
      %p334 = scmp.eq.s32.totalorder %s41, 0
      %p335 = por %p333, %p334
      %p336 = scmp.ne.s32.totalorder %s324, %s325
      %p337 = scmp.eq.s32.totalorder %s42, 1
      %p338 = por %p336, %p337
      %p340 = scmp.ne.s32.totalorder %s325, %s339
      %p341 = scmp.eq.s32.totalorder %s42, 0
      %p342 = por %p340, %p341
      %s344 = sadd.s32 %s343, 1
      %p347 = scmp.eq.s32.totalorder %s36, 1
      %p348 = scmp.ne.s32.totalorder %s343, %s345
      %p349 = scmp.eq.s32.totalorder %s36, 0
      %p350 = por %p348, %p349
      %p351 = scmp.ne.s32.totalorder %s343, %s345
      %p352 = scmp.eq.s32.totalorder %s41, 1
      %p353 = por %p351, %p352
      %p354 = scmp.ne.s32.totalorder %s345, %s346
      %p355 = scmp.eq.s32.totalorder %s41, 0
      %p356 = por %p354, %p355
      %p357 = scmp.ne.s32.totalorder %s345, %s346
      %p358 = scmp.eq.s32.totalorder %s42, 1
      %p359 = por %p357, %p358
      %p361 = scmp.ne.s32.totalorder %s346, %s360
      %p362 = scmp.eq.s32.totalorder %s42, 0
      %p363 = por %p361, %p362
      %s365 = sadd.s32 %s364, 1
      %p368 = scmp.eq.s32.totalorder %s36, 1
      %p369 = scmp.ne.s32.totalorder %s364, %s366
      %p370 = scmp.eq.s32.totalorder %s36, 0
      %p371 = por %p369, %p370
      %p372 = scmp.ne.s32.totalorder %s364, %s366
      %p373 = scmp.eq.s32.totalorder %s41, 1
      %p374 = por %p372, %p373
      %p375 = scmp.ne.s32.totalorder %s366, %s367
      %p376 = scmp.eq.s32.totalorder %s41, 0
      %p377 = por %p375, %p376
      %p378 = scmp.ne.s32.totalorder %s366, %s367
      %p379 = scmp.eq.s32.totalorder %s42, 1
      %p380 = por %p378, %p379
      %p382 = scmp.ne.s32.totalorder %s367, %s381
      %p383 = scmp.eq.s32.totalorder %s42, 0
      %p384 = por %p382, %p383
      %s386 = sadd.s32 %s385, 1
      %p389 = scmp.eq.s32.totalorder %s36, 1
      %p390 = scmp.ne.s32.totalorder %s385, %s387
      %p391 = scmp.eq.s32.totalorder %s36, 0
      %p392 = por %p390, %p391
      %p393 = scmp.ne.s32.totalorder %s385, %s387
      %p394 = scmp.eq.s32.totalorder %s41, 1
      %p395 = por %p393, %p394
      %p396 = scmp.ne.s32.totalorder %s387, %s388
      %p397 = scmp.eq.s32.totalorder %s41, 0
      %p398 = por %p396, %p397
      %p399 = scmp.ne.s32.totalorder %s387, %s388
      %p400 = scmp.eq.s32.totalorder %s42, 1
      %p401 = por %p399, %p400
      %p403 = scmp.ne.s32.totalorder %s388, %s402
      %p404 = scmp.eq.s32.totalorder %s42, 0
      %p405 = por %p403, %p404
      %s407 = sadd.s32 %s406, 1
      %p410 = scmp.eq.s32.totalorder %s36, 1
      %p411 = scmp.ne.s32.totalorder %s406, %s408
      %p412 = scmp.eq.s32.totalorder %s36, 0
      %p413 = por %p411, %p412
      %p414 = scmp.ne.s32.totalorder %s406, %s408
      %p415 = scmp.eq.s32.totalorder %s41, 1
      %p416 = por %p414, %p415
      %p417 = scmp.ne.s32.totalorder %s408, %s409
      %p418 = scmp.eq.s32.totalorder %s41, 0
      %p419 = por %p417, %p418
      %p420 = scmp.ne.s32.totalorder %s408, %s409
      %p421 = scmp.eq.s32.totalorder %s42, 1
      %p422 = por %p420, %p421
      %p424 = scmp.ne.s32.totalorder %s409, %s423
      %p425 = scmp.eq.s32.totalorder %s42, 0
      %p426 = por %p424, %p425
      %s428 = sadd.s32 %s427, 1
      %p431 = scmp.eq.s32.totalorder %s36, 1
      %p432 = scmp.ne.s32.totalorder %s427, %s429
      %p433 = scmp.eq.s32.totalorder %s36, 0
      %p434 = por %p432, %p433
      %p435 = scmp.ne.s32.totalorder %s427, %s429
      %p436 = scmp.eq.s32.totalorder %s41, 1
      %p437 = por %p435, %p436
      %p438 = scmp.ne.s32.totalorder %s429, %s430
      %p439 = scmp.eq.s32.totalorder %s41, 0
      %p440 = por %p438, %p439
      %p441 = scmp.ne.s32.totalorder %s429, %s430
      %p442 = scmp.eq.s32.totalorder %s42, 1
      %p443 = por %p441, %p442
      %p445 = scmp.ne.s32.totalorder %s430, %s444
      %p446 = scmp.eq.s32.totalorder %s42, 0
      %p447 = por %p445, %p446
      %s449 = sadd.s32 %s448, 1
      %p452 = scmp.eq.s32.totalorder %s36, 1
      %p453 = scmp.ne.s32.totalorder %s448, %s450
      %p454 = scmp.eq.s32.totalorder %s36, 0
      %p455 = por %p453, %p454
      %p456 = scmp.ne.s32.totalorder %s448, %s450
      %p457 = scmp.eq.s32.totalorder %s41, 1
      %p458 = por %p456, %p457
      %p459 = scmp.ne.s32.totalorder %s450, %s451
      %p460 = scmp.eq.s32.totalorder %s41, 0
      %p461 = por %p459, %p460
      %p462 = scmp.ne.s32.totalorder %s450, %s451
      %p463 = scmp.eq.s32.totalorder %s42, 1
      %p464 = por %p462, %p463
      %p466 = scmp.ne.s32.totalorder %s451, %s465
      %p467 = scmp.eq.s32.totalorder %s42, 0
      %p468 = por %p466, %p467
      %s470 = sadd.s32 %s469, 1
      %p473 = scmp.eq.s32.totalorder %s36, 1
      %p474 = scmp.ne.s32.totalorder %s469, %s471
      %p475 = scmp.eq.s32.totalorder %s36, 0
      %p476 = por %p474, %p475
      %p477 = scmp.ne.s32.totalorder %s469, %s471
      %p478 = scmp.eq.s32.totalorder %s41, 1
      %p479 = por %p477, %p478
      %p480 = scmp.ne.s32.totalorder %s471, %s472
      %p481 = scmp.eq.s32.totalorder %s41, 0
      %p482 = por %p480, %p481
      %p483 = scmp.ne.s32.totalorder %s471, %s472
      %p484 = scmp.eq.s32.totalorder %s42, 1
      %p485 = por %p483, %p484
      %p487 = scmp.ne.s32.totalorder %s472, %s486
      %p488 = scmp.eq.s32.totalorder %s42, 0
      %p489 = por %p487, %p488
      %s491 = sadd.s32 %s490, 1
      %p494 = scmp.eq.s32.totalorder %s36, 1
      %p495 = scmp.ne.s32.totalorder %s490, %s492
      %p496 = scmp.eq.s32.totalorder %s36, 0
      %p497 = por %p495, %p496
      %p498 = scmp.ne.s32.totalorder %s490, %s492
      %p499 = scmp.eq.s32.totalorder %s41, 1
      %p500 = por %p498, %p499
      %p501 = scmp.ne.s32.totalorder %s492, %s493
      %p502 = scmp.eq.s32.totalorder %s41, 0
      %p503 = por %p501, %p502
      %p504 = scmp.ne.s32.totalorder %s492, %s493
      %p505 = scmp.eq.s32.totalorder %s42, 1
      %p506 = por %p504, %p505
      %p508 = scmp.ne.s32.totalorder %s493, %s507
      %p509 = scmp.eq.s32.totalorder %s42, 0
      %p510 = por %p508, %p509
      %s512 = sadd.s32 %s511, 1
      %p515 = scmp.eq.s32.totalorder %s36, 1
      %p516 = scmp.ne.s32.totalorder %s511, %s513
      %p517 = scmp.eq.s32.totalorder %s36, 0
      %p518 = por %p516, %p517
      %p519 = scmp.ne.s32.totalorder %s511, %s513
      %p520 = scmp.eq.s32.totalorder %s41, 1
      %p521 = por %p519, %p520
      %p522 = scmp.ne.s32.totalorder %s513, %s514
      %p523 = scmp.eq.s32.totalorder %s41, 0
      %p524 = por %p522, %p523
      %p525 = scmp.ne.s32.totalorder %s513, %s514
      %p526 = scmp.eq.s32.totalorder %s42, 1
      %p527 = por %p525, %p526
      %p529 = scmp.ne.s32.totalorder %s514, %s528
      %p530 = scmp.eq.s32.totalorder %s42, 0
      %p531 = por %p529, %p530
      %s532 = ssub.s32 %s36, %s43
      %p533 = scmp.eq.s32.totalorder %s532, 0
      %s535 = sadd.s32 %s534, 1
      %s536 = scalar_select %p533, %s534, %s535
      %p539 = pneg %p533
      %p540 = scmp.eq.s32.totalorder %s36, 1
      %p541 = por %p539, %p540
      %p542 = scmp.ne.s32.totalorder %s534, %s537
      %p543 = scmp.eq.s32.totalorder %s36, 0
      %p544 = por %p542, %p543
      %p545 = scmp.ne.s32.totalorder %s534, %s537
      %p546 = scmp.eq.s32.totalorder %s41, 1
      %p547 = por %p545, %p546
      %p548 = scmp.ne.s32.totalorder %s537, %s538
      %p549 = scmp.eq.s32.totalorder %s41, 0
      %p550 = por %p548, %p549
      %p551 = scmp.ne.s32.totalorder %s537, %s538
      %p552 = scmp.eq.s32.totalorder %s42, 1
      %p553 = por %p551, %p552
      %p555 = scmp.ne.s32.totalorder %s538, %s554
      %p556 = scmp.eq.s32.totalorder %s42, 0
      %p557 = por %p555, %p556
      %s558 = ssub.s32 %s36, %s43
      %p559 = scmp.eq.s32.totalorder %s558, 0
      %s561 = sadd.s32 %s560, 1
      %s562 = scalar_select %p559, %s560, %s561
      %p565 = pneg %p559
      %p566 = scmp.eq.s32.totalorder %s36, 1
      %p567 = por %p565, %p566
      %p568 = scmp.ne.s32.totalorder %s560, %s563
      %p569 = scmp.eq.s32.totalorder %s36, 0
      %p570 = por %p568, %p569
      %p571 = scmp.ne.s32.totalorder %s560, %s563
      %p572 = scmp.eq.s32.totalorder %s41, 1
      %p573 = por %p571, %p572
      %p574 = scmp.ne.s32.totalorder %s563, %s564
      %p575 = scmp.eq.s32.totalorder %s41, 0
      %p576 = por %p574, %p575
      %p577 = scmp.ne.s32.totalorder %s563, %s564
      %p578 = scmp.eq.s32.totalorder %s42, 1
      %p579 = por %p577, %p578
      %p581 = scmp.ne.s32.totalorder %s564, %s580
      %p582 = scmp.eq.s32.totalorder %s42, 0
      %p583 = por %p581, %p582
      %p584 = scmp.le.s32.totalorder 1, %s36
      %p585 = scmp.lt.s32.totalorder %s36, 3
      %p586 = pnand %p584, %p585
      %p587 = pneg %p586
      // Predicated region
      $region9: #{trajectory_model_forward.2} parent=5 // pred_check
        _
      $region10: #{trajectory_model_forward.2} parent=5 // pred_check_branch
        %589 = sbr.rel (%p586) target = $region12
      $region11: #{trajectory_model_forward.2} parent=5 // pred_region
        %s590 = ssub.s32 %s36, 1
        // Predicated region
        $region13: #{trajectory_model_forward.2} parent=11 // pred_check
          %p591 = pneg %p83
        $region14: #{trajectory_model_forward.2} parent=11 // pred_check_branch
          %593 = sbr.rel (%p591) target = $region16
        $region15: #{trajectory_model_forward.2} parent=11 // pred_region
          _
        $region16: #{trajectory_model_forward.2} parent=11 // pred_fallthru
          _
        // Predicated region
        $region17: #{trajectory_model_forward.2} parent=11 // pred_check
          %p594 = pneg %p104
        $region18: #{trajectory_model_forward.2} parent=11 // pred_check_branch
          %596 = sbr.rel (%p594) target = $region20
        $region19: #{trajectory_model_forward.2} parent=11 // pred_region
          _
        $region20: #{trajectory_model_forward.2} parent=11 // pred_fallthru
          _
        // Predicated region
        $region21: #{trajectory_model_forward.2} parent=11 // pred_check
          %p597 = pneg %p125
        $region22: #{trajectory_model_forward.2} parent=11 // pred_check_branch
          %599 = sbr.rel (%p597) target = $region24
        $region23: #{trajectory_model_forward.2} parent=11 // pred_region
          _
        $region24: #{trajectory_model_forward.2} parent=11 // pred_fallthru
          _
        // Predicated region
        $region25: #{trajectory_model_forward.2} parent=11 // pred_check
          %p600 = pneg %p146
        $region26: #{trajectory_model_forward.2} parent=11 // pred_check_branch
          %602 = sbr.rel (%p600) target = $region28
        $region27: #{trajectory_model_forward.2} parent=11 // pred_region
          _
        $region28: #{trajectory_model_forward.2} parent=11 // pred_fallthru
          _
        // Predicated region
        $region29: #{trajectory_model_forward.2} parent=11 // pred_check
          %p603 = pneg %p167
        $region30: #{trajectory_model_forward.2} parent=11 // pred_check_branch
          %605 = sbr.rel (%p603) target = $region32
        $region31: #{trajectory_model_forward.2} parent=11 // pred_region
          _
        $region32: #{trajectory_model_forward.2} parent=11 // pred_fallthru
          _
        // Predicated region
        $region33: #{trajectory_model_forward.2} parent=11 // pred_check
          %p606 = pneg %p188
        $region34: #{trajectory_model_forward.2} parent=11 // pred_check_branch
          %608 = sbr.rel (%p606) target = $region36
        $region35: #{trajectory_model_forward.2} parent=11 // pred_region
          _
        $region36: #{trajectory_model_forward.2} parent=11 // pred_fallthru
          _
        // Predicated region
        $region37: #{trajectory_model_forward.2} parent=11 // pred_check
          %p609 = pneg %p209
        $region38: #{trajectory_model_forward.2} parent=11 // pred_check_branch
          %611 = sbr.rel (%p609) target = $region40
        $region39: #{trajectory_model_forward.2} parent=11 // pred_region
          _
        $region40: #{trajectory_model_forward.2} parent=11 // pred_fallthru
          _
        // Predicated region
        $region41: #{trajectory_model_forward.2} parent=11 // pred_check
          %p612 = pneg %p230
        $region42: #{trajectory_model_forward.2} parent=11 // pred_check_branch
          %614 = sbr.rel (%p612) target = $region44
        $region43: #{trajectory_model_forward.2} parent=11 // pred_region
          _
        $region44: #{trajectory_model_forward.2} parent=11 // pred_fallthru
          _
        // Predicated region
        $region45: #{trajectory_model_forward.2} parent=11 // pred_check
          %p615 = pneg %p251
        $region46: #{trajectory_model_forward.2} parent=11 // pred_check_branch
          %617 = sbr.rel (%p615) target = $region48
        $region47: #{trajectory_model_forward.2} parent=11 // pred_region
          _
        $region48: #{trajectory_model_forward.2} parent=11 // pred_fallthru
          _
        // Predicated region
        $region49: #{trajectory_model_forward.2} parent=11 // pred_check
          %p618 = pneg %p272
        $region50: #{trajectory_model_forward.2} parent=11 // pred_check_branch
          %620 = sbr.rel (%p618) target = $region52
        $region51: #{trajectory_model_forward.2} parent=11 // pred_region
          _
        $region52: #{trajectory_model_forward.2} parent=11 // pred_fallthru
          _
        // Predicated region
        $region53: #{trajectory_model_forward.2} parent=11 // pred_check
          %p621 = pneg %p293
        $region54: #{trajectory_model_forward.2} parent=11 // pred_check_branch
          %623 = sbr.rel (%p621) target = $region56
        $region55: #{trajectory_model_forward.2} parent=11 // pred_region
          _
        $region56: #{trajectory_model_forward.2} parent=11 // pred_fallthru
          _
        // Predicated region
        $region57: #{trajectory_model_forward.2} parent=11 // pred_check
          %p624 = pneg %p314
        $region58: #{trajectory_model_forward.2} parent=11 // pred_check_branch
          %626 = sbr.rel (%p624) target = $region60
        $region59: #{trajectory_model_forward.2} parent=11 // pred_region
          _
        $region60: #{trajectory_model_forward.2} parent=11 // pred_fallthru
          _
        // Predicated region
        $region61: #{trajectory_model_forward.2} parent=11 // pred_check
          %p627 = pneg %p335
        $region62: #{trajectory_model_forward.2} parent=11 // pred_check_branch
          %629 = sbr.rel (%p627) target = $region64
        $region63: #{trajectory_model_forward.2} parent=11 // pred_region
          _
        $region64: #{trajectory_model_forward.2} parent=11 // pred_fallthru
          _
        // Predicated region
        $region65: #{trajectory_model_forward.2} parent=11 // pred_check
          %p630 = pneg %p356
        $region66: #{trajectory_model_forward.2} parent=11 // pred_check_branch
          %632 = sbr.rel (%p630) target = $region68
        $region67: #{trajectory_model_forward.2} parent=11 // pred_region
          _
        $region68: #{trajectory_model_forward.2} parent=11 // pred_fallthru
          _
        // Predicated region
        $region69: #{trajectory_model_forward.2} parent=11 // pred_check
          %p633 = pneg %p377
        $region70: #{trajectory_model_forward.2} parent=11 // pred_check_branch
          %635 = sbr.rel (%p633) target = $region72
        $region71: #{trajectory_model_forward.2} parent=11 // pred_region
          _
        $region72: #{trajectory_model_forward.2} parent=11 // pred_fallthru
          _
        // Predicated region
        $region73: #{trajectory_model_forward.2} parent=11 // pred_check
          %p636 = pneg %p398
        $region74: #{trajectory_model_forward.2} parent=11 // pred_check_branch
          %638 = sbr.rel (%p636) target = $region76
        $region75: #{trajectory_model_forward.2} parent=11 // pred_region
          _
        $region76: #{trajectory_model_forward.2} parent=11 // pred_fallthru
          _
        // Predicated region
        $region77: #{trajectory_model_forward.2} parent=11 // pred_check
          %p639 = pneg %p419
        $region78: #{trajectory_model_forward.2} parent=11 // pred_check_branch
          %641 = sbr.rel (%p639) target = $region80
        $region79: #{trajectory_model_forward.2} parent=11 // pred_region
          _
        $region80: #{trajectory_model_forward.2} parent=11 // pred_fallthru
          _
        // Predicated region
        $region81: #{trajectory_model_forward.2} parent=11 // pred_check
          %p642 = pneg %p440
        $region82: #{trajectory_model_forward.2} parent=11 // pred_check_branch
          %644 = sbr.rel (%p642) target = $region84
        $region83: #{trajectory_model_forward.2} parent=11 // pred_region
          _
        $region84: #{trajectory_model_forward.2} parent=11 // pred_fallthru
          _
        // Predicated region
        $region85: #{trajectory_model_forward.2} parent=11 // pred_check
          %p645 = pneg %p461
        $region86: #{trajectory_model_forward.2} parent=11 // pred_check_branch
          %647 = sbr.rel (%p645) target = $region88
        $region87: #{trajectory_model_forward.2} parent=11 // pred_region
          _
        $region88: #{trajectory_model_forward.2} parent=11 // pred_fallthru
          _
        // Predicated region
        $region89: #{trajectory_model_forward.2} parent=11 // pred_check
          %p648 = pneg %p482
        $region90: #{trajectory_model_forward.2} parent=11 // pred_check_branch
          %650 = sbr.rel (%p648) target = $region92
        $region91: #{trajectory_model_forward.2} parent=11 // pred_region
          _
        $region92: #{trajectory_model_forward.2} parent=11 // pred_fallthru
          _
        // Predicated region
        $region93: #{trajectory_model_forward.2} parent=11 // pred_check
          %p651 = pneg %p503
        $region94: #{trajectory_model_forward.2} parent=11 // pred_check_branch
          %653 = sbr.rel (%p651) target = $region96
        $region95: #{trajectory_model_forward.2} parent=11 // pred_region
          _
        $region96: #{trajectory_model_forward.2} parent=11 // pred_fallthru
          _
        // Predicated region
        $region97: #{trajectory_model_forward.2} parent=11 // pred_check
          %p654 = pneg %p524
        $region98: #{trajectory_model_forward.2} parent=11 // pred_check_branch
          %656 = sbr.rel (%p654) target = $region100
        $region99: #{trajectory_model_forward.2} parent=11 // pred_region
          _
        $region100: #{trajectory_model_forward.2} parent=11 // pred_fallthru
          _
      $region12: #{trajectory_model_forward.2} parent=5 // pred_fallthru
        _
      %p657 = scmp.lt.s32.totalorder %s36, 2
      // Predicated region
      $region101: #{trajectory_model_forward.2} parent=5 // pred_check
        %p658 = pneg %p657
      $region102: #{trajectory_model_forward.2} parent=5 // pred_check_branch
        %660 = sbr.rel (%p658) target = $region104
      $region103: #{trajectory_model_forward.2} parent=5 // pred_region
        // Predicated region
        $region105: #{trajectory_model_forward.2} parent=103 // pred_check
          %p661 = pneg %p56
        $region106: #{trajectory_model_forward.2} parent=103 // pred_check_branch
          %663 = sbr.rel (%p661) target = $region108
        $region107: #{trajectory_model_forward.2} parent=103 // pred_region
          %p664 = scmp.lt.s32.totalorder %s36, 1
          %s665 = scalar_select %p664, %s36, 1
          %s666 = smul.addr %s665, 32
          %s667 = smul.addr %s666, 8
          %s668 = scalar_lea.vmem %s0, %s667
        $region108: #{trajectory_model_forward.2} parent=103 // pred_fallthru
          _
      $region104: #{trajectory_model_forward.2} parent=5 // pred_fallthru
        _
      %p669 = scmp.le.s32.totalorder 1, %s36
      %p670 = scmp.lt.s32.totalorder %s36, 3
      %p671 = pnand %p669, %p670
      %p672 = pneg %p671
      // Predicated region
      $region109: #{trajectory_model_forward.2} parent=5 // pred_check
        _
      $region110: #{trajectory_model_forward.2} parent=5 // pred_check_branch
        %674 = sbr.rel (%p671) target = $region112
      $region111: #{trajectory_model_forward.2} parent=5 // pred_region
        %s675 = ssub.s32 %s36, 1
        %p676 = scmp.lt.s32.totalorder %s41, 1
        %s677 = scalar_select %p676, %s41, 1
        %s678 = smul.addr %s677, 32
        %s679 = smul.addr %s678, 8
        %s680 = scalar_lea.vmem %s0, %s679
        %p681 = pneg %p62
        %p682 = pneg %p59
        %p683 = pneg %p83
        %p684 = pneg %p80
        %p685 = pneg %p104
        %p686 = pneg %p101
        %p687 = pneg %p125
        %p688 = pneg %p122
        %p689 = pneg %p146
        %p690 = pneg %p143
        %p691 = pneg %p167
        %p692 = pneg %p164
        %p693 = pneg %p188
        %p694 = pneg %p185
        %p695 = pneg %p209
        %p696 = pneg %p206
        %p697 = pneg %p230
        %p698 = pneg %p227
        %p699 = pneg %p251
        %p700 = pneg %p248
        %p701 = pneg %p272
        %p702 = pneg %p269
        %p703 = pneg %p293
        %p704 = pneg %p290
        %p705 = pneg %p314
        %p706 = pneg %p311
        %p707 = pneg %p335
        %p708 = pneg %p332
        %p709 = pneg %p356
        %p710 = pneg %p353
        %p711 = pneg %p377
        %p712 = pneg %p374
        %p713 = pneg %p398
        %p714 = pneg %p395
        %p715 = pneg %p419
        %p716 = pneg %p416
        %p717 = pneg %p440
        %p718 = pneg %p437
        %p719 = pneg %p461
        %p720 = pneg %p458
        %p721 = pneg %p482
        %p722 = pneg %p479
        %p723 = pneg %p503
        %p724 = pneg %p500
        %p725 = pneg %p524
        %p726 = pneg %p521
        %p727 = pneg %p550
        %p728 = pneg %p547
        %p729 = scmp.lt.s32.totalorder %s41, 1
        %s730 = scalar_select %p729, %s41, 1
        %s731 = smul.addr %s730, 16
        %s732 = smul.addr %s731, 8
        %s733 = scalar_lea.vmem %s23, %s732
        %p734 = pneg %p576
        %p735 = pneg %p573
        %s736 = sand.u32 %s563, 1
        %s737 = scalar_lea.sflag [#allocation4], %s736
        %s738 = sand.u32 %s563, 1
        %s739 = scalar_lea.vmem [#allocation3], %s738
        %p740 = scmp.lt.s32.totalorder %s41, 1
        %s741 = scalar_select %p740, %s41, 1
        %s742 = smul.addr %s741, 32
        %s743 = smul.addr %s742, 8
        %s744 = scalar_lea.vmem %s0, %s743
        %p745 = scmp.lt.s32.totalorder %s41, 1
        %s746 = scalar_select %p745, %s41, 1
        %s747 = smul.addr %s746, 16
        %s748 = smul.addr %s747, 8
        %s749 = scalar_lea.vmem %s23, %s748
        %v750 = vld [vmem:[%s1] sm:$0xff]
        %v751 = vld [vmem:[%s2] sm:$0xff]
        %v752 = vld [vmem:[%s3] sm:$0xff]
        %v753 = vld [vmem:[%s3 + $0x8] sm:$0xff]
        %v754 = vld [vmem:[%s3 + $0x10] sm:$0xff]
        %v755 = vld [vmem:[%s3 + $0x18] sm:$0xff]
        %v756 = vld [vmem:[%s3 + $0x20] sm:$0xff]
        %v757 = vld [vmem:[%s3 + $0x28] sm:$0xff]
        %v758 = vld [vmem:[%s3 + $0x30] sm:$0xff]
        %v759 = vld [vmem:[%s3 + $0x38] sm:$0xff]
        %v760 = vld [vmem:[%s3 + $0x40] sm:$0xff]
        %v761 = vld [vmem:[%s3 + $0x48] sm:$0xff]
        %v762 = vld [vmem:[%s3 + $0x50] sm:$0xff]
        %v763 = vld [vmem:[%s3 + $0x58] sm:$0xff]
        %v764 = vld [vmem:[%s3 + $0x60] sm:$0xff]
        %v765 = vld [vmem:[%s3 + $0x68] sm:$0xff]
        %v766 = vld [vmem:[%s3 + $0x70] sm:$0xff]
        %v767 = vld [vmem:[%s3 + $0x78] sm:$0xff]
        %v768 = vld [vmem:[%s4] sm:$0xff]
        %v769 = vld [vmem:[%s4 + $0x8] sm:$0xff]
        %v770 = vld [vmem:[%s4 + $0x10] sm:$0xff]
        %v771 = vld [vmem:[%s4 + $0x18] sm:$0xff]
        %v772 = vld [vmem:[%s4 + $0x20] sm:$0xff]
        %v773 = vld [vmem:[%s4 + $0x28] sm:$0xff]
        %v774 = vld [vmem:[%s4 + $0x30] sm:$0xff]
        %v775 = vld [vmem:[%s4 + $0x38] sm:$0xff]
        %v776 = vld [vmem:[%s4 + $0x40] sm:$0xff]
        %v777 = vld [vmem:[%s4 + $0x48] sm:$0xff]
        %v778 = vld [vmem:[%s4 + $0x50] sm:$0xff]
        %v779 = vld [vmem:[%s4 + $0x58] sm:$0xff]
        %v780 = vld [vmem:[%s4 + $0x60] sm:$0xff]
        %v781 = vld [vmem:[%s4 + $0x68] sm:$0xff]
        %v782 = vld [vmem:[%s4 + $0x70] sm:$0xff]
        %v783 = vld [vmem:[%s4 + $0x78] sm:$0xff]
        %v784 = vld [vmem:[%s744] sm:$0xff]
        %v785 = vld [vmem:[%s744 + $0x8] sm:$0xff]
        %v786 = vld [vmem:[%s744 + $0x10] sm:$0xff]
        %v787 = vld [vmem:[%s744 + $0x18] sm:$0xff]
        %v788 = vld [vmem:[%s744 + $0x20] sm:$0xff]
        %v789 = vld [vmem:[%s744 + $0x28] sm:$0xff]
        %v790 = vld [vmem:[%s744 + $0x30] sm:$0xff]
        %v791 = vld [vmem:[%s744 + $0x38] sm:$0xff]
        %v792 = vld [vmem:[%s744 + $0x40] sm:$0xff]
        %v793 = vld [vmem:[%s744 + $0x48] sm:$0xff]
        %v794 = vld [vmem:[%s744 + $0x50] sm:$0xff]
        %v795 = vld [vmem:[%s744 + $0x58] sm:$0xff]
        %v796 = vld [vmem:[%s744 + $0x60] sm:$0xff]
        %v797 = vld [vmem:[%s744 + $0x68] sm:$0xff]
        %v798 = vld [vmem:[%s744 + $0x70] sm:$0xff]
        %v799 = vld [vmem:[%s744 + $0x78] sm:$0xff]
        %s800 = scalar_lea.vmem %s744, 128
        %v801 = vld [vmem:[%s800] sm:$0xff]
        %v802 = vld [vmem:[%s800 + $0x8] sm:$0xff]
        %v803 = vld [vmem:[%s800 + $0x10] sm:$0xff]
        %v804 = vld [vmem:[%s800 + $0x18] sm:$0xff]
        %v805 = vld [vmem:[%s800 + $0x20] sm:$0xff]
        %v806 = vld [vmem:[%s800 + $0x28] sm:$0xff]
        %v807 = vld [vmem:[%s800 + $0x30] sm:$0xff]
        %v808 = vld [vmem:[%s800 + $0x38] sm:$0xff]
        %v809 = vld [vmem:[%s800 + $0x40] sm:$0xff]
        %v810 = vld [vmem:[%s800 + $0x48] sm:$0xff]
        %v811 = vld [vmem:[%s800 + $0x50] sm:$0xff]
        %v812 = vld [vmem:[%s800 + $0x58] sm:$0xff]
        %v813 = vld [vmem:[%s800 + $0x60] sm:$0xff]
        %v814 = vld [vmem:[%s800 + $0x68] sm:$0xff]
        %v815 = vld [vmem:[%s800 + $0x70] sm:$0xff]
        %v816 = vld [vmem:[%s800 + $0x78] sm:$0xff]
        %v817 = vadd.f32 %v784, %v801
        %v818 = vadd.f32 %v785, %v802
        %v819 = vadd.f32 %v786, %v803
        %v820 = vadd.f32 %v787, %v804
        %v821 = vadd.f32 %v788, %v805
        %v822 = vadd.f32 %v789, %v806
        %v823 = vadd.f32 %v790, %v807
        %v824 = vadd.f32 %v791, %v808
        %v825 = vadd.f32 %v792, %v809
        %v826 = vadd.f32 %v793, %v810
        %v827 = vadd.f32 %v794, %v811
        %v828 = vadd.f32 %v795, %v812
        %v829 = vadd.f32 %v796, %v813
        %v830 = vadd.f32 %v797, %v814
        %v831 = vadd.f32 %v798, %v815
        %v832 = vadd.f32 %v799, %v816
        %v833 = vmax.f32 %v784, %v801
        %v834 = vmax.f32 %v785, %v802
        %v835 = vmax.f32 %v786, %v803
        %v836 = vmax.f32 %v787, %v804
        %v837 = vmax.f32 %v788, %v805
        %v838 = vmax.f32 %v789, %v806
        %v839 = vmax.f32 %v790, %v807
        %v840 = vmax.f32 %v791, %v808
        %v841 = vmax.f32 %v792, %v809
        %v842 = vmax.f32 %v793, %v810
        %v843 = vmax.f32 %v794, %v811
        %v844 = vmax.f32 %v795, %v812
        %v845 = vmax.f32 %v796, %v813
        %v846 = vmax.f32 %v797, %v814
        %v847 = vmax.f32 %v798, %v815
        %v848 = vmax.f32 %v799, %v816
        %v849 = vmul.f32 %v817, 0.5
        %v850 = vmul.f32 %v818, 0.5
        %v851 = vmul.f32 %v819, 0.5
        %v852 = vmul.f32 %v820, 0.5
        %v853 = vmul.f32 %v821, 0.5
        %v854 = vmul.f32 %v822, 0.5
        %v855 = vmul.f32 %v823, 0.5
        %v856 = vmul.f32 %v824, 0.5
        %v857 = vmul.f32 %v825, 0.5
        %v858 = vmul.f32 %v826, 0.5
        %v859 = vmul.f32 %v827, 0.5
        %v860 = vmul.f32 %v828, 0.5
        %v861 = vmul.f32 %v829, 0.5
        %v862 = vmul.f32 %v830, 0.5
        %v863 = vmul.f32 %v831, 0.5
        %v864 = vmul.f32 %v832, 0.5
        %866 = vset.pattern.permute.xlu0 0
        %867 = vperm.xlu0 %866, %v751
        %v868 = vpop.permute.xlu0 %867
        %870 = vmatpush.msra.mxu0 %v864
        %871 = vmatpush.msra.mxu0 %v863
        %872 = vmatpush.msra.mxu0 %v862
        %873 = vmatpush.msra.mxu0 %v861
        %874 = vmatpush.msra.mxu0 %v860
        %875 = vmatpush.msra.mxu0 %v859
        %876 = vmatpush.msra.mxu0 %v858
        %877 = vmatpush.msra.mxu0 %v857
        %878 = vmatpush.msra.mxu0 %v856
        %879 = vmatpush.msra.mxu0 %v855
        %880 = vmatpush.msra.mxu0 %v854
        %881 = vmatpush.msra.mxu0 %v853
        %882 = vmatpush.msra.mxu0 %v852
        %883 = vmatpush.msra.mxu0 %v851
        %884 = vmatpush.msra.mxu0 %v850
        %885 = vmatpush.msra.mxu0 %v849
        %886 = vmatmul.f32.gmra.mxu0 %v750
        %v887 = vpop.f32.mrf.mxu0
        %v888 = vadd.f32 %v868, %v887
        %889 = vdwg.mxu0
        %v890 = vmax.f32 %v888, 0.0
        %892 = vset.pattern.permute.xlu0 0
        %893 = vperm.xlu0 %892, %v768
        %v894 = vpop.permute.xlu0 %893
        %897 = vset.pattern.permute.xlu0 0
        %898 = vperm.xlu0 %897, %v769
        %v899 = vpop.permute.xlu0 %898
        %902 = vset.pattern.permute.xlu0 0
        %903 = vperm.xlu0 %902, %v770
        %v904 = vpop.permute.xlu0 %903
        %907 = vset.pattern.permute.xlu0 0
        %908 = vperm.xlu0 %907, %v771
        %v909 = vpop.permute.xlu0 %908
        %912 = vset.pattern.permute.xlu0 0
        %913 = vperm.xlu0 %912, %v772
        %v914 = vpop.permute.xlu0 %913
        %917 = vset.pattern.permute.xlu0 0
        %918 = vperm.xlu0 %917, %v773
        %v919 = vpop.permute.xlu0 %918
        %922 = vset.pattern.permute.xlu0 0
        %923 = vperm.xlu0 %922, %v774
        %v924 = vpop.permute.xlu0 %923
        %927 = vset.pattern.permute.xlu0 0
        %928 = vperm.xlu0 %927, %v775
        %v929 = vpop.permute.xlu0 %928
        %932 = vset.pattern.permute.xlu0 0
        %933 = vperm.xlu0 %932, %v776
        %v934 = vpop.permute.xlu0 %933
        %937 = vset.pattern.permute.xlu0 0
        %938 = vperm.xlu0 %937, %v777
        %v939 = vpop.permute.xlu0 %938
        %942 = vset.pattern.permute.xlu0 0
        %943 = vperm.xlu0 %942, %v778
        %v944 = vpop.permute.xlu0 %943
        %947 = vset.pattern.permute.xlu0 0
        %948 = vperm.xlu0 %947, %v779
        %v949 = vpop.permute.xlu0 %948
        %952 = vset.pattern.permute.xlu0 0
        %953 = vperm.xlu0 %952, %v780
        %v954 = vpop.permute.xlu0 %953
        %957 = vset.pattern.permute.xlu0 0
        %958 = vperm.xlu0 %957, %v781
        %v959 = vpop.permute.xlu0 %958
        %962 = vset.pattern.permute.xlu0 0
        %963 = vperm.xlu0 %962, %v782
        %v964 = vpop.permute.xlu0 %963
        %967 = vset.pattern.permute.xlu0 0
        %968 = vperm.xlu0 %967, %v783
        %v969 = vpop.permute.xlu0 %968
        %vm971 = vcmask 64512
        %v973 = vsel %vm971, %v752, 0
        %v976 = vsel %vm971, %v753, 0
        %v979 = vsel %vm971, %v754, 0
        %v982 = vsel %vm971, %v755, 0
        %v985 = vsel %vm971, %v756, 0
        %v988 = vsel %vm971, %v757, 0
        %v991 = vsel %vm971, %v758, 0
        %v994 = vsel %vm971, %v759, 0
        %v997 = vsel %vm971, %v760, 0
        %v1000 = vsel %vm971, %v761, 0
        %v1003 = vsel %vm971, %v762, 0
        %v1006 = vsel %vm971, %v763, 0
        %v1009 = vsel %vm971, %v764, 0
        %v1012 = vsel %vm971, %v765, 0
        %v1015 = vsel %vm971, %v766, 0
        %v1018 = vsel %vm971, %v767, 0
        %1020 = vmatpush.msra.mxu0 0.0
        %1021 = vmatpush.msra.mxu0 0.0
        %1022 = vmatpush.msra.mxu0 0.0
        %1023 = vmatpush.msra.mxu0 0.0
        %1024 = vmatpush.msra.mxu0 0.0
        %1025 = vmatpush.msra.mxu0 0.0
        %1026 = vmatpush.msra.mxu0 0.0
        %1027 = vmatpush.msra.mxu0 0.0
        %1028 = vmatpush.msra.mxu0 0.0
        %1029 = vmatpush.msra.mxu0 0.0
        %1030 = vmatpush.msra.mxu0 0.0
        %1031 = vmatpush.msra.mxu0 0.0
        %1032 = vmatpush.msra.mxu0 0.0
        %1033 = vmatpush.msra.mxu0 0.0
        %1034 = vmatpush.msra.mxu0 0.0
        %1035 = vmatpush.msra.mxu0 %v890
        %1036 = vmatmul.f32.gmra.mxu0 %v973
        %v1037 = vpop.f32.mrf.mxu0
        %v1038 = vadd.f32 %v894, %v1037
        %1039 = vmatmul.f32.gmra.mxu0 %v976
        %v1040 = vpop.f32.mrf.mxu0
        %v1041 = vadd.f32 %v899, %v1040
        %1042 = vmatmul.f32.gmra.mxu0 %v979
        %v1043 = vpop.f32.mrf.mxu0
        %v1044 = vadd.f32 %v904, %v1043
        %1045 = vmatmul.f32.gmra.mxu0 %v982
        %v1046 = vpop.f32.mrf.mxu0
        %v1047 = vadd.f32 %v909, %v1046
        %1048 = vmatmul.f32.gmra.mxu0 %v985
        %v1049 = vpop.f32.mrf.mxu0
        %v1050 = vadd.f32 %v914, %v1049
        %1051 = vmatmul.f32.gmra.mxu0 %v988
        %v1052 = vpop.f32.mrf.mxu0
        %v1053 = vadd.f32 %v919, %v1052
        %1054 = vmatmul.f32.gmra.mxu0 %v991
        %v1055 = vpop.f32.mrf.mxu0
        %v1056 = vadd.f32 %v924, %v1055
        %1057 = vmatmul.f32.gmra.mxu0 %v994
        %v1058 = vpop.f32.mrf.mxu0
        %v1059 = vadd.f32 %v929, %v1058
        %1060 = vmatmul.f32.gmra.mxu0 %v997
        %v1061 = vpop.f32.mrf.mxu0
        %v1062 = vadd.f32 %v934, %v1061
        %1063 = vmatmul.f32.gmra.mxu0 %v1000
        %v1064 = vpop.f32.mrf.mxu0
        %v1065 = vadd.f32 %v939, %v1064
        %1066 = vmatmul.f32.gmra.mxu0 %v1003
        %v1067 = vpop.f32.mrf.mxu0
        %v1068 = vadd.f32 %v944, %v1067
        %1069 = vmatmul.f32.gmra.mxu0 %v1006
        %v1070 = vpop.f32.mrf.mxu0
        %v1071 = vadd.f32 %v949, %v1070
        %1072 = vmatmul.f32.gmra.mxu0 %v1009
        %v1073 = vpop.f32.mrf.mxu0
        %v1074 = vadd.f32 %v954, %v1073
        %1075 = vmatmul.f32.gmra.mxu0 %v1012
        %v1076 = vpop.f32.mrf.mxu0
        %v1077 = vadd.f32 %v959, %v1076
        %1078 = vmatmul.f32.gmra.mxu0 %v1015
        %v1079 = vpop.f32.mrf.mxu0
        %v1080 = vadd.f32 %v964, %v1079
        %1081 = vmatmul.f32.gmra.mxu0 %v1018
        %v1082 = vpop.f32.mrf.mxu0
        %v1083 = vadd.f32 %v969, %v1082
        %1084 = vdwg.mxu0
        %1085 = vmatpush.msra.mxu0 %v848
        %1086 = vmatpush.msra.mxu0 %v847
        %1087 = vmatpush.msra.mxu0 %v846
        %1088 = vmatpush.msra.mxu0 %v845
        %1089 = vmatpush.msra.mxu0 %v844
        %1090 = vmatpush.msra.mxu0 %v843
        %1091 = vmatpush.msra.mxu0 %v842
        %1092 = vmatpush.msra.mxu0 %v841
        %1093 = vmatpush.msra.mxu0 %v840
        %1094 = vmatpush.msra.mxu0 %v839
        %1095 = vmatpush.msra.mxu0 %v838
        %1096 = vmatpush.msra.mxu0 %v837
        %1097 = vmatpush.msra.mxu0 %v836
        %1098 = vmatpush.msra.mxu0 %v835
        %1099 = vmatpush.msra.mxu0 %v834
        %1100 = vmatpush.msra.mxu0 %v833
        %1101 = vmatmul.f32.gmra.mxu0 %v750
        %v1102 = vpop.f32.mrf.mxu0
        %v1103 = vadd.f32 %v868, %v1102
        %1104 = vdwg.mxu0
        %v1105 = vmax.f32 %v1103, 0.0
        %1106 = vmatpush.msra.mxu0 0.0
        %1107 = vmatpush.msra.mxu0 0.0
        %1108 = vmatpush.msra.mxu0 0.0
        %1109 = vmatpush.msra.mxu0 0.0
        %1110 = vmatpush.msra.mxu0 0.0
        %1111 = vmatpush.msra.mxu0 0.0
        %1112 = vmatpush.msra.mxu0 0.0
        %1113 = vmatpush.msra.mxu0 0.0
        %1114 = vmatpush.msra.mxu0 0.0
        %1115 = vmatpush.msra.mxu0 0.0
        %1116 = vmatpush.msra.mxu0 0.0
        %1117 = vmatpush.msra.mxu0 0.0
        %1118 = vmatpush.msra.mxu0 0.0
        %1119 = vmatpush.msra.mxu0 0.0
        %1120 = vmatpush.msra.mxu0 0.0
        %1121 = vmatpush.msra.mxu0 %v1105
        %1122 = vmatmul.f32.gmra.mxu0 %v973
        %v1123 = vpop.f32.mrf.mxu0
        %v1124 = vadd.f32 %v894, %v1123
        %1125 = vmatmul.f32.gmra.mxu0 %v976
        %v1126 = vpop.f32.mrf.mxu0
        %v1127 = vadd.f32 %v899, %v1126
        %1128 = vmatmul.f32.gmra.mxu0 %v979
        %v1129 = vpop.f32.mrf.mxu0
        %v1130 = vadd.f32 %v904, %v1129
        %1131 = vmatmul.f32.gmra.mxu0 %v982
        %v1132 = vpop.f32.mrf.mxu0
        %v1133 = vadd.f32 %v909, %v1132
        %1134 = vmatmul.f32.gmra.mxu0 %v985
        %v1135 = vpop.f32.mrf.mxu0
        %v1136 = vadd.f32 %v914, %v1135
        %1137 = vmatmul.f32.gmra.mxu0 %v988
        %v1138 = vpop.f32.mrf.mxu0
        %v1139 = vadd.f32 %v919, %v1138
        %1140 = vmatmul.f32.gmra.mxu0 %v991
        %v1141 = vpop.f32.mrf.mxu0
        %v1142 = vadd.f32 %v924, %v1141
        %1143 = vmatmul.f32.gmra.mxu0 %v994
        %v1144 = vpop.f32.mrf.mxu0
        %v1145 = vadd.f32 %v929, %v1144
        %1146 = vmatmul.f32.gmra.mxu0 %v997
        %v1147 = vpop.f32.mrf.mxu0
        %v1148 = vadd.f32 %v934, %v1147
        %1149 = vmatmul.f32.gmra.mxu0 %v1000
        %v1150 = vpop.f32.mrf.mxu0
        %v1151 = vadd.f32 %v939, %v1150
        %1152 = vmatmul.f32.gmra.mxu0 %v1003
        %v1153 = vpop.f32.mrf.mxu0
        %v1154 = vadd.f32 %v944, %v1153
        %1155 = vmatmul.f32.gmra.mxu0 %v1006
        %v1156 = vpop.f32.mrf.mxu0
        %v1157 = vadd.f32 %v949, %v1156
        %1158 = vmatmul.f32.gmra.mxu0 %v1009
        %v1159 = vpop.f32.mrf.mxu0
        %v1160 = vadd.f32 %v954, %v1159
        %1161 = vmatmul.f32.gmra.mxu0 %v1012
        %v1162 = vpop.f32.mrf.mxu0
        %v1163 = vadd.f32 %v959, %v1162
        %1164 = vmatmul.f32.gmra.mxu0 %v1015
        %v1165 = vpop.f32.mrf.mxu0
        %v1166 = vadd.f32 %v964, %v1165
        %1167 = vmatmul.f32.gmra.mxu0 %v1018
        %v1168 = vpop.f32.mrf.mxu0
        %v1169 = vadd.f32 %v969, %v1168
        %1170 = vdwg.mxu0
        %v1171 = vadd.f32 %v1038, %v1124
        %v1172 = vadd.f32 %v1041, %v1127
        %v1173 = vadd.f32 %v1044, %v1130
        %v1174 = vadd.f32 %v1047, %v1133
        %v1175 = vadd.f32 %v1050, %v1136
        %v1176 = vadd.f32 %v1053, %v1139
        %v1177 = vadd.f32 %v1056, %v1142
        %v1178 = vadd.f32 %v1059, %v1145
        %v1179 = vadd.f32 %v1062, %v1148
        %v1180 = vadd.f32 %v1065, %v1151
        %v1181 = vadd.f32 %v1068, %v1154
        %v1182 = vadd.f32 %v1071, %v1157
        %v1183 = vadd.f32 %v1074, %v1160
        %v1184 = vadd.f32 %v1077, %v1163
        %v1185 = vadd.f32 %v1080, %v1166
        %v1186 = vadd.f32 %v1083, %v1169
        %v1187 = vxor.u32 %v1171, 2147483648
        %v1188 = vxor.u32 %v1172, 2147483648
        %v1189 = vxor.u32 %v1173, 2147483648
        %v1190 = vxor.u32 %v1174, 2147483648
        %v1191 = vxor.u32 %v1175, 2147483648
        %v1192 = vxor.u32 %v1176, 2147483648
        %v1193 = vxor.u32 %v1177, 2147483648
        %v1194 = vxor.u32 %v1178, 2147483648
        %v1195 = vxor.u32 %v1179, 2147483648
        %v1196 = vxor.u32 %v1180, 2147483648
        %v1197 = vxor.u32 %v1181, 2147483648
        %v1198 = vxor.u32 %v1182, 2147483648
        %v1199 = vxor.u32 %v1183, 2147483648
        %v1200 = vxor.u32 %v1184, 2147483648
        %v1201 = vxor.u32 %v1185, 2147483648
        %v1202 = vxor.u32 %v1186, 2147483648
        %v1203 = vmul.f32 %v1187, 1.442695
        %v1204 = vpow.pop %v1203
        %v1205 = vmul.f32 %v1188, 1.442695
        %v1206 = vpow.pop %v1205
        %v1207 = vmul.f32 %v1189, 1.442695
        %v1208 = vpow.pop %v1207
        %v1209 = vmul.f32 %v1190, 1.442695
        %v1210 = vpow.pop %v1209
        %v1211 = vmul.f32 %v1191, 1.442695
        %v1212 = vpow.pop %v1211
        %v1213 = vmul.f32 %v1192, 1.442695
        %v1214 = vpow.pop %v1213
        %v1215 = vmul.f32 %v1193, 1.442695
        %v1216 = vpow.pop %v1215
        %v1217 = vmul.f32 %v1194, 1.442695
        %v1218 = vpow.pop %v1217
        %v1219 = vmul.f32 %v1195, 1.442695
        %v1220 = vpow.pop %v1219
        %v1221 = vmul.f32 %v1196, 1.442695
        %v1222 = vpow.pop %v1221
        %v1223 = vmul.f32 %v1197, 1.442695
        %v1224 = vpow.pop %v1223
        %v1225 = vmul.f32 %v1198, 1.442695
        %v1226 = vpow.pop %v1225
        %v1227 = vmul.f32 %v1199, 1.442695
        %v1228 = vpow.pop %v1227
        %v1229 = vmul.f32 %v1200, 1.442695
        %v1230 = vpow.pop %v1229
        %v1231 = vmul.f32 %v1201, 1.442695
        %v1232 = vpow.pop %v1231
        %v1233 = vmul.f32 %v1202, 1.442695
        %v1234 = vpow.pop %v1233
        %v1235 = vadd.f32 %v1204, 1.0
        %v1236 = vadd.f32 %v1206, 1.0
        %v1237 = vadd.f32 %v1208, 1.0
        %v1238 = vadd.f32 %v1210, 1.0
        %v1239 = vadd.f32 %v1212, 1.0
        %v1240 = vadd.f32 %v1214, 1.0
        %v1241 = vadd.f32 %v1216, 1.0
        %v1242 = vadd.f32 %v1218, 1.0
        %v1243 = vadd.f32 %v1220, 1.0
        %v1244 = vadd.f32 %v1222, 1.0
        %v1245 = vadd.f32 %v1224, 1.0
        %v1246 = vadd.f32 %v1226, 1.0
        %v1247 = vadd.f32 %v1228, 1.0
        %v1248 = vadd.f32 %v1230, 1.0
        %v1249 = vadd.f32 %v1232, 1.0
        %v1250 = vadd.f32 %v1234, 1.0
        %v1251 = vrcp.pop %v1235
        %v1252 = vmul.f32 %v1235, %v1251
        %v1253 = vsub.f32 1.0, %v1252
        %v1254 = vmul.f32 %v1251, %v1253
        %v1255 = vadd.f32 %v1251, %v1254
        %vm1256 = vweird.f32 %v1235
        %vm1257 = vweird.f32 %v1251
        %vm1258 = vmor %vm1256, %vm1257
        %v1259 = vsel %vm1258, %v1251, %v1255
        %v1260 = vand.u32 2147483647, %v1235
        %vm1261 = vcmp.eq.f32.partialorder %v1260, 8.507059e+37
        %v1262 = vand.u32 %v1235, 2147483648
        %v1263 = vor.u32 1.1754944e-38, %v1262
        %v1264 = vsel %vm1261, %v1263, %v1259
        %v1265 = vmul.f32 1.0, %v1264
        %v1266 = vrcp.pop %v1236
        %v1267 = vmul.f32 %v1236, %v1266
        %v1268 = vsub.f32 1.0, %v1267
        %v1269 = vmul.f32 %v1266, %v1268
        %v1270 = vadd.f32 %v1266, %v1269
        %vm1271 = vweird.f32 %v1236
        %vm1272 = vweird.f32 %v1266
        %vm1273 = vmor %vm1271, %vm1272
        %v1274 = vsel %vm1273, %v1266, %v1270
        %v1275 = vand.u32 2147483647, %v1236
        %vm1276 = vcmp.eq.f32.partialorder %v1275, 8.507059e+37
        %v1277 = vand.u32 %v1236, 2147483648
        %v1278 = vor.u32 1.1754944e-38, %v1277
        %v1279 = vsel %vm1276, %v1278, %v1274
        %v1280 = vmul.f32 1.0, %v1279
        %v1281 = vrcp.pop %v1237
        %v1282 = vmul.f32 %v1237, %v1281
        %v1283 = vsub.f32 1.0, %v1282
        %v1284 = vmul.f32 %v1281, %v1283
        %v1285 = vadd.f32 %v1281, %v1284
        %vm1286 = vweird.f32 %v1237
        %vm1287 = vweird.f32 %v1281
        %vm1288 = vmor %vm1286, %vm1287
        %v1289 = vsel %vm1288, %v1281, %v1285
        %v1290 = vand.u32 2147483647, %v1237
        %vm1291 = vcmp.eq.f32.partialorder %v1290, 8.507059e+37
        %v1292 = vand.u32 %v1237, 2147483648
        %v1293 = vor.u32 1.1754944e-38, %v1292
        %v1294 = vsel %vm1291, %v1293, %v1289
        %v1295 = vmul.f32 1.0, %v1294
        %v1296 = vrcp.pop %v1238
        %v1297 = vmul.f32 %v1238, %v1296
        %v1298 = vsub.f32 1.0, %v1297
        %v1299 = vmul.f32 %v1296, %v1298
        %v1300 = vadd.f32 %v1296, %v1299
        %vm1301 = vweird.f32 %v1238
        %vm1302 = vweird.f32 %v1296
        %vm1303 = vmor %vm1301, %vm1302
        %v1304 = vsel %vm1303, %v1296, %v1300
        %v1305 = vand.u32 2147483647, %v1238
        %vm1306 = vcmp.eq.f32.partialorder %v1305, 8.507059e+37
        %v1307 = vand.u32 %v1238, 2147483648
        %v1308 = vor.u32 1.1754944e-38, %v1307
        %v1309 = vsel %vm1306, %v1308, %v1304
        %v1310 = vmul.f32 1.0, %v1309
        %v1311 = vrcp.pop %v1239
        %v1312 = vmul.f32 %v1239, %v1311
        %v1313 = vsub.f32 1.0, %v1312
        %v1314 = vmul.f32 %v1311, %v1313
        %v1315 = vadd.f32 %v1311, %v1314
        %vm1316 = vweird.f32 %v1239
        %vm1317 = vweird.f32 %v1311
        %vm1318 = vmor %vm1316, %vm1317
        %v1319 = vsel %vm1318, %v1311, %v1315
        %v1320 = vand.u32 2147483647, %v1239
        %vm1321 = vcmp.eq.f32.partialorder %v1320, 8.507059e+37
        %v1322 = vand.u32 %v1239, 2147483648
        %v1323 = vor.u32 1.1754944e-38, %v1322
        %v1324 = vsel %vm1321, %v1323, %v1319
        %v1325 = vmul.f32 1.0, %v1324
        %v1326 = vrcp.pop %v1240
        %v1327 = vmul.f32 %v1240, %v1326
        %v1328 = vsub.f32 1.0, %v1327
        %v1329 = vmul.f32 %v1326, %v1328
        %v1330 = vadd.f32 %v1326, %v1329
        %vm1331 = vweird.f32 %v1240
        %vm1332 = vweird.f32 %v1326
        %vm1333 = vmor %vm1331, %vm1332
        %v1334 = vsel %vm1333, %v1326, %v1330
        %v1335 = vand.u32 2147483647, %v1240
        %vm1336 = vcmp.eq.f32.partialorder %v1335, 8.507059e+37
        %v1337 = vand.u32 %v1240, 2147483648
        %v1338 = vor.u32 1.1754944e-38, %v1337
        %v1339 = vsel %vm1336, %v1338, %v1334
        %v1340 = vmul.f32 1.0, %v1339
        %v1341 = vrcp.pop %v1241
        %v1342 = vmul.f32 %v1241, %v1341
        %v1343 = vsub.f32 1.0, %v1342
        %v1344 = vmul.f32 %v1341, %v1343
        %v1345 = vadd.f32 %v1341, %v1344
        %vm1346 = vweird.f32 %v1241
        %vm1347 = vweird.f32 %v1341
        %vm1348 = vmor %vm1346, %vm1347
        %v1349 = vsel %vm1348, %v1341, %v1345
        %v1350 = vand.u32 2147483647, %v1241
        %vm1351 = vcmp.eq.f32.partialorder %v1350, 8.507059e+37
        %v1352 = vand.u32 %v1241, 2147483648
        %v1353 = vor.u32 1.1754944e-38, %v1352
        %v1354 = vsel %vm1351, %v1353, %v1349
        %v1355 = vmul.f32 1.0, %v1354
        %v1356 = vrcp.pop %v1242
        %v1357 = vmul.f32 %v1242, %v1356
        %v1358 = vsub.f32 1.0, %v1357
        %v1359 = vmul.f32 %v1356, %v1358
        %v1360 = vadd.f32 %v1356, %v1359
        %vm1361 = vweird.f32 %v1242
        %vm1362 = vweird.f32 %v1356
        %vm1363 = vmor %vm1361, %vm1362
        %v1364 = vsel %vm1363, %v1356, %v1360
        %v1365 = vand.u32 2147483647, %v1242
        %vm1366 = vcmp.eq.f32.partialorder %v1365, 8.507059e+37
        %v1367 = vand.u32 %v1242, 2147483648
        %v1368 = vor.u32 1.1754944e-38, %v1367
        %v1369 = vsel %vm1366, %v1368, %v1364
        %v1370 = vmul.f32 1.0, %v1369
        %v1371 = vrcp.pop %v1243
        %v1372 = vmul.f32 %v1243, %v1371
        %v1373 = vsub.f32 1.0, %v1372
        %v1374 = vmul.f32 %v1371, %v1373
        %v1375 = vadd.f32 %v1371, %v1374
        %vm1376 = vweird.f32 %v1243
        %vm1377 = vweird.f32 %v1371
        %vm1378 = vmor %vm1376, %vm1377
        %v1379 = vsel %vm1378, %v1371, %v1375
        %v1380 = vand.u32 2147483647, %v1243
        %vm1381 = vcmp.eq.f32.partialorder %v1380, 8.507059e+37
        %v1382 = vand.u32 %v1243, 2147483648
        %v1383 = vor.u32 1.1754944e-38, %v1382
        %v1384 = vsel %vm1381, %v1383, %v1379
        %v1385 = vmul.f32 1.0, %v1384
        %v1386 = vrcp.pop %v1244
        %v1387 = vmul.f32 %v1244, %v1386
        %v1388 = vsub.f32 1.0, %v1387
        %v1389 = vmul.f32 %v1386, %v1388
        %v1390 = vadd.f32 %v1386, %v1389
        %vm1391 = vweird.f32 %v1244
        %vm1392 = vweird.f32 %v1386
        %vm1393 = vmor %vm1391, %vm1392
        %v1394 = vsel %vm1393, %v1386, %v1390
        %v1395 = vand.u32 2147483647, %v1244
        %vm1396 = vcmp.eq.f32.partialorder %v1395, 8.507059e+37
        %v1397 = vand.u32 %v1244, 2147483648
        %v1398 = vor.u32 1.1754944e-38, %v1397
        %v1399 = vsel %vm1396, %v1398, %v1394
        %v1400 = vmul.f32 1.0, %v1399
        %v1401 = vrcp.pop %v1245
        %v1402 = vmul.f32 %v1245, %v1401
        %v1403 = vsub.f32 1.0, %v1402
        %v1404 = vmul.f32 %v1401, %v1403
        %v1405 = vadd.f32 %v1401, %v1404
        %vm1406 = vweird.f32 %v1245
        %vm1407 = vweird.f32 %v1401
        %vm1408 = vmor %vm1406, %vm1407
        %v1409 = vsel %vm1408, %v1401, %v1405
        %v1410 = vand.u32 2147483647, %v1245
        %vm1411 = vcmp.eq.f32.partialorder %v1410, 8.507059e+37
        %v1412 = vand.u32 %v1245, 2147483648
        %v1413 = vor.u32 1.1754944e-38, %v1412
        %v1414 = vsel %vm1411, %v1413, %v1409
        %v1415 = vmul.f32 1.0, %v1414
        %v1416 = vrcp.pop %v1246
        %v1417 = vmul.f32 %v1246, %v1416
        %v1418 = vsub.f32 1.0, %v1417
        %v1419 = vmul.f32 %v1416, %v1418
        %v1420 = vadd.f32 %v1416, %v1419
        %vm1421 = vweird.f32 %v1246
        %vm1422 = vweird.f32 %v1416
        %vm1423 = vmor %vm1421, %vm1422
        %v1424 = vsel %vm1423, %v1416, %v1420
        %v1425 = vand.u32 2147483647, %v1246
        %vm1426 = vcmp.eq.f32.partialorder %v1425, 8.507059e+37
        %v1427 = vand.u32 %v1246, 2147483648
        %v1428 = vor.u32 1.1754944e-38, %v1427
        %v1429 = vsel %vm1426, %v1428, %v1424
        %v1430 = vmul.f32 1.0, %v1429
        %v1431 = vrcp.pop %v1247
        %v1432 = vmul.f32 %v1247, %v1431
        %v1433 = vsub.f32 1.0, %v1432
        %v1434 = vmul.f32 %v1431, %v1433
        %v1435 = vadd.f32 %v1431, %v1434
        %vm1436 = vweird.f32 %v1247
        %vm1437 = vweird.f32 %v1431
        %vm1438 = vmor %vm1436, %vm1437
        %v1439 = vsel %vm1438, %v1431, %v1435
        %v1440 = vand.u32 2147483647, %v1247
        %vm1441 = vcmp.eq.f32.partialorder %v1440, 8.507059e+37
        %v1442 = vand.u32 %v1247, 2147483648
        %v1443 = vor.u32 1.1754944e-38, %v1442
        %v1444 = vsel %vm1441, %v1443, %v1439
        %v1445 = vmul.f32 1.0, %v1444
        %v1446 = vrcp.pop %v1248
        %v1447 = vmul.f32 %v1248, %v1446
        %v1448 = vsub.f32 1.0, %v1447
        %v1449 = vmul.f32 %v1446, %v1448
        %v1450 = vadd.f32 %v1446, %v1449
        %vm1451 = vweird.f32 %v1248
        %vm1452 = vweird.f32 %v1446
        %vm1453 = vmor %vm1451, %vm1452
        %v1454 = vsel %vm1453, %v1446, %v1450
        %v1455 = vand.u32 2147483647, %v1248
        %vm1456 = vcmp.eq.f32.partialorder %v1455, 8.507059e+37
        %v1457 = vand.u32 %v1248, 2147483648
        %v1458 = vor.u32 1.1754944e-38, %v1457
        %v1459 = vsel %vm1456, %v1458, %v1454
        %v1460 = vmul.f32 1.0, %v1459
        %v1461 = vrcp.pop %v1249
        %v1462 = vmul.f32 %v1249, %v1461
        %v1463 = vsub.f32 1.0, %v1462
        %v1464 = vmul.f32 %v1461, %v1463
        %v1465 = vadd.f32 %v1461, %v1464
        %vm1466 = vweird.f32 %v1249
        %vm1467 = vweird.f32 %v1461
        %vm1468 = vmor %vm1466, %vm1467
        %v1469 = vsel %vm1468, %v1461, %v1465
        %v1470 = vand.u32 2147483647, %v1249
        %vm1471 = vcmp.eq.f32.partialorder %v1470, 8.507059e+37
        %v1472 = vand.u32 %v1249, 2147483648
        %v1473 = vor.u32 1.1754944e-38, %v1472
        %v1474 = vsel %vm1471, %v1473, %v1469
        %v1475 = vmul.f32 1.0, %v1474
        %v1476 = vrcp.pop %v1250
        %v1477 = vmul.f32 %v1250, %v1476
        %v1478 = vsub.f32 1.0, %v1477
        %v1479 = vmul.f32 %v1476, %v1478
        %v1480 = vadd.f32 %v1476, %v1479
        %vm1481 = vweird.f32 %v1250
        %vm1482 = vweird.f32 %v1476
        %vm1483 = vmor %vm1481, %vm1482
        %v1484 = vsel %vm1483, %v1476, %v1480
        %v1485 = vand.u32 2147483647, %v1250
        %vm1486 = vcmp.eq.f32.partialorder %v1485, 8.507059e+37
        %v1487 = vand.u32 %v1250, 2147483648
        %v1488 = vor.u32 1.1754944e-38, %v1487
        %v1489 = vsel %vm1486, %v1488, %v1484
        %v1490 = vmul.f32 1.0, %v1489
        %vm1491 = vcmask 162816
        %v1492 = vsel %vm1491, %v784, 0.0
        %1493 = vadd.xlane.f32.xlu0 %v1492
        %v1494 = vpop.xlane.xlu0 %1493
        %v1495 = vsel %vm1491, %v785, 0.0
        %1496 = vadd.xlane.f32.xlu0 %v1495
        %v1497 = vpop.xlane.xlu0 %1496
        %v1498 = vsel %vm1491, %v786, 0.0
        %1499 = vadd.xlane.f32.xlu0 %v1498
        %v1500 = vpop.xlane.xlu0 %1499
        %v1501 = vsel %vm1491, %v787, 0.0
        %1502 = vadd.xlane.f32.xlu0 %v1501
        %v1503 = vpop.xlane.xlu0 %1502
        %v1504 = vsel %vm1491, %v788, 0.0
        %1505 = vadd.xlane.f32.xlu0 %v1504
        %v1506 = vpop.xlane.xlu0 %1505
        %v1507 = vsel %vm1491, %v789, 0.0
        %1508 = vadd.xlane.f32.xlu0 %v1507
        %v1509 = vpop.xlane.xlu0 %1508
        %v1510 = vsel %vm1491, %v790, 0.0
        %1511 = vadd.xlane.f32.xlu0 %v1510
        %v1512 = vpop.xlane.xlu0 %1511
        %v1513 = vsel %vm1491, %v791, 0.0
        %1514 = vadd.xlane.f32.xlu0 %v1513
        %v1515 = vpop.xlane.xlu0 %1514
        %v1516 = vsel %vm1491, %v792, 0.0
        %1517 = vadd.xlane.f32.xlu0 %v1516
        %v1518 = vpop.xlane.xlu0 %1517
        %v1519 = vsel %vm1491, %v793, 0.0
        %1520 = vadd.xlane.f32.xlu0 %v1519
        %v1521 = vpop.xlane.xlu0 %1520
        %v1522 = vsel %vm1491, %v794, 0.0
        %1523 = vadd.xlane.f32.xlu0 %v1522
        %v1524 = vpop.xlane.xlu0 %1523
        %v1525 = vsel %vm1491, %v795, 0.0
        %1526 = vadd.xlane.f32.xlu0 %v1525
        %v1527 = vpop.xlane.xlu0 %1526
        %v1528 = vsel %vm1491, %v796, 0.0
        %1529 = vadd.xlane.f32.xlu0 %v1528
        %v1530 = vpop.xlane.xlu0 %1529
        %v1531 = vsel %vm1491, %v797, 0.0
        %1532 = vadd.xlane.f32.xlu0 %v1531
        %v1533 = vpop.xlane.xlu0 %1532
        %v1534 = vsel %vm1491, %v798, 0.0
        %1535 = vadd.xlane.f32.xlu0 %v1534
        %v1536 = vpop.xlane.xlu0 %1535
        %v1537 = vsel %vm1491, %v799, 0.0
        %1538 = vadd.xlane.f32.xlu0 %v1537
        %v1539 = vpop.xlane.xlu0 %1538
        %v1540 = vrcp.pop 20.0
        %v1541 = vmul.f32 20.0, %v1540
        %v1542 = vsub.f32 1.0, %v1541
        %v1543 = vmul.f32 %v1540, %v1542
        %v1544 = vadd.f32 %v1540, %v1543
        %vm1545 = vweird.f32 %v1540
        %v1546 = vsel %vm1545, %v1540, %v1544
        %v1547 = vmul.f32 %v1494, %v1546
        %v1548 = vmul.f32 %v1497, %v1546
        %v1549 = vmul.f32 %v1500, %v1546
        %v1550 = vmul.f32 %v1503, %v1546
        %v1551 = vmul.f32 %v1506, %v1546
        %v1552 = vmul.f32 %v1509, %v1546
        %v1553 = vmul.f32 %v1512, %v1546
        %v1554 = vmul.f32 %v1515, %v1546
        %v1555 = vmul.f32 %v1518, %v1546
        %v1556 = vmul.f32 %v1521, %v1546
        %v1557 = vmul.f32 %v1524, %v1546
        %v1558 = vmul.f32 %v1527, %v1546
        %v1559 = vmul.f32 %v1530, %v1546
        %v1560 = vmul.f32 %v1533, %v1546
        %v1561 = vmul.f32 %v1536, %v1546
        %v1562 = vmul.f32 %v1539, %v1546
        %v1563 = vsel %vm1491, %v784, -inf
        %1564 = vmax.xlane.f32.xlu0 %v1563
        %v1565 = vpop.xlane.xlu0 %1564
        %v1566 = vsel %vm1491, %v785, -inf
        %1567 = vmax.xlane.f32.xlu0 %v1566
        %v1568 = vpop.xlane.xlu0 %1567
        %v1569 = vsel %vm1491, %v786, -inf
        %1570 = vmax.xlane.f32.xlu0 %v1569
        %v1571 = vpop.xlane.xlu0 %1570
        %v1572 = vsel %vm1491, %v787, -inf
        %1573 = vmax.xlane.f32.xlu0 %v1572
        %v1574 = vpop.xlane.xlu0 %1573
        %v1575 = vsel %vm1491, %v788, -inf
        %1576 = vmax.xlane.f32.xlu0 %v1575
        %v1577 = vpop.xlane.xlu0 %1576
        %v1578 = vsel %vm1491, %v789, -inf
        %1579 = vmax.xlane.f32.xlu0 %v1578
        %v1580 = vpop.xlane.xlu0 %1579
        %v1581 = vsel %vm1491, %v790, -inf
        %1582 = vmax.xlane.f32.xlu0 %v1581
        %v1583 = vpop.xlane.xlu0 %1582
        %v1584 = vsel %vm1491, %v791, -inf
        %1585 = vmax.xlane.f32.xlu0 %v1584
        %v1586 = vpop.xlane.xlu0 %1585
        %v1587 = vsel %vm1491, %v792, -inf
        %1588 = vmax.xlane.f32.xlu0 %v1587
        %v1589 = vpop.xlane.xlu0 %1588
        %v1590 = vsel %vm1491, %v793, -inf
        %1591 = vmax.xlane.f32.xlu0 %v1590
        %v1592 = vpop.xlane.xlu0 %1591
        %v1593 = vsel %vm1491, %v794, -inf
        %1594 = vmax.xlane.f32.xlu0 %v1593
        %v1595 = vpop.xlane.xlu0 %1594
        %v1596 = vsel %vm1491, %v795, -inf
        %1597 = vmax.xlane.f32.xlu0 %v1596
        %v1598 = vpop.xlane.xlu0 %1597
        %v1599 = vsel %vm1491, %v796, -inf
        %1600 = vmax.xlane.f32.xlu0 %v1599
        %v1601 = vpop.xlane.xlu0 %1600
        %v1602 = vsel %vm1491, %v797, -inf
        %1603 = vmax.xlane.f32.xlu0 %v1602
        %v1604 = vpop.xlane.xlu0 %1603
        %v1605 = vsel %vm1491, %v798, -inf
        %1606 = vmax.xlane.f32.xlu0 %v1605
        %v1607 = vpop.xlane.xlu0 %1606
        %v1608 = vsel %vm1491, %v799, -inf
        %1609 = vmax.xlane.f32.xlu0 %v1608
        %v1610 = vpop.xlane.xlu0 %1609
        %1611 = vmatpush.msra.mxu0 %v1562
        %1612 = vmatpush.msra.mxu0 %v1561
        %1613 = vmatpush.msra.mxu0 %v1560
        %1614 = vmatpush.msra.mxu0 %v1559
        %1615 = vmatpush.msra.mxu0 %v1558
        %1616 = vmatpush.msra.mxu0 %v1557
        %1617 = vmatpush.msra.mxu0 %v1556
        %1618 = vmatpush.msra.mxu0 %v1555
        %1619 = vmatpush.msra.mxu0 %v1554
        %1620 = vmatpush.msra.mxu0 %v1553
        %1621 = vmatpush.msra.mxu0 %v1552
        %1622 = vmatpush.msra.mxu0 %v1551
        %1623 = vmatpush.msra.mxu0 %v1550
        %1624 = vmatpush.msra.mxu0 %v1549
        %1625 = vmatpush.msra.mxu0 %v1548
        %1626 = vmatpush.msra.mxu0 %v1547
        %1627 = vmatmul.f32.gmra.mxu0 %v750
        %v1628 = vpop.f32.mrf.mxu0
        %v1629 = vadd.f32 %v751, %v1628
        %1630 = vdwg.mxu0
        %v1631 = vmax.f32 %v1629, 0.0
        %1632 = vmatpush.msra.mxu0 0.0
        %1633 = vmatpush.msra.mxu0 0.0
        %1634 = vmatpush.msra.mxu0 0.0
        %1635 = vmatpush.msra.mxu0 0.0
        %1636 = vmatpush.msra.mxu0 0.0
        %1637 = vmatpush.msra.mxu0 0.0
        %1638 = vmatpush.msra.mxu0 0.0
        %1639 = vmatpush.msra.mxu0 0.0
        %1640 = vmatpush.msra.mxu0 0.0
        %1641 = vmatpush.msra.mxu0 0.0
        %1642 = vmatpush.msra.mxu0 0.0
        %1643 = vmatpush.msra.mxu0 0.0
        %1644 = vmatpush.msra.mxu0 0.0
        %1645 = vmatpush.msra.mxu0 0.0
        %1646 = vmatpush.msra.mxu0 0.0
        %1647 = vmatpush.msra.mxu0 %v1631
        %1648 = vmatmul.f32.gmra.mxu0 %v973
        %v1649 = vpop.f32.mrf.mxu0
        %v1650 = vadd.f32 %v768, %v1649
        %1651 = vmatmul.f32.gmra.mxu0 %v976
        %v1652 = vpop.f32.mrf.mxu0
        %v1653 = vadd.f32 %v769, %v1652
        %1654 = vmatmul.f32.gmra.mxu0 %v979
        %v1655 = vpop.f32.mrf.mxu0
        %v1656 = vadd.f32 %v770, %v1655
        %1657 = vmatmul.f32.gmra.mxu0 %v982
        %v1658 = vpop.f32.mrf.mxu0
        %v1659 = vadd.f32 %v771, %v1658
        %1660 = vmatmul.f32.gmra.mxu0 %v985
        %v1661 = vpop.f32.mrf.mxu0
        %v1662 = vadd.f32 %v772, %v1661
        %1663 = vmatmul.f32.gmra.mxu0 %v988
        %v1664 = vpop.f32.mrf.mxu0
        %v1665 = vadd.f32 %v773, %v1664
        %1666 = vmatmul.f32.gmra.mxu0 %v991
        %v1667 = vpop.f32.mrf.mxu0
        %v1668 = vadd.f32 %v774, %v1667
        %1669 = vmatmul.f32.gmra.mxu0 %v994
        %v1670 = vpop.f32.mrf.mxu0
        %v1671 = vadd.f32 %v775, %v1670
        %1672 = vmatmul.f32.gmra.mxu0 %v997
        %v1673 = vpop.f32.mrf.mxu0
        %v1674 = vadd.f32 %v776, %v1673
        %1675 = vmatmul.f32.gmra.mxu0 %v1000
        %v1676 = vpop.f32.mrf.mxu0
        %v1677 = vadd.f32 %v777, %v1676
        %1678 = vmatmul.f32.gmra.mxu0 %v1003
        %v1679 = vpop.f32.mrf.mxu0
        %v1680 = vadd.f32 %v778, %v1679
        %1681 = vmatmul.f32.gmra.mxu0 %v1006
        %v1682 = vpop.f32.mrf.mxu0
        %v1683 = vadd.f32 %v779, %v1682
        %1684 = vmatmul.f32.gmra.mxu0 %v1009
        %v1685 = vpop.f32.mrf.mxu0
        %v1686 = vadd.f32 %v780, %v1685
        %1687 = vmatmul.f32.gmra.mxu0 %v1012
        %v1688 = vpop.f32.mrf.mxu0
        %v1689 = vadd.f32 %v781, %v1688
        %1690 = vmatmul.f32.gmra.mxu0 %v1015
        %v1691 = vpop.f32.mrf.mxu0
        %v1692 = vadd.f32 %v782, %v1691
        %1693 = vmatmul.f32.gmra.mxu0 %v1018
        %v1694 = vpop.f32.mrf.mxu0
        %v1695 = vadd.f32 %v783, %v1694
        %1696 = vdwg.mxu0
        %1697 = vmatpush.msra.mxu0 %v1610
        %1698 = vmatpush.msra.mxu0 %v1607
        %1699 = vmatpush.msra.mxu0 %v1604
        %1700 = vmatpush.msra.mxu0 %v1601
        %1701 = vmatpush.msra.mxu0 %v1598
        %1702 = vmatpush.msra.mxu0 %v1595
        %1703 = vmatpush.msra.mxu0 %v1592
        %1704 = vmatpush.msra.mxu0 %v1589
        %1705 = vmatpush.msra.mxu0 %v1586
        %1706 = vmatpush.msra.mxu0 %v1583
        %1707 = vmatpush.msra.mxu0 %v1580
        %1708 = vmatpush.msra.mxu0 %v1577
        %1709 = vmatpush.msra.mxu0 %v1574
        %1710 = vmatpush.msra.mxu0 %v1571
        %1711 = vmatpush.msra.mxu0 %v1568
        %1712 = vmatpush.msra.mxu0 %v1565
        %1713 = vmatmul.f32.gmra.mxu0 %v750
        %v1714 = vpop.f32.mrf.mxu0
        %v1715 = vadd.f32 %v751, %v1714
        %1716 = vdwg.mxu0
        %v1717 = vmax.f32 %v1715, 0.0
        %1718 = vmatpush.msra.mxu0 0.0
        %1719 = vmatpush.msra.mxu0 0.0
        %1720 = vmatpush.msra.mxu0 0.0
        %1721 = vmatpush.msra.mxu0 0.0
        %1722 = vmatpush.msra.mxu0 0.0
        %1723 = vmatpush.msra.mxu0 0.0
        %1724 = vmatpush.msra.mxu0 0.0
        %1725 = vmatpush.msra.mxu0 0.0
        %1726 = vmatpush.msra.mxu0 0.0
        %1727 = vmatpush.msra.mxu0 0.0
        %1728 = vmatpush.msra.mxu0 0.0
        %1729 = vmatpush.msra.mxu0 0.0
        %1730 = vmatpush.msra.mxu0 0.0
        %1731 = vmatpush.msra.mxu0 0.0
        %1732 = vmatpush.msra.mxu0 0.0
        %1733 = vmatpush.msra.mxu0 %v1717
        %1734 = vmatmul.f32.gmra.mxu0 %v973
        %v1735 = vpop.f32.mrf.mxu0
        %v1736 = vadd.f32 %v768, %v1735
        %1737 = vmatmul.f32.gmra.mxu0 %v976
        %v1738 = vpop.f32.mrf.mxu0
        %v1739 = vadd.f32 %v769, %v1738
        %1740 = vmatmul.f32.gmra.mxu0 %v979
        %v1741 = vpop.f32.mrf.mxu0
        %v1742 = vadd.f32 %v770, %v1741
        %1743 = vmatmul.f32.gmra.mxu0 %v982
        %v1744 = vpop.f32.mrf.mxu0
        %v1745 = vadd.f32 %v771, %v1744
        %1746 = vmatmul.f32.gmra.mxu0 %v985
        %v1747 = vpop.f32.mrf.mxu0
        %v1748 = vadd.f32 %v772, %v1747
        %1749 = vmatmul.f32.gmra.mxu0 %v988
        %v1750 = vpop.f32.mrf.mxu0
        %v1751 = vadd.f32 %v773, %v1750
        %1752 = vmatmul.f32.gmra.mxu0 %v991
        %v1753 = vpop.f32.mrf.mxu0
        %v1754 = vadd.f32 %v774, %v1753
        %1755 = vmatmul.f32.gmra.mxu0 %v994
        %v1756 = vpop.f32.mrf.mxu0
        %v1757 = vadd.f32 %v775, %v1756
        %1758 = vmatmul.f32.gmra.mxu0 %v997
        %v1759 = vpop.f32.mrf.mxu0
        %v1760 = vadd.f32 %v776, %v1759
        %1761 = vmatmul.f32.gmra.mxu0 %v1000
        %v1762 = vpop.f32.mrf.mxu0
        %v1763 = vadd.f32 %v777, %v1762
        %1764 = vmatmul.f32.gmra.mxu0 %v1003
        %v1765 = vpop.f32.mrf.mxu0
        %v1766 = vadd.f32 %v778, %v1765
        %1767 = vmatmul.f32.gmra.mxu0 %v1006
        %v1768 = vpop.f32.mrf.mxu0
        %v1769 = vadd.f32 %v779, %v1768
        %1770 = vmatmul.f32.gmra.mxu0 %v1009
        %v1771 = vpop.f32.mrf.mxu0
        %v1772 = vadd.f32 %v780, %v1771
        %1773 = vmatmul.f32.gmra.mxu0 %v1012
        %v1774 = vpop.f32.mrf.mxu0
        %v1775 = vadd.f32 %v781, %v1774
        %1776 = vmatmul.f32.gmra.mxu0 %v1015
        %v1777 = vpop.f32.mrf.mxu0
        %v1778 = vadd.f32 %v782, %v1777
        %1779 = vmatmul.f32.gmra.mxu0 %v1018
        %v1780 = vpop.f32.mrf.mxu0
        %v1781 = vadd.f32 %v783, %v1780
        %1782 = vdwg.mxu0
        %v1783 = vadd.f32 %v1650, %v1736
        %v1784 = vadd.f32 %v1653, %v1739
        %v1785 = vadd.f32 %v1656, %v1742
        %v1786 = vadd.f32 %v1659, %v1745
        %v1787 = vadd.f32 %v1662, %v1748
        %v1788 = vadd.f32 %v1665, %v1751
        %v1789 = vadd.f32 %v1668, %v1754
        %v1790 = vadd.f32 %v1671, %v1757
        %v1791 = vadd.f32 %v1674, %v1760
        %v1792 = vadd.f32 %v1677, %v1763
        %v1793 = vadd.f32 %v1680, %v1766
        %v1794 = vadd.f32 %v1683, %v1769
        %v1795 = vadd.f32 %v1686, %v1772
        %v1796 = vadd.f32 %v1689, %v1775
        %v1797 = vadd.f32 %v1692, %v1778
        %v1798 = vadd.f32 %v1695, %v1781
        %v1799 = vxor.u32 %v1783, 2147483648
        %v1800 = vxor.u32 %v1784, 2147483648
        %v1801 = vxor.u32 %v1785, 2147483648
        %v1802 = vxor.u32 %v1786, 2147483648
        %v1803 = vxor.u32 %v1787, 2147483648
        %v1804 = vxor.u32 %v1788, 2147483648
        %v1805 = vxor.u32 %v1789, 2147483648
        %v1806 = vxor.u32 %v1790, 2147483648
        %v1807 = vxor.u32 %v1791, 2147483648
        %v1808 = vxor.u32 %v1792, 2147483648
        %v1809 = vxor.u32 %v1793, 2147483648
        %v1810 = vxor.u32 %v1794, 2147483648
        %v1811 = vxor.u32 %v1795, 2147483648
        %v1812 = vxor.u32 %v1796, 2147483648
        %v1813 = vxor.u32 %v1797, 2147483648
        %v1814 = vxor.u32 %v1798, 2147483648
        %v1815 = vmul.f32 %v1799, 1.442695
        %v1816 = vpow.pop %v1815
        %v1817 = vmul.f32 %v1800, 1.442695
        %v1818 = vpow.pop %v1817
        %v1819 = vmul.f32 %v1801, 1.442695
        %v1820 = vpow.pop %v1819
        %v1821 = vmul.f32 %v1802, 1.442695
        %v1822 = vpow.pop %v1821
        %v1823 = vmul.f32 %v1803, 1.442695
        %v1824 = vpow.pop %v1823
        %v1825 = vmul.f32 %v1804, 1.442695
        %v1826 = vpow.pop %v1825
        %v1827 = vmul.f32 %v1805, 1.442695
        %v1828 = vpow.pop %v1827
        %v1829 = vmul.f32 %v1806, 1.442695
        %v1830 = vpow.pop %v1829
        %v1831 = vmul.f32 %v1807, 1.442695
        %v1832 = vpow.pop %v1831
        %v1833 = vmul.f32 %v1808, 1.442695
        %v1834 = vpow.pop %v1833
        %v1835 = vmul.f32 %v1809, 1.442695
        %v1836 = vpow.pop %v1835
        %v1837 = vmul.f32 %v1810, 1.442695
        %v1838 = vpow.pop %v1837
        %v1839 = vmul.f32 %v1811, 1.442695
        %v1840 = vpow.pop %v1839
        %v1841 = vmul.f32 %v1812, 1.442695
        %v1842 = vpow.pop %v1841
        %v1843 = vmul.f32 %v1813, 1.442695
        %v1844 = vpow.pop %v1843
        %v1845 = vmul.f32 %v1814, 1.442695
        %v1846 = vpow.pop %v1845
        %v1847 = vadd.f32 %v1816, 1.0
        %v1848 = vadd.f32 %v1818, 1.0
        %v1849 = vadd.f32 %v1820, 1.0
        %v1850 = vadd.f32 %v1822, 1.0
        %v1851 = vadd.f32 %v1824, 1.0
        %v1852 = vadd.f32 %v1826, 1.0
        %v1853 = vadd.f32 %v1828, 1.0
        %v1854 = vadd.f32 %v1830, 1.0
        %v1855 = vadd.f32 %v1832, 1.0
        %v1856 = vadd.f32 %v1834, 1.0
        %v1857 = vadd.f32 %v1836, 1.0
        %v1858 = vadd.f32 %v1838, 1.0
        %v1859 = vadd.f32 %v1840, 1.0
        %v1860 = vadd.f32 %v1842, 1.0
        %v1861 = vadd.f32 %v1844, 1.0
        %v1862 = vadd.f32 %v1846, 1.0
        %v1863 = vrcp.pop %v1847
        %v1864 = vmul.f32 %v1847, %v1863
        %v1865 = vsub.f32 1.0, %v1864
        %v1866 = vmul.f32 %v1863, %v1865
        %v1867 = vadd.f32 %v1863, %v1866
        %vm1868 = vweird.f32 %v1847
        %vm1869 = vweird.f32 %v1863
        %vm1870 = vmor %vm1868, %vm1869
        %v1871 = vsel %vm1870, %v1863, %v1867
        %v1872 = vand.u32 2147483647, %v1847
        %vm1873 = vcmp.eq.f32.partialorder %v1872, 8.507059e+37
        %v1874 = vand.u32 %v1847, 2147483648
        %v1875 = vor.u32 1.1754944e-38, %v1874
        %v1876 = vsel %vm1873, %v1875, %v1871
        %v1877 = vmul.f32 1.0, %v1876
        %v1878 = vrcp.pop %v1848
        %v1879 = vmul.f32 %v1848, %v1878
        %v1880 = vsub.f32 1.0, %v1879
        %v1881 = vmul.f32 %v1878, %v1880
        %v1882 = vadd.f32 %v1878, %v1881
        %vm1883 = vweird.f32 %v1848
        %vm1884 = vweird.f32 %v1878
        %vm1885 = vmor %vm1883, %vm1884
        %v1886 = vsel %vm1885, %v1878, %v1882
        %v1887 = vand.u32 2147483647, %v1848
        %vm1888 = vcmp.eq.f32.partialorder %v1887, 8.507059e+37
        %v1889 = vand.u32 %v1848, 2147483648
        %v1890 = vor.u32 1.1754944e-38, %v1889
        %v1891 = vsel %vm1888, %v1890, %v1886
        %v1892 = vmul.f32 1.0, %v1891
        %v1893 = vrcp.pop %v1849
        %v1894 = vmul.f32 %v1849, %v1893
        %v1895 = vsub.f32 1.0, %v1894
        %v1896 = vmul.f32 %v1893, %v1895
        %v1897 = vadd.f32 %v1893, %v1896
        %vm1898 = vweird.f32 %v1849
        %vm1899 = vweird.f32 %v1893
        %vm1900 = vmor %vm1898, %vm1899
        %v1901 = vsel %vm1900, %v1893, %v1897
        %v1902 = vand.u32 2147483647, %v1849
        %vm1903 = vcmp.eq.f32.partialorder %v1902, 8.507059e+37
        %v1904 = vand.u32 %v1849, 2147483648
        %v1905 = vor.u32 1.1754944e-38, %v1904
        %v1906 = vsel %vm1903, %v1905, %v1901
        %v1907 = vmul.f32 1.0, %v1906
        %v1908 = vrcp.pop %v1850
        %v1909 = vmul.f32 %v1850, %v1908
        %v1910 = vsub.f32 1.0, %v1909
        %v1911 = vmul.f32 %v1908, %v1910
        %v1912 = vadd.f32 %v1908, %v1911
        %vm1913 = vweird.f32 %v1850
        %vm1914 = vweird.f32 %v1908
        %vm1915 = vmor %vm1913, %vm1914
        %v1916 = vsel %vm1915, %v1908, %v1912
        %v1917 = vand.u32 2147483647, %v1850
        %vm1918 = vcmp.eq.f32.partialorder %v1917, 8.507059e+37
        %v1919 = vand.u32 %v1850, 2147483648
        %v1920 = vor.u32 1.1754944e-38, %v1919
        %v1921 = vsel %vm1918, %v1920, %v1916
        %v1922 = vmul.f32 1.0, %v1921
        %v1923 = vrcp.pop %v1851
        %v1924 = vmul.f32 %v1851, %v1923
        %v1925 = vsub.f32 1.0, %v1924
        %v1926 = vmul.f32 %v1923, %v1925
        %v1927 = vadd.f32 %v1923, %v1926
        %vm1928 = vweird.f32 %v1851
        %vm1929 = vweird.f32 %v1923
        %vm1930 = vmor %vm1928, %vm1929
        %v1931 = vsel %vm1930, %v1923, %v1927
        %v1932 = vand.u32 2147483647, %v1851
        %vm1933 = vcmp.eq.f32.partialorder %v1932, 8.507059e+37
        %v1934 = vand.u32 %v1851, 2147483648
        %v1935 = vor.u32 1.1754944e-38, %v1934
        %v1936 = vsel %vm1933, %v1935, %v1931
        %v1937 = vmul.f32 1.0, %v1936
        %v1938 = vrcp.pop %v1852
        %v1939 = vmul.f32 %v1852, %v1938
        %v1940 = vsub.f32 1.0, %v1939
        %v1941 = vmul.f32 %v1938, %v1940
        %v1942 = vadd.f32 %v1938, %v1941
        %vm1943 = vweird.f32 %v1852
        %vm1944 = vweird.f32 %v1938
        %vm1945 = vmor %vm1943, %vm1944
        %v1946 = vsel %vm1945, %v1938, %v1942
        %v1947 = vand.u32 2147483647, %v1852
        %vm1948 = vcmp.eq.f32.partialorder %v1947, 8.507059e+37
        %v1949 = vand.u32 %v1852, 2147483648
        %v1950 = vor.u32 1.1754944e-38, %v1949
        %v1951 = vsel %vm1948, %v1950, %v1946
        %v1952 = vmul.f32 1.0, %v1951
        %v1953 = vrcp.pop %v1853
        %v1954 = vmul.f32 %v1853, %v1953
        %v1955 = vsub.f32 1.0, %v1954
        %v1956 = vmul.f32 %v1953, %v1955
        %v1957 = vadd.f32 %v1953, %v1956
        %vm1958 = vweird.f32 %v1853
        %vm1959 = vweird.f32 %v1953
        %vm1960 = vmor %vm1958, %vm1959
        %v1961 = vsel %vm1960, %v1953, %v1957
        %v1962 = vand.u32 2147483647, %v1853
        %vm1963 = vcmp.eq.f32.partialorder %v1962, 8.507059e+37
        %v1964 = vand.u32 %v1853, 2147483648
        %v1965 = vor.u32 1.1754944e-38, %v1964
        %v1966 = vsel %vm1963, %v1965, %v1961
        %v1967 = vmul.f32 1.0, %v1966
        %v1968 = vrcp.pop %v1854
        %v1969 = vmul.f32 %v1854, %v1968
        %v1970 = vsub.f32 1.0, %v1969
        %v1971 = vmul.f32 %v1968, %v1970
        %v1972 = vadd.f32 %v1968, %v1971
        %vm1973 = vweird.f32 %v1854
        %vm1974 = vweird.f32 %v1968
        %vm1975 = vmor %vm1973, %vm1974
        %v1976 = vsel %vm1975, %v1968, %v1972
        %v1977 = vand.u32 2147483647, %v1854
        %vm1978 = vcmp.eq.f32.partialorder %v1977, 8.507059e+37
        %v1979 = vand.u32 %v1854, 2147483648
        %v1980 = vor.u32 1.1754944e-38, %v1979
        %v1981 = vsel %vm1978, %v1980, %v1976
        %v1982 = vmul.f32 1.0, %v1981
        %v1983 = vrcp.pop %v1855
        %v1984 = vmul.f32 %v1855, %v1983
        %v1985 = vsub.f32 1.0, %v1984
        %v1986 = vmul.f32 %v1983, %v1985
        %v1987 = vadd.f32 %v1983, %v1986
        %vm1988 = vweird.f32 %v1855
        %vm1989 = vweird.f32 %v1983
        %vm1990 = vmor %vm1988, %vm1989
        %v1991 = vsel %vm1990, %v1983, %v1987
        %v1992 = vand.u32 2147483647, %v1855
        %vm1993 = vcmp.eq.f32.partialorder %v1992, 8.507059e+37
        %v1994 = vand.u32 %v1855, 2147483648
        %v1995 = vor.u32 1.1754944e-38, %v1994
        %v1996 = vsel %vm1993, %v1995, %v1991
        %v1997 = vmul.f32 1.0, %v1996
        %v1998 = vrcp.pop %v1856
        %v1999 = vmul.f32 %v1856, %v1998
        %v2000 = vsub.f32 1.0, %v1999
        %v2001 = vmul.f32 %v1998, %v2000
        %v2002 = vadd.f32 %v1998, %v2001
        %vm2003 = vweird.f32 %v1856
        %vm2004 = vweird.f32 %v1998
        %vm2005 = vmor %vm2003, %vm2004
        %v2006 = vsel %vm2005, %v1998, %v2002
        %v2007 = vand.u32 2147483647, %v1856
        %vm2008 = vcmp.eq.f32.partialorder %v2007, 8.507059e+37
        %v2009 = vand.u32 %v1856, 2147483648
        %v2010 = vor.u32 1.1754944e-38, %v2009
        %v2011 = vsel %vm2008, %v2010, %v2006
        %v2012 = vmul.f32 1.0, %v2011
        %v2013 = vrcp.pop %v1857
        %v2014 = vmul.f32 %v1857, %v2013
        %v2015 = vsub.f32 1.0, %v2014
        %v2016 = vmul.f32 %v2013, %v2015
        %v2017 = vadd.f32 %v2013, %v2016
        %vm2018 = vweird.f32 %v1857
        %vm2019 = vweird.f32 %v2013
        %vm2020 = vmor %vm2018, %vm2019
        %v2021 = vsel %vm2020, %v2013, %v2017
        %v2022 = vand.u32 2147483647, %v1857
        %vm2023 = vcmp.eq.f32.partialorder %v2022, 8.507059e+37
        %v2024 = vand.u32 %v1857, 2147483648
        %v2025 = vor.u32 1.1754944e-38, %v2024
        %v2026 = vsel %vm2023, %v2025, %v2021
        %v2027 = vmul.f32 1.0, %v2026
        %v2028 = vrcp.pop %v1858
        %v2029 = vmul.f32 %v1858, %v2028
        %v2030 = vsub.f32 1.0, %v2029
        %v2031 = vmul.f32 %v2028, %v2030
        %v2032 = vadd.f32 %v2028, %v2031
        %vm2033 = vweird.f32 %v1858
        %vm2034 = vweird.f32 %v2028
        %vm2035 = vmor %vm2033, %vm2034
        %v2036 = vsel %vm2035, %v2028, %v2032
        %v2037 = vand.u32 2147483647, %v1858
        %vm2038 = vcmp.eq.f32.partialorder %v2037, 8.507059e+37
        %v2039 = vand.u32 %v1858, 2147483648
        %v2040 = vor.u32 1.1754944e-38, %v2039
        %v2041 = vsel %vm2038, %v2040, %v2036
        %v2042 = vmul.f32 1.0, %v2041
        %v2043 = vrcp.pop %v1859
        %v2044 = vmul.f32 %v1859, %v2043
        %v2045 = vsub.f32 1.0, %v2044
        %v2046 = vmul.f32 %v2043, %v2045
        %v2047 = vadd.f32 %v2043, %v2046
        %vm2048 = vweird.f32 %v1859
        %vm2049 = vweird.f32 %v2043
        %vm2050 = vmor %vm2048, %vm2049
        %v2051 = vsel %vm2050, %v2043, %v2047
        %v2052 = vand.u32 2147483647, %v1859
        %vm2053 = vcmp.eq.f32.partialorder %v2052, 8.507059e+37
        %v2054 = vand.u32 %v1859, 2147483648
        %v2055 = vor.u32 1.1754944e-38, %v2054
        %v2056 = vsel %vm2053, %v2055, %v2051
        %v2057 = vmul.f32 1.0, %v2056
        %v2058 = vrcp.pop %v1860
        %v2059 = vmul.f32 %v1860, %v2058
        %v2060 = vsub.f32 1.0, %v2059
        %v2061 = vmul.f32 %v2058, %v2060
        %v2062 = vadd.f32 %v2058, %v2061
        %vm2063 = vweird.f32 %v1860
        %vm2064 = vweird.f32 %v2058
        %vm2065 = vmor %vm2063, %vm2064
        %v2066 = vsel %vm2065, %v2058, %v2062
        %v2067 = vand.u32 2147483647, %v1860
        %vm2068 = vcmp.eq.f32.partialorder %v2067, 8.507059e+37
        %v2069 = vand.u32 %v1860, 2147483648
        %v2070 = vor.u32 1.1754944e-38, %v2069
        %v2071 = vsel %vm2068, %v2070, %v2066
        %v2072 = vmul.f32 1.0, %v2071
        %v2073 = vrcp.pop %v1861
        %v2074 = vmul.f32 %v1861, %v2073
        %v2075 = vsub.f32 1.0, %v2074
        %v2076 = vmul.f32 %v2073, %v2075
        %v2077 = vadd.f32 %v2073, %v2076
        %vm2078 = vweird.f32 %v1861
        %vm2079 = vweird.f32 %v2073
        %vm2080 = vmor %vm2078, %vm2079
        %v2081 = vsel %vm2080, %v2073, %v2077
        %v2082 = vand.u32 2147483647, %v1861
        %vm2083 = vcmp.eq.f32.partialorder %v2082, 8.507059e+37
        %v2084 = vand.u32 %v1861, 2147483648
        %v2085 = vor.u32 1.1754944e-38, %v2084
        %v2086 = vsel %vm2083, %v2085, %v2081
        %v2087 = vmul.f32 1.0, %v2086
        %v2088 = vrcp.pop %v1862
        %v2089 = vmul.f32 %v1862, %v2088
        %v2090 = vsub.f32 1.0, %v2089
        %v2091 = vmul.f32 %v2088, %v2090
        %v2092 = vadd.f32 %v2088, %v2091
        %vm2093 = vweird.f32 %v1862
        %vm2094 = vweird.f32 %v2088
        %vm2095 = vmor %vm2093, %vm2094
        %v2096 = vsel %vm2095, %v2088, %v2092
        %v2097 = vand.u32 2147483647, %v1862
        %vm2098 = vcmp.eq.f32.partialorder %v2097, 8.507059e+37
        %v2099 = vand.u32 %v1862, 2147483648
        %v2100 = vor.u32 1.1754944e-38, %v2099
        %v2101 = vsel %vm2098, %v2100, %v2096
        %v2102 = vmul.f32 1.0, %v2101
        %v2103 = vmul.f32 %v784, %v1265
        %v2104 = vmul.f32 %v785, %v1280
        %v2105 = vmul.f32 %v786, %v1295
        %v2106 = vmul.f32 %v787, %v1310
        %v2107 = vmul.f32 %v788, %v1325
        %v2108 = vmul.f32 %v789, %v1340
        %v2109 = vmul.f32 %v790, %v1355
        %v2110 = vmul.f32 %v791, %v1370
        %v2111 = vmul.f32 %v792, %v1385
        %v2112 = vmul.f32 %v793, %v1400
        %v2113 = vmul.f32 %v794, %v1415
        %v2114 = vmul.f32 %v795, %v1430
        %v2115 = vmul.f32 %v796, %v1445
        %v2116 = vmul.f32 %v797, %v1460
        %v2117 = vmul.f32 %v798, %v1475
        %v2118 = vmul.f32 %v799, %v1490
        %2120 = vset.pattern.permute.xlu0 0
        %2121 = vperm.xlu0 %2120, %v1877
        %v2122 = vpop.permute.xlu0 %2121
        %2125 = vset.pattern.permute.xlu0 0
        %2126 = vperm.xlu0 %2125, %v1892
        %v2127 = vpop.permute.xlu0 %2126
        %2130 = vset.pattern.permute.xlu0 0
        %2131 = vperm.xlu0 %2130, %v1907
        %v2132 = vpop.permute.xlu0 %2131
        %2135 = vset.pattern.permute.xlu0 0
        %2136 = vperm.xlu0 %2135, %v1922
        %v2137 = vpop.permute.xlu0 %2136
        %2140 = vset.pattern.permute.xlu0 0
        %2141 = vperm.xlu0 %2140, %v1937
        %v2142 = vpop.permute.xlu0 %2141
        %2145 = vset.pattern.permute.xlu0 0
        %2146 = vperm.xlu0 %2145, %v1952
        %v2147 = vpop.permute.xlu0 %2146
        %2150 = vset.pattern.permute.xlu0 0
        %2151 = vperm.xlu0 %2150, %v1967
        %v2152 = vpop.permute.xlu0 %2151
        %2155 = vset.pattern.permute.xlu0 0
        %2156 = vperm.xlu0 %2155, %v1982
        %v2157 = vpop.permute.xlu0 %2156
        %2160 = vset.pattern.permute.xlu0 0
        %2161 = vperm.xlu0 %2160, %v1997
        %v2162 = vpop.permute.xlu0 %2161
        %2165 = vset.pattern.permute.xlu0 0
        %2166 = vperm.xlu0 %2165, %v2012
        %v2167 = vpop.permute.xlu0 %2166
        %2170 = vset.pattern.permute.xlu0 0
        %2171 = vperm.xlu0 %2170, %v2027
        %v2172 = vpop.permute.xlu0 %2171
        %2175 = vset.pattern.permute.xlu0 0
        %2176 = vperm.xlu0 %2175, %v2042
        %v2177 = vpop.permute.xlu0 %2176
        %2180 = vset.pattern.permute.xlu0 0
        %2181 = vperm.xlu0 %2180, %v2057
        %v2182 = vpop.permute.xlu0 %2181
        %2185 = vset.pattern.permute.xlu0 0
        %2186 = vperm.xlu0 %2185, %v2072
        %v2187 = vpop.permute.xlu0 %2186
        %2190 = vset.pattern.permute.xlu0 0
        %2191 = vperm.xlu0 %2190, %v2087
        %v2192 = vpop.permute.xlu0 %2191
        %2195 = vset.pattern.permute.xlu0 0
        %2196 = vperm.xlu0 %2195, %v2102
        %v2197 = vpop.permute.xlu0 %2196
        %v2199 = vmul.f32 %v2103, %v2122
        %v2200 = vmul.f32 %v2104, %v2127
        %v2201 = vmul.f32 %v2105, %v2132
        %v2202 = vmul.f32 %v2106, %v2137
        %v2203 = vmul.f32 %v2107, %v2142
        %v2204 = vmul.f32 %v2108, %v2147
        %v2205 = vmul.f32 %v2109, %v2152
        %v2206 = vmul.f32 %v2110, %v2157
        %v2207 = vmul.f32 %v2111, %v2162
        %v2208 = vmul.f32 %v2112, %v2167
        %v2209 = vmul.f32 %v2113, %v2172
        %v2210 = vmul.f32 %v2114, %v2177
        %v2211 = vmul.f32 %v2115, %v2182
        %v2212 = vmul.f32 %v2116, %v2187
        %v2213 = vmul.f32 %v2117, %v2192
        %v2214 = vmul.f32 %v2118, %v2197
        %v2215 = vld [vmem:[%s5] sm:$0xff]
        %v2216 = vld [vmem:[%s5 + $0x8] sm:$0xff]
        %v2217 = vld [vmem:[%s5 + $0x10] sm:$0xf]
        %v2218 = vsel %vm1491, %v801, 0.0
        %2219 = vadd.xlane.f32.xlu0 %v2218
        %v2220 = vpop.xlane.xlu0 %2219
        %v2221 = vsel %vm1491, %v802, 0.0
        %2222 = vadd.xlane.f32.xlu0 %v2221
        %v2223 = vpop.xlane.xlu0 %2222
        %v2224 = vsel %vm1491, %v803, 0.0
        %2225 = vadd.xlane.f32.xlu0 %v2224
        %v2226 = vpop.xlane.xlu0 %2225
        %v2227 = vsel %vm1491, %v804, 0.0
        %2228 = vadd.xlane.f32.xlu0 %v2227
        %v2229 = vpop.xlane.xlu0 %2228
        %v2230 = vsel %vm1491, %v805, 0.0
        %2231 = vadd.xlane.f32.xlu0 %v2230
        %v2232 = vpop.xlane.xlu0 %2231
        %v2233 = vsel %vm1491, %v806, 0.0
        %2234 = vadd.xlane.f32.xlu0 %v2233
        %v2235 = vpop.xlane.xlu0 %2234
        %v2236 = vsel %vm1491, %v807, 0.0
        %2237 = vadd.xlane.f32.xlu0 %v2236
        %v2238 = vpop.xlane.xlu0 %2237
        %v2239 = vsel %vm1491, %v808, 0.0
        %2240 = vadd.xlane.f32.xlu0 %v2239
        %v2241 = vpop.xlane.xlu0 %2240
        %v2242 = vsel %vm1491, %v809, 0.0
        %2243 = vadd.xlane.f32.xlu0 %v2242
        %v2244 = vpop.xlane.xlu0 %2243
        %v2245 = vsel %vm1491, %v810, 0.0
        %2246 = vadd.xlane.f32.xlu0 %v2245
        %v2247 = vpop.xlane.xlu0 %2246
        %v2248 = vsel %vm1491, %v811, 0.0
        %2249 = vadd.xlane.f32.xlu0 %v2248
        %v2250 = vpop.xlane.xlu0 %2249
        %v2251 = vsel %vm1491, %v812, 0.0
        %2252 = vadd.xlane.f32.xlu0 %v2251
        %v2253 = vpop.xlane.xlu0 %2252
        %v2254 = vsel %vm1491, %v813, 0.0
        %2255 = vadd.xlane.f32.xlu0 %v2254
        %v2256 = vpop.xlane.xlu0 %2255
        %v2257 = vsel %vm1491, %v814, 0.0
        %2258 = vadd.xlane.f32.xlu0 %v2257
        %v2259 = vpop.xlane.xlu0 %2258
        %v2260 = vsel %vm1491, %v815, 0.0
        %2261 = vadd.xlane.f32.xlu0 %v2260
        %v2262 = vpop.xlane.xlu0 %2261
        %v2263 = vsel %vm1491, %v816, 0.0
        %2264 = vadd.xlane.f32.xlu0 %v2263
        %v2265 = vpop.xlane.xlu0 %2264
        %v2266 = vmul.f32 %v2220, %v1546
        %v2267 = vmul.f32 %v2223, %v1546
        %v2268 = vmul.f32 %v2226, %v1546
        %v2269 = vmul.f32 %v2229, %v1546
        %v2270 = vmul.f32 %v2232, %v1546
        %v2271 = vmul.f32 %v2235, %v1546
        %v2272 = vmul.f32 %v2238, %v1546
        %v2273 = vmul.f32 %v2241, %v1546
        %v2274 = vmul.f32 %v2244, %v1546
        %v2275 = vmul.f32 %v2247, %v1546
        %v2276 = vmul.f32 %v2250, %v1546
        %v2277 = vmul.f32 %v2253, %v1546
        %v2278 = vmul.f32 %v2256, %v1546
        %v2279 = vmul.f32 %v2259, %v1546
        %v2280 = vmul.f32 %v2262, %v1546
        %v2281 = vmul.f32 %v2265, %v1546
        %v2282 = vsel %vm1491, %v801, -inf
        %2283 = vmax.xlane.f32.xlu0 %v2282
        %v2284 = vpop.xlane.xlu0 %2283
        %v2285 = vsel %vm1491, %v802, -inf
        %2286 = vmax.xlane.f32.xlu0 %v2285
        %v2287 = vpop.xlane.xlu0 %2286
        %v2288 = vsel %vm1491, %v803, -inf
        %2289 = vmax.xlane.f32.xlu0 %v2288
        %v2290 = vpop.xlane.xlu0 %2289
        %v2291 = vsel %vm1491, %v804, -inf
        %2292 = vmax.xlane.f32.xlu0 %v2291
        %v2293 = vpop.xlane.xlu0 %2292
        %v2294 = vsel %vm1491, %v805, -inf
        %2295 = vmax.xlane.f32.xlu0 %v2294
        %v2296 = vpop.xlane.xlu0 %2295
        %v2297 = vsel %vm1491, %v806, -inf
        %2298 = vmax.xlane.f32.xlu0 %v2297
        %v2299 = vpop.xlane.xlu0 %2298
        %v2300 = vsel %vm1491, %v807, -inf
        %2301 = vmax.xlane.f32.xlu0 %v2300
        %v2302 = vpop.xlane.xlu0 %2301
        %v2303 = vsel %vm1491, %v808, -inf
        %2304 = vmax.xlane.f32.xlu0 %v2303
        %v2305 = vpop.xlane.xlu0 %2304
        %v2306 = vsel %vm1491, %v809, -inf
        %2307 = vmax.xlane.f32.xlu0 %v2306
        %v2308 = vpop.xlane.xlu0 %2307
        %v2309 = vsel %vm1491, %v810, -inf
        %2310 = vmax.xlane.f32.xlu0 %v2309
        %v2311 = vpop.xlane.xlu0 %2310
        %v2312 = vsel %vm1491, %v811, -inf
        %2313 = vmax.xlane.f32.xlu0 %v2312
        %v2314 = vpop.xlane.xlu0 %2313
        %v2315 = vsel %vm1491, %v812, -inf
        %2316 = vmax.xlane.f32.xlu0 %v2315
        %v2317 = vpop.xlane.xlu0 %2316
        %v2318 = vsel %vm1491, %v813, -inf
        %2319 = vmax.xlane.f32.xlu0 %v2318
        %v2320 = vpop.xlane.xlu0 %2319
        %v2321 = vsel %vm1491, %v814, -inf
        %2322 = vmax.xlane.f32.xlu0 %v2321
        %v2323 = vpop.xlane.xlu0 %2322
        %v2324 = vsel %vm1491, %v815, -inf
        %2325 = vmax.xlane.f32.xlu0 %v2324
        %v2326 = vpop.xlane.xlu0 %2325
        %v2327 = vsel %vm1491, %v816, -inf
        %2328 = vmax.xlane.f32.xlu0 %v2327
        %v2329 = vpop.xlane.xlu0 %2328
        %2330 = vmatpush.msra.mxu0 %v2281
        %2331 = vmatpush.msra.mxu0 %v2280
        %2332 = vmatpush.msra.mxu0 %v2279
        %2333 = vmatpush.msra.mxu0 %v2278
        %2334 = vmatpush.msra.mxu0 %v2277
        %2335 = vmatpush.msra.mxu0 %v2276
        %2336 = vmatpush.msra.mxu0 %v2275
        %2337 = vmatpush.msra.mxu0 %v2274
        %2338 = vmatpush.msra.mxu0 %v2273
        %2339 = vmatpush.msra.mxu0 %v2272
        %2340 = vmatpush.msra.mxu0 %v2271
        %2341 = vmatpush.msra.mxu0 %v2270
        %2342 = vmatpush.msra.mxu0 %v2269
        %2343 = vmatpush.msra.mxu0 %v2268
        %2344 = vmatpush.msra.mxu0 %v2267
        %2345 = vmatpush.msra.mxu0 %v2266
        %2346 = vmatmul.f32.gmra.mxu0 %v750
        %v2347 = vpop.f32.mrf.mxu0
        %v2348 = vadd.f32 %v751, %v2347
        %2349 = vdwg.mxu0
        %v2350 = vmax.f32 %v2348, 0.0
        %2351 = vmatpush.msra.mxu0 0.0
        %2352 = vmatpush.msra.mxu0 0.0
        %2353 = vmatpush.msra.mxu0 0.0
        %2354 = vmatpush.msra.mxu0 0.0
        %2355 = vmatpush.msra.mxu0 0.0
        %2356 = vmatpush.msra.mxu0 0.0
        %2357 = vmatpush.msra.mxu0 0.0
        %2358 = vmatpush.msra.mxu0 0.0
        %2359 = vmatpush.msra.mxu0 0.0
        %2360 = vmatpush.msra.mxu0 0.0
        %2361 = vmatpush.msra.mxu0 0.0
        %2362 = vmatpush.msra.mxu0 0.0
        %2363 = vmatpush.msra.mxu0 0.0
        %2364 = vmatpush.msra.mxu0 0.0
        %2365 = vmatpush.msra.mxu0 0.0
        %2366 = vmatpush.msra.mxu0 %v2350
        %2367 = vmatmul.f32.gmra.mxu0 %v973
        %v2368 = vpop.f32.mrf.mxu0
        %v2369 = vadd.f32 %v768, %v2368
        %2370 = vmatmul.f32.gmra.mxu0 %v976
        %v2371 = vpop.f32.mrf.mxu0
        %v2372 = vadd.f32 %v769, %v2371
        %2373 = vmatmul.f32.gmra.mxu0 %v979
        %v2374 = vpop.f32.mrf.mxu0
        %v2375 = vadd.f32 %v770, %v2374
        %2376 = vmatmul.f32.gmra.mxu0 %v982
        %v2377 = vpop.f32.mrf.mxu0
        %v2378 = vadd.f32 %v771, %v2377
        %2379 = vmatmul.f32.gmra.mxu0 %v985
        %v2380 = vpop.f32.mrf.mxu0
        %v2381 = vadd.f32 %v772, %v2380
        %2382 = vmatmul.f32.gmra.mxu0 %v988
        %v2383 = vpop.f32.mrf.mxu0
        %v2384 = vadd.f32 %v773, %v2383
        %2385 = vmatmul.f32.gmra.mxu0 %v991
        %v2386 = vpop.f32.mrf.mxu0
        %v2387 = vadd.f32 %v774, %v2386
        %2388 = vmatmul.f32.gmra.mxu0 %v994
        %v2389 = vpop.f32.mrf.mxu0
        %v2390 = vadd.f32 %v775, %v2389
        %2391 = vmatmul.f32.gmra.mxu0 %v997
        %v2392 = vpop.f32.mrf.mxu0
        %v2393 = vadd.f32 %v776, %v2392
        %2394 = vmatmul.f32.gmra.mxu0 %v1000
        %v2395 = vpop.f32.mrf.mxu0
        %v2396 = vadd.f32 %v777, %v2395
        %2397 = vmatmul.f32.gmra.mxu0 %v1003
        %v2398 = vpop.f32.mrf.mxu0
        %v2399 = vadd.f32 %v778, %v2398
        %2400 = vmatmul.f32.gmra.mxu0 %v1006
        %v2401 = vpop.f32.mrf.mxu0
        %v2402 = vadd.f32 %v779, %v2401
        %2403 = vmatmul.f32.gmra.mxu0 %v1009
        %v2404 = vpop.f32.mrf.mxu0
        %v2405 = vadd.f32 %v780, %v2404
        %2406 = vmatmul.f32.gmra.mxu0 %v1012
        %v2407 = vpop.f32.mrf.mxu0
        %v2408 = vadd.f32 %v781, %v2407
        %2409 = vmatmul.f32.gmra.mxu0 %v1015
        %v2410 = vpop.f32.mrf.mxu0
        %v2411 = vadd.f32 %v782, %v2410
        %2412 = vmatmul.f32.gmra.mxu0 %v1018
        %v2413 = vpop.f32.mrf.mxu0
        %v2414 = vadd.f32 %v783, %v2413
        %2415 = vdwg.mxu0
        %2416 = vmatpush.msra.mxu0 %v2329
        %2417 = vmatpush.msra.mxu0 %v2326
        %2418 = vmatpush.msra.mxu0 %v2323
        %2419 = vmatpush.msra.mxu0 %v2320
        %2420 = vmatpush.msra.mxu0 %v2317
        %2421 = vmatpush.msra.mxu0 %v2314
        %2422 = vmatpush.msra.mxu0 %v2311
        %2423 = vmatpush.msra.mxu0 %v2308
        %2424 = vmatpush.msra.mxu0 %v2305
        %2425 = vmatpush.msra.mxu0 %v2302
        %2426 = vmatpush.msra.mxu0 %v2299
        %2427 = vmatpush.msra.mxu0 %v2296
        %2428 = vmatpush.msra.mxu0 %v2293
        %2429 = vmatpush.msra.mxu0 %v2290
        %2430 = vmatpush.msra.mxu0 %v2287
        %2431 = vmatpush.msra.mxu0 %v2284
        %2432 = vmatmul.f32.gmra.mxu0 %v750
        %v2433 = vpop.f32.mrf.mxu0
        %v2434 = vadd.f32 %v751, %v2433
        %2435 = vdwg.mxu0
        %v2436 = vmax.f32 %v2434, 0.0
        %2437 = vmatpush.msra.mxu0 0.0
        %2438 = vmatpush.msra.mxu0 0.0
        %2439 = vmatpush.msra.mxu0 0.0
        %2440 = vmatpush.msra.mxu0 0.0
        %2441 = vmatpush.msra.mxu0 0.0
        %2442 = vmatpush.msra.mxu0 0.0
        %2443 = vmatpush.msra.mxu0 0.0
        %2444 = vmatpush.msra.mxu0 0.0
        %2445 = vmatpush.msra.mxu0 0.0
        %2446 = vmatpush.msra.mxu0 0.0
        %2447 = vmatpush.msra.mxu0 0.0
        %2448 = vmatpush.msra.mxu0 0.0
        %2449 = vmatpush.msra.mxu0 0.0
        %2450 = vmatpush.msra.mxu0 0.0
        %2451 = vmatpush.msra.mxu0 0.0
        %2452 = vmatpush.msra.mxu0 %v2436
        %2453 = vmatmul.f32.gmra.mxu0 %v973
        %v2454 = vpop.f32.mrf.mxu0
        %v2455 = vadd.f32 %v768, %v2454
        %2456 = vmatmul.f32.gmra.mxu0 %v976
        %v2457 = vpop.f32.mrf.mxu0
        %v2458 = vadd.f32 %v769, %v2457
        %2459 = vmatmul.f32.gmra.mxu0 %v979
        %v2460 = vpop.f32.mrf.mxu0
        %v2461 = vadd.f32 %v770, %v2460
        %2462 = vmatmul.f32.gmra.mxu0 %v982
        %v2463 = vpop.f32.mrf.mxu0
        %v2464 = vadd.f32 %v771, %v2463
        %2465 = vmatmul.f32.gmra.mxu0 %v985
        %v2466 = vpop.f32.mrf.mxu0
        %v2467 = vadd.f32 %v772, %v2466
        %2468 = vmatmul.f32.gmra.mxu0 %v988
        %v2469 = vpop.f32.mrf.mxu0
        %v2470 = vadd.f32 %v773, %v2469
        %2471 = vmatmul.f32.gmra.mxu0 %v991
        %v2472 = vpop.f32.mrf.mxu0
        %v2473 = vadd.f32 %v774, %v2472
        %2474 = vmatmul.f32.gmra.mxu0 %v994
        %v2475 = vpop.f32.mrf.mxu0
        %v2476 = vadd.f32 %v775, %v2475
        %2477 = vmatmul.f32.gmra.mxu0 %v997
        %v2478 = vpop.f32.mrf.mxu0
        %v2479 = vadd.f32 %v776, %v2478
        %2480 = vmatmul.f32.gmra.mxu0 %v1000
        %v2481 = vpop.f32.mrf.mxu0
        %v2482 = vadd.f32 %v777, %v2481
        %2483 = vmatmul.f32.gmra.mxu0 %v1003
        %v2484 = vpop.f32.mrf.mxu0
        %v2485 = vadd.f32 %v778, %v2484
        %2486 = vmatmul.f32.gmra.mxu0 %v1006
        %v2487 = vpop.f32.mrf.mxu0
        %v2488 = vadd.f32 %v779, %v2487
        %2489 = vmatmul.f32.gmra.mxu0 %v1009
        %v2490 = vpop.f32.mrf.mxu0
        %v2491 = vadd.f32 %v780, %v2490
        %2492 = vmatmul.f32.gmra.mxu0 %v1012
        %v2493 = vpop.f32.mrf.mxu0
        %v2494 = vadd.f32 %v781, %v2493
        %2495 = vmatmul.f32.gmra.mxu0 %v1015
        %v2496 = vpop.f32.mrf.mxu0
        %v2497 = vadd.f32 %v782, %v2496
        %2498 = vmatmul.f32.gmra.mxu0 %v1018
        %v2499 = vpop.f32.mrf.mxu0
        %v2500 = vadd.f32 %v783, %v2499
        %2501 = vdwg.mxu0
        %v2502 = vadd.f32 %v2369, %v2455
        %v2503 = vadd.f32 %v2372, %v2458
        %v2504 = vadd.f32 %v2375, %v2461
        %v2505 = vadd.f32 %v2378, %v2464
        %v2506 = vadd.f32 %v2381, %v2467
        %v2507 = vadd.f32 %v2384, %v2470
        %v2508 = vadd.f32 %v2387, %v2473
        %v2509 = vadd.f32 %v2390, %v2476
        %v2510 = vadd.f32 %v2393, %v2479
        %v2511 = vadd.f32 %v2396, %v2482
        %v2512 = vadd.f32 %v2399, %v2485
        %v2513 = vadd.f32 %v2402, %v2488
        %v2514 = vadd.f32 %v2405, %v2491
        %v2515 = vadd.f32 %v2408, %v2494
        %v2516 = vadd.f32 %v2411, %v2497
        %v2517 = vadd.f32 %v2414, %v2500
        %v2518 = vxor.u32 %v2502, 2147483648
        %v2519 = vxor.u32 %v2503, 2147483648
        %v2520 = vxor.u32 %v2504, 2147483648
        %v2521 = vxor.u32 %v2505, 2147483648
        %v2522 = vxor.u32 %v2506, 2147483648
        %v2523 = vxor.u32 %v2507, 2147483648
        %v2524 = vxor.u32 %v2508, 2147483648
        %v2525 = vxor.u32 %v2509, 2147483648
        %v2526 = vxor.u32 %v2510, 2147483648
        %v2527 = vxor.u32 %v2511, 2147483648
        %v2528 = vxor.u32 %v2512, 2147483648
        %v2529 = vxor.u32 %v2513, 2147483648
        %v2530 = vxor.u32 %v2514, 2147483648
        %v2531 = vxor.u32 %v2515, 2147483648
        %v2532 = vxor.u32 %v2516, 2147483648
        %v2533 = vxor.u32 %v2517, 2147483648
        %v2534 = vmul.f32 %v2518, 1.442695
        %v2535 = vpow.pop %v2534
        %v2536 = vmul.f32 %v2519, 1.442695
        %v2537 = vpow.pop %v2536
        %v2538 = vmul.f32 %v2520, 1.442695
        %v2539 = vpow.pop %v2538
        %v2540 = vmul.f32 %v2521, 1.442695
        %v2541 = vpow.pop %v2540
        %v2542 = vmul.f32 %v2522, 1.442695
        %v2543 = vpow.pop %v2542
        %v2544 = vmul.f32 %v2523, 1.442695
        %v2545 = vpow.pop %v2544
        %v2546 = vmul.f32 %v2524, 1.442695
        %v2547 = vpow.pop %v2546
        %v2548 = vmul.f32 %v2525, 1.442695
        %v2549 = vpow.pop %v2548
        %v2550 = vmul.f32 %v2526, 1.442695
        %v2551 = vpow.pop %v2550
        %v2552 = vmul.f32 %v2527, 1.442695
        %v2553 = vpow.pop %v2552
        %v2554 = vmul.f32 %v2528, 1.442695
        %v2555 = vpow.pop %v2554
        %v2556 = vmul.f32 %v2529, 1.442695
        %v2557 = vpow.pop %v2556
        %v2558 = vmul.f32 %v2530, 1.442695
        %v2559 = vpow.pop %v2558
        %v2560 = vmul.f32 %v2531, 1.442695
        %v2561 = vpow.pop %v2560
        %v2562 = vmul.f32 %v2532, 1.442695
        %v2563 = vpow.pop %v2562
        %v2564 = vmul.f32 %v2533, 1.442695
        %v2565 = vpow.pop %v2564
        %v2566 = vadd.f32 %v2535, 1.0
        %v2567 = vadd.f32 %v2537, 1.0
        %v2568 = vadd.f32 %v2539, 1.0
        %v2569 = vadd.f32 %v2541, 1.0
        %v2570 = vadd.f32 %v2543, 1.0
        %v2571 = vadd.f32 %v2545, 1.0
        %v2572 = vadd.f32 %v2547, 1.0
        %v2573 = vadd.f32 %v2549, 1.0
        %v2574 = vadd.f32 %v2551, 1.0
        %v2575 = vadd.f32 %v2553, 1.0
        %v2576 = vadd.f32 %v2555, 1.0
        %v2577 = vadd.f32 %v2557, 1.0
        %v2578 = vadd.f32 %v2559, 1.0
        %v2579 = vadd.f32 %v2561, 1.0
        %v2580 = vadd.f32 %v2563, 1.0
        %v2581 = vadd.f32 %v2565, 1.0
        %v2582 = vrcp.pop %v2566
        %v2583 = vmul.f32 %v2566, %v2582
        %v2584 = vsub.f32 1.0, %v2583
        %v2585 = vmul.f32 %v2582, %v2584
        %v2586 = vadd.f32 %v2582, %v2585
        %vm2587 = vweird.f32 %v2566
        %vm2588 = vweird.f32 %v2582
        %vm2589 = vmor %vm2587, %vm2588
        %v2590 = vsel %vm2589, %v2582, %v2586
        %v2591 = vand.u32 2147483647, %v2566
        %vm2592 = vcmp.eq.f32.partialorder %v2591, 8.507059e+37
        %v2593 = vand.u32 %v2566, 2147483648
        %v2594 = vor.u32 1.1754944e-38, %v2593
        %v2595 = vsel %vm2592, %v2594, %v2590
        %v2596 = vmul.f32 1.0, %v2595
        %v2597 = vrcp.pop %v2567
        %v2598 = vmul.f32 %v2567, %v2597
        %v2599 = vsub.f32 1.0, %v2598
        %v2600 = vmul.f32 %v2597, %v2599
        %v2601 = vadd.f32 %v2597, %v2600
        %vm2602 = vweird.f32 %v2567
        %vm2603 = vweird.f32 %v2597
        %vm2604 = vmor %vm2602, %vm2603
        %v2605 = vsel %vm2604, %v2597, %v2601
        %v2606 = vand.u32 2147483647, %v2567
        %vm2607 = vcmp.eq.f32.partialorder %v2606, 8.507059e+37
        %v2608 = vand.u32 %v2567, 2147483648
        %v2609 = vor.u32 1.1754944e-38, %v2608
        %v2610 = vsel %vm2607, %v2609, %v2605
        %v2611 = vmul.f32 1.0, %v2610
        %v2612 = vrcp.pop %v2568
        %v2613 = vmul.f32 %v2568, %v2612
        %v2614 = vsub.f32 1.0, %v2613
        %v2615 = vmul.f32 %v2612, %v2614
        %v2616 = vadd.f32 %v2612, %v2615
        %vm2617 = vweird.f32 %v2568
        %vm2618 = vweird.f32 %v2612
        %vm2619 = vmor %vm2617, %vm2618
        %v2620 = vsel %vm2619, %v2612, %v2616
        %v2621 = vand.u32 2147483647, %v2568
        %vm2622 = vcmp.eq.f32.partialorder %v2621, 8.507059e+37
        %v2623 = vand.u32 %v2568, 2147483648
        %v2624 = vor.u32 1.1754944e-38, %v2623
        %v2625 = vsel %vm2622, %v2624, %v2620
        %v2626 = vmul.f32 1.0, %v2625
        %v2627 = vrcp.pop %v2569
        %v2628 = vmul.f32 %v2569, %v2627
        %v2629 = vsub.f32 1.0, %v2628
        %v2630 = vmul.f32 %v2627, %v2629
        %v2631 = vadd.f32 %v2627, %v2630
        %vm2632 = vweird.f32 %v2569
        %vm2633 = vweird.f32 %v2627
        %vm2634 = vmor %vm2632, %vm2633
        %v2635 = vsel %vm2634, %v2627, %v2631
        %v2636 = vand.u32 2147483647, %v2569
        %vm2637 = vcmp.eq.f32.partialorder %v2636, 8.507059e+37
        %v2638 = vand.u32 %v2569, 2147483648
        %v2639 = vor.u32 1.1754944e-38, %v2638
        %v2640 = vsel %vm2637, %v2639, %v2635
        %v2641 = vmul.f32 1.0, %v2640
        %v2642 = vrcp.pop %v2570
        %v2643 = vmul.f32 %v2570, %v2642
        %v2644 = vsub.f32 1.0, %v2643
        %v2645 = vmul.f32 %v2642, %v2644
        %v2646 = vadd.f32 %v2642, %v2645
        %vm2647 = vweird.f32 %v2570
        %vm2648 = vweird.f32 %v2642
        %vm2649 = vmor %vm2647, %vm2648
        %v2650 = vsel %vm2649, %v2642, %v2646
        %v2651 = vand.u32 2147483647, %v2570
        %vm2652 = vcmp.eq.f32.partialorder %v2651, 8.507059e+37
        %v2653 = vand.u32 %v2570, 2147483648
        %v2654 = vor.u32 1.1754944e-38, %v2653
        %v2655 = vsel %vm2652, %v2654, %v2650
        %v2656 = vmul.f32 1.0, %v2655
        %v2657 = vrcp.pop %v2571
        %v2658 = vmul.f32 %v2571, %v2657
        %v2659 = vsub.f32 1.0, %v2658
        %v2660 = vmul.f32 %v2657, %v2659
        %v2661 = vadd.f32 %v2657, %v2660
        %vm2662 = vweird.f32 %v2571
        %vm2663 = vweird.f32 %v2657
        %vm2664 = vmor %vm2662, %vm2663
        %v2665 = vsel %vm2664, %v2657, %v2661
        %v2666 = vand.u32 2147483647, %v2571
        %vm2667 = vcmp.eq.f32.partialorder %v2666, 8.507059e+37
        %v2668 = vand.u32 %v2571, 2147483648
        %v2669 = vor.u32 1.1754944e-38, %v2668
        %v2670 = vsel %vm2667, %v2669, %v2665
        %v2671 = vmul.f32 1.0, %v2670
        %v2672 = vrcp.pop %v2572
        %v2673 = vmul.f32 %v2572, %v2672
        %v2674 = vsub.f32 1.0, %v2673
        %v2675 = vmul.f32 %v2672, %v2674
        %v2676 = vadd.f32 %v2672, %v2675
        %vm2677 = vweird.f32 %v2572
        %vm2678 = vweird.f32 %v2672
        %vm2679 = vmor %vm2677, %vm2678
        %v2680 = vsel %vm2679, %v2672, %v2676
        %v2681 = vand.u32 2147483647, %v2572
        %vm2682 = vcmp.eq.f32.partialorder %v2681, 8.507059e+37
        %v2683 = vand.u32 %v2572, 2147483648
        %v2684 = vor.u32 1.1754944e-38, %v2683
        %v2685 = vsel %vm2682, %v2684, %v2680
        %v2686 = vmul.f32 1.0, %v2685
        %v2687 = vrcp.pop %v2573
        %v2688 = vmul.f32 %v2573, %v2687
        %v2689 = vsub.f32 1.0, %v2688
        %v2690 = vmul.f32 %v2687, %v2689
        %v2691 = vadd.f32 %v2687, %v2690
        %vm2692 = vweird.f32 %v2573
        %vm2693 = vweird.f32 %v2687
        %vm2694 = vmor %vm2692, %vm2693
        %v2695 = vsel %vm2694, %v2687, %v2691
        %v2696 = vand.u32 2147483647, %v2573
        %vm2697 = vcmp.eq.f32.partialorder %v2696, 8.507059e+37
        %v2698 = vand.u32 %v2573, 2147483648
        %v2699 = vor.u32 1.1754944e-38, %v2698
        %v2700 = vsel %vm2697, %v2699, %v2695
        %v2701 = vmul.f32 1.0, %v2700
        %v2702 = vrcp.pop %v2574
        %v2703 = vmul.f32 %v2574, %v2702
        %v2704 = vsub.f32 1.0, %v2703
        %v2705 = vmul.f32 %v2702, %v2704
        %v2706 = vadd.f32 %v2702, %v2705
        %vm2707 = vweird.f32 %v2574
        %vm2708 = vweird.f32 %v2702
        %vm2709 = vmor %vm2707, %vm2708
        %v2710 = vsel %vm2709, %v2702, %v2706
        %v2711 = vand.u32 2147483647, %v2574
        %vm2712 = vcmp.eq.f32.partialorder %v2711, 8.507059e+37
        %v2713 = vand.u32 %v2574, 2147483648
        %v2714 = vor.u32 1.1754944e-38, %v2713
        %v2715 = vsel %vm2712, %v2714, %v2710
        %v2716 = vmul.f32 1.0, %v2715
        %v2717 = vrcp.pop %v2575
        %v2718 = vmul.f32 %v2575, %v2717
        %v2719 = vsub.f32 1.0, %v2718
        %v2720 = vmul.f32 %v2717, %v2719
        %v2721 = vadd.f32 %v2717, %v2720
        %vm2722 = vweird.f32 %v2575
        %vm2723 = vweird.f32 %v2717
        %vm2724 = vmor %vm2722, %vm2723
        %v2725 = vsel %vm2724, %v2717, %v2721
        %v2726 = vand.u32 2147483647, %v2575
        %vm2727 = vcmp.eq.f32.partialorder %v2726, 8.507059e+37
        %v2728 = vand.u32 %v2575, 2147483648
        %v2729 = vor.u32 1.1754944e-38, %v2728
        %v2730 = vsel %vm2727, %v2729, %v2725
        %v2731 = vmul.f32 1.0, %v2730
        %v2732 = vrcp.pop %v2576
        %v2733 = vmul.f32 %v2576, %v2732
        %v2734 = vsub.f32 1.0, %v2733
        %v2735 = vmul.f32 %v2732, %v2734
        %v2736 = vadd.f32 %v2732, %v2735
        %vm2737 = vweird.f32 %v2576
        %vm2738 = vweird.f32 %v2732
        %vm2739 = vmor %vm2737, %vm2738
        %v2740 = vsel %vm2739, %v2732, %v2736
        %v2741 = vand.u32 2147483647, %v2576
        %vm2742 = vcmp.eq.f32.partialorder %v2741, 8.507059e+37
        %v2743 = vand.u32 %v2576, 2147483648
        %v2744 = vor.u32 1.1754944e-38, %v2743
        %v2745 = vsel %vm2742, %v2744, %v2740
        %v2746 = vmul.f32 1.0, %v2745
        %v2747 = vrcp.pop %v2577
        %v2748 = vmul.f32 %v2577, %v2747
        %v2749 = vsub.f32 1.0, %v2748
        %v2750 = vmul.f32 %v2747, %v2749
        %v2751 = vadd.f32 %v2747, %v2750
        %vm2752 = vweird.f32 %v2577
        %vm2753 = vweird.f32 %v2747
        %vm2754 = vmor %vm2752, %vm2753
        %v2755 = vsel %vm2754, %v2747, %v2751
        %v2756 = vand.u32 2147483647, %v2577
        %vm2757 = vcmp.eq.f32.partialorder %v2756, 8.507059e+37
        %v2758 = vand.u32 %v2577, 2147483648
        %v2759 = vor.u32 1.1754944e-38, %v2758
        %v2760 = vsel %vm2757, %v2759, %v2755
        %v2761 = vmul.f32 1.0, %v2760
        %v2762 = vrcp.pop %v2578
        %v2763 = vmul.f32 %v2578, %v2762
        %v2764 = vsub.f32 1.0, %v2763
        %v2765 = vmul.f32 %v2762, %v2764
        %v2766 = vadd.f32 %v2762, %v2765
        %vm2767 = vweird.f32 %v2578
        %vm2768 = vweird.f32 %v2762
        %vm2769 = vmor %vm2767, %vm2768
        %v2770 = vsel %vm2769, %v2762, %v2766
        %v2771 = vand.u32 2147483647, %v2578
        %vm2772 = vcmp.eq.f32.partialorder %v2771, 8.507059e+37
        %v2773 = vand.u32 %v2578, 2147483648
        %v2774 = vor.u32 1.1754944e-38, %v2773
        %v2775 = vsel %vm2772, %v2774, %v2770
        %v2776 = vmul.f32 1.0, %v2775
        %v2777 = vrcp.pop %v2579
        %v2778 = vmul.f32 %v2579, %v2777
        %v2779 = vsub.f32 1.0, %v2778
        %v2780 = vmul.f32 %v2777, %v2779
        %v2781 = vadd.f32 %v2777, %v2780
        %vm2782 = vweird.f32 %v2579
        %vm2783 = vweird.f32 %v2777
        %vm2784 = vmor %vm2782, %vm2783
        %v2785 = vsel %vm2784, %v2777, %v2781
        %v2786 = vand.u32 2147483647, %v2579
        %vm2787 = vcmp.eq.f32.partialorder %v2786, 8.507059e+37
        %v2788 = vand.u32 %v2579, 2147483648
        %v2789 = vor.u32 1.1754944e-38, %v2788
        %v2790 = vsel %vm2787, %v2789, %v2785
        %v2791 = vmul.f32 1.0, %v2790
        %v2792 = vrcp.pop %v2580
        %v2793 = vmul.f32 %v2580, %v2792
        %v2794 = vsub.f32 1.0, %v2793
        %v2795 = vmul.f32 %v2792, %v2794
        %v2796 = vadd.f32 %v2792, %v2795
        %vm2797 = vweird.f32 %v2580
        %vm2798 = vweird.f32 %v2792
        %vm2799 = vmor %vm2797, %vm2798
        %v2800 = vsel %vm2799, %v2792, %v2796
        %v2801 = vand.u32 2147483647, %v2580
        %vm2802 = vcmp.eq.f32.partialorder %v2801, 8.507059e+37
        %v2803 = vand.u32 %v2580, 2147483648
        %v2804 = vor.u32 1.1754944e-38, %v2803
        %v2805 = vsel %vm2802, %v2804, %v2800
        %v2806 = vmul.f32 1.0, %v2805
        %v2807 = vrcp.pop %v2581
        %v2808 = vmul.f32 %v2581, %v2807
        %v2809 = vsub.f32 1.0, %v2808
        %v2810 = vmul.f32 %v2807, %v2809
        %v2811 = vadd.f32 %v2807, %v2810
        %vm2812 = vweird.f32 %v2581
        %vm2813 = vweird.f32 %v2807
        %vm2814 = vmor %vm2812, %vm2813
        %v2815 = vsel %vm2814, %v2807, %v2811
        %v2816 = vand.u32 2147483647, %v2581
        %vm2817 = vcmp.eq.f32.partialorder %v2816, 8.507059e+37
        %v2818 = vand.u32 %v2581, 2147483648
        %v2819 = vor.u32 1.1754944e-38, %v2818
        %v2820 = vsel %vm2817, %v2819, %v2815
        %v2821 = vmul.f32 1.0, %v2820
        %v2822 = vmul.f32 %v801, %v1265
        %v2823 = vmul.f32 %v802, %v1280
        %v2824 = vmul.f32 %v803, %v1295
        %v2825 = vmul.f32 %v804, %v1310
        %v2826 = vmul.f32 %v805, %v1325
        %v2827 = vmul.f32 %v806, %v1340
        %v2828 = vmul.f32 %v807, %v1355
        %v2829 = vmul.f32 %v808, %v1370
        %v2830 = vmul.f32 %v809, %v1385
        %v2831 = vmul.f32 %v810, %v1400
        %v2832 = vmul.f32 %v811, %v1415
        %v2833 = vmul.f32 %v812, %v1430
        %v2834 = vmul.f32 %v813, %v1445
        %v2835 = vmul.f32 %v814, %v1460
        %v2836 = vmul.f32 %v815, %v1475
        %v2837 = vmul.f32 %v816, %v1490
        %2839 = vset.pattern.permute.xlu0 0
        %2840 = vperm.xlu0 %2839, %v2596
        %v2841 = vpop.permute.xlu0 %2840
        %2844 = vset.pattern.permute.xlu0 0
        %2845 = vperm.xlu0 %2844, %v2611
        %v2846 = vpop.permute.xlu0 %2845
        %2849 = vset.pattern.permute.xlu0 0
        %2850 = vperm.xlu0 %2849, %v2626
        %v2851 = vpop.permute.xlu0 %2850
        %2854 = vset.pattern.permute.xlu0 0
        %2855 = vperm.xlu0 %2854, %v2641
        %v2856 = vpop.permute.xlu0 %2855
        %2859 = vset.pattern.permute.xlu0 0
        %2860 = vperm.xlu0 %2859, %v2656
        %v2861 = vpop.permute.xlu0 %2860
        %2864 = vset.pattern.permute.xlu0 0
        %2865 = vperm.xlu0 %2864, %v2671
        %v2866 = vpop.permute.xlu0 %2865
        %2869 = vset.pattern.permute.xlu0 0
        %2870 = vperm.xlu0 %2869, %v2686
        %v2871 = vpop.permute.xlu0 %2870
        %2874 = vset.pattern.permute.xlu0 0
        %2875 = vperm.xlu0 %2874, %v2701
        %v2876 = vpop.permute.xlu0 %2875
        %2879 = vset.pattern.permute.xlu0 0
        %2880 = vperm.xlu0 %2879, %v2716
        %v2881 = vpop.permute.xlu0 %2880
        %2884 = vset.pattern.permute.xlu0 0
        %2885 = vperm.xlu0 %2884, %v2731
        %v2886 = vpop.permute.xlu0 %2885
        %2889 = vset.pattern.permute.xlu0 0
        %2890 = vperm.xlu0 %2889, %v2746
        %v2891 = vpop.permute.xlu0 %2890
        %2894 = vset.pattern.permute.xlu0 0
        %2895 = vperm.xlu0 %2894, %v2761
        %v2896 = vpop.permute.xlu0 %2895
        %2899 = vset.pattern.permute.xlu0 0
        %2900 = vperm.xlu0 %2899, %v2776
        %v2901 = vpop.permute.xlu0 %2900
        %2904 = vset.pattern.permute.xlu0 0
        %2905 = vperm.xlu0 %2904, %v2791
        %v2906 = vpop.permute.xlu0 %2905
        %2909 = vset.pattern.permute.xlu0 0
        %2910 = vperm.xlu0 %2909, %v2806
        %v2911 = vpop.permute.xlu0 %2910
        %2914 = vset.pattern.permute.xlu0 0
        %2915 = vperm.xlu0 %2914, %v2821
        %v2916 = vpop.permute.xlu0 %2915
        %v2918 = vmul.f32 %v2822, %v2841
        %v2919 = vmul.f32 %v2823, %v2846
        %v2920 = vmul.f32 %v2824, %v2851
        %v2921 = vmul.f32 %v2825, %v2856
        %v2922 = vmul.f32 %v2826, %v2861
        %v2923 = vmul.f32 %v2827, %v2866
        %v2924 = vmul.f32 %v2828, %v2871
        %v2925 = vmul.f32 %v2829, %v2876
        %v2926 = vmul.f32 %v2830, %v2881
        %v2927 = vmul.f32 %v2831, %v2886
        %v2928 = vmul.f32 %v2832, %v2891
        %v2929 = vmul.f32 %v2833, %v2896
        %v2930 = vmul.f32 %v2834, %v2901
        %v2931 = vmul.f32 %v2835, %v2906
        %v2932 = vmul.f32 %v2836, %v2911
        %v2933 = vmul.f32 %v2837, %v2916
        %s2934 = scalar_lea.vmem %s5, 24
        %v2935 = vld [vmem:[%s2934] sm:$0xff]
        %v2936 = vld [vmem:[%s2934 + $0x8] sm:$0xff]
        %v2937 = vld [vmem:[%s2934 + $0x10] sm:$0xf]
        %v2939 = vsel %vm1491, %v2918, 0
        %v2942 = vsel %vm1491, %v2919, 0
        %v2945 = vsel %vm1491, %v2920, 0
        %v2948 = vsel %vm1491, %v2921, 0
        %v2951 = vsel %vm1491, %v2922, 0
        %v2954 = vsel %vm1491, %v2923, 0
        %v2957 = vsel %vm1491, %v2924, 0
        %v2960 = vsel %vm1491, %v2925, 0
        %v2963 = vsel %vm1491, %v2926, 0
        %v2966 = vsel %vm1491, %v2927, 0
        %v2969 = vsel %vm1491, %v2928, 0
        %v2972 = vsel %vm1491, %v2929, 0
        %v2975 = vsel %vm1491, %v2930, 0
        %v2978 = vsel %vm1491, %v2931, 0
        %v2981 = vsel %vm1491, %v2932, 0
        %v2984 = vsel %vm1491, %v2933, 0
        %vm2986 = vcmask 1043456
        %v2988 = vsel %vm2986, %v2937, 0
        %2990 = vmatpush.msra.mxu0 0.0
        %2991 = vmatpush.msra.mxu0 0.0
        %2992 = vmatpush.msra.mxu0 0.0
        %2993 = vmatpush.msra.mxu0 0.0
        %2994 = vmatpush.msra.mxu0 0.0
        %2995 = vmatpush.msra.mxu0 0.0
        %2996 = vmatpush.msra.mxu0 0.0
        %2997 = vmatpush.msra.mxu0 0.0
        %2998 = vmatpush.msra.mxu0 0.0
        %2999 = vmatpush.msra.mxu0 0.0
        %3000 = vmatpush.msra.mxu0 0.0
        %3001 = vmatpush.msra.mxu0 0.0
        %3002 = vmatpush.msra.mxu0 0.0
        %3003 = vmatpush.msra.mxu0 %v2988
        %3004 = vmatpush.msra.mxu0 %v2936
        %3005 = vmatpush.msra.mxu0 %v2935
        %3006 = vmatmul.f32.gmra.mxu0 %v2939
        %v3007 = vpop.f32.mrf.mxu0
        %v3008 = vadd.f32 0.0, %v3007
        %3009 = vmatmul.f32.gmra.mxu0 %v2942
        %v3010 = vpop.f32.mrf.mxu0
        %v3011 = vadd.f32 0.0, %v3010
        %3012 = vmatmul.f32.gmra.mxu0 %v2945
        %v3013 = vpop.f32.mrf.mxu0
        %v3014 = vadd.f32 0.0, %v3013
        %3015 = vmatmul.f32.gmra.mxu0 %v2948
        %v3016 = vpop.f32.mrf.mxu0
        %v3017 = vadd.f32 0.0, %v3016
        %3018 = vmatmul.f32.gmra.mxu0 %v2951
        %v3019 = vpop.f32.mrf.mxu0
        %v3020 = vadd.f32 0.0, %v3019
        %3021 = vmatmul.f32.gmra.mxu0 %v2954
        %v3022 = vpop.f32.mrf.mxu0
        %v3023 = vadd.f32 0.0, %v3022
        %3024 = vmatmul.f32.gmra.mxu0 %v2957
        %v3025 = vpop.f32.mrf.mxu0
        %v3026 = vadd.f32 0.0, %v3025
        %3027 = vmatmul.f32.gmra.mxu0 %v2960
        %v3028 = vpop.f32.mrf.mxu0
        %v3029 = vadd.f32 0.0, %v3028
        %3030 = vmatmul.f32.gmra.mxu0 %v2963
        %v3031 = vpop.f32.mrf.mxu0
        %v3032 = vadd.f32 0.0, %v3031
        %3033 = vmatmul.f32.gmra.mxu0 %v2966
        %v3034 = vpop.f32.mrf.mxu0
        %v3035 = vadd.f32 0.0, %v3034
        %3036 = vmatmul.f32.gmra.mxu0 %v2969
        %v3037 = vpop.f32.mrf.mxu0
        %v3038 = vadd.f32 0.0, %v3037
        %3039 = vmatmul.f32.gmra.mxu0 %v2972
        %v3040 = vpop.f32.mrf.mxu0
        %v3041 = vadd.f32 0.0, %v3040
        %3042 = vmatmul.f32.gmra.mxu0 %v2975
        %v3043 = vpop.f32.mrf.mxu0
        %v3044 = vadd.f32 0.0, %v3043
        %3045 = vmatmul.f32.gmra.mxu0 %v2978
        %v3046 = vpop.f32.mrf.mxu0
        %v3047 = vadd.f32 0.0, %v3046
        %3048 = vmatmul.f32.gmra.mxu0 %v2981
        %v3049 = vpop.f32.mrf.mxu0
        %v3050 = vadd.f32 0.0, %v3049
        %3051 = vmatmul.f32.gmra.mxu0 %v2984
        %v3052 = vpop.f32.mrf.mxu0
        %v3053 = vadd.f32 0.0, %v3052
        %3054 = vdwg.mxu0
        %v3056 = vsel %vm1491, %v2199, 0
        %v3059 = vsel %vm1491, %v2200, 0
        %v3062 = vsel %vm1491, %v2201, 0
        %v3065 = vsel %vm1491, %v2202, 0
        %v3068 = vsel %vm1491, %v2203, 0
        %v3071 = vsel %vm1491, %v2204, 0
        %v3074 = vsel %vm1491, %v2205, 0
        %v3077 = vsel %vm1491, %v2206, 0
        %v3080 = vsel %vm1491, %v2207, 0
        %v3083 = vsel %vm1491, %v2208, 0
        %v3086 = vsel %vm1491, %v2209, 0
        %v3089 = vsel %vm1491, %v2210, 0
        %v3092 = vsel %vm1491, %v2211, 0
        %v3095 = vsel %vm1491, %v2212, 0
        %v3098 = vsel %vm1491, %v2213, 0
        %v3101 = vsel %vm1491, %v2214, 0
        %v3104 = vsel %vm2986, %v2217, 0
        %3106 = vmatpush.msra.mxu0 0.0
        %3107 = vmatpush.msra.mxu0 0.0
        %3108 = vmatpush.msra.mxu0 0.0
        %3109 = vmatpush.msra.mxu0 0.0
        %3110 = vmatpush.msra.mxu0 0.0
        %3111 = vmatpush.msra.mxu0 0.0
        %3112 = vmatpush.msra.mxu0 0.0
        %3113 = vmatpush.msra.mxu0 0.0
        %3114 = vmatpush.msra.mxu0 0.0
        %3115 = vmatpush.msra.mxu0 0.0
        %3116 = vmatpush.msra.mxu0 0.0
        %3117 = vmatpush.msra.mxu0 0.0
        %3118 = vmatpush.msra.mxu0 0.0
        %3119 = vmatpush.msra.mxu0 %v3104
        %3120 = vmatpush.msra.mxu0 %v2216
        %3121 = vmatpush.msra.mxu0 %v2215
        %3122 = vmatmul.f32.gmra.mxu0 %v3056
        %v3123 = vpop.f32.mrf.mxu0
        %v3124 = vadd.f32 %v3008, %v3123
        %3125 = vmatmul.f32.gmra.mxu0 %v3059
        %v3126 = vpop.f32.mrf.mxu0
        %v3127 = vadd.f32 %v3011, %v3126
        %3128 = vmatmul.f32.gmra.mxu0 %v3062
        %v3129 = vpop.f32.mrf.mxu0
        %v3130 = vadd.f32 %v3014, %v3129
        %3131 = vmatmul.f32.gmra.mxu0 %v3065
        %v3132 = vpop.f32.mrf.mxu0
        %v3133 = vadd.f32 %v3017, %v3132
        %3134 = vmatmul.f32.gmra.mxu0 %v3068
        %v3135 = vpop.f32.mrf.mxu0
        %v3136 = vadd.f32 %v3020, %v3135
        %3137 = vmatmul.f32.gmra.mxu0 %v3071
        %v3138 = vpop.f32.mrf.mxu0
        %v3139 = vadd.f32 %v3023, %v3138
        %3140 = vmatmul.f32.gmra.mxu0 %v3074
        %v3141 = vpop.f32.mrf.mxu0
        %v3142 = vadd.f32 %v3026, %v3141
        %3143 = vmatmul.f32.gmra.mxu0 %v3077
        %v3144 = vpop.f32.mrf.mxu0
        %v3145 = vadd.f32 %v3029, %v3144
        %3146 = vmatmul.f32.gmra.mxu0 %v3080
        %v3147 = vpop.f32.mrf.mxu0
        %v3148 = vadd.f32 %v3032, %v3147
        %3149 = vmatmul.f32.gmra.mxu0 %v3083
        %v3150 = vpop.f32.mrf.mxu0
        %v3151 = vadd.f32 %v3035, %v3150
        %3152 = vmatmul.f32.gmra.mxu0 %v3086
        %v3153 = vpop.f32.mrf.mxu0
        %v3154 = vadd.f32 %v3038, %v3153
        %3155 = vmatmul.f32.gmra.mxu0 %v3089
        %v3156 = vpop.f32.mrf.mxu0
        %v3157 = vadd.f32 %v3041, %v3156
        %3158 = vmatmul.f32.gmra.mxu0 %v3092
        %v3159 = vpop.f32.mrf.mxu0
        %v3160 = vadd.f32 %v3044, %v3159
        %3161 = vmatmul.f32.gmra.mxu0 %v3095
        %v3162 = vpop.f32.mrf.mxu0
        %v3163 = vadd.f32 %v3047, %v3162
        %3164 = vmatmul.f32.gmra.mxu0 %v3098
        %v3165 = vpop.f32.mrf.mxu0
        %v3166 = vadd.f32 %v3050, %v3165
        %3167 = vmatmul.f32.gmra.mxu0 %v3101
        %v3168 = vpop.f32.mrf.mxu0
        %v3169 = vadd.f32 %v3053, %v3168
        %3170 = vdwg.mxu0
        %v3171 = vld [vmem:[%s6] sm:$0x1]
        %v3173 = vperm.slane %v3171, 0
        %v3175 = vadd.f32 %v3124, %v3173
        %v3176 = vadd.f32 %v3127, %v3173
        %v3177 = vadd.f32 %v3130, %v3173
        %v3178 = vadd.f32 %v3133, %v3173
        %v3179 = vadd.f32 %v3136, %v3173
        %v3180 = vadd.f32 %v3139, %v3173
        %v3181 = vadd.f32 %v3142, %v3173
        %v3182 = vadd.f32 %v3145, %v3173
        %v3183 = vadd.f32 %v3148, %v3173
        %v3184 = vadd.f32 %v3151, %v3173
        %v3185 = vadd.f32 %v3154, %v3173
        %v3186 = vadd.f32 %v3157, %v3173
        %v3187 = vadd.f32 %v3160, %v3173
        %v3188 = vadd.f32 %v3163, %v3173
        %v3189 = vadd.f32 %v3166, %v3173
        %v3190 = vadd.f32 %v3169, %v3173
        %v3191 = vlaneseq
        %v3192 = vand.u32 %v3191, 127
        %vm3193 = vcmp.lt.s32.totalorder %v3192, 100
        %v3194 = vld [vmem:[%s7] sm:$0xff]
        %v3195 = vld [vmem:[%s7 + $0x8] sm:$0xff]
        %v3196 = vld [vmem:[%s7 + $0x10] sm:$0xff]
        %v3197 = vld [vmem:[%s7 + $0x18] sm:$0xff]
        %v3198 = vld [vmem:[%s8] sm:$0x1]
        %v3199 = vld [vmem:[%s9] sm:$0xff]
        %v3200 = vld [vmem:[%s9 + $0x8] sm:$0xff]
        %v3201 = vld [vmem:[%s9 + $0x10] sm:$0xff]
        %v3202 = vld [vmem:[%s9 + $0x18] sm:$0xff]
        %v3203 = vld [vmem:[%s10] sm:$0x1]
        %v3204 = vld [vmem:[%s11] sm:$0xff]
        %v3205 = vld [vmem:[%s11 + $0x8] sm:$0xff]
        %v3206 = vld [vmem:[%s11 + $0x10] sm:$0xff]
        %v3207 = vld [vmem:[%s11 + $0x18] sm:$0xff]
        %v3208 = vld [vmem:[%s12] sm:$0x1]
        %v3209 = vld [vmem:[%s13] sm:$0x1]
        %v3210 = vld [vmem:[%s14] sm:$0x1]
        %v3211 = vld [vmem:[%s15] sm:$0xff]
        %v3212 = vld [vmem:[%s15 + $0x8] sm:$0xff]
        %v3213 = vld [vmem:[%s15 + $0x10] sm:$0xff]
        %v3214 = vld [vmem:[%s15 + $0x18] sm:$0xff]
        %v3215 = vld [vmem:[%s16] sm:$0x1]
        %v3216 = vld [vmem:[%s17] sm:$0xff]
        %v3217 = vld [vmem:[%s17 + $0x8] sm:$0xff]
        %v3218 = vld [vmem:[%s17 + $0x10] sm:$0xff]
        %v3219 = vld [vmem:[%s17 + $0x18] sm:$0xff]
        %v3220 = vld [vmem:[%s17 + $0x20] sm:$0xff]
        %v3221 = vld [vmem:[%s17 + $0x28] sm:$0xff]
        %v3222 = vld [vmem:[%s17 + $0x30] sm:$0xff]
        %v3223 = vld [vmem:[%s17 + $0x38] sm:$0xff]
        %v3224 = vld [vmem:[%s18] sm:$0x1]
        %v3225 = vld [vmem:[%s19] sm:$0x1]
        %v3226 = vld [vmem:[%s20] sm:$0x1]
        %v3228 = vperm.slane %v3198, 0
        %vm3230 = vcmask 261120
        %v3232 = vsel %vm3230, %v3175, 0
        %v3235 = vsel %vm3230, %v3176, 0
        %v3238 = vsel %vm3230, %v3177, 0
        %v3241 = vsel %vm3230, %v3178, 0
        %v3244 = vsel %vm3230, %v3179, 0
        %v3247 = vsel %vm3230, %v3180, 0
        %v3250 = vsel %vm3230, %v3181, 0
        %v3253 = vsel %vm3230, %v3182, 0
        %v3256 = vsel %vm3230, %v3183, 0
        %v3259 = vsel %vm3230, %v3184, 0
        %v3262 = vsel %vm3230, %v3185, 0
        %v3265 = vsel %vm3230, %v3186, 0
        %v3268 = vsel %vm3230, %v3187, 0
        %v3271 = vsel %vm3230, %v3188, 0
        %v3274 = vsel %vm3230, %v3189, 0
        %v3277 = vsel %vm3230, %v3190, 0
        %3279 = vmatpush.msra.mxu0 0.0
        %3280 = vmatpush.msra.mxu0 0.0
        %3281 = vmatpush.msra.mxu0 0.0
        %3282 = vmatpush.msra.mxu0 0.0
        %3283 = vmatpush.msra.mxu0 0.0
        %3284 = vmatpush.msra.mxu0 0.0
        %3285 = vmatpush.msra.mxu0 0.0
        %3286 = vmatpush.msra.mxu0 0.0
        %3287 = vmatpush.msra.mxu0 0.0
        %3288 = vmatpush.msra.mxu0 0.0
        %3289 = vmatpush.msra.mxu0 0.0
        %3290 = vmatpush.msra.mxu0 0.0
        %3291 = vmatpush.msra.mxu0 %v3197
        %3292 = vmatpush.msra.mxu0 %v3196
        %3293 = vmatpush.msra.mxu0 %v3195
        %3294 = vmatpush.msra.mxu0 %v3194
        %3295 = vmatmul.f32.gmra.mxu0 %v3232
        %v3296 = vpop.f32.mrf.mxu0
        %v3297 = vadd.f32 %v3228, %v3296
        %3298 = vmatmul.f32.gmra.mxu0 %v3235
        %v3299 = vpop.f32.mrf.mxu0
        %v3300 = vadd.f32 %v3228, %v3299
        %3301 = vmatmul.f32.gmra.mxu0 %v3238
        %v3302 = vpop.f32.mrf.mxu0
        %v3303 = vadd.f32 %v3228, %v3302
        %3304 = vmatmul.f32.gmra.mxu0 %v3241
        %v3305 = vpop.f32.mrf.mxu0
        %v3306 = vadd.f32 %v3228, %v3305
        %3307 = vmatmul.f32.gmra.mxu0 %v3244
        %v3308 = vpop.f32.mrf.mxu0
        %v3309 = vadd.f32 %v3228, %v3308
        %3310 = vmatmul.f32.gmra.mxu0 %v3247
        %v3311 = vpop.f32.mrf.mxu0
        %v3312 = vadd.f32 %v3228, %v3311
        %3313 = vmatmul.f32.gmra.mxu0 %v3250
        %v3314 = vpop.f32.mrf.mxu0
        %v3315 = vadd.f32 %v3228, %v3314
        %3316 = vmatmul.f32.gmra.mxu0 %v3253
        %v3317 = vpop.f32.mrf.mxu0
        %v3318 = vadd.f32 %v3228, %v3317
        %3319 = vmatmul.f32.gmra.mxu0 %v3256
        %v3320 = vpop.f32.mrf.mxu0
        %v3321 = vadd.f32 %v3228, %v3320
        %3322 = vmatmul.f32.gmra.mxu0 %v3259
        %v3323 = vpop.f32.mrf.mxu0
        %v3324 = vadd.f32 %v3228, %v3323
        %3325 = vmatmul.f32.gmra.mxu0 %v3262
        %v3326 = vpop.f32.mrf.mxu0
        %v3327 = vadd.f32 %v3228, %v3326
        %3328 = vmatmul.f32.gmra.mxu0 %v3265
        %v3329 = vpop.f32.mrf.mxu0
        %v3330 = vadd.f32 %v3228, %v3329
        %3331 = vmatmul.f32.gmra.mxu0 %v3268
        %v3332 = vpop.f32.mrf.mxu0
        %v3333 = vadd.f32 %v3228, %v3332
        %3334 = vmatmul.f32.gmra.mxu0 %v3271
        %v3335 = vpop.f32.mrf.mxu0
        %v3336 = vadd.f32 %v3228, %v3335
        %3337 = vmatmul.f32.gmra.mxu0 %v3274
        %v3338 = vpop.f32.mrf.mxu0
        %v3339 = vadd.f32 %v3228, %v3338
        %3340 = vmatmul.f32.gmra.mxu0 %v3277
        %v3341 = vpop.f32.mrf.mxu0
        %v3342 = vadd.f32 %v3228, %v3341
        %3343 = vdwg.mxu0
        %v3345 = vperm.slane %v3203, 0
        %3347 = vmatpush.msra.mxu0 0.0
        %3348 = vmatpush.msra.mxu0 0.0
        %3349 = vmatpush.msra.mxu0 0.0
        %3350 = vmatpush.msra.mxu0 0.0
        %3351 = vmatpush.msra.mxu0 0.0
        %3352 = vmatpush.msra.mxu0 0.0
        %3353 = vmatpush.msra.mxu0 0.0
        %3354 = vmatpush.msra.mxu0 0.0
        %3355 = vmatpush.msra.mxu0 0.0
        %3356 = vmatpush.msra.mxu0 0.0
        %3357 = vmatpush.msra.mxu0 0.0
        %3358 = vmatpush.msra.mxu0 0.0
        %3359 = vmatpush.msra.mxu0 %v3202
        %3360 = vmatpush.msra.mxu0 %v3201
        %3361 = vmatpush.msra.mxu0 %v3200
        %3362 = vmatpush.msra.mxu0 %v3199
        %3363 = vmatmul.f32.gmra.mxu0 %v3232
        %v3364 = vpop.f32.mrf.mxu0
        %v3365 = vadd.f32 %v3345, %v3364
        %3366 = vmatmul.f32.gmra.mxu0 %v3235
        %v3367 = vpop.f32.mrf.mxu0
        %v3368 = vadd.f32 %v3345, %v3367
        %3369 = vmatmul.f32.gmra.mxu0 %v3238
        %v3370 = vpop.f32.mrf.mxu0
        %v3371 = vadd.f32 %v3345, %v3370
        %3372 = vmatmul.f32.gmra.mxu0 %v3241
        %v3373 = vpop.f32.mrf.mxu0
        %v3374 = vadd.f32 %v3345, %v3373
        %3375 = vmatmul.f32.gmra.mxu0 %v3244
        %v3376 = vpop.f32.mrf.mxu0
        %v3377 = vadd.f32 %v3345, %v3376
        %3378 = vmatmul.f32.gmra.mxu0 %v3247
        %v3379 = vpop.f32.mrf.mxu0
        %v3380 = vadd.f32 %v3345, %v3379
        %3381 = vmatmul.f32.gmra.mxu0 %v3250
        %v3382 = vpop.f32.mrf.mxu0
        %v3383 = vadd.f32 %v3345, %v3382
        %3384 = vmatmul.f32.gmra.mxu0 %v3253
        %v3385 = vpop.f32.mrf.mxu0
        %v3386 = vadd.f32 %v3345, %v3385
        %3387 = vmatmul.f32.gmra.mxu0 %v3256
        %v3388 = vpop.f32.mrf.mxu0
        %v3389 = vadd.f32 %v3345, %v3388
        %3390 = vmatmul.f32.gmra.mxu0 %v3259
        %v3391 = vpop.f32.mrf.mxu0
        %v3392 = vadd.f32 %v3345, %v3391
        %3393 = vmatmul.f32.gmra.mxu0 %v3262
        %v3394 = vpop.f32.mrf.mxu0
        %v3395 = vadd.f32 %v3345, %v3394
        %3396 = vmatmul.f32.gmra.mxu0 %v3265
        %v3397 = vpop.f32.mrf.mxu0
        %v3398 = vadd.f32 %v3345, %v3397
        %3399 = vmatmul.f32.gmra.mxu0 %v3268
        %v3400 = vpop.f32.mrf.mxu0
        %v3401 = vadd.f32 %v3345, %v3400
        %3402 = vmatmul.f32.gmra.mxu0 %v3271
        %v3403 = vpop.f32.mrf.mxu0
        %v3404 = vadd.f32 %v3345, %v3403
        %3405 = vmatmul.f32.gmra.mxu0 %v3274
        %v3406 = vpop.f32.mrf.mxu0
        %v3407 = vadd.f32 %v3345, %v3406
        %3408 = vmatmul.f32.gmra.mxu0 %v3277
        %v3409 = vpop.f32.mrf.mxu0
        %v3410 = vadd.f32 %v3345, %v3409
        %3411 = vdwg.mxu0
        %v3413 = vsel %vm971, %v3297, 0
        %v3416 = vsel %vm971, %v3300, 0
        %v3419 = vsel %vm971, %v3303, 0
        %v3422 = vsel %vm971, %v3306, 0
        %v3425 = vsel %vm971, %v3309, 0
        %v3428 = vsel %vm971, %v3312, 0
        %v3431 = vsel %vm971, %v3315, 0
        %v3434 = vsel %vm971, %v3318, 0
        %v3437 = vsel %vm971, %v3321, 0
        %v3440 = vsel %vm971, %v3324, 0
        %v3443 = vsel %vm971, %v3327, 0
        %v3446 = vsel %vm971, %v3330, 0
        %v3449 = vsel %vm971, %v3333, 0
        %v3452 = vsel %vm971, %v3336, 0
        %v3455 = vsel %vm971, %v3339, 0
        %v3458 = vsel %vm971, %v3342, 0
        %v3461 = vsel %vm971, %v3365, 0
        %v3464 = vsel %vm971, %v3368, 0
        %v3467 = vsel %vm971, %v3371, 0
        %v3470 = vsel %vm971, %v3374, 0
        %v3473 = vsel %vm971, %v3377, 0
        %v3476 = vsel %vm971, %v3380, 0
        %v3479 = vsel %vm971, %v3383, 0
        %v3482 = vsel %vm971, %v3386, 0
        %v3485 = vsel %vm971, %v3389, 0
        %v3488 = vsel %vm971, %v3392, 0
        %v3491 = vsel %vm971, %v3395, 0
        %v3494 = vsel %vm971, %v3398, 0
        %v3497 = vsel %vm971, %v3401, 0
        %v3500 = vsel %vm971, %v3404, 0
        %v3503 = vsel %vm971, %v3407, 0
        %v3506 = vsel %vm971, %v3410, 0
        %3508 = vmatpush.xpose.msra.mxu0 %v3506
        %3509 = vmatpush.xpose.msra.mxu0 %v3503
        %3510 = vmatpush.xpose.msra.mxu0 %v3500
        %3511 = vmatpush.xpose.msra.mxu0 %v3497
        %3512 = vmatpush.xpose.msra.mxu0 %v3494
        %3513 = vmatpush.xpose.msra.mxu0 %v3491
        %3514 = vmatpush.xpose.msra.mxu0 %v3488
        %3515 = vmatpush.xpose.msra.mxu0 %v3485
        %3516 = vmatpush.xpose.msra.mxu0 %v3482
        %3517 = vmatpush.xpose.msra.mxu0 %v3479
        %3518 = vmatpush.xpose.msra.mxu0 %v3476
        %3519 = vmatpush.xpose.msra.mxu0 %v3473
        %3520 = vmatpush.xpose.msra.mxu0 %v3470
        %3521 = vmatpush.xpose.msra.mxu0 %v3467
        %3522 = vmatpush.xpose.msra.mxu0 %v3464
        %3523 = vmatpush.xpose.msra.mxu0 %v3461
        %3524 = vmatmul.f32.gmra.mxu0 %v3413
        %v3525 = vpop.f32.mrf.mxu0
        %v3526 = vadd.f32 0.0, %v3525
        %3527 = vmatmul.f32.gmra.mxu0 %v3416
        %v3528 = vpop.f32.mrf.mxu0
        %v3529 = vadd.f32 0.0, %v3528
        %3530 = vmatmul.f32.gmra.mxu0 %v3419
        %v3531 = vpop.f32.mrf.mxu0
        %v3532 = vadd.f32 0.0, %v3531
        %3533 = vmatmul.f32.gmra.mxu0 %v3422
        %v3534 = vpop.f32.mrf.mxu0
        %v3535 = vadd.f32 0.0, %v3534
        %3536 = vmatmul.f32.gmra.mxu0 %v3425
        %v3537 = vpop.f32.mrf.mxu0
        %v3538 = vadd.f32 0.0, %v3537
        %3539 = vmatmul.f32.gmra.mxu0 %v3428
        %v3540 = vpop.f32.mrf.mxu0
        %v3541 = vadd.f32 0.0, %v3540
        %3542 = vmatmul.f32.gmra.mxu0 %v3431
        %v3543 = vpop.f32.mrf.mxu0
        %v3544 = vadd.f32 0.0, %v3543
        %3545 = vmatmul.f32.gmra.mxu0 %v3434
        %v3546 = vpop.f32.mrf.mxu0
        %v3547 = vadd.f32 0.0, %v3546
        %3548 = vmatmul.f32.gmra.mxu0 %v3437
        %v3549 = vpop.f32.mrf.mxu0
        %v3550 = vadd.f32 0.0, %v3549
        %3551 = vmatmul.f32.gmra.mxu0 %v3440
        %v3552 = vpop.f32.mrf.mxu0
        %v3553 = vadd.f32 0.0, %v3552
        %3554 = vmatmul.f32.gmra.mxu0 %v3443
        %v3555 = vpop.f32.mrf.mxu0
        %v3556 = vadd.f32 0.0, %v3555
        %3557 = vmatmul.f32.gmra.mxu0 %v3446
        %v3558 = vpop.f32.mrf.mxu0
        %v3559 = vadd.f32 0.0, %v3558
        %3560 = vmatmul.f32.gmra.mxu0 %v3449
        %v3561 = vpop.f32.mrf.mxu0
        %v3562 = vadd.f32 0.0, %v3561
        %3563 = vmatmul.f32.gmra.mxu0 %v3452
        %v3564 = vpop.f32.mrf.mxu0
        %v3565 = vadd.f32 0.0, %v3564
        %3566 = vmatmul.f32.gmra.mxu0 %v3455
        %v3567 = vpop.f32.mrf.mxu0
        %v3568 = vadd.f32 0.0, %v3567
        %3569 = vmatmul.f32.gmra.mxu0 %v3458
        %v3570 = vpop.f32.mrf.mxu0
        %v3571 = vadd.f32 0.0, %v3570
        %3572 = vdwg.mxu0
        %v3573 = vmul.f32 %v3526, 0.35355338
        %v3574 = vmul.f32 %v3529, 0.35355338
        %v3575 = vmul.f32 %v3532, 0.35355338
        %v3576 = vmul.f32 %v3535, 0.35355338
        %v3577 = vmul.f32 %v3538, 0.35355338
        %v3578 = vmul.f32 %v3541, 0.35355338
        %v3579 = vmul.f32 %v3544, 0.35355338
        %v3580 = vmul.f32 %v3547, 0.35355338
        %v3581 = vmul.f32 %v3550, 0.35355338
        %v3582 = vmul.f32 %v3553, 0.35355338
        %v3583 = vmul.f32 %v3556, 0.35355338
        %v3584 = vmul.f32 %v3559, 0.35355338
        %v3585 = vmul.f32 %v3562, 0.35355338
        %v3586 = vmul.f32 %v3565, 0.35355338
        %v3587 = vmul.f32 %v3568, 0.35355338
        %v3588 = vmul.f32 %v3571, 0.35355338
        %v3589 = vsel %vm3193, 1, 0
        %vm3590 = vcmp.eq.s32.totalorder %v3589, 1
        %v3591 = vsel %vm3590, %v3573, -1e+09
        %v3592 = vsel %vm3590, %v3574, -1e+09
        %v3593 = vsel %vm3590, %v3575, -1e+09
        %v3594 = vsel %vm3590, %v3576, -1e+09
        %v3595 = vsel %vm3590, %v3577, -1e+09
        %v3596 = vsel %vm3590, %v3578, -1e+09
        %v3597 = vsel %vm3590, %v3579, -1e+09
        %v3598 = vsel %vm3590, %v3580, -1e+09
        %v3599 = vsel %vm3590, %v3581, -1e+09
        %v3600 = vsel %vm3590, %v3582, -1e+09
        %v3601 = vsel %vm3590, %v3583, -1e+09
        %v3602 = vsel %vm3590, %v3584, -1e+09
        %v3603 = vsel %vm3590, %v3585, -1e+09
        %v3604 = vsel %vm3590, %v3586, -1e+09
        %v3605 = vsel %vm3590, %v3587, -1e+09
        %v3606 = vsel %vm3590, %v3588, -1e+09
        %3607 = vmax.xlane.f32.xlu0 %v3591
        %v3608 = vpop.xlane.xlu0 %3607
        %3609 = vmax.xlane.f32.xlu0 %v3592
        %v3610 = vpop.xlane.xlu0 %3609
        %3611 = vmax.xlane.f32.xlu0 %v3593
        %v3612 = vpop.xlane.xlu0 %3611
        %3613 = vmax.xlane.f32.xlu0 %v3594
        %v3614 = vpop.xlane.xlu0 %3613
        %3615 = vmax.xlane.f32.xlu0 %v3595
        %v3616 = vpop.xlane.xlu0 %3615
        %3617 = vmax.xlane.f32.xlu0 %v3596
        %v3618 = vpop.xlane.xlu0 %3617
        %3619 = vmax.xlane.f32.xlu0 %v3597
        %v3620 = vpop.xlane.xlu0 %3619
        %3621 = vmax.xlane.f32.xlu0 %v3598
        %v3622 = vpop.xlane.xlu0 %3621
        %3623 = vmax.xlane.f32.xlu0 %v3599
        %v3624 = vpop.xlane.xlu0 %3623
        %3625 = vmax.xlane.f32.xlu0 %v3600
        %v3626 = vpop.xlane.xlu0 %3625
        %3627 = vmax.xlane.f32.xlu0 %v3601
        %v3628 = vpop.xlane.xlu0 %3627
        %3629 = vmax.xlane.f32.xlu0 %v3602
        %v3630 = vpop.xlane.xlu0 %3629
        %3631 = vmax.xlane.f32.xlu0 %v3603
        %v3632 = vpop.xlane.xlu0 %3631
        %3633 = vmax.xlane.f32.xlu0 %v3604
        %v3634 = vpop.xlane.xlu0 %3633
        %3635 = vmax.xlane.f32.xlu0 %v3605
        %v3636 = vpop.xlane.xlu0 %3635
        %3637 = vmax.xlane.f32.xlu0 %v3606
        %v3638 = vpop.xlane.xlu0 %3637
        %v3639 = vsub.f32 %v3591, %v3608
        %v3640 = vsub.f32 %v3592, %v3610
        %v3641 = vsub.f32 %v3593, %v3612
        %v3642 = vsub.f32 %v3594, %v3614
        %v3643 = vsub.f32 %v3595, %v3616
        %v3644 = vsub.f32 %v3596, %v3618
        %v3645 = vsub.f32 %v3597, %v3620
        %v3646 = vsub.f32 %v3598, %v3622
        %v3647 = vsub.f32 %v3599, %v3624
        %v3648 = vsub.f32 %v3600, %v3626
        %v3649 = vsub.f32 %v3601, %v3628
        %v3650 = vsub.f32 %v3602, %v3630
        %v3651 = vsub.f32 %v3603, %v3632
        %v3652 = vsub.f32 %v3604, %v3634
        %v3653 = vsub.f32 %v3605, %v3636
        %v3654 = vsub.f32 %v3606, %v3638
        %v3655 = vmul.f32 %v3639, 1.442695
        %v3656 = vpow.pop %v3655
        %v3657 = vmul.f32 %v3640, 1.442695
        %v3658 = vpow.pop %v3657
        %v3659 = vmul.f32 %v3641, 1.442695
        %v3660 = vpow.pop %v3659
        %v3661 = vmul.f32 %v3642, 1.442695
        %v3662 = vpow.pop %v3661
        %v3663 = vmul.f32 %v3643, 1.442695
        %v3664 = vpow.pop %v3663
        %v3665 = vmul.f32 %v3644, 1.442695
        %v3666 = vpow.pop %v3665
        %v3667 = vmul.f32 %v3645, 1.442695
        %v3668 = vpow.pop %v3667
        %v3669 = vmul.f32 %v3646, 1.442695
        %v3670 = vpow.pop %v3669
        %v3671 = vmul.f32 %v3647, 1.442695
        %v3672 = vpow.pop %v3671
        %v3673 = vmul.f32 %v3648, 1.442695
        %v3674 = vpow.pop %v3673
        %v3675 = vmul.f32 %v3649, 1.442695
        %v3676 = vpow.pop %v3675
        %v3677 = vmul.f32 %v3650, 1.442695
        %v3678 = vpow.pop %v3677
        %v3679 = vmul.f32 %v3651, 1.442695
        %v3680 = vpow.pop %v3679
        %v3681 = vmul.f32 %v3652, 1.442695
        %v3682 = vpow.pop %v3681
        %v3683 = vmul.f32 %v3653, 1.442695
        %v3684 = vpow.pop %v3683
        %v3685 = vmul.f32 %v3654, 1.442695
        %v3686 = vpow.pop %v3685
        %3687 = vadd.xlane.f32.xlu0 %v3656
        %v3688 = vpop.xlane.xlu0 %3687
        %3689 = vadd.xlane.f32.xlu0 %v3658
        %v3690 = vpop.xlane.xlu0 %3689
        %3691 = vadd.xlane.f32.xlu0 %v3660
        %v3692 = vpop.xlane.xlu0 %3691
        %3693 = vadd.xlane.f32.xlu0 %v3662
        %v3694 = vpop.xlane.xlu0 %3693
        %3695 = vadd.xlane.f32.xlu0 %v3664
        %v3696 = vpop.xlane.xlu0 %3695
        %3697 = vadd.xlane.f32.xlu0 %v3666
        %v3698 = vpop.xlane.xlu0 %3697
        %3699 = vadd.xlane.f32.xlu0 %v3668
        %v3700 = vpop.xlane.xlu0 %3699
        %3701 = vadd.xlane.f32.xlu0 %v3670
        %v3702 = vpop.xlane.xlu0 %3701
        %3703 = vadd.xlane.f32.xlu0 %v3672
        %v3704 = vpop.xlane.xlu0 %3703
        %3705 = vadd.xlane.f32.xlu0 %v3674
        %v3706 = vpop.xlane.xlu0 %3705
        %3707 = vadd.xlane.f32.xlu0 %v3676
        %v3708 = vpop.xlane.xlu0 %3707
        %3709 = vadd.xlane.f32.xlu0 %v3678
        %v3710 = vpop.xlane.xlu0 %3709
        %3711 = vadd.xlane.f32.xlu0 %v3680
        %v3712 = vpop.xlane.xlu0 %3711
        %3713 = vadd.xlane.f32.xlu0 %v3682
        %v3714 = vpop.xlane.xlu0 %3713
        %3715 = vadd.xlane.f32.xlu0 %v3684
        %v3716 = vpop.xlane.xlu0 %3715
        %3717 = vadd.xlane.f32.xlu0 %v3686
        %v3718 = vpop.xlane.xlu0 %3717
        %v3719 = vrcp.pop %v3688
        %v3720 = vmul.f32 %v3688, %v3719
        %v3721 = vsub.f32 1.0, %v3720
        %v3722 = vmul.f32 %v3719, %v3721
        %v3723 = vadd.f32 %v3719, %v3722
        %vm3724 = vweird.f32 %v3688
        %vm3725 = vweird.f32 %v3719
        %vm3726 = vmor %vm3724, %vm3725
        %v3727 = vsel %vm3726, %v3719, %v3723
        %v3728 = vand.u32 2147483647, %v3688
        %vm3729 = vcmp.eq.f32.partialorder %v3728, 8.507059e+37
        %v3730 = vand.u32 %v3688, 2147483648
        %v3731 = vor.u32 1.1754944e-38, %v3730
        %v3732 = vsel %vm3729, %v3731, %v3727
        %v3733 = vmul.f32 %v3656, %v3732
        %v3734 = vrcp.pop %v3690
        %v3735 = vmul.f32 %v3690, %v3734
        %v3736 = vsub.f32 1.0, %v3735
        %v3737 = vmul.f32 %v3734, %v3736
        %v3738 = vadd.f32 %v3734, %v3737
        %vm3739 = vweird.f32 %v3690
        %vm3740 = vweird.f32 %v3734
        %vm3741 = vmor %vm3739, %vm3740
        %v3742 = vsel %vm3741, %v3734, %v3738
        %v3743 = vand.u32 2147483647, %v3690
        %vm3744 = vcmp.eq.f32.partialorder %v3743, 8.507059e+37
        %v3745 = vand.u32 %v3690, 2147483648
        %v3746 = vor.u32 1.1754944e-38, %v3745
        %v3747 = vsel %vm3744, %v3746, %v3742
        %v3748 = vmul.f32 %v3658, %v3747
        %v3749 = vrcp.pop %v3692
        %v3750 = vmul.f32 %v3692, %v3749
        %v3751 = vsub.f32 1.0, %v3750
        %v3752 = vmul.f32 %v3749, %v3751
        %v3753 = vadd.f32 %v3749, %v3752
        %vm3754 = vweird.f32 %v3692
        %vm3755 = vweird.f32 %v3749
        %vm3756 = vmor %vm3754, %vm3755
        %v3757 = vsel %vm3756, %v3749, %v3753
        %v3758 = vand.u32 2147483647, %v3692
        %vm3759 = vcmp.eq.f32.partialorder %v3758, 8.507059e+37
        %v3760 = vand.u32 %v3692, 2147483648
        %v3761 = vor.u32 1.1754944e-38, %v3760
        %v3762 = vsel %vm3759, %v3761, %v3757
        %v3763 = vmul.f32 %v3660, %v3762
        %v3764 = vrcp.pop %v3694
        %v3765 = vmul.f32 %v3694, %v3764
        %v3766 = vsub.f32 1.0, %v3765
        %v3767 = vmul.f32 %v3764, %v3766
        %v3768 = vadd.f32 %v3764, %v3767
        %vm3769 = vweird.f32 %v3694
        %vm3770 = vweird.f32 %v3764
        %vm3771 = vmor %vm3769, %vm3770
        %v3772 = vsel %vm3771, %v3764, %v3768
        %v3773 = vand.u32 2147483647, %v3694
        %vm3774 = vcmp.eq.f32.partialorder %v3773, 8.507059e+37
        %v3775 = vand.u32 %v3694, 2147483648
        %v3776 = vor.u32 1.1754944e-38, %v3775
        %v3777 = vsel %vm3774, %v3776, %v3772
        %v3778 = vmul.f32 %v3662, %v3777
        %v3779 = vrcp.pop %v3696
        %v3780 = vmul.f32 %v3696, %v3779
        %v3781 = vsub.f32 1.0, %v3780
        %v3782 = vmul.f32 %v3779, %v3781
        %v3783 = vadd.f32 %v3779, %v3782
        %vm3784 = vweird.f32 %v3696
        %vm3785 = vweird.f32 %v3779
        %vm3786 = vmor %vm3784, %vm3785
        %v3787 = vsel %vm3786, %v3779, %v3783
        %v3788 = vand.u32 2147483647, %v3696
        %vm3789 = vcmp.eq.f32.partialorder %v3788, 8.507059e+37
        %v3790 = vand.u32 %v3696, 2147483648
        %v3791 = vor.u32 1.1754944e-38, %v3790
        %v3792 = vsel %vm3789, %v3791, %v3787
        %v3793 = vmul.f32 %v3664, %v3792
        %v3794 = vrcp.pop %v3698
        %v3795 = vmul.f32 %v3698, %v3794
        %v3796 = vsub.f32 1.0, %v3795
        %v3797 = vmul.f32 %v3794, %v3796
        %v3798 = vadd.f32 %v3794, %v3797
        %vm3799 = vweird.f32 %v3698
        %vm3800 = vweird.f32 %v3794
        %vm3801 = vmor %vm3799, %vm3800
        %v3802 = vsel %vm3801, %v3794, %v3798
        %v3803 = vand.u32 2147483647, %v3698
        %vm3804 = vcmp.eq.f32.partialorder %v3803, 8.507059e+37
        %v3805 = vand.u32 %v3698, 2147483648
        %v3806 = vor.u32 1.1754944e-38, %v3805
        %v3807 = vsel %vm3804, %v3806, %v3802
        %v3808 = vmul.f32 %v3666, %v3807
        %v3809 = vrcp.pop %v3700
        %v3810 = vmul.f32 %v3700, %v3809
        %v3811 = vsub.f32 1.0, %v3810
        %v3812 = vmul.f32 %v3809, %v3811
        %v3813 = vadd.f32 %v3809, %v3812
        %vm3814 = vweird.f32 %v3700
        %vm3815 = vweird.f32 %v3809
        %vm3816 = vmor %vm3814, %vm3815
        %v3817 = vsel %vm3816, %v3809, %v3813
        %v3818 = vand.u32 2147483647, %v3700
        %vm3819 = vcmp.eq.f32.partialorder %v3818, 8.507059e+37
        %v3820 = vand.u32 %v3700, 2147483648
        %v3821 = vor.u32 1.1754944e-38, %v3820
        %v3822 = vsel %vm3819, %v3821, %v3817
        %v3823 = vmul.f32 %v3668, %v3822
        %v3824 = vrcp.pop %v3702
        %v3825 = vmul.f32 %v3702, %v3824
        %v3826 = vsub.f32 1.0, %v3825
        %v3827 = vmul.f32 %v3824, %v3826
        %v3828 = vadd.f32 %v3824, %v3827
        %vm3829 = vweird.f32 %v3702
        %vm3830 = vweird.f32 %v3824
        %vm3831 = vmor %vm3829, %vm3830
        %v3832 = vsel %vm3831, %v3824, %v3828
        %v3833 = vand.u32 2147483647, %v3702
        %vm3834 = vcmp.eq.f32.partialorder %v3833, 8.507059e+37
        %v3835 = vand.u32 %v3702, 2147483648
        %v3836 = vor.u32 1.1754944e-38, %v3835
        %v3837 = vsel %vm3834, %v3836, %v3832
        %v3838 = vmul.f32 %v3670, %v3837
        %v3839 = vrcp.pop %v3704
        %v3840 = vmul.f32 %v3704, %v3839
        %v3841 = vsub.f32 1.0, %v3840
        %v3842 = vmul.f32 %v3839, %v3841
        %v3843 = vadd.f32 %v3839, %v3842
        %vm3844 = vweird.f32 %v3704
        %vm3845 = vweird.f32 %v3839
        %vm3846 = vmor %vm3844, %vm3845
        %v3847 = vsel %vm3846, %v3839, %v3843
        %v3848 = vand.u32 2147483647, %v3704
        %vm3849 = vcmp.eq.f32.partialorder %v3848, 8.507059e+37
        %v3850 = vand.u32 %v3704, 2147483648
        %v3851 = vor.u32 1.1754944e-38, %v3850
        %v3852 = vsel %vm3849, %v3851, %v3847
        %v3853 = vmul.f32 %v3672, %v3852
        %v3854 = vrcp.pop %v3706
        %v3855 = vmul.f32 %v3706, %v3854
        %v3856 = vsub.f32 1.0, %v3855
        %v3857 = vmul.f32 %v3854, %v3856
        %v3858 = vadd.f32 %v3854, %v3857
        %vm3859 = vweird.f32 %v3706
        %vm3860 = vweird.f32 %v3854
        %vm3861 = vmor %vm3859, %vm3860
        %v3862 = vsel %vm3861, %v3854, %v3858
        %v3863 = vand.u32 2147483647, %v3706
        %vm3864 = vcmp.eq.f32.partialorder %v3863, 8.507059e+37
        %v3865 = vand.u32 %v3706, 2147483648
        %v3866 = vor.u32 1.1754944e-38, %v3865
        %v3867 = vsel %vm3864, %v3866, %v3862
        %v3868 = vmul.f32 %v3674, %v3867
        %v3869 = vrcp.pop %v3708
        %v3870 = vmul.f32 %v3708, %v3869
        %v3871 = vsub.f32 1.0, %v3870
        %v3872 = vmul.f32 %v3869, %v3871
        %v3873 = vadd.f32 %v3869, %v3872
        %vm3874 = vweird.f32 %v3708
        %vm3875 = vweird.f32 %v3869
        %vm3876 = vmor %vm3874, %vm3875
        %v3877 = vsel %vm3876, %v3869, %v3873
        %v3878 = vand.u32 2147483647, %v3708
        %vm3879 = vcmp.eq.f32.partialorder %v3878, 8.507059e+37
        %v3880 = vand.u32 %v3708, 2147483648
        %v3881 = vor.u32 1.1754944e-38, %v3880
        %v3882 = vsel %vm3879, %v3881, %v3877
        %v3883 = vmul.f32 %v3676, %v3882
        %v3884 = vrcp.pop %v3710
        %v3885 = vmul.f32 %v3710, %v3884
        %v3886 = vsub.f32 1.0, %v3885
        %v3887 = vmul.f32 %v3884, %v3886
        %v3888 = vadd.f32 %v3884, %v3887
        %vm3889 = vweird.f32 %v3710
        %vm3890 = vweird.f32 %v3884
        %vm3891 = vmor %vm3889, %vm3890
        %v3892 = vsel %vm3891, %v3884, %v3888
        %v3893 = vand.u32 2147483647, %v3710
        %vm3894 = vcmp.eq.f32.partialorder %v3893, 8.507059e+37
        %v3895 = vand.u32 %v3710, 2147483648
        %v3896 = vor.u32 1.1754944e-38, %v3895
        %v3897 = vsel %vm3894, %v3896, %v3892
        %v3898 = vmul.f32 %v3678, %v3897
        %v3899 = vrcp.pop %v3712
        %v3900 = vmul.f32 %v3712, %v3899
        %v3901 = vsub.f32 1.0, %v3900
        %v3902 = vmul.f32 %v3899, %v3901
        %v3903 = vadd.f32 %v3899, %v3902
        %vm3904 = vweird.f32 %v3712
        %vm3905 = vweird.f32 %v3899
        %vm3906 = vmor %vm3904, %vm3905
        %v3907 = vsel %vm3906, %v3899, %v3903
        %v3908 = vand.u32 2147483647, %v3712
        %vm3909 = vcmp.eq.f32.partialorder %v3908, 8.507059e+37
        %v3910 = vand.u32 %v3712, 2147483648
        %v3911 = vor.u32 1.1754944e-38, %v3910
        %v3912 = vsel %vm3909, %v3911, %v3907
        %v3913 = vmul.f32 %v3680, %v3912
        %v3914 = vrcp.pop %v3714
        %v3915 = vmul.f32 %v3714, %v3914
        %v3916 = vsub.f32 1.0, %v3915
        %v3917 = vmul.f32 %v3914, %v3916
        %v3918 = vadd.f32 %v3914, %v3917
        %vm3919 = vweird.f32 %v3714
        %vm3920 = vweird.f32 %v3914
        %vm3921 = vmor %vm3919, %vm3920
        %v3922 = vsel %vm3921, %v3914, %v3918
        %v3923 = vand.u32 2147483647, %v3714
        %vm3924 = vcmp.eq.f32.partialorder %v3923, 8.507059e+37
        %v3925 = vand.u32 %v3714, 2147483648
        %v3926 = vor.u32 1.1754944e-38, %v3925
        %v3927 = vsel %vm3924, %v3926, %v3922
        %v3928 = vmul.f32 %v3682, %v3927
        %v3929 = vrcp.pop %v3716
        %v3930 = vmul.f32 %v3716, %v3929
        %v3931 = vsub.f32 1.0, %v3930
        %v3932 = vmul.f32 %v3929, %v3931
        %v3933 = vadd.f32 %v3929, %v3932
        %vm3934 = vweird.f32 %v3716
        %vm3935 = vweird.f32 %v3929
        %vm3936 = vmor %vm3934, %vm3935
        %v3937 = vsel %vm3936, %v3929, %v3933
        %v3938 = vand.u32 2147483647, %v3716
        %vm3939 = vcmp.eq.f32.partialorder %v3938, 8.507059e+37
        %v3940 = vand.u32 %v3716, 2147483648
        %v3941 = vor.u32 1.1754944e-38, %v3940
        %v3942 = vsel %vm3939, %v3941, %v3937
        %v3943 = vmul.f32 %v3684, %v3942
        %v3944 = vrcp.pop %v3718
        %v3945 = vmul.f32 %v3718, %v3944
        %v3946 = vsub.f32 1.0, %v3945
        %v3947 = vmul.f32 %v3944, %v3946
        %v3948 = vadd.f32 %v3944, %v3947
        %vm3949 = vweird.f32 %v3718
        %vm3950 = vweird.f32 %v3944
        %vm3951 = vmor %vm3949, %vm3950
        %v3952 = vsel %vm3951, %v3944, %v3948
        %v3953 = vand.u32 2147483647, %v3718
        %vm3954 = vcmp.eq.f32.partialorder %v3953, 8.507059e+37
        %v3955 = vand.u32 %v3718, 2147483648
        %v3956 = vor.u32 1.1754944e-38, %v3955
        %v3957 = vsel %vm3954, %v3956, %v3952
        %v3958 = vmul.f32 %v3686, %v3957
        %3959 = vrot.lane.b32.xlu0 %v3365, 96
        %v3960 = vpop.permute.xlu0 %3959
        %3961 = vrot.lane.b32.xlu0 %v3368, 96
        %v3962 = vpop.permute.xlu0 %3961
        %3963 = vrot.lane.b32.xlu0 %v3371, 96
        %v3964 = vpop.permute.xlu0 %3963
        %3965 = vrot.lane.b32.xlu0 %v3374, 96
        %v3966 = vpop.permute.xlu0 %3965
        %3967 = vrot.lane.b32.xlu0 %v3377, 96
        %v3968 = vpop.permute.xlu0 %3967
        %3969 = vrot.lane.b32.xlu0 %v3380, 96
        %v3970 = vpop.permute.xlu0 %3969
        %3971 = vrot.lane.b32.xlu0 %v3383, 96
        %v3972 = vpop.permute.xlu0 %3971
        %3973 = vrot.lane.b32.xlu0 %v3386, 96
        %v3974 = vpop.permute.xlu0 %3973
        %3975 = vrot.lane.b32.xlu0 %v3389, 96
        %v3976 = vpop.permute.xlu0 %3975
        %3977 = vrot.lane.b32.xlu0 %v3392, 96
        %v3978 = vpop.permute.xlu0 %3977
        %3979 = vrot.lane.b32.xlu0 %v3395, 96
        %v3980 = vpop.permute.xlu0 %3979
        %3981 = vrot.lane.b32.xlu0 %v3398, 96
        %v3982 = vpop.permute.xlu0 %3981
        %3983 = vrot.lane.b32.xlu0 %v3401, 96
        %v3984 = vpop.permute.xlu0 %3983
        %3985 = vrot.lane.b32.xlu0 %v3404, 96
        %v3986 = vpop.permute.xlu0 %3985
        %3987 = vrot.lane.b32.xlu0 %v3407, 96
        %v3988 = vpop.permute.xlu0 %3987
        %3989 = vrot.lane.b32.xlu0 %v3410, 96
        %v3990 = vpop.permute.xlu0 %3989
        %4007 = vmatpush.msra.mxu0 %v3990
        %4008 = vmatpush.msra.mxu0 %v3988
        %4009 = vmatpush.msra.mxu0 %v3986
        %4010 = vmatpush.msra.mxu0 %v3984
        %4011 = vmatpush.msra.mxu0 %v3982
        %4012 = vmatpush.msra.mxu0 %v3980
        %4013 = vmatpush.msra.mxu0 %v3978
        %4014 = vmatpush.msra.mxu0 %v3976
        %4015 = vmatpush.msra.mxu0 %v3974
        %4016 = vmatpush.msra.mxu0 %v3972
        %4017 = vmatpush.msra.mxu0 %v3970
        %4018 = vmatpush.msra.mxu0 %v3968
        %4019 = vmatpush.msra.mxu0 %v3966
        %4020 = vmatpush.msra.mxu0 %v3964
        %4021 = vmatpush.msra.mxu0 %v3962
        %4022 = vmatpush.msra.mxu0 %v3960
        %4023 = vmatmul.f32.gmra.mxu0 %v3733
        %v4024 = vpop.f32.mrf.mxu0
        %v4025 = vadd.f32 0.0, %v4024
        %4026 = vmatmul.f32.gmra.mxu0 %v3748
        %v4027 = vpop.f32.mrf.mxu0
        %v4028 = vadd.f32 0.0, %v4027
        %4029 = vmatmul.f32.gmra.mxu0 %v3763
        %v4030 = vpop.f32.mrf.mxu0
        %v4031 = vadd.f32 0.0, %v4030
        %4032 = vmatmul.f32.gmra.mxu0 %v3778
        %v4033 = vpop.f32.mrf.mxu0
        %v4034 = vadd.f32 0.0, %v4033
        %4035 = vmatmul.f32.gmra.mxu0 %v3793
        %v4036 = vpop.f32.mrf.mxu0
        %v4037 = vadd.f32 0.0, %v4036
        %4038 = vmatmul.f32.gmra.mxu0 %v3808
        %v4039 = vpop.f32.mrf.mxu0
        %v4040 = vadd.f32 0.0, %v4039
        %4041 = vmatmul.f32.gmra.mxu0 %v3823
        %v4042 = vpop.f32.mrf.mxu0
        %v4043 = vadd.f32 0.0, %v4042
        %4044 = vmatmul.f32.gmra.mxu0 %v3838
        %v4045 = vpop.f32.mrf.mxu0
        %v4046 = vadd.f32 0.0, %v4045
        %4047 = vmatmul.f32.gmra.mxu0 %v3853
        %v4048 = vpop.f32.mrf.mxu0
        %v4049 = vadd.f32 0.0, %v4048
        %4050 = vmatmul.f32.gmra.mxu0 %v3868
        %v4051 = vpop.f32.mrf.mxu0
        %v4052 = vadd.f32 0.0, %v4051
        %4053 = vmatmul.f32.gmra.mxu0 %v3883
        %v4054 = vpop.f32.mrf.mxu0
        %v4055 = vadd.f32 0.0, %v4054
        %4056 = vmatmul.f32.gmra.mxu0 %v3898
        %v4057 = vpop.f32.mrf.mxu0
        %v4058 = vadd.f32 0.0, %v4057
        %4059 = vmatmul.f32.gmra.mxu0 %v3913
        %v4060 = vpop.f32.mrf.mxu0
        %v4061 = vadd.f32 0.0, %v4060
        %4062 = vmatmul.f32.gmra.mxu0 %v3928
        %v4063 = vpop.f32.mrf.mxu0
        %v4064 = vadd.f32 0.0, %v4063
        %4065 = vmatmul.f32.gmra.mxu0 %v3943
        %v4066 = vpop.f32.mrf.mxu0
        %v4067 = vadd.f32 0.0, %v4066
        %4068 = vmatmul.f32.gmra.mxu0 %v3958
        %v4069 = vpop.f32.mrf.mxu0
        %v4070 = vadd.f32 0.0, %v4069
        %4071 = vdwg.mxu0
        %4072 = vrot.lane.b32.xlu0 %v3297, 120
        %v4073 = vpop.permute.xlu0 %4072
        %4074 = vrot.lane.b32.xlu0 %v3300, 120
        %v4075 = vpop.permute.xlu0 %4074
        %4076 = vrot.lane.b32.xlu0 %v3303, 120
        %v4077 = vpop.permute.xlu0 %4076
        %4078 = vrot.lane.b32.xlu0 %v3306, 120
        %v4079 = vpop.permute.xlu0 %4078
        %4080 = vrot.lane.b32.xlu0 %v3309, 120
        %v4081 = vpop.permute.xlu0 %4080
        %4082 = vrot.lane.b32.xlu0 %v3312, 120
        %v4083 = vpop.permute.xlu0 %4082
        %4084 = vrot.lane.b32.xlu0 %v3315, 120
        %v4085 = vpop.permute.xlu0 %4084
        %4086 = vrot.lane.b32.xlu0 %v3318, 120
        %v4087 = vpop.permute.xlu0 %4086
        %4088 = vrot.lane.b32.xlu0 %v3321, 120
        %v4089 = vpop.permute.xlu0 %4088
        %4090 = vrot.lane.b32.xlu0 %v3324, 120
        %v4091 = vpop.permute.xlu0 %4090
        %4092 = vrot.lane.b32.xlu0 %v3327, 120
        %v4093 = vpop.permute.xlu0 %4092
        %4094 = vrot.lane.b32.xlu0 %v3330, 120
        %v4095 = vpop.permute.xlu0 %4094
        %4096 = vrot.lane.b32.xlu0 %v3333, 120
        %v4097 = vpop.permute.xlu0 %4096
        %4098 = vrot.lane.b32.xlu0 %v3336, 120
        %v4099 = vpop.permute.xlu0 %4098
        %4100 = vrot.lane.b32.xlu0 %v3339, 120
        %v4101 = vpop.permute.xlu0 %4100
        %4102 = vrot.lane.b32.xlu0 %v3342, 120
        %v4103 = vpop.permute.xlu0 %4102
        %4104 = vrot.lane.b32.xlu0 %v3365, 120
        %v4105 = vpop.permute.xlu0 %4104
        %4106 = vrot.lane.b32.xlu0 %v3368, 120
        %v4107 = vpop.permute.xlu0 %4106
        %4108 = vrot.lane.b32.xlu0 %v3371, 120
        %v4109 = vpop.permute.xlu0 %4108
        %4110 = vrot.lane.b32.xlu0 %v3374, 120
        %v4111 = vpop.permute.xlu0 %4110
        %4112 = vrot.lane.b32.xlu0 %v3377, 120
        %v4113 = vpop.permute.xlu0 %4112
        %4114 = vrot.lane.b32.xlu0 %v3380, 120
        %v4115 = vpop.permute.xlu0 %4114
        %4116 = vrot.lane.b32.xlu0 %v3383, 120
        %v4117 = vpop.permute.xlu0 %4116
        %4118 = vrot.lane.b32.xlu0 %v3386, 120
        %v4119 = vpop.permute.xlu0 %4118
        %4120 = vrot.lane.b32.xlu0 %v3389, 120
        %v4121 = vpop.permute.xlu0 %4120
        %4122 = vrot.lane.b32.xlu0 %v3392, 120
        %v4123 = vpop.permute.xlu0 %4122
        %4124 = vrot.lane.b32.xlu0 %v3395, 120
        %v4125 = vpop.permute.xlu0 %4124
        %4126 = vrot.lane.b32.xlu0 %v3398, 120
        %v4127 = vpop.permute.xlu0 %4126
        %4128 = vrot.lane.b32.xlu0 %v3401, 120
        %v4129 = vpop.permute.xlu0 %4128
        %4130 = vrot.lane.b32.xlu0 %v3404, 120
        %v4131 = vpop.permute.xlu0 %4130
        %4132 = vrot.lane.b32.xlu0 %v3407, 120
        %v4133 = vpop.permute.xlu0 %4132
        %4134 = vrot.lane.b32.xlu0 %v3410, 120
        %v4135 = vpop.permute.xlu0 %4134
        %v4136 = vsel %vm971, %v4073, 0
        %v4138 = vsel %vm971, %v4075, 0
        %v4140 = vsel %vm971, %v4077, 0
        %v4142 = vsel %vm971, %v4079, 0
        %v4144 = vsel %vm971, %v4081, 0
        %v4146 = vsel %vm971, %v4083, 0
        %v4148 = vsel %vm971, %v4085, 0
        %v4150 = vsel %vm971, %v4087, 0
        %v4152 = vsel %vm971, %v4089, 0
        %v4154 = vsel %vm971, %v4091, 0
        %v4156 = vsel %vm971, %v4093, 0
        %v4158 = vsel %vm971, %v4095, 0
        %v4160 = vsel %vm971, %v4097, 0
        %v4162 = vsel %vm971, %v4099, 0
        %v4164 = vsel %vm971, %v4101, 0
        %v4166 = vsel %vm971, %v4103, 0
        %v4168 = vsel %vm971, %v4105, 0
        %v4170 = vsel %vm971, %v4107, 0
        %v4172 = vsel %vm971, %v4109, 0
        %v4174 = vsel %vm971, %v4111, 0
        %v4176 = vsel %vm971, %v4113, 0
        %v4178 = vsel %vm971, %v4115, 0
        %v4180 = vsel %vm971, %v4117, 0
        %v4182 = vsel %vm971, %v4119, 0
        %v4184 = vsel %vm971, %v4121, 0
        %v4186 = vsel %vm971, %v4123, 0
        %v4188 = vsel %vm971, %v4125, 0
        %v4190 = vsel %vm971, %v4127, 0
        %v4192 = vsel %vm971, %v4129, 0
        %v4194 = vsel %vm971, %v4131, 0
        %v4196 = vsel %vm971, %v4133, 0
        %v4198 = vsel %vm971, %v4135, 0
        %4200 = vmatpush.xpose.msra.mxu0 %v4198
        %4201 = vmatpush.xpose.msra.mxu0 %v4196
        %4202 = vmatpush.xpose.msra.mxu0 %v4194
        %4203 = vmatpush.xpose.msra.mxu0 %v4192
        %4204 = vmatpush.xpose.msra.mxu0 %v4190
        %4205 = vmatpush.xpose.msra.mxu0 %v4188
        %4206 = vmatpush.xpose.msra.mxu0 %v4186
        %4207 = vmatpush.xpose.msra.mxu0 %v4184
        %4208 = vmatpush.xpose.msra.mxu0 %v4182
        %4209 = vmatpush.xpose.msra.mxu0 %v4180
        %4210 = vmatpush.xpose.msra.mxu0 %v4178
        %4211 = vmatpush.xpose.msra.mxu0 %v4176
        %4212 = vmatpush.xpose.msra.mxu0 %v4174
        %4213 = vmatpush.xpose.msra.mxu0 %v4172
        %4214 = vmatpush.xpose.msra.mxu0 %v4170
        %4215 = vmatpush.xpose.msra.mxu0 %v4168
        %4216 = vmatmul.f32.gmra.mxu0 %v4136
        %v4217 = vpop.f32.mrf.mxu0
        %v4218 = vadd.f32 0.0, %v4217
        %4219 = vmatmul.f32.gmra.mxu0 %v4138
        %v4220 = vpop.f32.mrf.mxu0
        %v4221 = vadd.f32 0.0, %v4220
        %4222 = vmatmul.f32.gmra.mxu0 %v4140
        %v4223 = vpop.f32.mrf.mxu0
        %v4224 = vadd.f32 0.0, %v4223
        %4225 = vmatmul.f32.gmra.mxu0 %v4142
        %v4226 = vpop.f32.mrf.mxu0
        %v4227 = vadd.f32 0.0, %v4226
        %4228 = vmatmul.f32.gmra.mxu0 %v4144
        %v4229 = vpop.f32.mrf.mxu0
        %v4230 = vadd.f32 0.0, %v4229
        %4231 = vmatmul.f32.gmra.mxu0 %v4146
        %v4232 = vpop.f32.mrf.mxu0
        %v4233 = vadd.f32 0.0, %v4232
        %4234 = vmatmul.f32.gmra.mxu0 %v4148
        %v4235 = vpop.f32.mrf.mxu0
        %v4236 = vadd.f32 0.0, %v4235
        %4237 = vmatmul.f32.gmra.mxu0 %v4150
        %v4238 = vpop.f32.mrf.mxu0
        %v4239 = vadd.f32 0.0, %v4238
        %4240 = vmatmul.f32.gmra.mxu0 %v4152
        %v4241 = vpop.f32.mrf.mxu0
        %v4242 = vadd.f32 0.0, %v4241
        %4243 = vmatmul.f32.gmra.mxu0 %v4154
        %v4244 = vpop.f32.mrf.mxu0
        %v4245 = vadd.f32 0.0, %v4244
        %4246 = vmatmul.f32.gmra.mxu0 %v4156
        %v4247 = vpop.f32.mrf.mxu0
        %v4248 = vadd.f32 0.0, %v4247
        %4249 = vmatmul.f32.gmra.mxu0 %v4158
        %v4250 = vpop.f32.mrf.mxu0
        %v4251 = vadd.f32 0.0, %v4250
        %4252 = vmatmul.f32.gmra.mxu0 %v4160
        %v4253 = vpop.f32.mrf.mxu0
        %v4254 = vadd.f32 0.0, %v4253
        %4255 = vmatmul.f32.gmra.mxu0 %v4162
        %v4256 = vpop.f32.mrf.mxu0
        %v4257 = vadd.f32 0.0, %v4256
        %4258 = vmatmul.f32.gmra.mxu0 %v4164
        %v4259 = vpop.f32.mrf.mxu0
        %v4260 = vadd.f32 0.0, %v4259
        %4261 = vmatmul.f32.gmra.mxu0 %v4166
        %v4262 = vpop.f32.mrf.mxu0
        %v4263 = vadd.f32 0.0, %v4262
        %4264 = vdwg.mxu0
        %v4265 = vmul.f32 %v4218, 0.35355338
        %v4266 = vmul.f32 %v4221, 0.35355338
        %v4267 = vmul.f32 %v4224, 0.35355338
        %v4268 = vmul.f32 %v4227, 0.35355338
        %v4269 = vmul.f32 %v4230, 0.35355338
        %v4270 = vmul.f32 %v4233, 0.35355338
        %v4271 = vmul.f32 %v4236, 0.35355338
        %v4272 = vmul.f32 %v4239, 0.35355338
        %v4273 = vmul.f32 %v4242, 0.35355338
        %v4274 = vmul.f32 %v4245, 0.35355338
        %v4275 = vmul.f32 %v4248, 0.35355338
        %v4276 = vmul.f32 %v4251, 0.35355338
        %v4277 = vmul.f32 %v4254, 0.35355338
        %v4278 = vmul.f32 %v4257, 0.35355338
        %v4279 = vmul.f32 %v4260, 0.35355338
        %v4280 = vmul.f32 %v4263, 0.35355338
        %v4281 = vsel %vm3590, %v4265, -1e+09
        %v4282 = vsel %vm3590, %v4266, -1e+09
        %v4283 = vsel %vm3590, %v4267, -1e+09
        %v4284 = vsel %vm3590, %v4268, -1e+09
        %v4285 = vsel %vm3590, %v4269, -1e+09
        %v4286 = vsel %vm3590, %v4270, -1e+09
        %v4287 = vsel %vm3590, %v4271, -1e+09
        %v4288 = vsel %vm3590, %v4272, -1e+09
        %v4289 = vsel %vm3590, %v4273, -1e+09
        %v4290 = vsel %vm3590, %v4274, -1e+09
        %v4291 = vsel %vm3590, %v4275, -1e+09
        %v4292 = vsel %vm3590, %v4276, -1e+09
        %v4293 = vsel %vm3590, %v4277, -1e+09
        %v4294 = vsel %vm3590, %v4278, -1e+09
        %v4295 = vsel %vm3590, %v4279, -1e+09
        %v4296 = vsel %vm3590, %v4280, -1e+09
        %4297 = vmax.xlane.f32.xlu0 %v4281
        %v4298 = vpop.xlane.xlu0 %4297
        %4299 = vmax.xlane.f32.xlu0 %v4282
        %v4300 = vpop.xlane.xlu0 %4299
        %4301 = vmax.xlane.f32.xlu0 %v4283
        %v4302 = vpop.xlane.xlu0 %4301
        %4303 = vmax.xlane.f32.xlu0 %v4284
        %v4304 = vpop.xlane.xlu0 %4303
        %4305 = vmax.xlane.f32.xlu0 %v4285
        %v4306 = vpop.xlane.xlu0 %4305
        %4307 = vmax.xlane.f32.xlu0 %v4286
        %v4308 = vpop.xlane.xlu0 %4307
        %4309 = vmax.xlane.f32.xlu0 %v4287
        %v4310 = vpop.xlane.xlu0 %4309
        %4311 = vmax.xlane.f32.xlu0 %v4288
        %v4312 = vpop.xlane.xlu0 %4311
        %4313 = vmax.xlane.f32.xlu0 %v4289
        %v4314 = vpop.xlane.xlu0 %4313
        %4315 = vmax.xlane.f32.xlu0 %v4290
        %v4316 = vpop.xlane.xlu0 %4315
        %4317 = vmax.xlane.f32.xlu0 %v4291
        %v4318 = vpop.xlane.xlu0 %4317
        %4319 = vmax.xlane.f32.xlu0 %v4292
        %v4320 = vpop.xlane.xlu0 %4319
        %4321 = vmax.xlane.f32.xlu0 %v4293
        %v4322 = vpop.xlane.xlu0 %4321
        %4323 = vmax.xlane.f32.xlu0 %v4294
        %v4324 = vpop.xlane.xlu0 %4323
        %4325 = vmax.xlane.f32.xlu0 %v4295
        %v4326 = vpop.xlane.xlu0 %4325
        %4327 = vmax.xlane.f32.xlu0 %v4296
        %v4328 = vpop.xlane.xlu0 %4327
        %v4329 = vsub.f32 %v4281, %v4298
        %v4330 = vsub.f32 %v4282, %v4300
        %v4331 = vsub.f32 %v4283, %v4302
        %v4332 = vsub.f32 %v4284, %v4304
        %v4333 = vsub.f32 %v4285, %v4306
        %v4334 = vsub.f32 %v4286, %v4308
        %v4335 = vsub.f32 %v4287, %v4310
        %v4336 = vsub.f32 %v4288, %v4312
        %v4337 = vsub.f32 %v4289, %v4314
        %v4338 = vsub.f32 %v4290, %v4316
        %v4339 = vsub.f32 %v4291, %v4318
        %v4340 = vsub.f32 %v4292, %v4320
        %v4341 = vsub.f32 %v4293, %v4322
        %v4342 = vsub.f32 %v4294, %v4324
        %v4343 = vsub.f32 %v4295, %v4326
        %v4344 = vsub.f32 %v4296, %v4328
        %v4345 = vmul.f32 %v4329, 1.442695
        %v4346 = vpow.pop %v4345
        %v4347 = vmul.f32 %v4330, 1.442695
        %v4348 = vpow.pop %v4347
        %v4349 = vmul.f32 %v4331, 1.442695
        %v4350 = vpow.pop %v4349
        %v4351 = vmul.f32 %v4332, 1.442695
        %v4352 = vpow.pop %v4351
        %v4353 = vmul.f32 %v4333, 1.442695
        %v4354 = vpow.pop %v4353
        %v4355 = vmul.f32 %v4334, 1.442695
        %v4356 = vpow.pop %v4355
        %v4357 = vmul.f32 %v4335, 1.442695
        %v4358 = vpow.pop %v4357
        %v4359 = vmul.f32 %v4336, 1.442695
        %v4360 = vpow.pop %v4359
        %v4361 = vmul.f32 %v4337, 1.442695
        %v4362 = vpow.pop %v4361
        %v4363 = vmul.f32 %v4338, 1.442695
        %v4364 = vpow.pop %v4363
        %v4365 = vmul.f32 %v4339, 1.442695
        %v4366 = vpow.pop %v4365
        %v4367 = vmul.f32 %v4340, 1.442695
        %v4368 = vpow.pop %v4367
        %v4369 = vmul.f32 %v4341, 1.442695
        %v4370 = vpow.pop %v4369
        %v4371 = vmul.f32 %v4342, 1.442695
        %v4372 = vpow.pop %v4371
        %v4373 = vmul.f32 %v4343, 1.442695
        %v4374 = vpow.pop %v4373
        %v4375 = vmul.f32 %v4344, 1.442695
        %v4376 = vpow.pop %v4375
        %4377 = vadd.xlane.f32.xlu0 %v4346
        %v4378 = vpop.xlane.xlu0 %4377
        %4379 = vadd.xlane.f32.xlu0 %v4348
        %v4380 = vpop.xlane.xlu0 %4379
        %4381 = vadd.xlane.f32.xlu0 %v4350
        %v4382 = vpop.xlane.xlu0 %4381
        %4383 = vadd.xlane.f32.xlu0 %v4352
        %v4384 = vpop.xlane.xlu0 %4383
        %4385 = vadd.xlane.f32.xlu0 %v4354
        %v4386 = vpop.xlane.xlu0 %4385
        %4387 = vadd.xlane.f32.xlu0 %v4356
        %v4388 = vpop.xlane.xlu0 %4387
        %4389 = vadd.xlane.f32.xlu0 %v4358
        %v4390 = vpop.xlane.xlu0 %4389
        %4391 = vadd.xlane.f32.xlu0 %v4360
        %v4392 = vpop.xlane.xlu0 %4391
        %4393 = vadd.xlane.f32.xlu0 %v4362
        %v4394 = vpop.xlane.xlu0 %4393
        %4395 = vadd.xlane.f32.xlu0 %v4364
        %v4396 = vpop.xlane.xlu0 %4395
        %4397 = vadd.xlane.f32.xlu0 %v4366
        %v4398 = vpop.xlane.xlu0 %4397
        %4399 = vadd.xlane.f32.xlu0 %v4368
        %v4400 = vpop.xlane.xlu0 %4399
        %4401 = vadd.xlane.f32.xlu0 %v4370
        %v4402 = vpop.xlane.xlu0 %4401
        %4403 = vadd.xlane.f32.xlu0 %v4372
        %v4404 = vpop.xlane.xlu0 %4403
        %4405 = vadd.xlane.f32.xlu0 %v4374
        %v4406 = vpop.xlane.xlu0 %4405
        %4407 = vadd.xlane.f32.xlu0 %v4376
        %v4408 = vpop.xlane.xlu0 %4407
        %v4409 = vrcp.pop %v4378
        %v4410 = vmul.f32 %v4378, %v4409
        %v4411 = vsub.f32 1.0, %v4410
        %v4412 = vmul.f32 %v4409, %v4411
        %v4413 = vadd.f32 %v4409, %v4412
        %vm4414 = vweird.f32 %v4378
        %vm4415 = vweird.f32 %v4409
        %vm4416 = vmor %vm4414, %vm4415
        %v4417 = vsel %vm4416, %v4409, %v4413
        %v4418 = vand.u32 2147483647, %v4378
        %vm4419 = vcmp.eq.f32.partialorder %v4418, 8.507059e+37
        %v4420 = vand.u32 %v4378, 2147483648
        %v4421 = vor.u32 1.1754944e-38, %v4420
        %v4422 = vsel %vm4419, %v4421, %v4417
        %v4423 = vmul.f32 %v4346, %v4422
        %v4424 = vrcp.pop %v4380
        %v4425 = vmul.f32 %v4380, %v4424
        %v4426 = vsub.f32 1.0, %v4425
        %v4427 = vmul.f32 %v4424, %v4426
        %v4428 = vadd.f32 %v4424, %v4427
        %vm4429 = vweird.f32 %v4380
        %vm4430 = vweird.f32 %v4424
        %vm4431 = vmor %vm4429, %vm4430
        %v4432 = vsel %vm4431, %v4424, %v4428
        %v4433 = vand.u32 2147483647, %v4380
        %vm4434 = vcmp.eq.f32.partialorder %v4433, 8.507059e+37
        %v4435 = vand.u32 %v4380, 2147483648
        %v4436 = vor.u32 1.1754944e-38, %v4435
        %v4437 = vsel %vm4434, %v4436, %v4432
        %v4438 = vmul.f32 %v4348, %v4437
        %v4439 = vrcp.pop %v4382
        %v4440 = vmul.f32 %v4382, %v4439
        %v4441 = vsub.f32 1.0, %v4440
        %v4442 = vmul.f32 %v4439, %v4441
        %v4443 = vadd.f32 %v4439, %v4442
        %vm4444 = vweird.f32 %v4382
        %vm4445 = vweird.f32 %v4439
        %vm4446 = vmor %vm4444, %vm4445
        %v4447 = vsel %vm4446, %v4439, %v4443
        %v4448 = vand.u32 2147483647, %v4382
        %vm4449 = vcmp.eq.f32.partialorder %v4448, 8.507059e+37
        %v4450 = vand.u32 %v4382, 2147483648
        %v4451 = vor.u32 1.1754944e-38, %v4450
        %v4452 = vsel %vm4449, %v4451, %v4447
        %v4453 = vmul.f32 %v4350, %v4452
        %v4454 = vrcp.pop %v4384
        %v4455 = vmul.f32 %v4384, %v4454
        %v4456 = vsub.f32 1.0, %v4455
        %v4457 = vmul.f32 %v4454, %v4456
        %v4458 = vadd.f32 %v4454, %v4457
        %vm4459 = vweird.f32 %v4384
        %vm4460 = vweird.f32 %v4454
        %vm4461 = vmor %vm4459, %vm4460
        %v4462 = vsel %vm4461, %v4454, %v4458
        %v4463 = vand.u32 2147483647, %v4384
        %vm4464 = vcmp.eq.f32.partialorder %v4463, 8.507059e+37
        %v4465 = vand.u32 %v4384, 2147483648
        %v4466 = vor.u32 1.1754944e-38, %v4465
        %v4467 = vsel %vm4464, %v4466, %v4462
        %v4468 = vmul.f32 %v4352, %v4467
        %v4469 = vrcp.pop %v4386
        %v4470 = vmul.f32 %v4386, %v4469
        %v4471 = vsub.f32 1.0, %v4470
        %v4472 = vmul.f32 %v4469, %v4471
        %v4473 = vadd.f32 %v4469, %v4472
        %vm4474 = vweird.f32 %v4386
        %vm4475 = vweird.f32 %v4469
        %vm4476 = vmor %vm4474, %vm4475
        %v4477 = vsel %vm4476, %v4469, %v4473
        %v4478 = vand.u32 2147483647, %v4386
        %vm4479 = vcmp.eq.f32.partialorder %v4478, 8.507059e+37
        %v4480 = vand.u32 %v4386, 2147483648
        %v4481 = vor.u32 1.1754944e-38, %v4480
        %v4482 = vsel %vm4479, %v4481, %v4477
        %v4483 = vmul.f32 %v4354, %v4482
        %v4484 = vrcp.pop %v4388
        %v4485 = vmul.f32 %v4388, %v4484
        %v4486 = vsub.f32 1.0, %v4485
        %v4487 = vmul.f32 %v4484, %v4486
        %v4488 = vadd.f32 %v4484, %v4487
        %vm4489 = vweird.f32 %v4388
        %vm4490 = vweird.f32 %v4484
        %vm4491 = vmor %vm4489, %vm4490
        %v4492 = vsel %vm4491, %v4484, %v4488
        %v4493 = vand.u32 2147483647, %v4388
        %vm4494 = vcmp.eq.f32.partialorder %v4493, 8.507059e+37
        %v4495 = vand.u32 %v4388, 2147483648
        %v4496 = vor.u32 1.1754944e-38, %v4495
        %v4497 = vsel %vm4494, %v4496, %v4492
        %v4498 = vmul.f32 %v4356, %v4497
        %v4499 = vrcp.pop %v4390
        %v4500 = vmul.f32 %v4390, %v4499
        %v4501 = vsub.f32 1.0, %v4500
        %v4502 = vmul.f32 %v4499, %v4501
        %v4503 = vadd.f32 %v4499, %v4502
        %vm4504 = vweird.f32 %v4390
        %vm4505 = vweird.f32 %v4499
        %vm4506 = vmor %vm4504, %vm4505
        %v4507 = vsel %vm4506, %v4499, %v4503
        %v4508 = vand.u32 2147483647, %v4390
        %vm4509 = vcmp.eq.f32.partialorder %v4508, 8.507059e+37
        %v4510 = vand.u32 %v4390, 2147483648
        %v4511 = vor.u32 1.1754944e-38, %v4510
        %v4512 = vsel %vm4509, %v4511, %v4507
        %v4513 = vmul.f32 %v4358, %v4512
        %v4514 = vrcp.pop %v4392
        %v4515 = vmul.f32 %v4392, %v4514
        %v4516 = vsub.f32 1.0, %v4515
        %v4517 = vmul.f32 %v4514, %v4516
        %v4518 = vadd.f32 %v4514, %v4517
        %vm4519 = vweird.f32 %v4392
        %vm4520 = vweird.f32 %v4514
        %vm4521 = vmor %vm4519, %vm4520
        %v4522 = vsel %vm4521, %v4514, %v4518
        %v4523 = vand.u32 2147483647, %v4392
        %vm4524 = vcmp.eq.f32.partialorder %v4523, 8.507059e+37
        %v4525 = vand.u32 %v4392, 2147483648
        %v4526 = vor.u32 1.1754944e-38, %v4525
        %v4527 = vsel %vm4524, %v4526, %v4522
        %v4528 = vmul.f32 %v4360, %v4527
        %v4529 = vrcp.pop %v4394
        %v4530 = vmul.f32 %v4394, %v4529
        %v4531 = vsub.f32 1.0, %v4530
        %v4532 = vmul.f32 %v4529, %v4531
        %v4533 = vadd.f32 %v4529, %v4532
        %vm4534 = vweird.f32 %v4394
        %vm4535 = vweird.f32 %v4529
        %vm4536 = vmor %vm4534, %vm4535
        %v4537 = vsel %vm4536, %v4529, %v4533
        %v4538 = vand.u32 2147483647, %v4394
        %vm4539 = vcmp.eq.f32.partialorder %v4538, 8.507059e+37
        %v4540 = vand.u32 %v4394, 2147483648
        %v4541 = vor.u32 1.1754944e-38, %v4540
        %v4542 = vsel %vm4539, %v4541, %v4537
        %v4543 = vmul.f32 %v4362, %v4542
        %v4544 = vrcp.pop %v4396
        %v4545 = vmul.f32 %v4396, %v4544
        %v4546 = vsub.f32 1.0, %v4545
        %v4547 = vmul.f32 %v4544, %v4546
        %v4548 = vadd.f32 %v4544, %v4547
        %vm4549 = vweird.f32 %v4396
        %vm4550 = vweird.f32 %v4544
        %vm4551 = vmor %vm4549, %vm4550
        %v4552 = vsel %vm4551, %v4544, %v4548
        %v4553 = vand.u32 2147483647, %v4396
        %vm4554 = vcmp.eq.f32.partialorder %v4553, 8.507059e+37
        %v4555 = vand.u32 %v4396, 2147483648
        %v4556 = vor.u32 1.1754944e-38, %v4555
        %v4557 = vsel %vm4554, %v4556, %v4552
        %v4558 = vmul.f32 %v4364, %v4557
        %v4559 = vrcp.pop %v4398
        %v4560 = vmul.f32 %v4398, %v4559
        %v4561 = vsub.f32 1.0, %v4560
        %v4562 = vmul.f32 %v4559, %v4561
        %v4563 = vadd.f32 %v4559, %v4562
        %vm4564 = vweird.f32 %v4398
        %vm4565 = vweird.f32 %v4559
        %vm4566 = vmor %vm4564, %vm4565
        %v4567 = vsel %vm4566, %v4559, %v4563
        %v4568 = vand.u32 2147483647, %v4398
        %vm4569 = vcmp.eq.f32.partialorder %v4568, 8.507059e+37
        %v4570 = vand.u32 %v4398, 2147483648
        %v4571 = vor.u32 1.1754944e-38, %v4570
        %v4572 = vsel %vm4569, %v4571, %v4567
        %v4573 = vmul.f32 %v4366, %v4572
        %v4574 = vrcp.pop %v4400
        %v4575 = vmul.f32 %v4400, %v4574
        %v4576 = vsub.f32 1.0, %v4575
        %v4577 = vmul.f32 %v4574, %v4576
        %v4578 = vadd.f32 %v4574, %v4577
        %vm4579 = vweird.f32 %v4400
        %vm4580 = vweird.f32 %v4574
        %vm4581 = vmor %vm4579, %vm4580
        %v4582 = vsel %vm4581, %v4574, %v4578
        %v4583 = vand.u32 2147483647, %v4400
        %vm4584 = vcmp.eq.f32.partialorder %v4583, 8.507059e+37
        %v4585 = vand.u32 %v4400, 2147483648
        %v4586 = vor.u32 1.1754944e-38, %v4585
        %v4587 = vsel %vm4584, %v4586, %v4582
        %v4588 = vmul.f32 %v4368, %v4587
        %v4589 = vrcp.pop %v4402
        %v4590 = vmul.f32 %v4402, %v4589
        %v4591 = vsub.f32 1.0, %v4590
        %v4592 = vmul.f32 %v4589, %v4591
        %v4593 = vadd.f32 %v4589, %v4592
        %vm4594 = vweird.f32 %v4402
        %vm4595 = vweird.f32 %v4589
        %vm4596 = vmor %vm4594, %vm4595
        %v4597 = vsel %vm4596, %v4589, %v4593
        %v4598 = vand.u32 2147483647, %v4402
        %vm4599 = vcmp.eq.f32.partialorder %v4598, 8.507059e+37
        %v4600 = vand.u32 %v4402, 2147483648
        %v4601 = vor.u32 1.1754944e-38, %v4600
        %v4602 = vsel %vm4599, %v4601, %v4597
        %v4603 = vmul.f32 %v4370, %v4602
        %v4604 = vrcp.pop %v4404
        %v4605 = vmul.f32 %v4404, %v4604
        %v4606 = vsub.f32 1.0, %v4605
        %v4607 = vmul.f32 %v4604, %v4606
        %v4608 = vadd.f32 %v4604, %v4607
        %vm4609 = vweird.f32 %v4404
        %vm4610 = vweird.f32 %v4604
        %vm4611 = vmor %vm4609, %vm4610
        %v4612 = vsel %vm4611, %v4604, %v4608
        %v4613 = vand.u32 2147483647, %v4404
        %vm4614 = vcmp.eq.f32.partialorder %v4613, 8.507059e+37
        %v4615 = vand.u32 %v4404, 2147483648
        %v4616 = vor.u32 1.1754944e-38, %v4615
        %v4617 = vsel %vm4614, %v4616, %v4612
        %v4618 = vmul.f32 %v4372, %v4617
        %v4619 = vrcp.pop %v4406
        %v4620 = vmul.f32 %v4406, %v4619
        %v4621 = vsub.f32 1.0, %v4620
        %v4622 = vmul.f32 %v4619, %v4621
        %v4623 = vadd.f32 %v4619, %v4622
        %vm4624 = vweird.f32 %v4406
        %vm4625 = vweird.f32 %v4619
        %vm4626 = vmor %vm4624, %vm4625
        %v4627 = vsel %vm4626, %v4619, %v4623
        %v4628 = vand.u32 2147483647, %v4406
        %vm4629 = vcmp.eq.f32.partialorder %v4628, 8.507059e+37
        %v4630 = vand.u32 %v4406, 2147483648
        %v4631 = vor.u32 1.1754944e-38, %v4630
        %v4632 = vsel %vm4629, %v4631, %v4627
        %v4633 = vmul.f32 %v4374, %v4632
        %v4634 = vrcp.pop %v4408
        %v4635 = vmul.f32 %v4408, %v4634
        %v4636 = vsub.f32 1.0, %v4635
        %v4637 = vmul.f32 %v4634, %v4636
        %v4638 = vadd.f32 %v4634, %v4637
        %vm4639 = vweird.f32 %v4408
        %vm4640 = vweird.f32 %v4634
        %vm4641 = vmor %vm4639, %vm4640
        %v4642 = vsel %vm4641, %v4634, %v4638
        %v4643 = vand.u32 2147483647, %v4408
        %vm4644 = vcmp.eq.f32.partialorder %v4643, 8.507059e+37
        %v4645 = vand.u32 %v4408, 2147483648
        %v4646 = vor.u32 1.1754944e-38, %v4645
        %v4647 = vsel %vm4644, %v4646, %v4642
        %v4648 = vmul.f32 %v4376, %v4647
        %4649 = vrot.lane.b32.xlu0 %v3365, 88
        %v4650 = vpop.permute.xlu0 %4649
        %4651 = vrot.lane.b32.xlu0 %v3368, 88
        %v4652 = vpop.permute.xlu0 %4651
        %4653 = vrot.lane.b32.xlu0 %v3371, 88
        %v4654 = vpop.permute.xlu0 %4653
        %4655 = vrot.lane.b32.xlu0 %v3374, 88
        %v4656 = vpop.permute.xlu0 %4655
        %4657 = vrot.lane.b32.xlu0 %v3377, 88
        %v4658 = vpop.permute.xlu0 %4657
        %4659 = vrot.lane.b32.xlu0 %v3380, 88
        %v4660 = vpop.permute.xlu0 %4659
        %4661 = vrot.lane.b32.xlu0 %v3383, 88
        %v4662 = vpop.permute.xlu0 %4661
        %4663 = vrot.lane.b32.xlu0 %v3386, 88
        %v4664 = vpop.permute.xlu0 %4663
        %4665 = vrot.lane.b32.xlu0 %v3389, 88
        %v4666 = vpop.permute.xlu0 %4665
        %4667 = vrot.lane.b32.xlu0 %v3392, 88
        %v4668 = vpop.permute.xlu0 %4667
        %4669 = vrot.lane.b32.xlu0 %v3395, 88
        %v4670 = vpop.permute.xlu0 %4669
        %4671 = vrot.lane.b32.xlu0 %v3398, 88
        %v4672 = vpop.permute.xlu0 %4671
        %4673 = vrot.lane.b32.xlu0 %v3401, 88
        %v4674 = vpop.permute.xlu0 %4673
        %4675 = vrot.lane.b32.xlu0 %v3404, 88
        %v4676 = vpop.permute.xlu0 %4675
        %4677 = vrot.lane.b32.xlu0 %v3407, 88
        %v4678 = vpop.permute.xlu0 %4677
        %4679 = vrot.lane.b32.xlu0 %v3410, 88
        %v4680 = vpop.permute.xlu0 %4679
        %4697 = vmatpush.msra.mxu0 %v4680
        %4698 = vmatpush.msra.mxu0 %v4678
        %4699 = vmatpush.msra.mxu0 %v4676
        %4700 = vmatpush.msra.mxu0 %v4674
        %4701 = vmatpush.msra.mxu0 %v4672
        %4702 = vmatpush.msra.mxu0 %v4670
        %4703 = vmatpush.msra.mxu0 %v4668
        %4704 = vmatpush.msra.mxu0 %v4666
        %4705 = vmatpush.msra.mxu0 %v4664
        %4706 = vmatpush.msra.mxu0 %v4662
        %4707 = vmatpush.msra.mxu0 %v4660
        %4708 = vmatpush.msra.mxu0 %v4658
        %4709 = vmatpush.msra.mxu0 %v4656
        %4710 = vmatpush.msra.mxu0 %v4654
        %4711 = vmatpush.msra.mxu0 %v4652
        %4712 = vmatpush.msra.mxu0 %v4650
        %4713 = vmatmul.f32.gmra.mxu0 %v4423
        %v4714 = vpop.f32.mrf.mxu0
        %v4715 = vadd.f32 0.0, %v4714
        %4716 = vmatmul.f32.gmra.mxu0 %v4438
        %v4717 = vpop.f32.mrf.mxu0
        %v4718 = vadd.f32 0.0, %v4717
        %4719 = vmatmul.f32.gmra.mxu0 %v4453
        %v4720 = vpop.f32.mrf.mxu0
        %v4721 = vadd.f32 0.0, %v4720
        %4722 = vmatmul.f32.gmra.mxu0 %v4468
        %v4723 = vpop.f32.mrf.mxu0
        %v4724 = vadd.f32 0.0, %v4723
        %4725 = vmatmul.f32.gmra.mxu0 %v4483
        %v4726 = vpop.f32.mrf.mxu0
        %v4727 = vadd.f32 0.0, %v4726
        %4728 = vmatmul.f32.gmra.mxu0 %v4498
        %v4729 = vpop.f32.mrf.mxu0
        %v4730 = vadd.f32 0.0, %v4729
        %4731 = vmatmul.f32.gmra.mxu0 %v4513
        %v4732 = vpop.f32.mrf.mxu0
        %v4733 = vadd.f32 0.0, %v4732
        %4734 = vmatmul.f32.gmra.mxu0 %v4528
        %v4735 = vpop.f32.mrf.mxu0
        %v4736 = vadd.f32 0.0, %v4735
        %4737 = vmatmul.f32.gmra.mxu0 %v4543
        %v4738 = vpop.f32.mrf.mxu0
        %v4739 = vadd.f32 0.0, %v4738
        %4740 = vmatmul.f32.gmra.mxu0 %v4558
        %v4741 = vpop.f32.mrf.mxu0
        %v4742 = vadd.f32 0.0, %v4741
        %4743 = vmatmul.f32.gmra.mxu0 %v4573
        %v4744 = vpop.f32.mrf.mxu0
        %v4745 = vadd.f32 0.0, %v4744
        %4746 = vmatmul.f32.gmra.mxu0 %v4588
        %v4747 = vpop.f32.mrf.mxu0
        %v4748 = vadd.f32 0.0, %v4747
        %4749 = vmatmul.f32.gmra.mxu0 %v4603
        %v4750 = vpop.f32.mrf.mxu0
        %v4751 = vadd.f32 0.0, %v4750
        %4752 = vmatmul.f32.gmra.mxu0 %v4618
        %v4753 = vpop.f32.mrf.mxu0
        %v4754 = vadd.f32 0.0, %v4753
        %4755 = vmatmul.f32.gmra.mxu0 %v4633
        %v4756 = vpop.f32.mrf.mxu0
        %v4757 = vadd.f32 0.0, %v4756
        %4758 = vmatmul.f32.gmra.mxu0 %v4648
        %v4759 = vpop.f32.mrf.mxu0
        %v4760 = vadd.f32 0.0, %v4759
        %4761 = vdwg.mxu0
        %4762 = vrot.lane.b32.xlu0 %v3297, 112
        %v4763 = vpop.permute.xlu0 %4762
        %4764 = vrot.lane.b32.xlu0 %v3300, 112
        %v4765 = vpop.permute.xlu0 %4764
        %4766 = vrot.lane.b32.xlu0 %v3303, 112
        %v4767 = vpop.permute.xlu0 %4766
        %4768 = vrot.lane.b32.xlu0 %v3306, 112
        %v4769 = vpop.permute.xlu0 %4768
        %4770 = vrot.lane.b32.xlu0 %v3309, 112
        %v4771 = vpop.permute.xlu0 %4770
        %4772 = vrot.lane.b32.xlu0 %v3312, 112
        %v4773 = vpop.permute.xlu0 %4772
        %4774 = vrot.lane.b32.xlu0 %v3315, 112
        %v4775 = vpop.permute.xlu0 %4774
        %4776 = vrot.lane.b32.xlu0 %v3318, 112
        %v4777 = vpop.permute.xlu0 %4776
        %4778 = vrot.lane.b32.xlu0 %v3321, 112
        %v4779 = vpop.permute.xlu0 %4778
        %4780 = vrot.lane.b32.xlu0 %v3324, 112
        %v4781 = vpop.permute.xlu0 %4780
        %4782 = vrot.lane.b32.xlu0 %v3327, 112
        %v4783 = vpop.permute.xlu0 %4782
        %4784 = vrot.lane.b32.xlu0 %v3330, 112
        %v4785 = vpop.permute.xlu0 %4784
        %4786 = vrot.lane.b32.xlu0 %v3333, 112
        %v4787 = vpop.permute.xlu0 %4786
        %4788 = vrot.lane.b32.xlu0 %v3336, 112
        %v4789 = vpop.permute.xlu0 %4788
        %4790 = vrot.lane.b32.xlu0 %v3339, 112
        %v4791 = vpop.permute.xlu0 %4790
        %4792 = vrot.lane.b32.xlu0 %v3342, 112
        %v4793 = vpop.permute.xlu0 %4792
        %4794 = vrot.lane.b32.xlu0 %v3365, 112
        %v4795 = vpop.permute.xlu0 %4794
        %4796 = vrot.lane.b32.xlu0 %v3368, 112
        %v4797 = vpop.permute.xlu0 %4796
        %4798 = vrot.lane.b32.xlu0 %v3371, 112
        %v4799 = vpop.permute.xlu0 %4798
        %4800 = vrot.lane.b32.xlu0 %v3374, 112
        %v4801 = vpop.permute.xlu0 %4800
        %4802 = vrot.lane.b32.xlu0 %v3377, 112
        %v4803 = vpop.permute.xlu0 %4802
        %4804 = vrot.lane.b32.xlu0 %v3380, 112
        %v4805 = vpop.permute.xlu0 %4804
        %4806 = vrot.lane.b32.xlu0 %v3383, 112
        %v4807 = vpop.permute.xlu0 %4806
        %4808 = vrot.lane.b32.xlu0 %v3386, 112
        %v4809 = vpop.permute.xlu0 %4808
        %4810 = vrot.lane.b32.xlu0 %v3389, 112
        %v4811 = vpop.permute.xlu0 %4810
        %4812 = vrot.lane.b32.xlu0 %v3392, 112
        %v4813 = vpop.permute.xlu0 %4812
        %4814 = vrot.lane.b32.xlu0 %v3395, 112
        %v4815 = vpop.permute.xlu0 %4814
        %4816 = vrot.lane.b32.xlu0 %v3398, 112
        %v4817 = vpop.permute.xlu0 %4816
        %4818 = vrot.lane.b32.xlu0 %v3401, 112
        %v4819 = vpop.permute.xlu0 %4818
        %4820 = vrot.lane.b32.xlu0 %v3404, 112
        %v4821 = vpop.permute.xlu0 %4820
        %4822 = vrot.lane.b32.xlu0 %v3407, 112
        %v4823 = vpop.permute.xlu0 %4822
        %4824 = vrot.lane.b32.xlu0 %v3410, 112
        %v4825 = vpop.permute.xlu0 %4824
        %v4826 = vsel %vm971, %v4763, 0
        %v4828 = vsel %vm971, %v4765, 0
        %v4830 = vsel %vm971, %v4767, 0
        %v4832 = vsel %vm971, %v4769, 0
        %v4834 = vsel %vm971, %v4771, 0
        %v4836 = vsel %vm971, %v4773, 0
        %v4838 = vsel %vm971, %v4775, 0
        %v4840 = vsel %vm971, %v4777, 0
        %v4842 = vsel %vm971, %v4779, 0
        %v4844 = vsel %vm971, %v4781, 0
        %v4846 = vsel %vm971, %v4783, 0
        %v4848 = vsel %vm971, %v4785, 0
        %v4850 = vsel %vm971, %v4787, 0
        %v4852 = vsel %vm971, %v4789, 0
        %v4854 = vsel %vm971, %v4791, 0
        %v4856 = vsel %vm971, %v4793, 0
        %v4858 = vsel %vm971, %v4795, 0
        %v4860 = vsel %vm971, %v4797, 0
        %v4862 = vsel %vm971, %v4799, 0
        %v4864 = vsel %vm971, %v4801, 0
        %v4866 = vsel %vm971, %v4803, 0
        %v4868 = vsel %vm971, %v4805, 0
        %v4870 = vsel %vm971, %v4807, 0
        %v4872 = vsel %vm971, %v4809, 0
        %v4874 = vsel %vm971, %v4811, 0
        %v4876 = vsel %vm971, %v4813, 0
        %v4878 = vsel %vm971, %v4815, 0
        %v4880 = vsel %vm971, %v4817, 0
        %v4882 = vsel %vm971, %v4819, 0
        %v4884 = vsel %vm971, %v4821, 0
        %v4886 = vsel %vm971, %v4823, 0
        %v4888 = vsel %vm971, %v4825, 0
        %4890 = vmatpush.xpose.msra.mxu0 %v4888
        %4891 = vmatpush.xpose.msra.mxu0 %v4886
        %4892 = vmatpush.xpose.msra.mxu0 %v4884
        %4893 = vmatpush.xpose.msra.mxu0 %v4882
        %4894 = vmatpush.xpose.msra.mxu0 %v4880
        %4895 = vmatpush.xpose.msra.mxu0 %v4878
        %4896 = vmatpush.xpose.msra.mxu0 %v4876
        %4897 = vmatpush.xpose.msra.mxu0 %v4874
        %4898 = vmatpush.xpose.msra.mxu0 %v4872
        %4899 = vmatpush.xpose.msra.mxu0 %v4870
        %4900 = vmatpush.xpose.msra.mxu0 %v4868
        %4901 = vmatpush.xpose.msra.mxu0 %v4866
        %4902 = vmatpush.xpose.msra.mxu0 %v4864
        %4903 = vmatpush.xpose.msra.mxu0 %v4862
        %4904 = vmatpush.xpose.msra.mxu0 %v4860
        %4905 = vmatpush.xpose.msra.mxu0 %v4858
        %4906 = vmatmul.f32.gmra.mxu0 %v4826
        %v4907 = vpop.f32.mrf.mxu0
        %v4908 = vadd.f32 0.0, %v4907
        %4909 = vmatmul.f32.gmra.mxu0 %v4828
        %v4910 = vpop.f32.mrf.mxu0
        %v4911 = vadd.f32 0.0, %v4910
        %4912 = vmatmul.f32.gmra.mxu0 %v4830
        %v4913 = vpop.f32.mrf.mxu0
        %v4914 = vadd.f32 0.0, %v4913
        %4915 = vmatmul.f32.gmra.mxu0 %v4832
        %v4916 = vpop.f32.mrf.mxu0
        %v4917 = vadd.f32 0.0, %v4916
        %4918 = vmatmul.f32.gmra.mxu0 %v4834
        %v4919 = vpop.f32.mrf.mxu0
        %v4920 = vadd.f32 0.0, %v4919
        %4921 = vmatmul.f32.gmra.mxu0 %v4836
        %v4922 = vpop.f32.mrf.mxu0
        %v4923 = vadd.f32 0.0, %v4922
        %4924 = vmatmul.f32.gmra.mxu0 %v4838
        %v4925 = vpop.f32.mrf.mxu0
        %v4926 = vadd.f32 0.0, %v4925
        %4927 = vmatmul.f32.gmra.mxu0 %v4840
        %v4928 = vpop.f32.mrf.mxu0
        %v4929 = vadd.f32 0.0, %v4928
        %4930 = vmatmul.f32.gmra.mxu0 %v4842
        %v4931 = vpop.f32.mrf.mxu0
        %v4932 = vadd.f32 0.0, %v4931
        %4933 = vmatmul.f32.gmra.mxu0 %v4844
        %v4934 = vpop.f32.mrf.mxu0
        %v4935 = vadd.f32 0.0, %v4934
        %4936 = vmatmul.f32.gmra.mxu0 %v4846
        %v4937 = vpop.f32.mrf.mxu0
        %v4938 = vadd.f32 0.0, %v4937
        %4939 = vmatmul.f32.gmra.mxu0 %v4848
        %v4940 = vpop.f32.mrf.mxu0
        %v4941 = vadd.f32 0.0, %v4940
        %4942 = vmatmul.f32.gmra.mxu0 %v4850
        %v4943 = vpop.f32.mrf.mxu0
        %v4944 = vadd.f32 0.0, %v4943
        %4945 = vmatmul.f32.gmra.mxu0 %v4852
        %v4946 = vpop.f32.mrf.mxu0
        %v4947 = vadd.f32 0.0, %v4946
        %4948 = vmatmul.f32.gmra.mxu0 %v4854
        %v4949 = vpop.f32.mrf.mxu0
        %v4950 = vadd.f32 0.0, %v4949
        %4951 = vmatmul.f32.gmra.mxu0 %v4856
        %v4952 = vpop.f32.mrf.mxu0
        %v4953 = vadd.f32 0.0, %v4952
        %4954 = vdwg.mxu0
        %v4955 = vmul.f32 %v4908, 0.35355338
        %v4956 = vmul.f32 %v4911, 0.35355338
        %v4957 = vmul.f32 %v4914, 0.35355338
        %v4958 = vmul.f32 %v4917, 0.35355338
        %v4959 = vmul.f32 %v4920, 0.35355338
        %v4960 = vmul.f32 %v4923, 0.35355338
        %v4961 = vmul.f32 %v4926, 0.35355338
        %v4962 = vmul.f32 %v4929, 0.35355338
        %v4963 = vmul.f32 %v4932, 0.35355338
        %v4964 = vmul.f32 %v4935, 0.35355338
        %v4965 = vmul.f32 %v4938, 0.35355338
        %v4966 = vmul.f32 %v4941, 0.35355338
        %v4967 = vmul.f32 %v4944, 0.35355338
        %v4968 = vmul.f32 %v4947, 0.35355338
        %v4969 = vmul.f32 %v4950, 0.35355338
        %v4970 = vmul.f32 %v4953, 0.35355338
        %v4971 = vsel %vm3590, %v4955, -1e+09
        %v4972 = vsel %vm3590, %v4956, -1e+09
        %v4973 = vsel %vm3590, %v4957, -1e+09
        %v4974 = vsel %vm3590, %v4958, -1e+09
        %v4975 = vsel %vm3590, %v4959, -1e+09
        %v4976 = vsel %vm3590, %v4960, -1e+09
        %v4977 = vsel %vm3590, %v4961, -1e+09
        %v4978 = vsel %vm3590, %v4962, -1e+09
        %v4979 = vsel %vm3590, %v4963, -1e+09
        %v4980 = vsel %vm3590, %v4964, -1e+09
        %v4981 = vsel %vm3590, %v4965, -1e+09
        %v4982 = vsel %vm3590, %v4966, -1e+09
        %v4983 = vsel %vm3590, %v4967, -1e+09
        %v4984 = vsel %vm3590, %v4968, -1e+09
        %v4985 = vsel %vm3590, %v4969, -1e+09
        %v4986 = vsel %vm3590, %v4970, -1e+09
        %4987 = vmax.xlane.f32.xlu0 %v4971
        %v4988 = vpop.xlane.xlu0 %4987
        %4989 = vmax.xlane.f32.xlu0 %v4972
        %v4990 = vpop.xlane.xlu0 %4989
        %4991 = vmax.xlane.f32.xlu0 %v4973
        %v4992 = vpop.xlane.xlu0 %4991
        %4993 = vmax.xlane.f32.xlu0 %v4974
        %v4994 = vpop.xlane.xlu0 %4993
        %4995 = vmax.xlane.f32.xlu0 %v4975
        %v4996 = vpop.xlane.xlu0 %4995
        %4997 = vmax.xlane.f32.xlu0 %v4976
        %v4998 = vpop.xlane.xlu0 %4997
        %4999 = vmax.xlane.f32.xlu0 %v4977
        %v5000 = vpop.xlane.xlu0 %4999
        %5001 = vmax.xlane.f32.xlu0 %v4978
        %v5002 = vpop.xlane.xlu0 %5001
        %5003 = vmax.xlane.f32.xlu0 %v4979
        %v5004 = vpop.xlane.xlu0 %5003
        %5005 = vmax.xlane.f32.xlu0 %v4980
        %v5006 = vpop.xlane.xlu0 %5005
        %5007 = vmax.xlane.f32.xlu0 %v4981
        %v5008 = vpop.xlane.xlu0 %5007
        %5009 = vmax.xlane.f32.xlu0 %v4982
        %v5010 = vpop.xlane.xlu0 %5009
        %5011 = vmax.xlane.f32.xlu0 %v4983
        %v5012 = vpop.xlane.xlu0 %5011
        %5013 = vmax.xlane.f32.xlu0 %v4984
        %v5014 = vpop.xlane.xlu0 %5013
        %5015 = vmax.xlane.f32.xlu0 %v4985
        %v5016 = vpop.xlane.xlu0 %5015
        %5017 = vmax.xlane.f32.xlu0 %v4986
        %v5018 = vpop.xlane.xlu0 %5017
        %v5019 = vsub.f32 %v4971, %v4988
        %v5020 = vsub.f32 %v4972, %v4990
        %v5021 = vsub.f32 %v4973, %v4992
        %v5022 = vsub.f32 %v4974, %v4994
        %v5023 = vsub.f32 %v4975, %v4996
        %v5024 = vsub.f32 %v4976, %v4998
        %v5025 = vsub.f32 %v4977, %v5000
        %v5026 = vsub.f32 %v4978, %v5002
        %v5027 = vsub.f32 %v4979, %v5004
        %v5028 = vsub.f32 %v4980, %v5006
        %v5029 = vsub.f32 %v4981, %v5008
        %v5030 = vsub.f32 %v4982, %v5010
        %v5031 = vsub.f32 %v4983, %v5012
        %v5032 = vsub.f32 %v4984, %v5014
        %v5033 = vsub.f32 %v4985, %v5016
        %v5034 = vsub.f32 %v4986, %v5018
        %v5035 = vmul.f32 %v5019, 1.442695
        %v5036 = vpow.pop %v5035
        %v5037 = vmul.f32 %v5020, 1.442695
        %v5038 = vpow.pop %v5037
        %v5039 = vmul.f32 %v5021, 1.442695
        %v5040 = vpow.pop %v5039
        %v5041 = vmul.f32 %v5022, 1.442695
        %v5042 = vpow.pop %v5041
        %v5043 = vmul.f32 %v5023, 1.442695
        %v5044 = vpow.pop %v5043
        %v5045 = vmul.f32 %v5024, 1.442695
        %v5046 = vpow.pop %v5045
        %v5047 = vmul.f32 %v5025, 1.442695
        %v5048 = vpow.pop %v5047
        %v5049 = vmul.f32 %v5026, 1.442695
        %v5050 = vpow.pop %v5049
        %v5051 = vmul.f32 %v5027, 1.442695
        %v5052 = vpow.pop %v5051
        %v5053 = vmul.f32 %v5028, 1.442695
        %v5054 = vpow.pop %v5053
        %v5055 = vmul.f32 %v5029, 1.442695
        %v5056 = vpow.pop %v5055
        %v5057 = vmul.f32 %v5030, 1.442695
        %v5058 = vpow.pop %v5057
        %v5059 = vmul.f32 %v5031, 1.442695
        %v5060 = vpow.pop %v5059
        %v5061 = vmul.f32 %v5032, 1.442695
        %v5062 = vpow.pop %v5061
        %v5063 = vmul.f32 %v5033, 1.442695
        %v5064 = vpow.pop %v5063
        %v5065 = vmul.f32 %v5034, 1.442695
        %v5066 = vpow.pop %v5065
        %5067 = vadd.xlane.f32.xlu0 %v5036
        %v5068 = vpop.xlane.xlu0 %5067
        %5069 = vadd.xlane.f32.xlu0 %v5038
        %v5070 = vpop.xlane.xlu0 %5069
        %5071 = vadd.xlane.f32.xlu0 %v5040
        %v5072 = vpop.xlane.xlu0 %5071
        %5073 = vadd.xlane.f32.xlu0 %v5042
        %v5074 = vpop.xlane.xlu0 %5073
        %5075 = vadd.xlane.f32.xlu0 %v5044
        %v5076 = vpop.xlane.xlu0 %5075
        %5077 = vadd.xlane.f32.xlu0 %v5046
        %v5078 = vpop.xlane.xlu0 %5077
        %5079 = vadd.xlane.f32.xlu0 %v5048
        %v5080 = vpop.xlane.xlu0 %5079
        %5081 = vadd.xlane.f32.xlu0 %v5050
        %v5082 = vpop.xlane.xlu0 %5081
        %5083 = vadd.xlane.f32.xlu0 %v5052
        %v5084 = vpop.xlane.xlu0 %5083
        %5085 = vadd.xlane.f32.xlu0 %v5054
        %v5086 = vpop.xlane.xlu0 %5085
        %5087 = vadd.xlane.f32.xlu0 %v5056
        %v5088 = vpop.xlane.xlu0 %5087
        %5089 = vadd.xlane.f32.xlu0 %v5058
        %v5090 = vpop.xlane.xlu0 %5089
        %5091 = vadd.xlane.f32.xlu0 %v5060
        %v5092 = vpop.xlane.xlu0 %5091
        %5093 = vadd.xlane.f32.xlu0 %v5062
        %v5094 = vpop.xlane.xlu0 %5093
        %5095 = vadd.xlane.f32.xlu0 %v5064
        %v5096 = vpop.xlane.xlu0 %5095
        %5097 = vadd.xlane.f32.xlu0 %v5066
        %v5098 = vpop.xlane.xlu0 %5097
        %v5099 = vrcp.pop %v5068
        %v5100 = vmul.f32 %v5068, %v5099
        %v5101 = vsub.f32 1.0, %v5100
        %v5102 = vmul.f32 %v5099, %v5101
        %v5103 = vadd.f32 %v5099, %v5102
        %vm5104 = vweird.f32 %v5068
        %vm5105 = vweird.f32 %v5099
        %vm5106 = vmor %vm5104, %vm5105
        %v5107 = vsel %vm5106, %v5099, %v5103
        %v5108 = vand.u32 2147483647, %v5068
        %vm5109 = vcmp.eq.f32.partialorder %v5108, 8.507059e+37
        %v5110 = vand.u32 %v5068, 2147483648
        %v5111 = vor.u32 1.1754944e-38, %v5110
        %v5112 = vsel %vm5109, %v5111, %v5107
        %v5113 = vmul.f32 %v5036, %v5112
        %v5114 = vrcp.pop %v5070
        %v5115 = vmul.f32 %v5070, %v5114
        %v5116 = vsub.f32 1.0, %v5115
        %v5117 = vmul.f32 %v5114, %v5116
        %v5118 = vadd.f32 %v5114, %v5117
        %vm5119 = vweird.f32 %v5070
        %vm5120 = vweird.f32 %v5114
        %vm5121 = vmor %vm5119, %vm5120
        %v5122 = vsel %vm5121, %v5114, %v5118
        %v5123 = vand.u32 2147483647, %v5070
        %vm5124 = vcmp.eq.f32.partialorder %v5123, 8.507059e+37
        %v5125 = vand.u32 %v5070, 2147483648
        %v5126 = vor.u32 1.1754944e-38, %v5125
        %v5127 = vsel %vm5124, %v5126, %v5122
        %v5128 = vmul.f32 %v5038, %v5127
        %v5129 = vrcp.pop %v5072
        %v5130 = vmul.f32 %v5072, %v5129
        %v5131 = vsub.f32 1.0, %v5130
        %v5132 = vmul.f32 %v5129, %v5131
        %v5133 = vadd.f32 %v5129, %v5132
        %vm5134 = vweird.f32 %v5072
        %vm5135 = vweird.f32 %v5129
        %vm5136 = vmor %vm5134, %vm5135
        %v5137 = vsel %vm5136, %v5129, %v5133
        %v5138 = vand.u32 2147483647, %v5072
        %vm5139 = vcmp.eq.f32.partialorder %v5138, 8.507059e+37
        %v5140 = vand.u32 %v5072, 2147483648
        %v5141 = vor.u32 1.1754944e-38, %v5140
        %v5142 = vsel %vm5139, %v5141, %v5137
        %v5143 = vmul.f32 %v5040, %v5142
        %v5144 = vrcp.pop %v5074
        %v5145 = vmul.f32 %v5074, %v5144
        %v5146 = vsub.f32 1.0, %v5145
        %v5147 = vmul.f32 %v5144, %v5146
        %v5148 = vadd.f32 %v5144, %v5147
        %vm5149 = vweird.f32 %v5074
        %vm5150 = vweird.f32 %v5144
        %vm5151 = vmor %vm5149, %vm5150
        %v5152 = vsel %vm5151, %v5144, %v5148
        %v5153 = vand.u32 2147483647, %v5074
        %vm5154 = vcmp.eq.f32.partialorder %v5153, 8.507059e+37
        %v5155 = vand.u32 %v5074, 2147483648
        %v5156 = vor.u32 1.1754944e-38, %v5155
        %v5157 = vsel %vm5154, %v5156, %v5152
        %v5158 = vmul.f32 %v5042, %v5157
        %v5159 = vrcp.pop %v5076
        %v5160 = vmul.f32 %v5076, %v5159
        %v5161 = vsub.f32 1.0, %v5160
        %v5162 = vmul.f32 %v5159, %v5161
        %v5163 = vadd.f32 %v5159, %v5162
        %vm5164 = vweird.f32 %v5076
        %vm5165 = vweird.f32 %v5159
        %vm5166 = vmor %vm5164, %vm5165
        %v5167 = vsel %vm5166, %v5159, %v5163
        %v5168 = vand.u32 2147483647, %v5076
        %vm5169 = vcmp.eq.f32.partialorder %v5168, 8.507059e+37
        %v5170 = vand.u32 %v5076, 2147483648
        %v5171 = vor.u32 1.1754944e-38, %v5170
        %v5172 = vsel %vm5169, %v5171, %v5167
        %v5173 = vmul.f32 %v5044, %v5172
        %v5174 = vrcp.pop %v5078
        %v5175 = vmul.f32 %v5078, %v5174
        %v5176 = vsub.f32 1.0, %v5175
        %v5177 = vmul.f32 %v5174, %v5176
        %v5178 = vadd.f32 %v5174, %v5177
        %vm5179 = vweird.f32 %v5078
        %vm5180 = vweird.f32 %v5174
        %vm5181 = vmor %vm5179, %vm5180
        %v5182 = vsel %vm5181, %v5174, %v5178
        %v5183 = vand.u32 2147483647, %v5078
        %vm5184 = vcmp.eq.f32.partialorder %v5183, 8.507059e+37
        %v5185 = vand.u32 %v5078, 2147483648
        %v5186 = vor.u32 1.1754944e-38, %v5185
        %v5187 = vsel %vm5184, %v5186, %v5182
        %v5188 = vmul.f32 %v5046, %v5187
        %v5189 = vrcp.pop %v5080
        %v5190 = vmul.f32 %v5080, %v5189
        %v5191 = vsub.f32 1.0, %v5190
        %v5192 = vmul.f32 %v5189, %v5191
        %v5193 = vadd.f32 %v5189, %v5192
        %vm5194 = vweird.f32 %v5080
        %vm5195 = vweird.f32 %v5189
        %vm5196 = vmor %vm5194, %vm5195
        %v5197 = vsel %vm5196, %v5189, %v5193
        %v5198 = vand.u32 2147483647, %v5080
        %vm5199 = vcmp.eq.f32.partialorder %v5198, 8.507059e+37
        %v5200 = vand.u32 %v5080, 2147483648
        %v5201 = vor.u32 1.1754944e-38, %v5200
        %v5202 = vsel %vm5199, %v5201, %v5197
        %v5203 = vmul.f32 %v5048, %v5202
        %v5204 = vrcp.pop %v5082
        %v5205 = vmul.f32 %v5082, %v5204
        %v5206 = vsub.f32 1.0, %v5205
        %v5207 = vmul.f32 %v5204, %v5206
        %v5208 = vadd.f32 %v5204, %v5207
        %vm5209 = vweird.f32 %v5082
        %vm5210 = vweird.f32 %v5204
        %vm5211 = vmor %vm5209, %vm5210
        %v5212 = vsel %vm5211, %v5204, %v5208
        %v5213 = vand.u32 2147483647, %v5082
        %vm5214 = vcmp.eq.f32.partialorder %v5213, 8.507059e+37
        %v5215 = vand.u32 %v5082, 2147483648
        %v5216 = vor.u32 1.1754944e-38, %v5215
        %v5217 = vsel %vm5214, %v5216, %v5212
        %v5218 = vmul.f32 %v5050, %v5217
        %v5219 = vrcp.pop %v5084
        %v5220 = vmul.f32 %v5084, %v5219
        %v5221 = vsub.f32 1.0, %v5220
        %v5222 = vmul.f32 %v5219, %v5221
        %v5223 = vadd.f32 %v5219, %v5222
        %vm5224 = vweird.f32 %v5084
        %vm5225 = vweird.f32 %v5219
        %vm5226 = vmor %vm5224, %vm5225
        %v5227 = vsel %vm5226, %v5219, %v5223
        %v5228 = vand.u32 2147483647, %v5084
        %vm5229 = vcmp.eq.f32.partialorder %v5228, 8.507059e+37
        %v5230 = vand.u32 %v5084, 2147483648
        %v5231 = vor.u32 1.1754944e-38, %v5230
        %v5232 = vsel %vm5229, %v5231, %v5227
        %v5233 = vmul.f32 %v5052, %v5232
        %v5234 = vrcp.pop %v5086
        %v5235 = vmul.f32 %v5086, %v5234
        %v5236 = vsub.f32 1.0, %v5235
        %v5237 = vmul.f32 %v5234, %v5236
        %v5238 = vadd.f32 %v5234, %v5237
        %vm5239 = vweird.f32 %v5086
        %vm5240 = vweird.f32 %v5234
        %vm5241 = vmor %vm5239, %vm5240
        %v5242 = vsel %vm5241, %v5234, %v5238
        %v5243 = vand.u32 2147483647, %v5086
        %vm5244 = vcmp.eq.f32.partialorder %v5243, 8.507059e+37
        %v5245 = vand.u32 %v5086, 2147483648
        %v5246 = vor.u32 1.1754944e-38, %v5245
        %v5247 = vsel %vm5244, %v5246, %v5242
        %v5248 = vmul.f32 %v5054, %v5247
        %v5249 = vrcp.pop %v5088
        %v5250 = vmul.f32 %v5088, %v5249
        %v5251 = vsub.f32 1.0, %v5250
        %v5252 = vmul.f32 %v5249, %v5251
        %v5253 = vadd.f32 %v5249, %v5252
        %vm5254 = vweird.f32 %v5088
        %vm5255 = vweird.f32 %v5249
        %vm5256 = vmor %vm5254, %vm5255
        %v5257 = vsel %vm5256, %v5249, %v5253
        %v5258 = vand.u32 2147483647, %v5088
        %vm5259 = vcmp.eq.f32.partialorder %v5258, 8.507059e+37
        %v5260 = vand.u32 %v5088, 2147483648
        %v5261 = vor.u32 1.1754944e-38, %v5260
        %v5262 = vsel %vm5259, %v5261, %v5257
        %v5263 = vmul.f32 %v5056, %v5262
        %v5264 = vrcp.pop %v5090
        %v5265 = vmul.f32 %v5090, %v5264
        %v5266 = vsub.f32 1.0, %v5265
        %v5267 = vmul.f32 %v5264, %v5266
        %v5268 = vadd.f32 %v5264, %v5267
        %vm5269 = vweird.f32 %v5090
        %vm5270 = vweird.f32 %v5264
        %vm5271 = vmor %vm5269, %vm5270
        %v5272 = vsel %vm5271, %v5264, %v5268
        %v5273 = vand.u32 2147483647, %v5090
        %vm5274 = vcmp.eq.f32.partialorder %v5273, 8.507059e+37
        %v5275 = vand.u32 %v5090, 2147483648
        %v5276 = vor.u32 1.1754944e-38, %v5275
        %v5277 = vsel %vm5274, %v5276, %v5272
        %v5278 = vmul.f32 %v5058, %v5277
        %v5279 = vrcp.pop %v5092
        %v5280 = vmul.f32 %v5092, %v5279
        %v5281 = vsub.f32 1.0, %v5280
        %v5282 = vmul.f32 %v5279, %v5281
        %v5283 = vadd.f32 %v5279, %v5282
        %vm5284 = vweird.f32 %v5092
        %vm5285 = vweird.f32 %v5279
        %vm5286 = vmor %vm5284, %vm5285
        %v5287 = vsel %vm5286, %v5279, %v5283
        %v5288 = vand.u32 2147483647, %v5092
        %vm5289 = vcmp.eq.f32.partialorder %v5288, 8.507059e+37
        %v5290 = vand.u32 %v5092, 2147483648
        %v5291 = vor.u32 1.1754944e-38, %v5290
        %v5292 = vsel %vm5289, %v5291, %v5287
        %v5293 = vmul.f32 %v5060, %v5292
        %v5294 = vrcp.pop %v5094
        %v5295 = vmul.f32 %v5094, %v5294
        %v5296 = vsub.f32 1.0, %v5295
        %v5297 = vmul.f32 %v5294, %v5296
        %v5298 = vadd.f32 %v5294, %v5297
        %vm5299 = vweird.f32 %v5094
        %vm5300 = vweird.f32 %v5294
        %vm5301 = vmor %vm5299, %vm5300
        %v5302 = vsel %vm5301, %v5294, %v5298
        %v5303 = vand.u32 2147483647, %v5094
        %vm5304 = vcmp.eq.f32.partialorder %v5303, 8.507059e+37
        %v5305 = vand.u32 %v5094, 2147483648
        %v5306 = vor.u32 1.1754944e-38, %v5305
        %v5307 = vsel %vm5304, %v5306, %v5302
        %v5308 = vmul.f32 %v5062, %v5307
        %v5309 = vrcp.pop %v5096
        %v5310 = vmul.f32 %v5096, %v5309
        %v5311 = vsub.f32 1.0, %v5310
        %v5312 = vmul.f32 %v5309, %v5311
        %v5313 = vadd.f32 %v5309, %v5312
        %vm5314 = vweird.f32 %v5096
        %vm5315 = vweird.f32 %v5309
        %vm5316 = vmor %vm5314, %vm5315
        %v5317 = vsel %vm5316, %v5309, %v5313
        %v5318 = vand.u32 2147483647, %v5096
        %vm5319 = vcmp.eq.f32.partialorder %v5318, 8.507059e+37
        %v5320 = vand.u32 %v5096, 2147483648
        %v5321 = vor.u32 1.1754944e-38, %v5320
        %v5322 = vsel %vm5319, %v5321, %v5317
        %v5323 = vmul.f32 %v5064, %v5322
        %v5324 = vrcp.pop %v5098
        %v5325 = vmul.f32 %v5098, %v5324
        %v5326 = vsub.f32 1.0, %v5325
        %v5327 = vmul.f32 %v5324, %v5326
        %v5328 = vadd.f32 %v5324, %v5327
        %vm5329 = vweird.f32 %v5098
        %vm5330 = vweird.f32 %v5324
        %vm5331 = vmor %vm5329, %vm5330
        %v5332 = vsel %vm5331, %v5324, %v5328
        %v5333 = vand.u32 2147483647, %v5098
        %vm5334 = vcmp.eq.f32.partialorder %v5333, 8.507059e+37
        %v5335 = vand.u32 %v5098, 2147483648
        %v5336 = vor.u32 1.1754944e-38, %v5335
        %v5337 = vsel %vm5334, %v5336, %v5332
        %v5338 = vmul.f32 %v5066, %v5337
        %5339 = vrot.lane.b32.xlu0 %v3365, 80
        %v5340 = vpop.permute.xlu0 %5339
        %5341 = vrot.lane.b32.xlu0 %v3368, 80
        %v5342 = vpop.permute.xlu0 %5341
        %5343 = vrot.lane.b32.xlu0 %v3371, 80
        %v5344 = vpop.permute.xlu0 %5343
        %5345 = vrot.lane.b32.xlu0 %v3374, 80
        %v5346 = vpop.permute.xlu0 %5345
        %5347 = vrot.lane.b32.xlu0 %v3377, 80
        %v5348 = vpop.permute.xlu0 %5347
        %5349 = vrot.lane.b32.xlu0 %v3380, 80
        %v5350 = vpop.permute.xlu0 %5349
        %5351 = vrot.lane.b32.xlu0 %v3383, 80
        %v5352 = vpop.permute.xlu0 %5351
        %5353 = vrot.lane.b32.xlu0 %v3386, 80
        %v5354 = vpop.permute.xlu0 %5353
        %5355 = vrot.lane.b32.xlu0 %v3389, 80
        %v5356 = vpop.permute.xlu0 %5355
        %5357 = vrot.lane.b32.xlu0 %v3392, 80
        %v5358 = vpop.permute.xlu0 %5357
        %5359 = vrot.lane.b32.xlu0 %v3395, 80
        %v5360 = vpop.permute.xlu0 %5359
        %5361 = vrot.lane.b32.xlu0 %v3398, 80
        %v5362 = vpop.permute.xlu0 %5361
        %5363 = vrot.lane.b32.xlu0 %v3401, 80
        %v5364 = vpop.permute.xlu0 %5363
        %5365 = vrot.lane.b32.xlu0 %v3404, 80
        %v5366 = vpop.permute.xlu0 %5365
        %5367 = vrot.lane.b32.xlu0 %v3407, 80
        %v5368 = vpop.permute.xlu0 %5367
        %5369 = vrot.lane.b32.xlu0 %v3410, 80
        %v5370 = vpop.permute.xlu0 %5369
        %5387 = vmatpush.msra.mxu0 %v5370
        %5388 = vmatpush.msra.mxu0 %v5368
        %5389 = vmatpush.msra.mxu0 %v5366
        %5390 = vmatpush.msra.mxu0 %v5364
        %5391 = vmatpush.msra.mxu0 %v5362
        %5392 = vmatpush.msra.mxu0 %v5360
        %5393 = vmatpush.msra.mxu0 %v5358
        %5394 = vmatpush.msra.mxu0 %v5356
        %5395 = vmatpush.msra.mxu0 %v5354
        %5396 = vmatpush.msra.mxu0 %v5352
        %5397 = vmatpush.msra.mxu0 %v5350
        %5398 = vmatpush.msra.mxu0 %v5348
        %5399 = vmatpush.msra.mxu0 %v5346
        %5400 = vmatpush.msra.mxu0 %v5344
        %5401 = vmatpush.msra.mxu0 %v5342
        %5402 = vmatpush.msra.mxu0 %v5340
        %5403 = vmatmul.f32.gmra.mxu0 %v5113
        %v5404 = vpop.f32.mrf.mxu0
        %v5405 = vadd.f32 0.0, %v5404
        %5406 = vmatmul.f32.gmra.mxu0 %v5128
        %v5407 = vpop.f32.mrf.mxu0
        %v5408 = vadd.f32 0.0, %v5407
        %5409 = vmatmul.f32.gmra.mxu0 %v5143
        %v5410 = vpop.f32.mrf.mxu0
        %v5411 = vadd.f32 0.0, %v5410
        %5412 = vmatmul.f32.gmra.mxu0 %v5158
        %v5413 = vpop.f32.mrf.mxu0
        %v5414 = vadd.f32 0.0, %v5413
        %5415 = vmatmul.f32.gmra.mxu0 %v5173
        %v5416 = vpop.f32.mrf.mxu0
        %v5417 = vadd.f32 0.0, %v5416
        %5418 = vmatmul.f32.gmra.mxu0 %v5188
        %v5419 = vpop.f32.mrf.mxu0
        %v5420 = vadd.f32 0.0, %v5419
        %5421 = vmatmul.f32.gmra.mxu0 %v5203
        %v5422 = vpop.f32.mrf.mxu0
        %v5423 = vadd.f32 0.0, %v5422
        %5424 = vmatmul.f32.gmra.mxu0 %v5218
        %v5425 = vpop.f32.mrf.mxu0
        %v5426 = vadd.f32 0.0, %v5425
        %5427 = vmatmul.f32.gmra.mxu0 %v5233
        %v5428 = vpop.f32.mrf.mxu0
        %v5429 = vadd.f32 0.0, %v5428
        %5430 = vmatmul.f32.gmra.mxu0 %v5248
        %v5431 = vpop.f32.mrf.mxu0
        %v5432 = vadd.f32 0.0, %v5431
        %5433 = vmatmul.f32.gmra.mxu0 %v5263
        %v5434 = vpop.f32.mrf.mxu0
        %v5435 = vadd.f32 0.0, %v5434
        %5436 = vmatmul.f32.gmra.mxu0 %v5278
        %v5437 = vpop.f32.mrf.mxu0
        %v5438 = vadd.f32 0.0, %v5437
        %5439 = vmatmul.f32.gmra.mxu0 %v5293
        %v5440 = vpop.f32.mrf.mxu0
        %v5441 = vadd.f32 0.0, %v5440
        %5442 = vmatmul.f32.gmra.mxu0 %v5308
        %v5443 = vpop.f32.mrf.mxu0
        %v5444 = vadd.f32 0.0, %v5443
        %5445 = vmatmul.f32.gmra.mxu0 %v5323
        %v5446 = vpop.f32.mrf.mxu0
        %v5447 = vadd.f32 0.0, %v5446
        %5448 = vmatmul.f32.gmra.mxu0 %v5338
        %v5449 = vpop.f32.mrf.mxu0
        %v5450 = vadd.f32 0.0, %v5449
        %5451 = vdwg.mxu0
        %5452 = vrot.lane.b32.xlu0 %v3297, 104
        %v5453 = vpop.permute.xlu0 %5452
        %5454 = vrot.lane.b32.xlu0 %v3300, 104
        %v5455 = vpop.permute.xlu0 %5454
        %5456 = vrot.lane.b32.xlu0 %v3303, 104
        %v5457 = vpop.permute.xlu0 %5456
        %5458 = vrot.lane.b32.xlu0 %v3306, 104
        %v5459 = vpop.permute.xlu0 %5458
        %5460 = vrot.lane.b32.xlu0 %v3309, 104
        %v5461 = vpop.permute.xlu0 %5460
        %5462 = vrot.lane.b32.xlu0 %v3312, 104
        %v5463 = vpop.permute.xlu0 %5462
        %5464 = vrot.lane.b32.xlu0 %v3315, 104
        %v5465 = vpop.permute.xlu0 %5464
        %5466 = vrot.lane.b32.xlu0 %v3318, 104
        %v5467 = vpop.permute.xlu0 %5466
        %5468 = vrot.lane.b32.xlu0 %v3321, 104
        %v5469 = vpop.permute.xlu0 %5468
        %5470 = vrot.lane.b32.xlu0 %v3324, 104
        %v5471 = vpop.permute.xlu0 %5470
        %5472 = vrot.lane.b32.xlu0 %v3327, 104
        %v5473 = vpop.permute.xlu0 %5472
        %5474 = vrot.lane.b32.xlu0 %v3330, 104
        %v5475 = vpop.permute.xlu0 %5474
        %5476 = vrot.lane.b32.xlu0 %v3333, 104
        %v5477 = vpop.permute.xlu0 %5476
        %5478 = vrot.lane.b32.xlu0 %v3336, 104
        %v5479 = vpop.permute.xlu0 %5478
        %5480 = vrot.lane.b32.xlu0 %v3339, 104
        %v5481 = vpop.permute.xlu0 %5480
        %5482 = vrot.lane.b32.xlu0 %v3342, 104
        %v5483 = vpop.permute.xlu0 %5482
        %5484 = vrot.lane.b32.xlu0 %v3365, 104
        %v5485 = vpop.permute.xlu0 %5484
        %5486 = vrot.lane.b32.xlu0 %v3368, 104
        %v5487 = vpop.permute.xlu0 %5486
        %5488 = vrot.lane.b32.xlu0 %v3371, 104
        %v5489 = vpop.permute.xlu0 %5488
        %5490 = vrot.lane.b32.xlu0 %v3374, 104
        %v5491 = vpop.permute.xlu0 %5490
        %5492 = vrot.lane.b32.xlu0 %v3377, 104
        %v5493 = vpop.permute.xlu0 %5492
        %5494 = vrot.lane.b32.xlu0 %v3380, 104
        %v5495 = vpop.permute.xlu0 %5494
        %5496 = vrot.lane.b32.xlu0 %v3383, 104
        %v5497 = vpop.permute.xlu0 %5496
        %5498 = vrot.lane.b32.xlu0 %v3386, 104
        %v5499 = vpop.permute.xlu0 %5498
        %5500 = vrot.lane.b32.xlu0 %v3389, 104
        %v5501 = vpop.permute.xlu0 %5500
        %5502 = vrot.lane.b32.xlu0 %v3392, 104
        %v5503 = vpop.permute.xlu0 %5502
        %5504 = vrot.lane.b32.xlu0 %v3395, 104
        %v5505 = vpop.permute.xlu0 %5504
        %5506 = vrot.lane.b32.xlu0 %v3398, 104
        %v5507 = vpop.permute.xlu0 %5506
        %5508 = vrot.lane.b32.xlu0 %v3401, 104
        %v5509 = vpop.permute.xlu0 %5508
        %5510 = vrot.lane.b32.xlu0 %v3404, 104
        %v5511 = vpop.permute.xlu0 %5510
        %5512 = vrot.lane.b32.xlu0 %v3407, 104
        %v5513 = vpop.permute.xlu0 %5512
        %5514 = vrot.lane.b32.xlu0 %v3410, 104
        %v5515 = vpop.permute.xlu0 %5514
        %v5516 = vsel %vm971, %v5453, 0
        %v5518 = vsel %vm971, %v5455, 0
        %v5520 = vsel %vm971, %v5457, 0
        %v5522 = vsel %vm971, %v5459, 0
        %v5524 = vsel %vm971, %v5461, 0
        %v5526 = vsel %vm971, %v5463, 0
        %v5528 = vsel %vm971, %v5465, 0
        %v5530 = vsel %vm971, %v5467, 0
        %v5532 = vsel %vm971, %v5469, 0
        %v5534 = vsel %vm971, %v5471, 0
        %v5536 = vsel %vm971, %v5473, 0
        %v5538 = vsel %vm971, %v5475, 0
        %v5540 = vsel %vm971, %v5477, 0
        %v5542 = vsel %vm971, %v5479, 0
        %v5544 = vsel %vm971, %v5481, 0
        %v5546 = vsel %vm971, %v5483, 0
        %v5548 = vsel %vm971, %v5485, 0
        %v5550 = vsel %vm971, %v5487, 0
        %v5552 = vsel %vm971, %v5489, 0
        %v5554 = vsel %vm971, %v5491, 0
        %v5556 = vsel %vm971, %v5493, 0
        %v5558 = vsel %vm971, %v5495, 0
        %v5560 = vsel %vm971, %v5497, 0
        %v5562 = vsel %vm971, %v5499, 0
        %v5564 = vsel %vm971, %v5501, 0
        %v5566 = vsel %vm971, %v5503, 0
        %v5568 = vsel %vm971, %v5505, 0
        %v5570 = vsel %vm971, %v5507, 0
        %v5572 = vsel %vm971, %v5509, 0
        %v5574 = vsel %vm971, %v5511, 0
        %v5576 = vsel %vm971, %v5513, 0
        %v5578 = vsel %vm971, %v5515, 0
        %5580 = vmatpush.xpose.msra.mxu0 %v5578
        %5581 = vmatpush.xpose.msra.mxu0 %v5576
        %5582 = vmatpush.xpose.msra.mxu0 %v5574
        %5583 = vmatpush.xpose.msra.mxu0 %v5572
        %5584 = vmatpush.xpose.msra.mxu0 %v5570
        %5585 = vmatpush.xpose.msra.mxu0 %v5568
        %5586 = vmatpush.xpose.msra.mxu0 %v5566
        %5587 = vmatpush.xpose.msra.mxu0 %v5564
        %5588 = vmatpush.xpose.msra.mxu0 %v5562
        %5589 = vmatpush.xpose.msra.mxu0 %v5560
        %5590 = vmatpush.xpose.msra.mxu0 %v5558
        %5591 = vmatpush.xpose.msra.mxu0 %v5556
        %5592 = vmatpush.xpose.msra.mxu0 %v5554
        %5593 = vmatpush.xpose.msra.mxu0 %v5552
        %5594 = vmatpush.xpose.msra.mxu0 %v5550
        %5595 = vmatpush.xpose.msra.mxu0 %v5548
        %5596 = vmatmul.f32.gmra.mxu0 %v5516
        %v5597 = vpop.f32.mrf.mxu0
        %v5598 = vadd.f32 0.0, %v5597
        %5599 = vmatmul.f32.gmra.mxu0 %v5518
        %v5600 = vpop.f32.mrf.mxu0
        %v5601 = vadd.f32 0.0, %v5600
        %5602 = vmatmul.f32.gmra.mxu0 %v5520
        %v5603 = vpop.f32.mrf.mxu0
        %v5604 = vadd.f32 0.0, %v5603
        %5605 = vmatmul.f32.gmra.mxu0 %v5522
        %v5606 = vpop.f32.mrf.mxu0
        %v5607 = vadd.f32 0.0, %v5606
        %5608 = vmatmul.f32.gmra.mxu0 %v5524
        %v5609 = vpop.f32.mrf.mxu0
        %v5610 = vadd.f32 0.0, %v5609
        %5611 = vmatmul.f32.gmra.mxu0 %v5526
        %v5612 = vpop.f32.mrf.mxu0
        %v5613 = vadd.f32 0.0, %v5612
        %5614 = vmatmul.f32.gmra.mxu0 %v5528
        %v5615 = vpop.f32.mrf.mxu0
        %v5616 = vadd.f32 0.0, %v5615
        %5617 = vmatmul.f32.gmra.mxu0 %v5530
        %v5618 = vpop.f32.mrf.mxu0
        %v5619 = vadd.f32 0.0, %v5618
        %5620 = vmatmul.f32.gmra.mxu0 %v5532
        %v5621 = vpop.f32.mrf.mxu0
        %v5622 = vadd.f32 0.0, %v5621
        %5623 = vmatmul.f32.gmra.mxu0 %v5534
        %v5624 = vpop.f32.mrf.mxu0
        %v5625 = vadd.f32 0.0, %v5624
        %5626 = vmatmul.f32.gmra.mxu0 %v5536
        %v5627 = vpop.f32.mrf.mxu0
        %v5628 = vadd.f32 0.0, %v5627
        %5629 = vmatmul.f32.gmra.mxu0 %v5538
        %v5630 = vpop.f32.mrf.mxu0
        %v5631 = vadd.f32 0.0, %v5630
        %5632 = vmatmul.f32.gmra.mxu0 %v5540
        %v5633 = vpop.f32.mrf.mxu0
        %v5634 = vadd.f32 0.0, %v5633
        %5635 = vmatmul.f32.gmra.mxu0 %v5542
        %v5636 = vpop.f32.mrf.mxu0
        %v5637 = vadd.f32 0.0, %v5636
        %5638 = vmatmul.f32.gmra.mxu0 %v5544
        %v5639 = vpop.f32.mrf.mxu0
        %v5640 = vadd.f32 0.0, %v5639
        %5641 = vmatmul.f32.gmra.mxu0 %v5546
        %v5642 = vpop.f32.mrf.mxu0
        %v5643 = vadd.f32 0.0, %v5642
        %5644 = vdwg.mxu0
        %v5645 = vmul.f32 %v5598, 0.35355338
        %v5646 = vmul.f32 %v5601, 0.35355338
        %v5647 = vmul.f32 %v5604, 0.35355338
        %v5648 = vmul.f32 %v5607, 0.35355338
        %v5649 = vmul.f32 %v5610, 0.35355338
        %v5650 = vmul.f32 %v5613, 0.35355338
        %v5651 = vmul.f32 %v5616, 0.35355338
        %v5652 = vmul.f32 %v5619, 0.35355338
        %v5653 = vmul.f32 %v5622, 0.35355338
        %v5654 = vmul.f32 %v5625, 0.35355338
        %v5655 = vmul.f32 %v5628, 0.35355338
        %v5656 = vmul.f32 %v5631, 0.35355338
        %v5657 = vmul.f32 %v5634, 0.35355338
        %v5658 = vmul.f32 %v5637, 0.35355338
        %v5659 = vmul.f32 %v5640, 0.35355338
        %v5660 = vmul.f32 %v5643, 0.35355338
        %v5661 = vsel %vm3590, %v5645, -1e+09
        %v5662 = vsel %vm3590, %v5646, -1e+09
        %v5663 = vsel %vm3590, %v5647, -1e+09
        %v5664 = vsel %vm3590, %v5648, -1e+09
        %v5665 = vsel %vm3590, %v5649, -1e+09
        %v5666 = vsel %vm3590, %v5650, -1e+09
        %v5667 = vsel %vm3590, %v5651, -1e+09
        %v5668 = vsel %vm3590, %v5652, -1e+09
        %v5669 = vsel %vm3590, %v5653, -1e+09
        %v5670 = vsel %vm3590, %v5654, -1e+09
        %v5671 = vsel %vm3590, %v5655, -1e+09
        %v5672 = vsel %vm3590, %v5656, -1e+09
        %v5673 = vsel %vm3590, %v5657, -1e+09
        %v5674 = vsel %vm3590, %v5658, -1e+09
        %v5675 = vsel %vm3590, %v5659, -1e+09
        %v5676 = vsel %vm3590, %v5660, -1e+09
        %5677 = vmax.xlane.f32.xlu0 %v5661
        %v5678 = vpop.xlane.xlu0 %5677
        %5679 = vmax.xlane.f32.xlu0 %v5662
        %v5680 = vpop.xlane.xlu0 %5679
        %5681 = vmax.xlane.f32.xlu0 %v5663
        %v5682 = vpop.xlane.xlu0 %5681
        %5683 = vmax.xlane.f32.xlu0 %v5664
        %v5684 = vpop.xlane.xlu0 %5683
        %5685 = vmax.xlane.f32.xlu0 %v5665
        %v5686 = vpop.xlane.xlu0 %5685
        %5687 = vmax.xlane.f32.xlu0 %v5666
        %v5688 = vpop.xlane.xlu0 %5687
        %5689 = vmax.xlane.f32.xlu0 %v5667
        %v5690 = vpop.xlane.xlu0 %5689
        %5691 = vmax.xlane.f32.xlu0 %v5668
        %v5692 = vpop.xlane.xlu0 %5691
        %5693 = vmax.xlane.f32.xlu0 %v5669
        %v5694 = vpop.xlane.xlu0 %5693
        %5695 = vmax.xlane.f32.xlu0 %v5670
        %v5696 = vpop.xlane.xlu0 %5695
        %5697 = vmax.xlane.f32.xlu0 %v5671
        %v5698 = vpop.xlane.xlu0 %5697
        %5699 = vmax.xlane.f32.xlu0 %v5672
        %v5700 = vpop.xlane.xlu0 %5699
        %5701 = vmax.xlane.f32.xlu0 %v5673
        %v5702 = vpop.xlane.xlu0 %5701
        %5703 = vmax.xlane.f32.xlu0 %v5674
        %v5704 = vpop.xlane.xlu0 %5703
        %5705 = vmax.xlane.f32.xlu0 %v5675
        %v5706 = vpop.xlane.xlu0 %5705
        %5707 = vmax.xlane.f32.xlu0 %v5676
        %v5708 = vpop.xlane.xlu0 %5707
        %v5709 = vsub.f32 %v5661, %v5678
        %v5710 = vsub.f32 %v5662, %v5680
        %v5711 = vsub.f32 %v5663, %v5682
        %v5712 = vsub.f32 %v5664, %v5684
        %v5713 = vsub.f32 %v5665, %v5686
        %v5714 = vsub.f32 %v5666, %v5688
        %v5715 = vsub.f32 %v5667, %v5690
        %v5716 = vsub.f32 %v5668, %v5692
        %v5717 = vsub.f32 %v5669, %v5694
        %v5718 = vsub.f32 %v5670, %v5696
        %v5719 = vsub.f32 %v5671, %v5698
        %v5720 = vsub.f32 %v5672, %v5700
        %v5721 = vsub.f32 %v5673, %v5702
        %v5722 = vsub.f32 %v5674, %v5704
        %v5723 = vsub.f32 %v5675, %v5706
        %v5724 = vsub.f32 %v5676, %v5708
        %v5725 = vmul.f32 %v5709, 1.442695
        %v5726 = vpow.pop %v5725
        %v5727 = vmul.f32 %v5710, 1.442695
        %v5728 = vpow.pop %v5727
        %v5729 = vmul.f32 %v5711, 1.442695
        %v5730 = vpow.pop %v5729
        %v5731 = vmul.f32 %v5712, 1.442695
        %v5732 = vpow.pop %v5731
        %v5733 = vmul.f32 %v5713, 1.442695
        %v5734 = vpow.pop %v5733
        %v5735 = vmul.f32 %v5714, 1.442695
        %v5736 = vpow.pop %v5735
        %v5737 = vmul.f32 %v5715, 1.442695
        %v5738 = vpow.pop %v5737
        %v5739 = vmul.f32 %v5716, 1.442695
        %v5740 = vpow.pop %v5739
        %v5741 = vmul.f32 %v5717, 1.442695
        %v5742 = vpow.pop %v5741
        %v5743 = vmul.f32 %v5718, 1.442695
        %v5744 = vpow.pop %v5743
        %v5745 = vmul.f32 %v5719, 1.442695
        %v5746 = vpow.pop %v5745
        %v5747 = vmul.f32 %v5720, 1.442695
        %v5748 = vpow.pop %v5747
        %v5749 = vmul.f32 %v5721, 1.442695
        %v5750 = vpow.pop %v5749
        %v5751 = vmul.f32 %v5722, 1.442695
        %v5752 = vpow.pop %v5751
        %v5753 = vmul.f32 %v5723, 1.442695
        %v5754 = vpow.pop %v5753
        %v5755 = vmul.f32 %v5724, 1.442695
        %v5756 = vpow.pop %v5755
        %5757 = vadd.xlane.f32.xlu0 %v5726
        %v5758 = vpop.xlane.xlu0 %5757
        %5759 = vadd.xlane.f32.xlu0 %v5728
        %v5760 = vpop.xlane.xlu0 %5759
        %5761 = vadd.xlane.f32.xlu0 %v5730
        %v5762 = vpop.xlane.xlu0 %5761
        %5763 = vadd.xlane.f32.xlu0 %v5732
        %v5764 = vpop.xlane.xlu0 %5763
        %5765 = vadd.xlane.f32.xlu0 %v5734
        %v5766 = vpop.xlane.xlu0 %5765
        %5767 = vadd.xlane.f32.xlu0 %v5736
        %v5768 = vpop.xlane.xlu0 %5767
        %5769 = vadd.xlane.f32.xlu0 %v5738
        %v5770 = vpop.xlane.xlu0 %5769
        %5771 = vadd.xlane.f32.xlu0 %v5740
        %v5772 = vpop.xlane.xlu0 %5771
        %5773 = vadd.xlane.f32.xlu0 %v5742
        %v5774 = vpop.xlane.xlu0 %5773
        %5775 = vadd.xlane.f32.xlu0 %v5744
        %v5776 = vpop.xlane.xlu0 %5775
        %5777 = vadd.xlane.f32.xlu0 %v5746
        %v5778 = vpop.xlane.xlu0 %5777
        %5779 = vadd.xlane.f32.xlu0 %v5748
        %v5780 = vpop.xlane.xlu0 %5779
        %5781 = vadd.xlane.f32.xlu0 %v5750
        %v5782 = vpop.xlane.xlu0 %5781
        %5783 = vadd.xlane.f32.xlu0 %v5752
        %v5784 = vpop.xlane.xlu0 %5783
        %5785 = vadd.xlane.f32.xlu0 %v5754
        %v5786 = vpop.xlane.xlu0 %5785
        %5787 = vadd.xlane.f32.xlu0 %v5756
        %v5788 = vpop.xlane.xlu0 %5787
        %v5789 = vrcp.pop %v5758
        %v5790 = vmul.f32 %v5758, %v5789
        %v5791 = vsub.f32 1.0, %v5790
        %v5792 = vmul.f32 %v5789, %v5791
        %v5793 = vadd.f32 %v5789, %v5792
        %vm5794 = vweird.f32 %v5758
        %vm5795 = vweird.f32 %v5789
        %vm5796 = vmor %vm5794, %vm5795
        %v5797 = vsel %vm5796, %v5789, %v5793
        %v5798 = vand.u32 2147483647, %v5758
        %vm5799 = vcmp.eq.f32.partialorder %v5798, 8.507059e+37
        %v5800 = vand.u32 %v5758, 2147483648
        %v5801 = vor.u32 1.1754944e-38, %v5800
        %v5802 = vsel %vm5799, %v5801, %v5797
        %v5803 = vmul.f32 %v5726, %v5802
        %v5804 = vrcp.pop %v5760
        %v5805 = vmul.f32 %v5760, %v5804
        %v5806 = vsub.f32 1.0, %v5805
        %v5807 = vmul.f32 %v5804, %v5806
        %v5808 = vadd.f32 %v5804, %v5807
        %vm5809 = vweird.f32 %v5760
        %vm5810 = vweird.f32 %v5804
        %vm5811 = vmor %vm5809, %vm5810
        %v5812 = vsel %vm5811, %v5804, %v5808
        %v5813 = vand.u32 2147483647, %v5760
        %vm5814 = vcmp.eq.f32.partialorder %v5813, 8.507059e+37
        %v5815 = vand.u32 %v5760, 2147483648
        %v5816 = vor.u32 1.1754944e-38, %v5815
        %v5817 = vsel %vm5814, %v5816, %v5812
        %v5818 = vmul.f32 %v5728, %v5817
        %v5819 = vrcp.pop %v5762
        %v5820 = vmul.f32 %v5762, %v5819
        %v5821 = vsub.f32 1.0, %v5820
        %v5822 = vmul.f32 %v5819, %v5821
        %v5823 = vadd.f32 %v5819, %v5822
        %vm5824 = vweird.f32 %v5762
        %vm5825 = vweird.f32 %v5819
        %vm5826 = vmor %vm5824, %vm5825
        %v5827 = vsel %vm5826, %v5819, %v5823
        %v5828 = vand.u32 2147483647, %v5762
        %vm5829 = vcmp.eq.f32.partialorder %v5828, 8.507059e+37
        %v5830 = vand.u32 %v5762, 2147483648
        %v5831 = vor.u32 1.1754944e-38, %v5830
        %v5832 = vsel %vm5829, %v5831, %v5827
        %v5833 = vmul.f32 %v5730, %v5832
        %v5834 = vrcp.pop %v5764
        %v5835 = vmul.f32 %v5764, %v5834
        %v5836 = vsub.f32 1.0, %v5835
        %v5837 = vmul.f32 %v5834, %v5836
        %v5838 = vadd.f32 %v5834, %v5837
        %vm5839 = vweird.f32 %v5764
        %vm5840 = vweird.f32 %v5834
        %vm5841 = vmor %vm5839, %vm5840
        %v5842 = vsel %vm5841, %v5834, %v5838
        %v5843 = vand.u32 2147483647, %v5764
        %vm5844 = vcmp.eq.f32.partialorder %v5843, 8.507059e+37
        %v5845 = vand.u32 %v5764, 2147483648
        %v5846 = vor.u32 1.1754944e-38, %v5845
        %v5847 = vsel %vm5844, %v5846, %v5842
        %v5848 = vmul.f32 %v5732, %v5847
        %v5849 = vrcp.pop %v5766
        %v5850 = vmul.f32 %v5766, %v5849
        %v5851 = vsub.f32 1.0, %v5850
        %v5852 = vmul.f32 %v5849, %v5851
        %v5853 = vadd.f32 %v5849, %v5852
        %vm5854 = vweird.f32 %v5766
        %vm5855 = vweird.f32 %v5849
        %vm5856 = vmor %vm5854, %vm5855
        %v5857 = vsel %vm5856, %v5849, %v5853
        %v5858 = vand.u32 2147483647, %v5766
        %vm5859 = vcmp.eq.f32.partialorder %v5858, 8.507059e+37
        %v5860 = vand.u32 %v5766, 2147483648
        %v5861 = vor.u32 1.1754944e-38, %v5860
        %v5862 = vsel %vm5859, %v5861, %v5857
        %v5863 = vmul.f32 %v5734, %v5862
        %v5864 = vrcp.pop %v5768
        %v5865 = vmul.f32 %v5768, %v5864
        %v5866 = vsub.f32 1.0, %v5865
        %v5867 = vmul.f32 %v5864, %v5866
        %v5868 = vadd.f32 %v5864, %v5867
        %vm5869 = vweird.f32 %v5768
        %vm5870 = vweird.f32 %v5864
        %vm5871 = vmor %vm5869, %vm5870
        %v5872 = vsel %vm5871, %v5864, %v5868
        %v5873 = vand.u32 2147483647, %v5768
        %vm5874 = vcmp.eq.f32.partialorder %v5873, 8.507059e+37
        %v5875 = vand.u32 %v5768, 2147483648
        %v5876 = vor.u32 1.1754944e-38, %v5875
        %v5877 = vsel %vm5874, %v5876, %v5872
        %v5878 = vmul.f32 %v5736, %v5877
        %v5879 = vrcp.pop %v5770
        %v5880 = vmul.f32 %v5770, %v5879
        %v5881 = vsub.f32 1.0, %v5880
        %v5882 = vmul.f32 %v5879, %v5881
        %v5883 = vadd.f32 %v5879, %v5882
        %vm5884 = vweird.f32 %v5770
        %vm5885 = vweird.f32 %v5879
        %vm5886 = vmor %vm5884, %vm5885
        %v5887 = vsel %vm5886, %v5879, %v5883
        %v5888 = vand.u32 2147483647, %v5770
        %vm5889 = vcmp.eq.f32.partialorder %v5888, 8.507059e+37
        %v5890 = vand.u32 %v5770, 2147483648
        %v5891 = vor.u32 1.1754944e-38, %v5890
        %v5892 = vsel %vm5889, %v5891, %v5887
        %v5893 = vmul.f32 %v5738, %v5892
        %v5894 = vrcp.pop %v5772
        %v5895 = vmul.f32 %v5772, %v5894
        %v5896 = vsub.f32 1.0, %v5895
        %v5897 = vmul.f32 %v5894, %v5896
        %v5898 = vadd.f32 %v5894, %v5897
        %vm5899 = vweird.f32 %v5772
        %vm5900 = vweird.f32 %v5894
        %vm5901 = vmor %vm5899, %vm5900
        %v5902 = vsel %vm5901, %v5894, %v5898
        %v5903 = vand.u32 2147483647, %v5772
        %vm5904 = vcmp.eq.f32.partialorder %v5903, 8.507059e+37
        %v5905 = vand.u32 %v5772, 2147483648
        %v5906 = vor.u32 1.1754944e-38, %v5905
        %v5907 = vsel %vm5904, %v5906, %v5902
        %v5908 = vmul.f32 %v5740, %v5907
        %v5909 = vrcp.pop %v5774
        %v5910 = vmul.f32 %v5774, %v5909
        %v5911 = vsub.f32 1.0, %v5910
        %v5912 = vmul.f32 %v5909, %v5911
        %v5913 = vadd.f32 %v5909, %v5912
        %vm5914 = vweird.f32 %v5774
        %vm5915 = vweird.f32 %v5909
        %vm5916 = vmor %vm5914, %vm5915
        %v5917 = vsel %vm5916, %v5909, %v5913
        %v5918 = vand.u32 2147483647, %v5774
        %vm5919 = vcmp.eq.f32.partialorder %v5918, 8.507059e+37
        %v5920 = vand.u32 %v5774, 2147483648
        %v5921 = vor.u32 1.1754944e-38, %v5920
        %v5922 = vsel %vm5919, %v5921, %v5917
        %v5923 = vmul.f32 %v5742, %v5922
        %v5924 = vrcp.pop %v5776
        %v5925 = vmul.f32 %v5776, %v5924
        %v5926 = vsub.f32 1.0, %v5925
        %v5927 = vmul.f32 %v5924, %v5926
        %v5928 = vadd.f32 %v5924, %v5927
        %vm5929 = vweird.f32 %v5776
        %vm5930 = vweird.f32 %v5924
        %vm5931 = vmor %vm5929, %vm5930
        %v5932 = vsel %vm5931, %v5924, %v5928
        %v5933 = vand.u32 2147483647, %v5776
        %vm5934 = vcmp.eq.f32.partialorder %v5933, 8.507059e+37
        %v5935 = vand.u32 %v5776, 2147483648
        %v5936 = vor.u32 1.1754944e-38, %v5935
        %v5937 = vsel %vm5934, %v5936, %v5932
        %v5938 = vmul.f32 %v5744, %v5937
        %v5939 = vrcp.pop %v5778
        %v5940 = vmul.f32 %v5778, %v5939
        %v5941 = vsub.f32 1.0, %v5940
        %v5942 = vmul.f32 %v5939, %v5941
        %v5943 = vadd.f32 %v5939, %v5942
        %vm5944 = vweird.f32 %v5778
        %vm5945 = vweird.f32 %v5939
        %vm5946 = vmor %vm5944, %vm5945
        %v5947 = vsel %vm5946, %v5939, %v5943
        %v5948 = vand.u32 2147483647, %v5778
        %vm5949 = vcmp.eq.f32.partialorder %v5948, 8.507059e+37
        %v5950 = vand.u32 %v5778, 2147483648
        %v5951 = vor.u32 1.1754944e-38, %v5950
        %v5952 = vsel %vm5949, %v5951, %v5947
        %v5953 = vmul.f32 %v5746, %v5952
        %v5954 = vrcp.pop %v5780
        %v5955 = vmul.f32 %v5780, %v5954
        %v5956 = vsub.f32 1.0, %v5955
        %v5957 = vmul.f32 %v5954, %v5956
        %v5958 = vadd.f32 %v5954, %v5957
        %vm5959 = vweird.f32 %v5780
        %vm5960 = vweird.f32 %v5954
        %vm5961 = vmor %vm5959, %vm5960
        %v5962 = vsel %vm5961, %v5954, %v5958
        %v5963 = vand.u32 2147483647, %v5780
        %vm5964 = vcmp.eq.f32.partialorder %v5963, 8.507059e+37
        %v5965 = vand.u32 %v5780, 2147483648
        %v5966 = vor.u32 1.1754944e-38, %v5965
        %v5967 = vsel %vm5964, %v5966, %v5962
        %v5968 = vmul.f32 %v5748, %v5967
        %v5969 = vrcp.pop %v5782
        %v5970 = vmul.f32 %v5782, %v5969
        %v5971 = vsub.f32 1.0, %v5970
        %v5972 = vmul.f32 %v5969, %v5971
        %v5973 = vadd.f32 %v5969, %v5972
        %vm5974 = vweird.f32 %v5782
        %vm5975 = vweird.f32 %v5969
        %vm5976 = vmor %vm5974, %vm5975
        %v5977 = vsel %vm5976, %v5969, %v5973
        %v5978 = vand.u32 2147483647, %v5782
        %vm5979 = vcmp.eq.f32.partialorder %v5978, 8.507059e+37
        %v5980 = vand.u32 %v5782, 2147483648
        %v5981 = vor.u32 1.1754944e-38, %v5980
        %v5982 = vsel %vm5979, %v5981, %v5977
        %v5983 = vmul.f32 %v5750, %v5982
        %v5984 = vrcp.pop %v5784
        %v5985 = vmul.f32 %v5784, %v5984
        %v5986 = vsub.f32 1.0, %v5985
        %v5987 = vmul.f32 %v5984, %v5986
        %v5988 = vadd.f32 %v5984, %v5987
        %vm5989 = vweird.f32 %v5784
        %vm5990 = vweird.f32 %v5984
        %vm5991 = vmor %vm5989, %vm5990
        %v5992 = vsel %vm5991, %v5984, %v5988
        %v5993 = vand.u32 2147483647, %v5784
        %vm5994 = vcmp.eq.f32.partialorder %v5993, 8.507059e+37
        %v5995 = vand.u32 %v5784, 2147483648
        %v5996 = vor.u32 1.1754944e-38, %v5995
        %v5997 = vsel %vm5994, %v5996, %v5992
        %v5998 = vmul.f32 %v5752, %v5997
        %v5999 = vrcp.pop %v5786
        %v6000 = vmul.f32 %v5786, %v5999
        %v6001 = vsub.f32 1.0, %v6000
        %v6002 = vmul.f32 %v5999, %v6001
        %v6003 = vadd.f32 %v5999, %v6002
        %vm6004 = vweird.f32 %v5786
        %vm6005 = vweird.f32 %v5999
        %vm6006 = vmor %vm6004, %vm6005
        %v6007 = vsel %vm6006, %v5999, %v6003
        %v6008 = vand.u32 2147483647, %v5786
        %vm6009 = vcmp.eq.f32.partialorder %v6008, 8.507059e+37
        %v6010 = vand.u32 %v5786, 2147483648
        %v6011 = vor.u32 1.1754944e-38, %v6010
        %v6012 = vsel %vm6009, %v6011, %v6007
        %v6013 = vmul.f32 %v5754, %v6012
        %v6014 = vrcp.pop %v5788
        %v6015 = vmul.f32 %v5788, %v6014
        %v6016 = vsub.f32 1.0, %v6015
        %v6017 = vmul.f32 %v6014, %v6016
        %v6018 = vadd.f32 %v6014, %v6017
        %vm6019 = vweird.f32 %v5788
        %vm6020 = vweird.f32 %v6014
        %vm6021 = vmor %vm6019, %vm6020
        %v6022 = vsel %vm6021, %v6014, %v6018
        %v6023 = vand.u32 2147483647, %v5788
        %vm6024 = vcmp.eq.f32.partialorder %v6023, 8.507059e+37
        %v6025 = vand.u32 %v5788, 2147483648
        %v6026 = vor.u32 1.1754944e-38, %v6025
        %v6027 = vsel %vm6024, %v6026, %v6022
        %v6028 = vmul.f32 %v5756, %v6027
        %6029 = vrot.lane.b32.xlu0 %v3365, 72
        %v6030 = vpop.permute.xlu0 %6029
        %6031 = vrot.lane.b32.xlu0 %v3368, 72
        %v6032 = vpop.permute.xlu0 %6031
        %6033 = vrot.lane.b32.xlu0 %v3371, 72
        %v6034 = vpop.permute.xlu0 %6033
        %6035 = vrot.lane.b32.xlu0 %v3374, 72
        %v6036 = vpop.permute.xlu0 %6035
        %6037 = vrot.lane.b32.xlu0 %v3377, 72
        %v6038 = vpop.permute.xlu0 %6037
        %6039 = vrot.lane.b32.xlu0 %v3380, 72
        %v6040 = vpop.permute.xlu0 %6039
        %6041 = vrot.lane.b32.xlu0 %v3383, 72
        %v6042 = vpop.permute.xlu0 %6041
        %6043 = vrot.lane.b32.xlu0 %v3386, 72
        %v6044 = vpop.permute.xlu0 %6043
        %6045 = vrot.lane.b32.xlu0 %v3389, 72
        %v6046 = vpop.permute.xlu0 %6045
        %6047 = vrot.lane.b32.xlu0 %v3392, 72
        %v6048 = vpop.permute.xlu0 %6047
        %6049 = vrot.lane.b32.xlu0 %v3395, 72
        %v6050 = vpop.permute.xlu0 %6049
        %6051 = vrot.lane.b32.xlu0 %v3398, 72
        %v6052 = vpop.permute.xlu0 %6051
        %6053 = vrot.lane.b32.xlu0 %v3401, 72
        %v6054 = vpop.permute.xlu0 %6053
        %6055 = vrot.lane.b32.xlu0 %v3404, 72
        %v6056 = vpop.permute.xlu0 %6055
        %6057 = vrot.lane.b32.xlu0 %v3407, 72
        %v6058 = vpop.permute.xlu0 %6057
        %6059 = vrot.lane.b32.xlu0 %v3410, 72
        %v6060 = vpop.permute.xlu0 %6059
        %6077 = vmatpush.msra.mxu0 %v6060
        %6078 = vmatpush.msra.mxu0 %v6058
        %6079 = vmatpush.msra.mxu0 %v6056
        %6080 = vmatpush.msra.mxu0 %v6054
        %6081 = vmatpush.msra.mxu0 %v6052
        %6082 = vmatpush.msra.mxu0 %v6050
        %6083 = vmatpush.msra.mxu0 %v6048
        %6084 = vmatpush.msra.mxu0 %v6046
        %6085 = vmatpush.msra.mxu0 %v6044
        %6086 = vmatpush.msra.mxu0 %v6042
        %6087 = vmatpush.msra.mxu0 %v6040
        %6088 = vmatpush.msra.mxu0 %v6038
        %6089 = vmatpush.msra.mxu0 %v6036
        %6090 = vmatpush.msra.mxu0 %v6034
        %6091 = vmatpush.msra.mxu0 %v6032
        %6092 = vmatpush.msra.mxu0 %v6030
        %6093 = vmatmul.f32.gmra.mxu0 %v5803
        %v6094 = vpop.f32.mrf.mxu0
        %v6095 = vadd.f32 0.0, %v6094
        %6096 = vmatmul.f32.gmra.mxu0 %v5818
        %v6097 = vpop.f32.mrf.mxu0
        %v6098 = vadd.f32 0.0, %v6097
        %6099 = vmatmul.f32.gmra.mxu0 %v5833
        %v6100 = vpop.f32.mrf.mxu0
        %v6101 = vadd.f32 0.0, %v6100
        %6102 = vmatmul.f32.gmra.mxu0 %v5848
        %v6103 = vpop.f32.mrf.mxu0
        %v6104 = vadd.f32 0.0, %v6103
        %6105 = vmatmul.f32.gmra.mxu0 %v5863
        %v6106 = vpop.f32.mrf.mxu0
        %v6107 = vadd.f32 0.0, %v6106
        %6108 = vmatmul.f32.gmra.mxu0 %v5878
        %v6109 = vpop.f32.mrf.mxu0
        %v6110 = vadd.f32 0.0, %v6109
        %6111 = vmatmul.f32.gmra.mxu0 %v5893
        %v6112 = vpop.f32.mrf.mxu0
        %v6113 = vadd.f32 0.0, %v6112
        %6114 = vmatmul.f32.gmra.mxu0 %v5908
        %v6115 = vpop.f32.mrf.mxu0
        %v6116 = vadd.f32 0.0, %v6115
        %6117 = vmatmul.f32.gmra.mxu0 %v5923
        %v6118 = vpop.f32.mrf.mxu0
        %v6119 = vadd.f32 0.0, %v6118
        %6120 = vmatmul.f32.gmra.mxu0 %v5938
        %v6121 = vpop.f32.mrf.mxu0
        %v6122 = vadd.f32 0.0, %v6121
        %6123 = vmatmul.f32.gmra.mxu0 %v5953
        %v6124 = vpop.f32.mrf.mxu0
        %v6125 = vadd.f32 0.0, %v6124
        %6126 = vmatmul.f32.gmra.mxu0 %v5968
        %v6127 = vpop.f32.mrf.mxu0
        %v6128 = vadd.f32 0.0, %v6127
        %6129 = vmatmul.f32.gmra.mxu0 %v5983
        %v6130 = vpop.f32.mrf.mxu0
        %v6131 = vadd.f32 0.0, %v6130
        %6132 = vmatmul.f32.gmra.mxu0 %v5998
        %v6133 = vpop.f32.mrf.mxu0
        %v6134 = vadd.f32 0.0, %v6133
        %6135 = vmatmul.f32.gmra.mxu0 %v6013
        %v6136 = vpop.f32.mrf.mxu0
        %v6137 = vadd.f32 0.0, %v6136
        %6138 = vmatmul.f32.gmra.mxu0 %v6028
        %v6139 = vpop.f32.mrf.mxu0
        %v6140 = vadd.f32 0.0, %v6139
        %6141 = vdwg.mxu0
        %6158 = vrot.lane.b32.xlu0 %v4715, 8
        %v6159 = vpop.permute.xlu0 %6158
        %6160 = vrot.lane.b32.xlu0 %v4718, 8
        %v6161 = vpop.permute.xlu0 %6160
        %6162 = vrot.lane.b32.xlu0 %v4721, 8
        %v6163 = vpop.permute.xlu0 %6162
        %6164 = vrot.lane.b32.xlu0 %v4724, 8
        %v6165 = vpop.permute.xlu0 %6164
        %6166 = vrot.lane.b32.xlu0 %v4727, 8
        %v6167 = vpop.permute.xlu0 %6166
        %6168 = vrot.lane.b32.xlu0 %v4730, 8
        %v6169 = vpop.permute.xlu0 %6168
        %6170 = vrot.lane.b32.xlu0 %v4733, 8
        %v6171 = vpop.permute.xlu0 %6170
        %6172 = vrot.lane.b32.xlu0 %v4736, 8
        %v6173 = vpop.permute.xlu0 %6172
        %6174 = vrot.lane.b32.xlu0 %v4739, 8
        %v6175 = vpop.permute.xlu0 %6174
        %6176 = vrot.lane.b32.xlu0 %v4742, 8
        %v6177 = vpop.permute.xlu0 %6176
        %6178 = vrot.lane.b32.xlu0 %v4745, 8
        %v6179 = vpop.permute.xlu0 %6178
        %6180 = vrot.lane.b32.xlu0 %v4748, 8
        %v6181 = vpop.permute.xlu0 %6180
        %6182 = vrot.lane.b32.xlu0 %v4751, 8
        %v6183 = vpop.permute.xlu0 %6182
        %6184 = vrot.lane.b32.xlu0 %v4754, 8
        %v6185 = vpop.permute.xlu0 %6184
        %6186 = vrot.lane.b32.xlu0 %v4757, 8
        %v6187 = vpop.permute.xlu0 %6186
        %6188 = vrot.lane.b32.xlu0 %v4760, 8
        %v6189 = vpop.permute.xlu0 %6188
        %6222 = vrot.lane.b32.xlu0 %v5405, 16
        %v6223 = vpop.permute.xlu0 %6222
        %6224 = vrot.lane.b32.xlu0 %v5408, 16
        %v6225 = vpop.permute.xlu0 %6224
        %6226 = vrot.lane.b32.xlu0 %v5411, 16
        %v6227 = vpop.permute.xlu0 %6226
        %6228 = vrot.lane.b32.xlu0 %v5414, 16
        %v6229 = vpop.permute.xlu0 %6228
        %6230 = vrot.lane.b32.xlu0 %v5417, 16
        %v6231 = vpop.permute.xlu0 %6230
        %6232 = vrot.lane.b32.xlu0 %v5420, 16
        %v6233 = vpop.permute.xlu0 %6232
        %6234 = vrot.lane.b32.xlu0 %v5423, 16
        %v6235 = vpop.permute.xlu0 %6234
        %6236 = vrot.lane.b32.xlu0 %v5426, 16
        %v6237 = vpop.permute.xlu0 %6236
        %6238 = vrot.lane.b32.xlu0 %v5429, 16
        %v6239 = vpop.permute.xlu0 %6238
        %6240 = vrot.lane.b32.xlu0 %v5432, 16
        %v6241 = vpop.permute.xlu0 %6240
        %6242 = vrot.lane.b32.xlu0 %v5435, 16
        %v6243 = vpop.permute.xlu0 %6242
        %6244 = vrot.lane.b32.xlu0 %v5438, 16
        %v6245 = vpop.permute.xlu0 %6244
        %6246 = vrot.lane.b32.xlu0 %v5441, 16
        %v6247 = vpop.permute.xlu0 %6246
        %6248 = vrot.lane.b32.xlu0 %v5444, 16
        %v6249 = vpop.permute.xlu0 %6248
        %6250 = vrot.lane.b32.xlu0 %v5447, 16
        %v6251 = vpop.permute.xlu0 %6250
        %6252 = vrot.lane.b32.xlu0 %v5450, 16
        %v6253 = vpop.permute.xlu0 %6252
        %6286 = vrot.lane.b32.xlu0 %v6095, 24
        %v6287 = vpop.permute.xlu0 %6286
        %6288 = vrot.lane.b32.xlu0 %v6098, 24
        %v6289 = vpop.permute.xlu0 %6288
        %6290 = vrot.lane.b32.xlu0 %v6101, 24
        %v6291 = vpop.permute.xlu0 %6290
        %6292 = vrot.lane.b32.xlu0 %v6104, 24
        %v6293 = vpop.permute.xlu0 %6292
        %6294 = vrot.lane.b32.xlu0 %v6107, 24
        %v6295 = vpop.permute.xlu0 %6294
        %6296 = vrot.lane.b32.xlu0 %v6110, 24
        %v6297 = vpop.permute.xlu0 %6296
        %6298 = vrot.lane.b32.xlu0 %v6113, 24
        %v6299 = vpop.permute.xlu0 %6298
        %6300 = vrot.lane.b32.xlu0 %v6116, 24
        %v6301 = vpop.permute.xlu0 %6300
        %6302 = vrot.lane.b32.xlu0 %v6119, 24
        %v6303 = vpop.permute.xlu0 %6302
        %6304 = vrot.lane.b32.xlu0 %v6122, 24
        %v6305 = vpop.permute.xlu0 %6304
        %6306 = vrot.lane.b32.xlu0 %v6125, 24
        %v6307 = vpop.permute.xlu0 %6306
        %6308 = vrot.lane.b32.xlu0 %v6128, 24
        %v6309 = vpop.permute.xlu0 %6308
        %6310 = vrot.lane.b32.xlu0 %v6131, 24
        %v6311 = vpop.permute.xlu0 %6310
        %6312 = vrot.lane.b32.xlu0 %v6134, 24
        %v6313 = vpop.permute.xlu0 %6312
        %6314 = vrot.lane.b32.xlu0 %v6137, 24
        %v6315 = vpop.permute.xlu0 %6314
        %6316 = vrot.lane.b32.xlu0 %v6140, 24
        %v6317 = vpop.permute.xlu0 %6316
        %v6334 = vsel %vm971, %v4025, %v6159
        %v6335 = vsel %vm971, %v4028, %v6161
        %v6336 = vsel %vm971, %v4031, %v6163
        %v6337 = vsel %vm971, %v4034, %v6165
        %v6338 = vsel %vm971, %v4037, %v6167
        %v6339 = vsel %vm971, %v4040, %v6169
        %v6340 = vsel %vm971, %v4043, %v6171
        %v6341 = vsel %vm971, %v4046, %v6173
        %v6342 = vsel %vm971, %v4049, %v6175
        %v6343 = vsel %vm971, %v4052, %v6177
        %v6344 = vsel %vm971, %v4055, %v6179
        %v6345 = vsel %vm971, %v4058, %v6181
        %v6346 = vsel %vm971, %v4061, %v6183
        %v6347 = vsel %vm971, %v4064, %v6185
        %v6348 = vsel %vm971, %v4067, %v6187
        %v6349 = vsel %vm971, %v4070, %v6189
        %vm6350 = vcmask 130048
        %v6351 = vsel %vm6350, %v6334, %v6223
        %v6352 = vsel %vm6350, %v6335, %v6225
        %v6353 = vsel %vm6350, %v6336, %v6227
        %v6354 = vsel %vm6350, %v6337, %v6229
        %v6355 = vsel %vm6350, %v6338, %v6231
        %v6356 = vsel %vm6350, %v6339, %v6233
        %v6357 = vsel %vm6350, %v6340, %v6235
        %v6358 = vsel %vm6350, %v6341, %v6237
        %v6359 = vsel %vm6350, %v6342, %v6239
        %v6360 = vsel %vm6350, %v6343, %v6241
        %v6361 = vsel %vm6350, %v6344, %v6243
        %v6362 = vsel %vm6350, %v6345, %v6245
        %v6363 = vsel %vm6350, %v6346, %v6247
        %v6364 = vsel %vm6350, %v6347, %v6249
        %v6365 = vsel %vm6350, %v6348, %v6251
        %v6366 = vsel %vm6350, %v6349, %v6253
        %vm6367 = vcmask 195584
        %v6368 = vsel %vm6367, %v6351, %v6287
        %v6369 = vsel %vm6367, %v6352, %v6289
        %v6370 = vsel %vm6367, %v6353, %v6291
        %v6371 = vsel %vm6367, %v6354, %v6293
        %v6372 = vsel %vm6367, %v6355, %v6295
        %v6373 = vsel %vm6367, %v6356, %v6297
        %v6374 = vsel %vm6367, %v6357, %v6299
        %v6375 = vsel %vm6367, %v6358, %v6301
        %v6376 = vsel %vm6367, %v6359, %v6303
        %v6377 = vsel %vm6367, %v6360, %v6305
        %v6378 = vsel %vm6367, %v6361, %v6307
        %v6379 = vsel %vm6367, %v6362, %v6309
        %v6380 = vsel %vm6367, %v6363, %v6311
        %v6381 = vsel %vm6367, %v6364, %v6313
        %v6382 = vsel %vm6367, %v6365, %v6315
        %v6383 = vsel %vm6367, %v6366, %v6317
        %v6385 = vperm.slane %v3208, 0
        %v6388 = vsel %vm3230, %v6368, 0
        %v6391 = vsel %vm3230, %v6369, 0
        %v6394 = vsel %vm3230, %v6370, 0
        %v6397 = vsel %vm3230, %v6371, 0
        %v6400 = vsel %vm3230, %v6372, 0
        %v6403 = vsel %vm3230, %v6373, 0
        %v6406 = vsel %vm3230, %v6374, 0
        %v6409 = vsel %vm3230, %v6375, 0
        %v6412 = vsel %vm3230, %v6376, 0
        %v6415 = vsel %vm3230, %v6377, 0
        %v6418 = vsel %vm3230, %v6378, 0
        %v6421 = vsel %vm3230, %v6379, 0
        %v6424 = vsel %vm3230, %v6380, 0
        %v6427 = vsel %vm3230, %v6381, 0
        %v6430 = vsel %vm3230, %v6382, 0
        %v6433 = vsel %vm3230, %v6383, 0
        %6435 = vmatpush.msra.mxu0 0.0
        %6436 = vmatpush.msra.mxu0 0.0
        %6437 = vmatpush.msra.mxu0 0.0
        %6438 = vmatpush.msra.mxu0 0.0
        %6439 = vmatpush.msra.mxu0 0.0
        %6440 = vmatpush.msra.mxu0 0.0
        %6441 = vmatpush.msra.mxu0 0.0
        %6442 = vmatpush.msra.mxu0 0.0
        %6443 = vmatpush.msra.mxu0 0.0
        %6444 = vmatpush.msra.mxu0 0.0
        %6445 = vmatpush.msra.mxu0 0.0
        %6446 = vmatpush.msra.mxu0 0.0
        %6447 = vmatpush.msra.mxu0 %v3207
        %6448 = vmatpush.msra.mxu0 %v3206
        %6449 = vmatpush.msra.mxu0 %v3205
        %6450 = vmatpush.msra.mxu0 %v3204
        %6451 = vmatmul.f32.gmra.mxu0 %v6388
        %v6452 = vpop.f32.mrf.mxu0
        %v6453 = vadd.f32 %v6385, %v6452
        %6454 = vmatmul.f32.gmra.mxu0 %v6391
        %v6455 = vpop.f32.mrf.mxu0
        %v6456 = vadd.f32 %v6385, %v6455
        %6457 = vmatmul.f32.gmra.mxu0 %v6394
        %v6458 = vpop.f32.mrf.mxu0
        %v6459 = vadd.f32 %v6385, %v6458
        %6460 = vmatmul.f32.gmra.mxu0 %v6397
        %v6461 = vpop.f32.mrf.mxu0
        %v6462 = vadd.f32 %v6385, %v6461
        %6463 = vmatmul.f32.gmra.mxu0 %v6400
        %v6464 = vpop.f32.mrf.mxu0
        %v6465 = vadd.f32 %v6385, %v6464
        %6466 = vmatmul.f32.gmra.mxu0 %v6403
        %v6467 = vpop.f32.mrf.mxu0
        %v6468 = vadd.f32 %v6385, %v6467
        %6469 = vmatmul.f32.gmra.mxu0 %v6406
        %v6470 = vpop.f32.mrf.mxu0
        %v6471 = vadd.f32 %v6385, %v6470
        %6472 = vmatmul.f32.gmra.mxu0 %v6409
        %v6473 = vpop.f32.mrf.mxu0
        %v6474 = vadd.f32 %v6385, %v6473
        %6475 = vmatmul.f32.gmra.mxu0 %v6412
        %v6476 = vpop.f32.mrf.mxu0
        %v6477 = vadd.f32 %v6385, %v6476
        %6478 = vmatmul.f32.gmra.mxu0 %v6415
        %v6479 = vpop.f32.mrf.mxu0
        %v6480 = vadd.f32 %v6385, %v6479
        %6481 = vmatmul.f32.gmra.mxu0 %v6418
        %v6482 = vpop.f32.mrf.mxu0
        %v6483 = vadd.f32 %v6385, %v6482
        %6484 = vmatmul.f32.gmra.mxu0 %v6421
        %v6485 = vpop.f32.mrf.mxu0
        %v6486 = vadd.f32 %v6385, %v6485
        %6487 = vmatmul.f32.gmra.mxu0 %v6424
        %v6488 = vpop.f32.mrf.mxu0
        %v6489 = vadd.f32 %v6385, %v6488
        %6490 = vmatmul.f32.gmra.mxu0 %v6427
        %v6491 = vpop.f32.mrf.mxu0
        %v6492 = vadd.f32 %v6385, %v6491
        %6493 = vmatmul.f32.gmra.mxu0 %v6430
        %v6494 = vpop.f32.mrf.mxu0
        %v6495 = vadd.f32 %v6385, %v6494
        %6496 = vmatmul.f32.gmra.mxu0 %v6433
        %v6497 = vpop.f32.mrf.mxu0
        %v6498 = vadd.f32 %v6385, %v6497
        %6499 = vdwg.mxu0
        %v6500 = vadd.f32 %v3175, %v6453
        %v6501 = vadd.f32 %v3176, %v6456
        %v6502 = vadd.f32 %v3177, %v6459
        %v6503 = vadd.f32 %v3178, %v6462
        %v6504 = vadd.f32 %v3179, %v6465
        %v6505 = vadd.f32 %v3180, %v6468
        %v6506 = vadd.f32 %v3181, %v6471
        %v6507 = vadd.f32 %v3182, %v6474
        %v6508 = vadd.f32 %v3183, %v6477
        %v6509 = vadd.f32 %v3184, %v6480
        %v6510 = vadd.f32 %v3185, %v6483
        %v6511 = vadd.f32 %v3186, %v6486
        %v6512 = vadd.f32 %v3187, %v6489
        %v6513 = vadd.f32 %v3188, %v6492
        %v6514 = vadd.f32 %v3189, %v6495
        %v6515 = vadd.f32 %v3190, %v6498
        %v6516 = vsel %vm3230, %v6500, 0.0
        %6517 = vadd.xlane.f32.xlu0 %v6516
        %v6518 = vpop.xlane.xlu0 %6517
        %v6519 = vsel %vm3230, %v6501, 0.0
        %6520 = vadd.xlane.f32.xlu0 %v6519
        %v6521 = vpop.xlane.xlu0 %6520
        %v6522 = vsel %vm3230, %v6502, 0.0
        %6523 = vadd.xlane.f32.xlu0 %v6522
        %v6524 = vpop.xlane.xlu0 %6523
        %v6525 = vsel %vm3230, %v6503, 0.0
        %6526 = vadd.xlane.f32.xlu0 %v6525
        %v6527 = vpop.xlane.xlu0 %6526
        %v6528 = vsel %vm3230, %v6504, 0.0
        %6529 = vadd.xlane.f32.xlu0 %v6528
        %v6530 = vpop.xlane.xlu0 %6529
        %v6531 = vsel %vm3230, %v6505, 0.0
        %6532 = vadd.xlane.f32.xlu0 %v6531
        %v6533 = vpop.xlane.xlu0 %6532
        %v6534 = vsel %vm3230, %v6506, 0.0
        %6535 = vadd.xlane.f32.xlu0 %v6534
        %v6536 = vpop.xlane.xlu0 %6535
        %v6537 = vsel %vm3230, %v6507, 0.0
        %6538 = vadd.xlane.f32.xlu0 %v6537
        %v6539 = vpop.xlane.xlu0 %6538
        %v6540 = vsel %vm3230, %v6508, 0.0
        %6541 = vadd.xlane.f32.xlu0 %v6540
        %v6542 = vpop.xlane.xlu0 %6541
        %v6543 = vsel %vm3230, %v6509, 0.0
        %6544 = vadd.xlane.f32.xlu0 %v6543
        %v6545 = vpop.xlane.xlu0 %6544
        %v6546 = vsel %vm3230, %v6510, 0.0
        %6547 = vadd.xlane.f32.xlu0 %v6546
        %v6548 = vpop.xlane.xlu0 %6547
        %v6549 = vsel %vm3230, %v6511, 0.0
        %6550 = vadd.xlane.f32.xlu0 %v6549
        %v6551 = vpop.xlane.xlu0 %6550
        %v6552 = vsel %vm3230, %v6512, 0.0
        %6553 = vadd.xlane.f32.xlu0 %v6552
        %v6554 = vpop.xlane.xlu0 %6553
        %v6555 = vsel %vm3230, %v6513, 0.0
        %6556 = vadd.xlane.f32.xlu0 %v6555
        %v6557 = vpop.xlane.xlu0 %6556
        %v6558 = vsel %vm3230, %v6514, 0.0
        %6559 = vadd.xlane.f32.xlu0 %v6558
        %v6560 = vpop.xlane.xlu0 %6559
        %v6561 = vsel %vm3230, %v6515, 0.0
        %6562 = vadd.xlane.f32.xlu0 %v6561
        %v6563 = vpop.xlane.xlu0 %6562
        %v6564 = vrcp.pop 32.0
        %v6565 = vmul.f32 32.0, %v6564
        %v6566 = vsub.f32 1.0, %v6565
        %v6567 = vmul.f32 %v6564, %v6566
        %v6568 = vadd.f32 %v6564, %v6567
        %vm6569 = vweird.f32 %v6564
        %v6570 = vsel %vm6569, %v6564, %v6568
        %v6571 = vmul.f32 %v6518, %v6570
        %v6572 = vmul.f32 %v6521, %v6570
        %v6573 = vmul.f32 %v6524, %v6570
        %v6574 = vmul.f32 %v6527, %v6570
        %v6575 = vmul.f32 %v6530, %v6570
        %v6576 = vmul.f32 %v6533, %v6570
        %v6577 = vmul.f32 %v6536, %v6570
        %v6578 = vmul.f32 %v6539, %v6570
        %v6579 = vmul.f32 %v6542, %v6570
        %v6580 = vmul.f32 %v6545, %v6570
        %v6581 = vmul.f32 %v6548, %v6570
        %v6582 = vmul.f32 %v6551, %v6570
        %v6583 = vmul.f32 %v6554, %v6570
        %v6584 = vmul.f32 %v6557, %v6570
        %v6585 = vmul.f32 %v6560, %v6570
        %v6586 = vmul.f32 %v6563, %v6570
        %v6587 = vsub.f32 %v6500, %v6571
        %v6588 = vsub.f32 %v6501, %v6572
        %v6589 = vsub.f32 %v6502, %v6573
        %v6590 = vsub.f32 %v6503, %v6574
        %v6591 = vsub.f32 %v6504, %v6575
        %v6592 = vsub.f32 %v6505, %v6576
        %v6593 = vsub.f32 %v6506, %v6577
        %v6594 = vsub.f32 %v6507, %v6578
        %v6595 = vsub.f32 %v6508, %v6579
        %v6596 = vsub.f32 %v6509, %v6580
        %v6597 = vsub.f32 %v6510, %v6581
        %v6598 = vsub.f32 %v6511, %v6582
        %v6599 = vsub.f32 %v6512, %v6583
        %v6600 = vsub.f32 %v6513, %v6584
        %v6601 = vsub.f32 %v6514, %v6585
        %v6602 = vsub.f32 %v6515, %v6586
        %v6603 = vmul.f32 %v6587, %v6587
        %v6604 = vmul.f32 %v6588, %v6588
        %v6605 = vmul.f32 %v6589, %v6589
        %v6606 = vmul.f32 %v6590, %v6590
        %v6607 = vmul.f32 %v6591, %v6591
        %v6608 = vmul.f32 %v6592, %v6592
        %v6609 = vmul.f32 %v6593, %v6593
        %v6610 = vmul.f32 %v6594, %v6594
        %v6611 = vmul.f32 %v6595, %v6595
        %v6612 = vmul.f32 %v6596, %v6596
        %v6613 = vmul.f32 %v6597, %v6597
        %v6614 = vmul.f32 %v6598, %v6598
        %v6615 = vmul.f32 %v6599, %v6599
        %v6616 = vmul.f32 %v6600, %v6600
        %v6617 = vmul.f32 %v6601, %v6601
        %v6618 = vmul.f32 %v6602, %v6602
        %v6619 = vsel %vm3230, %v6603, 0.0
        %6620 = vadd.xlane.f32.xlu0 %v6619
        %v6621 = vpop.xlane.xlu0 %6620
        %v6622 = vsel %vm3230, %v6604, 0.0
        %6623 = vadd.xlane.f32.xlu0 %v6622
        %v6624 = vpop.xlane.xlu0 %6623
        %v6625 = vsel %vm3230, %v6605, 0.0
        %6626 = vadd.xlane.f32.xlu0 %v6625
        %v6627 = vpop.xlane.xlu0 %6626
        %v6628 = vsel %vm3230, %v6606, 0.0
        %6629 = vadd.xlane.f32.xlu0 %v6628
        %v6630 = vpop.xlane.xlu0 %6629
        %v6631 = vsel %vm3230, %v6607, 0.0
        %6632 = vadd.xlane.f32.xlu0 %v6631
        %v6633 = vpop.xlane.xlu0 %6632
        %v6634 = vsel %vm3230, %v6608, 0.0
        %6635 = vadd.xlane.f32.xlu0 %v6634
        %v6636 = vpop.xlane.xlu0 %6635
        %v6637 = vsel %vm3230, %v6609, 0.0
        %6638 = vadd.xlane.f32.xlu0 %v6637
        %v6639 = vpop.xlane.xlu0 %6638
        %v6640 = vsel %vm3230, %v6610, 0.0
        %6641 = vadd.xlane.f32.xlu0 %v6640
        %v6642 = vpop.xlane.xlu0 %6641
        %v6643 = vsel %vm3230, %v6611, 0.0
        %6644 = vadd.xlane.f32.xlu0 %v6643
        %v6645 = vpop.xlane.xlu0 %6644
        %v6646 = vsel %vm3230, %v6612, 0.0
        %6647 = vadd.xlane.f32.xlu0 %v6646
        %v6648 = vpop.xlane.xlu0 %6647
        %v6649 = vsel %vm3230, %v6613, 0.0
        %6650 = vadd.xlane.f32.xlu0 %v6649
        %v6651 = vpop.xlane.xlu0 %6650
        %v6652 = vsel %vm3230, %v6614, 0.0
        %6653 = vadd.xlane.f32.xlu0 %v6652
        %v6654 = vpop.xlane.xlu0 %6653
        %v6655 = vsel %vm3230, %v6615, 0.0
        %6656 = vadd.xlane.f32.xlu0 %v6655
        %v6657 = vpop.xlane.xlu0 %6656
        %v6658 = vsel %vm3230, %v6616, 0.0
        %6659 = vadd.xlane.f32.xlu0 %v6658
        %v6660 = vpop.xlane.xlu0 %6659
        %v6661 = vsel %vm3230, %v6617, 0.0
        %6662 = vadd.xlane.f32.xlu0 %v6661
        %v6663 = vpop.xlane.xlu0 %6662
        %v6664 = vsel %vm3230, %v6618, 0.0
        %6665 = vadd.xlane.f32.xlu0 %v6664
        %v6666 = vpop.xlane.xlu0 %6665
        %v6667 = vmul.f32 %v6621, %v6570
        %v6668 = vmul.f32 %v6624, %v6570
        %v6669 = vmul.f32 %v6627, %v6570
        %v6670 = vmul.f32 %v6630, %v6570
        %v6671 = vmul.f32 %v6633, %v6570
        %v6672 = vmul.f32 %v6636, %v6570
        %v6673 = vmul.f32 %v6639, %v6570
        %v6674 = vmul.f32 %v6642, %v6570
        %v6675 = vmul.f32 %v6645, %v6570
        %v6676 = vmul.f32 %v6648, %v6570
        %v6677 = vmul.f32 %v6651, %v6570
        %v6678 = vmul.f32 %v6654, %v6570
        %v6679 = vmul.f32 %v6657, %v6570
        %v6680 = vmul.f32 %v6660, %v6570
        %v6681 = vmul.f32 %v6663, %v6570
        %v6682 = vmul.f32 %v6666, %v6570
        %v6683 = vadd.f32 %v6667, 1e-05
        %v6684 = vadd.f32 %v6668, 1e-05
        %v6685 = vadd.f32 %v6669, 1e-05
        %v6686 = vadd.f32 %v6670, 1e-05
        %v6687 = vadd.f32 %v6671, 1e-05
        %v6688 = vadd.f32 %v6672, 1e-05
        %v6689 = vadd.f32 %v6673, 1e-05
        %v6690 = vadd.f32 %v6674, 1e-05
        %v6691 = vadd.f32 %v6675, 1e-05
        %v6692 = vadd.f32 %v6676, 1e-05
        %v6693 = vadd.f32 %v6677, 1e-05
        %v6694 = vadd.f32 %v6678, 1e-05
        %v6695 = vadd.f32 %v6679, 1e-05
        %v6696 = vadd.f32 %v6680, 1e-05
        %v6697 = vadd.f32 %v6681, 1e-05
        %v6698 = vadd.f32 %v6682, 1e-05
        %v6699 = vrsqrt.pop %v6683
        %v6700 = vmul.f32 %v6699, %v6683
        %v6701 = vmul.f32 %v6700, %v6699
        %v6702 = vmul.f32 0.5, %v6701
        %v6703 = vsub.f32 1.5, %v6702
        %v6704 = vmul.f32 %v6699, %v6703
        %vm6705 = vweird.f32 %v6683
        %vm6706 = vweird.f32 %v6699
        %vm6707 = vmor %vm6705, %vm6706
        %v6708 = vsel %vm6707, %v6699, %v6704
        %v6709 = vrsqrt.pop %v6684
        %v6710 = vmul.f32 %v6709, %v6684
        %v6711 = vmul.f32 %v6710, %v6709
        %v6712 = vmul.f32 0.5, %v6711
        %v6713 = vsub.f32 1.5, %v6712
        %v6714 = vmul.f32 %v6709, %v6713
        %vm6715 = vweird.f32 %v6684
        %vm6716 = vweird.f32 %v6709
        %vm6717 = vmor %vm6715, %vm6716
        %v6718 = vsel %vm6717, %v6709, %v6714
        %v6719 = vrsqrt.pop %v6685
        %v6720 = vmul.f32 %v6719, %v6685
        %v6721 = vmul.f32 %v6720, %v6719
        %v6722 = vmul.f32 0.5, %v6721
        %v6723 = vsub.f32 1.5, %v6722
        %v6724 = vmul.f32 %v6719, %v6723
        %vm6725 = vweird.f32 %v6685
        %vm6726 = vweird.f32 %v6719
        %vm6727 = vmor %vm6725, %vm6726
        %v6728 = vsel %vm6727, %v6719, %v6724
        %v6729 = vrsqrt.pop %v6686
        %v6730 = vmul.f32 %v6729, %v6686
        %v6731 = vmul.f32 %v6730, %v6729
        %v6732 = vmul.f32 0.5, %v6731
        %v6733 = vsub.f32 1.5, %v6732
        %v6734 = vmul.f32 %v6729, %v6733
        %vm6735 = vweird.f32 %v6686
        %vm6736 = vweird.f32 %v6729
        %vm6737 = vmor %vm6735, %vm6736
        %v6738 = vsel %vm6737, %v6729, %v6734
        %v6739 = vrsqrt.pop %v6687
        %v6740 = vmul.f32 %v6739, %v6687
        %v6741 = vmul.f32 %v6740, %v6739
        %v6742 = vmul.f32 0.5, %v6741
        %v6743 = vsub.f32 1.5, %v6742
        %v6744 = vmul.f32 %v6739, %v6743
        %vm6745 = vweird.f32 %v6687
        %vm6746 = vweird.f32 %v6739
        %vm6747 = vmor %vm6745, %vm6746
        %v6748 = vsel %vm6747, %v6739, %v6744
        %v6749 = vrsqrt.pop %v6688
        %v6750 = vmul.f32 %v6749, %v6688
        %v6751 = vmul.f32 %v6750, %v6749
        %v6752 = vmul.f32 0.5, %v6751
        %v6753 = vsub.f32 1.5, %v6752
        %v6754 = vmul.f32 %v6749, %v6753
        %vm6755 = vweird.f32 %v6688
        %vm6756 = vweird.f32 %v6749
        %vm6757 = vmor %vm6755, %vm6756
        %v6758 = vsel %vm6757, %v6749, %v6754
        %v6759 = vrsqrt.pop %v6689
        %v6760 = vmul.f32 %v6759, %v6689
        %v6761 = vmul.f32 %v6760, %v6759
        %v6762 = vmul.f32 0.5, %v6761
        %v6763 = vsub.f32 1.5, %v6762
        %v6764 = vmul.f32 %v6759, %v6763
        %vm6765 = vweird.f32 %v6689
        %vm6766 = vweird.f32 %v6759
        %vm6767 = vmor %vm6765, %vm6766
        %v6768 = vsel %vm6767, %v6759, %v6764
        %v6769 = vrsqrt.pop %v6690
        %v6770 = vmul.f32 %v6769, %v6690
        %v6771 = vmul.f32 %v6770, %v6769
        %v6772 = vmul.f32 0.5, %v6771
        %v6773 = vsub.f32 1.5, %v6772
        %v6774 = vmul.f32 %v6769, %v6773
        %vm6775 = vweird.f32 %v6690
        %vm6776 = vweird.f32 %v6769
        %vm6777 = vmor %vm6775, %vm6776
        %v6778 = vsel %vm6777, %v6769, %v6774
        %v6779 = vrsqrt.pop %v6691
        %v6780 = vmul.f32 %v6779, %v6691
        %v6781 = vmul.f32 %v6780, %v6779
        %v6782 = vmul.f32 0.5, %v6781
        %v6783 = vsub.f32 1.5, %v6782
        %v6784 = vmul.f32 %v6779, %v6783
        %vm6785 = vweird.f32 %v6691
        %vm6786 = vweird.f32 %v6779
        %vm6787 = vmor %vm6785, %vm6786
        %v6788 = vsel %vm6787, %v6779, %v6784
        %v6789 = vrsqrt.pop %v6692
        %v6790 = vmul.f32 %v6789, %v6692
        %v6791 = vmul.f32 %v6790, %v6789
        %v6792 = vmul.f32 0.5, %v6791
        %v6793 = vsub.f32 1.5, %v6792
        %v6794 = vmul.f32 %v6789, %v6793
        %vm6795 = vweird.f32 %v6692
        %vm6796 = vweird.f32 %v6789
        %vm6797 = vmor %vm6795, %vm6796
        %v6798 = vsel %vm6797, %v6789, %v6794
        %v6799 = vrsqrt.pop %v6693
        %v6800 = vmul.f32 %v6799, %v6693
        %v6801 = vmul.f32 %v6800, %v6799
        %v6802 = vmul.f32 0.5, %v6801
        %v6803 = vsub.f32 1.5, %v6802
        %v6804 = vmul.f32 %v6799, %v6803
        %vm6805 = vweird.f32 %v6693
        %vm6806 = vweird.f32 %v6799
        %vm6807 = vmor %vm6805, %vm6806
        %v6808 = vsel %vm6807, %v6799, %v6804
        %v6809 = vrsqrt.pop %v6694
        %v6810 = vmul.f32 %v6809, %v6694
        %v6811 = vmul.f32 %v6810, %v6809
        %v6812 = vmul.f32 0.5, %v6811
        %v6813 = vsub.f32 1.5, %v6812
        %v6814 = vmul.f32 %v6809, %v6813
        %vm6815 = vweird.f32 %v6694
        %vm6816 = vweird.f32 %v6809
        %vm6817 = vmor %vm6815, %vm6816
        %v6818 = vsel %vm6817, %v6809, %v6814
        %v6819 = vrsqrt.pop %v6695
        %v6820 = vmul.f32 %v6819, %v6695
        %v6821 = vmul.f32 %v6820, %v6819
        %v6822 = vmul.f32 0.5, %v6821
        %v6823 = vsub.f32 1.5, %v6822
        %v6824 = vmul.f32 %v6819, %v6823
        %vm6825 = vweird.f32 %v6695
        %vm6826 = vweird.f32 %v6819
        %vm6827 = vmor %vm6825, %vm6826
        %v6828 = vsel %vm6827, %v6819, %v6824
        %v6829 = vrsqrt.pop %v6696
        %v6830 = vmul.f32 %v6829, %v6696
        %v6831 = vmul.f32 %v6830, %v6829
        %v6832 = vmul.f32 0.5, %v6831
        %v6833 = vsub.f32 1.5, %v6832
        %v6834 = vmul.f32 %v6829, %v6833
        %vm6835 = vweird.f32 %v6696
        %vm6836 = vweird.f32 %v6829
        %vm6837 = vmor %vm6835, %vm6836
        %v6838 = vsel %vm6837, %v6829, %v6834
        %v6839 = vrsqrt.pop %v6697
        %v6840 = vmul.f32 %v6839, %v6697
        %v6841 = vmul.f32 %v6840, %v6839
        %v6842 = vmul.f32 0.5, %v6841
        %v6843 = vsub.f32 1.5, %v6842
        %v6844 = vmul.f32 %v6839, %v6843
        %vm6845 = vweird.f32 %v6697
        %vm6846 = vweird.f32 %v6839
        %vm6847 = vmor %vm6845, %vm6846
        %v6848 = vsel %vm6847, %v6839, %v6844
        %v6849 = vrsqrt.pop %v6698
        %v6850 = vmul.f32 %v6849, %v6698
        %v6851 = vmul.f32 %v6850, %v6849
        %v6852 = vmul.f32 0.5, %v6851
        %v6853 = vsub.f32 1.5, %v6852
        %v6854 = vmul.f32 %v6849, %v6853
        %vm6855 = vweird.f32 %v6698
        %vm6856 = vweird.f32 %v6849
        %vm6857 = vmor %vm6855, %vm6856
        %v6858 = vsel %vm6857, %v6849, %v6854
        %v6859 = vmul.f32 %v6587, %v6708
        %v6860 = vmul.f32 %v6588, %v6718
        %v6861 = vmul.f32 %v6589, %v6728
        %v6862 = vmul.f32 %v6590, %v6738
        %v6863 = vmul.f32 %v6591, %v6748
        %v6864 = vmul.f32 %v6592, %v6758
        %v6865 = vmul.f32 %v6593, %v6768
        %v6866 = vmul.f32 %v6594, %v6778
        %v6867 = vmul.f32 %v6595, %v6788
        %v6868 = vmul.f32 %v6596, %v6798
        %v6869 = vmul.f32 %v6597, %v6808
        %v6870 = vmul.f32 %v6598, %v6818
        %v6871 = vmul.f32 %v6599, %v6828
        %v6872 = vmul.f32 %v6600, %v6838
        %v6873 = vmul.f32 %v6601, %v6848
        %v6874 = vmul.f32 %v6602, %v6858
        %v6876 = vperm.slane %v3209, 0
        %v6878 = vmul.f32 %v6859, %v6876
        %v6879 = vmul.f32 %v6860, %v6876
        %v6880 = vmul.f32 %v6861, %v6876
        %v6881 = vmul.f32 %v6862, %v6876
        %v6882 = vmul.f32 %v6863, %v6876
        %v6883 = vmul.f32 %v6864, %v6876
        %v6884 = vmul.f32 %v6865, %v6876
        %v6885 = vmul.f32 %v6866, %v6876
        %v6886 = vmul.f32 %v6867, %v6876
        %v6887 = vmul.f32 %v6868, %v6876
        %v6888 = vmul.f32 %v6869, %v6876
        %v6889 = vmul.f32 %v6870, %v6876
        %v6890 = vmul.f32 %v6871, %v6876
        %v6891 = vmul.f32 %v6872, %v6876
        %v6892 = vmul.f32 %v6873, %v6876
        %v6893 = vmul.f32 %v6874, %v6876
        %v6895 = vperm.slane %v3210, 0
        %v6897 = vadd.f32 %v6878, %v6895
        %v6898 = vadd.f32 %v6879, %v6895
        %v6899 = vadd.f32 %v6880, %v6895
        %v6900 = vadd.f32 %v6881, %v6895
        %v6901 = vadd.f32 %v6882, %v6895
        %v6902 = vadd.f32 %v6883, %v6895
        %v6903 = vadd.f32 %v6884, %v6895
        %v6904 = vadd.f32 %v6885, %v6895
        %v6905 = vadd.f32 %v6886, %v6895
        %v6906 = vadd.f32 %v6887, %v6895
        %v6907 = vadd.f32 %v6888, %v6895
        %v6908 = vadd.f32 %v6889, %v6895
        %v6909 = vadd.f32 %v6890, %v6895
        %v6910 = vadd.f32 %v6891, %v6895
        %v6911 = vadd.f32 %v6892, %v6895
        %v6912 = vadd.f32 %v6893, %v6895
        %v6914 = vperm.slane %v3215, 0
        %v6917 = vsel %vm3230, %v6897, 0
        %v6920 = vsel %vm3230, %v6898, 0
        %v6923 = vsel %vm3230, %v6899, 0
        %v6926 = vsel %vm3230, %v6900, 0
        %v6929 = vsel %vm3230, %v6901, 0
        %v6932 = vsel %vm3230, %v6902, 0
        %v6935 = vsel %vm3230, %v6903, 0
        %v6938 = vsel %vm3230, %v6904, 0
        %v6941 = vsel %vm3230, %v6905, 0
        %v6944 = vsel %vm3230, %v6906, 0
        %v6947 = vsel %vm3230, %v6907, 0
        %v6950 = vsel %vm3230, %v6908, 0
        %v6953 = vsel %vm3230, %v6909, 0
        %v6956 = vsel %vm3230, %v6910, 0
        %v6959 = vsel %vm3230, %v6911, 0
        %v6962 = vsel %vm3230, %v6912, 0
        %6964 = vmatpush.msra.mxu0 0.0
        %6965 = vmatpush.msra.mxu0 0.0
        %6966 = vmatpush.msra.mxu0 0.0
        %6967 = vmatpush.msra.mxu0 0.0
        %6968 = vmatpush.msra.mxu0 0.0
        %6969 = vmatpush.msra.mxu0 0.0
        %6970 = vmatpush.msra.mxu0 0.0
        %6971 = vmatpush.msra.mxu0 0.0
        %6972 = vmatpush.msra.mxu0 0.0
        %6973 = vmatpush.msra.mxu0 0.0
        %6974 = vmatpush.msra.mxu0 0.0
        %6975 = vmatpush.msra.mxu0 0.0
        %6976 = vmatpush.msra.mxu0 %v3214
        %6977 = vmatpush.msra.mxu0 %v3213
        %6978 = vmatpush.msra.mxu0 %v3212
        %6979 = vmatpush.msra.mxu0 %v3211
        %6980 = vmatmul.f32.gmra.mxu0 %v6917
        %v6981 = vpop.f32.mrf.mxu0
        %v6982 = vadd.f32 %v6914, %v6981
        %6983 = vmatmul.f32.gmra.mxu0 %v6920
        %v6984 = vpop.f32.mrf.mxu0
        %v6985 = vadd.f32 %v6914, %v6984
        %6986 = vmatmul.f32.gmra.mxu0 %v6923
        %v6987 = vpop.f32.mrf.mxu0
        %v6988 = vadd.f32 %v6914, %v6987
        %6989 = vmatmul.f32.gmra.mxu0 %v6926
        %v6990 = vpop.f32.mrf.mxu0
        %v6991 = vadd.f32 %v6914, %v6990
        %6992 = vmatmul.f32.gmra.mxu0 %v6929
        %v6993 = vpop.f32.mrf.mxu0
        %v6994 = vadd.f32 %v6914, %v6993
        %6995 = vmatmul.f32.gmra.mxu0 %v6932
        %v6996 = vpop.f32.mrf.mxu0
        %v6997 = vadd.f32 %v6914, %v6996
        %6998 = vmatmul.f32.gmra.mxu0 %v6935
        %v6999 = vpop.f32.mrf.mxu0
        %v7000 = vadd.f32 %v6914, %v6999
        %7001 = vmatmul.f32.gmra.mxu0 %v6938
        %v7002 = vpop.f32.mrf.mxu0
        %v7003 = vadd.f32 %v6914, %v7002
        %7004 = vmatmul.f32.gmra.mxu0 %v6941
        %v7005 = vpop.f32.mrf.mxu0
        %v7006 = vadd.f32 %v6914, %v7005
        %7007 = vmatmul.f32.gmra.mxu0 %v6944
        %v7008 = vpop.f32.mrf.mxu0
        %v7009 = vadd.f32 %v6914, %v7008
        %7010 = vmatmul.f32.gmra.mxu0 %v6947
        %v7011 = vpop.f32.mrf.mxu0
        %v7012 = vadd.f32 %v6914, %v7011
        %7013 = vmatmul.f32.gmra.mxu0 %v6950
        %v7014 = vpop.f32.mrf.mxu0
        %v7015 = vadd.f32 %v6914, %v7014
        %7016 = vmatmul.f32.gmra.mxu0 %v6953
        %v7017 = vpop.f32.mrf.mxu0
        %v7018 = vadd.f32 %v6914, %v7017
        %7019 = vmatmul.f32.gmra.mxu0 %v6956
        %v7020 = vpop.f32.mrf.mxu0
        %v7021 = vadd.f32 %v6914, %v7020
        %7022 = vmatmul.f32.gmra.mxu0 %v6959
        %v7023 = vpop.f32.mrf.mxu0
        %v7024 = vadd.f32 %v6914, %v7023
        %7025 = vmatmul.f32.gmra.mxu0 %v6962
        %v7026 = vpop.f32.mrf.mxu0
        %v7027 = vadd.f32 %v6914, %v7026
        %7028 = vdwg.mxu0
        %v7029 = vmax.f32 %v6982, 0.0
        %v7030 = vmax.f32 %v6985, 0.0
        %v7031 = vmax.f32 %v6988, 0.0
        %v7032 = vmax.f32 %v6991, 0.0
        %v7033 = vmax.f32 %v6994, 0.0
        %v7034 = vmax.f32 %v6997, 0.0
        %v7035 = vmax.f32 %v7000, 0.0
        %v7036 = vmax.f32 %v7003, 0.0
        %v7037 = vmax.f32 %v7006, 0.0
        %v7038 = vmax.f32 %v7009, 0.0
        %v7039 = vmax.f32 %v7012, 0.0
        %v7040 = vmax.f32 %v7015, 0.0
        %v7041 = vmax.f32 %v7018, 0.0
        %v7042 = vmax.f32 %v7021, 0.0
        %v7043 = vmax.f32 %v7024, 0.0
        %v7044 = vmax.f32 %v7027, 0.0
        %v7046 = vperm.slane %v3224, 0
        %vm7048 = vcmask 523264
        %v7050 = vsel %vm7048, %v7029, 0
        %v7053 = vsel %vm7048, %v7030, 0
        %v7056 = vsel %vm7048, %v7031, 0
        %v7059 = vsel %vm7048, %v7032, 0
        %v7062 = vsel %vm7048, %v7033, 0
        %v7065 = vsel %vm7048, %v7034, 0
        %v7068 = vsel %vm7048, %v7035, 0
        %v7071 = vsel %vm7048, %v7036, 0
        %v7074 = vsel %vm7048, %v7037, 0
        %v7077 = vsel %vm7048, %v7038, 0
        %v7080 = vsel %vm7048, %v7039, 0
        %v7083 = vsel %vm7048, %v7040, 0
        %v7086 = vsel %vm7048, %v7041, 0
        %v7089 = vsel %vm7048, %v7042, 0
        %v7092 = vsel %vm7048, %v7043, 0
        %v7095 = vsel %vm7048, %v7044, 0
        %7097 = vmatpush.msra.mxu0 0.0
        %7098 = vmatpush.msra.mxu0 0.0
        %7099 = vmatpush.msra.mxu0 0.0
        %7100 = vmatpush.msra.mxu0 0.0
        %7101 = vmatpush.msra.mxu0 0.0
        %7102 = vmatpush.msra.mxu0 0.0
        %7103 = vmatpush.msra.mxu0 0.0
        %7104 = vmatpush.msra.mxu0 0.0
        %7105 = vmatpush.msra.mxu0 %v3223
        %7106 = vmatpush.msra.mxu0 %v3222
        %7107 = vmatpush.msra.mxu0 %v3221
        %7108 = vmatpush.msra.mxu0 %v3220
        %7109 = vmatpush.msra.mxu0 %v3219
        %7110 = vmatpush.msra.mxu0 %v3218
        %7111 = vmatpush.msra.mxu0 %v3217
        %7112 = vmatpush.msra.mxu0 %v3216
        %7113 = vmatmul.f32.gmra.mxu0 %v7050
        %v7114 = vpop.f32.mrf.mxu0
        %v7115 = vadd.f32 %v7046, %v7114
        %7116 = vmatmul.f32.gmra.mxu0 %v7053
        %v7117 = vpop.f32.mrf.mxu0
        %v7118 = vadd.f32 %v7046, %v7117
        %7119 = vmatmul.f32.gmra.mxu0 %v7056
        %v7120 = vpop.f32.mrf.mxu0
        %v7121 = vadd.f32 %v7046, %v7120
        %7122 = vmatmul.f32.gmra.mxu0 %v7059
        %v7123 = vpop.f32.mrf.mxu0
        %v7124 = vadd.f32 %v7046, %v7123
        %7125 = vmatmul.f32.gmra.mxu0 %v7062
        %v7126 = vpop.f32.mrf.mxu0
        %v7127 = vadd.f32 %v7046, %v7126
        %7128 = vmatmul.f32.gmra.mxu0 %v7065
        %v7129 = vpop.f32.mrf.mxu0
        %v7130 = vadd.f32 %v7046, %v7129
        %7131 = vmatmul.f32.gmra.mxu0 %v7068
        %v7132 = vpop.f32.mrf.mxu0
        %v7133 = vadd.f32 %v7046, %v7132
        %7134 = vmatmul.f32.gmra.mxu0 %v7071
        %v7135 = vpop.f32.mrf.mxu0
        %v7136 = vadd.f32 %v7046, %v7135
        %7137 = vmatmul.f32.gmra.mxu0 %v7074
        %v7138 = vpop.f32.mrf.mxu0
        %v7139 = vadd.f32 %v7046, %v7138
        %7140 = vmatmul.f32.gmra.mxu0 %v7077
        %v7141 = vpop.f32.mrf.mxu0
        %v7142 = vadd.f32 %v7046, %v7141
        %7143 = vmatmul.f32.gmra.mxu0 %v7080
        %v7144 = vpop.f32.mrf.mxu0
        %v7145 = vadd.f32 %v7046, %v7144
        %7146 = vmatmul.f32.gmra.mxu0 %v7083
        %v7147 = vpop.f32.mrf.mxu0
        %v7148 = vadd.f32 %v7046, %v7147
        %7149 = vmatmul.f32.gmra.mxu0 %v7086
        %v7150 = vpop.f32.mrf.mxu0
        %v7151 = vadd.f32 %v7046, %v7150
        %7152 = vmatmul.f32.gmra.mxu0 %v7089
        %v7153 = vpop.f32.mrf.mxu0
        %v7154 = vadd.f32 %v7046, %v7153
        %7155 = vmatmul.f32.gmra.mxu0 %v7092
        %v7156 = vpop.f32.mrf.mxu0
        %v7157 = vadd.f32 %v7046, %v7156
        %7158 = vmatmul.f32.gmra.mxu0 %v7095
        %v7159 = vpop.f32.mrf.mxu0
        %v7160 = vadd.f32 %v7046, %v7159
        %7161 = vdwg.mxu0
        %v7162 = vadd.f32 %v6897, %v7115
        %v7163 = vadd.f32 %v6898, %v7118
        %v7164 = vadd.f32 %v6899, %v7121
        %v7165 = vadd.f32 %v6900, %v7124
        %v7166 = vadd.f32 %v6901, %v7127
        %v7167 = vadd.f32 %v6902, %v7130
        %v7168 = vadd.f32 %v6903, %v7133
        %v7169 = vadd.f32 %v6904, %v7136
        %v7170 = vadd.f32 %v6905, %v7139
        %v7171 = vadd.f32 %v6906, %v7142
        %v7172 = vadd.f32 %v6907, %v7145
        %v7173 = vadd.f32 %v6908, %v7148
        %v7174 = vadd.f32 %v6909, %v7151
        %v7175 = vadd.f32 %v6910, %v7154
        %v7176 = vadd.f32 %v6911, %v7157
        %v7177 = vadd.f32 %v6912, %v7160
        %v7178 = vsel %vm3230, %v7162, 0.0
        %7179 = vadd.xlane.f32.xlu0 %v7178
        %v7180 = vpop.xlane.xlu0 %7179
        %v7181 = vsel %vm3230, %v7163, 0.0
        %7182 = vadd.xlane.f32.xlu0 %v7181
        %v7183 = vpop.xlane.xlu0 %7182
        %v7184 = vsel %vm3230, %v7164, 0.0
        %7185 = vadd.xlane.f32.xlu0 %v7184
        %v7186 = vpop.xlane.xlu0 %7185
        %v7187 = vsel %vm3230, %v7165, 0.0
        %7188 = vadd.xlane.f32.xlu0 %v7187
        %v7189 = vpop.xlane.xlu0 %7188
        %v7190 = vsel %vm3230, %v7166, 0.0
        %7191 = vadd.xlane.f32.xlu0 %v7190
        %v7192 = vpop.xlane.xlu0 %7191
        %v7193 = vsel %vm3230, %v7167, 0.0
        %7194 = vadd.xlane.f32.xlu0 %v7193
        %v7195 = vpop.xlane.xlu0 %7194
        %v7196 = vsel %vm3230, %v7168, 0.0
        %7197 = vadd.xlane.f32.xlu0 %v7196
        %v7198 = vpop.xlane.xlu0 %7197
        %v7199 = vsel %vm3230, %v7169, 0.0
        %7200 = vadd.xlane.f32.xlu0 %v7199
        %v7201 = vpop.xlane.xlu0 %7200
        %v7202 = vsel %vm3230, %v7170, 0.0
        %7203 = vadd.xlane.f32.xlu0 %v7202
        %v7204 = vpop.xlane.xlu0 %7203
        %v7205 = vsel %vm3230, %v7171, 0.0
        %7206 = vadd.xlane.f32.xlu0 %v7205
        %v7207 = vpop.xlane.xlu0 %7206
        %v7208 = vsel %vm3230, %v7172, 0.0
        %7209 = vadd.xlane.f32.xlu0 %v7208
        %v7210 = vpop.xlane.xlu0 %7209
        %v7211 = vsel %vm3230, %v7173, 0.0
        %7212 = vadd.xlane.f32.xlu0 %v7211
        %v7213 = vpop.xlane.xlu0 %7212
        %v7214 = vsel %vm3230, %v7174, 0.0
        %7215 = vadd.xlane.f32.xlu0 %v7214
        %v7216 = vpop.xlane.xlu0 %7215
        %v7217 = vsel %vm3230, %v7175, 0.0
        %7218 = vadd.xlane.f32.xlu0 %v7217
        %v7219 = vpop.xlane.xlu0 %7218
        %v7220 = vsel %vm3230, %v7176, 0.0
        %7221 = vadd.xlane.f32.xlu0 %v7220
        %v7222 = vpop.xlane.xlu0 %7221
        %v7223 = vsel %vm3230, %v7177, 0.0
        %7224 = vadd.xlane.f32.xlu0 %v7223
        %v7225 = vpop.xlane.xlu0 %7224
        %v7226 = vmul.f32 %v7180, %v6570
        %v7227 = vmul.f32 %v7183, %v6570
        %v7228 = vmul.f32 %v7186, %v6570
        %v7229 = vmul.f32 %v7189, %v6570
        %v7230 = vmul.f32 %v7192, %v6570
        %v7231 = vmul.f32 %v7195, %v6570
        %v7232 = vmul.f32 %v7198, %v6570
        %v7233 = vmul.f32 %v7201, %v6570
        %v7234 = vmul.f32 %v7204, %v6570
        %v7235 = vmul.f32 %v7207, %v6570
        %v7236 = vmul.f32 %v7210, %v6570
        %v7237 = vmul.f32 %v7213, %v6570
        %v7238 = vmul.f32 %v7216, %v6570
        %v7239 = vmul.f32 %v7219, %v6570
        %v7240 = vmul.f32 %v7222, %v6570
        %v7241 = vmul.f32 %v7225, %v6570
        %v7242 = vsub.f32 %v7162, %v7226
        %v7243 = vsub.f32 %v7163, %v7227
        %v7244 = vsub.f32 %v7164, %v7228
        %v7245 = vsub.f32 %v7165, %v7229
        %v7246 = vsub.f32 %v7166, %v7230
        %v7247 = vsub.f32 %v7167, %v7231
        %v7248 = vsub.f32 %v7168, %v7232
        %v7249 = vsub.f32 %v7169, %v7233
        %v7250 = vsub.f32 %v7170, %v7234
        %v7251 = vsub.f32 %v7171, %v7235
        %v7252 = vsub.f32 %v7172, %v7236
        %v7253 = vsub.f32 %v7173, %v7237
        %v7254 = vsub.f32 %v7174, %v7238
        %v7255 = vsub.f32 %v7175, %v7239
        %v7256 = vsub.f32 %v7176, %v7240
        %v7257 = vsub.f32 %v7177, %v7241
        %v7258 = vmul.f32 %v7242, %v7242
        %v7259 = vmul.f32 %v7243, %v7243
        %v7260 = vmul.f32 %v7244, %v7244
        %v7261 = vmul.f32 %v7245, %v7245
        %v7262 = vmul.f32 %v7246, %v7246
        %v7263 = vmul.f32 %v7247, %v7247
        %v7264 = vmul.f32 %v7248, %v7248
        %v7265 = vmul.f32 %v7249, %v7249
        %v7266 = vmul.f32 %v7250, %v7250
        %v7267 = vmul.f32 %v7251, %v7251
        %v7268 = vmul.f32 %v7252, %v7252
        %v7269 = vmul.f32 %v7253, %v7253
        %v7270 = vmul.f32 %v7254, %v7254
        %v7271 = vmul.f32 %v7255, %v7255
        %v7272 = vmul.f32 %v7256, %v7256
        %v7273 = vmul.f32 %v7257, %v7257
        %v7274 = vsel %vm3230, %v7258, 0.0
        %7275 = vadd.xlane.f32.xlu0 %v7274
        %v7276 = vpop.xlane.xlu0 %7275
        %v7277 = vsel %vm3230, %v7259, 0.0
        %7278 = vadd.xlane.f32.xlu0 %v7277
        %v7279 = vpop.xlane.xlu0 %7278
        %v7280 = vsel %vm3230, %v7260, 0.0
        %7281 = vadd.xlane.f32.xlu0 %v7280
        %v7282 = vpop.xlane.xlu0 %7281
        %v7283 = vsel %vm3230, %v7261, 0.0
        %7284 = vadd.xlane.f32.xlu0 %v7283
        %v7285 = vpop.xlane.xlu0 %7284
        %v7286 = vsel %vm3230, %v7262, 0.0
        %7287 = vadd.xlane.f32.xlu0 %v7286
        %v7288 = vpop.xlane.xlu0 %7287
        %v7289 = vsel %vm3230, %v7263, 0.0
        %7290 = vadd.xlane.f32.xlu0 %v7289
        %v7291 = vpop.xlane.xlu0 %7290
        %v7292 = vsel %vm3230, %v7264, 0.0
        %7293 = vadd.xlane.f32.xlu0 %v7292
        %v7294 = vpop.xlane.xlu0 %7293
        %v7295 = vsel %vm3230, %v7265, 0.0
        %7296 = vadd.xlane.f32.xlu0 %v7295
        %v7297 = vpop.xlane.xlu0 %7296
        %v7298 = vsel %vm3230, %v7266, 0.0
        %7299 = vadd.xlane.f32.xlu0 %v7298
        %v7300 = vpop.xlane.xlu0 %7299
        %v7301 = vsel %vm3230, %v7267, 0.0
        %7302 = vadd.xlane.f32.xlu0 %v7301
        %v7303 = vpop.xlane.xlu0 %7302
        %v7304 = vsel %vm3230, %v7268, 0.0
        %7305 = vadd.xlane.f32.xlu0 %v7304
        %v7306 = vpop.xlane.xlu0 %7305
        %v7307 = vsel %vm3230, %v7269, 0.0
        %7308 = vadd.xlane.f32.xlu0 %v7307
        %v7309 = vpop.xlane.xlu0 %7308
        %v7310 = vsel %vm3230, %v7270, 0.0
        %7311 = vadd.xlane.f32.xlu0 %v7310
        %v7312 = vpop.xlane.xlu0 %7311
        %v7313 = vsel %vm3230, %v7271, 0.0
        %7314 = vadd.xlane.f32.xlu0 %v7313
        %v7315 = vpop.xlane.xlu0 %7314
        %v7316 = vsel %vm3230, %v7272, 0.0
        %7317 = vadd.xlane.f32.xlu0 %v7316
        %v7318 = vpop.xlane.xlu0 %7317
        %v7319 = vsel %vm3230, %v7273, 0.0
        %7320 = vadd.xlane.f32.xlu0 %v7319
        %v7321 = vpop.xlane.xlu0 %7320
        %v7322 = vmul.f32 %v7276, %v6570
        %v7323 = vmul.f32 %v7279, %v6570
        %v7324 = vmul.f32 %v7282, %v6570
        %v7325 = vmul.f32 %v7285, %v6570
        %v7326 = vmul.f32 %v7288, %v6570
        %v7327 = vmul.f32 %v7291, %v6570
        %v7328 = vmul.f32 %v7294, %v6570
        %v7329 = vmul.f32 %v7297, %v6570
        %v7330 = vmul.f32 %v7300, %v6570
        %v7331 = vmul.f32 %v7303, %v6570
        %v7332 = vmul.f32 %v7306, %v6570
        %v7333 = vmul.f32 %v7309, %v6570
        %v7334 = vmul.f32 %v7312, %v6570
        %v7335 = vmul.f32 %v7315, %v6570
        %v7336 = vmul.f32 %v7318, %v6570
        %v7337 = vmul.f32 %v7321, %v6570
        %v7338 = vadd.f32 %v7322, 1e-05
        %v7339 = vadd.f32 %v7323, 1e-05
        %v7340 = vadd.f32 %v7324, 1e-05
        %v7341 = vadd.f32 %v7325, 1e-05
        %v7342 = vadd.f32 %v7326, 1e-05
        %v7343 = vadd.f32 %v7327, 1e-05
        %v7344 = vadd.f32 %v7328, 1e-05
        %v7345 = vadd.f32 %v7329, 1e-05
        %v7346 = vadd.f32 %v7330, 1e-05
        %v7347 = vadd.f32 %v7331, 1e-05
        %v7348 = vadd.f32 %v7332, 1e-05
        %v7349 = vadd.f32 %v7333, 1e-05
        %v7350 = vadd.f32 %v7334, 1e-05
        %v7351 = vadd.f32 %v7335, 1e-05
        %v7352 = vadd.f32 %v7336, 1e-05
        %v7353 = vadd.f32 %v7337, 1e-05
        %v7354 = vrsqrt.pop %v7338
        %v7355 = vmul.f32 %v7354, %v7338
        %v7356 = vmul.f32 %v7355, %v7354
        %v7357 = vmul.f32 0.5, %v7356
        %v7358 = vsub.f32 1.5, %v7357
        %v7359 = vmul.f32 %v7354, %v7358
        %vm7360 = vweird.f32 %v7338
        %vm7361 = vweird.f32 %v7354
        %vm7362 = vmor %vm7360, %vm7361
        %v7363 = vsel %vm7362, %v7354, %v7359
        %v7364 = vrsqrt.pop %v7339
        %v7365 = vmul.f32 %v7364, %v7339
        %v7366 = vmul.f32 %v7365, %v7364
        %v7367 = vmul.f32 0.5, %v7366
        %v7368 = vsub.f32 1.5, %v7367
        %v7369 = vmul.f32 %v7364, %v7368
        %vm7370 = vweird.f32 %v7339
        %vm7371 = vweird.f32 %v7364
        %vm7372 = vmor %vm7370, %vm7371
        %v7373 = vsel %vm7372, %v7364, %v7369
        %v7374 = vrsqrt.pop %v7340
        %v7375 = vmul.f32 %v7374, %v7340
        %v7376 = vmul.f32 %v7375, %v7374
        %v7377 = vmul.f32 0.5, %v7376
        %v7378 = vsub.f32 1.5, %v7377
        %v7379 = vmul.f32 %v7374, %v7378
        %vm7380 = vweird.f32 %v7340
        %vm7381 = vweird.f32 %v7374
        %vm7382 = vmor %vm7380, %vm7381
        %v7383 = vsel %vm7382, %v7374, %v7379
        %v7384 = vrsqrt.pop %v7341
        %v7385 = vmul.f32 %v7384, %v7341
        %v7386 = vmul.f32 %v7385, %v7384
        %v7387 = vmul.f32 0.5, %v7386
        %v7388 = vsub.f32 1.5, %v7387
        %v7389 = vmul.f32 %v7384, %v7388
        %vm7390 = vweird.f32 %v7341
        %vm7391 = vweird.f32 %v7384
        %vm7392 = vmor %vm7390, %vm7391
        %v7393 = vsel %vm7392, %v7384, %v7389
        %v7394 = vrsqrt.pop %v7342
        %v7395 = vmul.f32 %v7394, %v7342
        %v7396 = vmul.f32 %v7395, %v7394
        %v7397 = vmul.f32 0.5, %v7396
        %v7398 = vsub.f32 1.5, %v7397
        %v7399 = vmul.f32 %v7394, %v7398
        %vm7400 = vweird.f32 %v7342
        %vm7401 = vweird.f32 %v7394
        %vm7402 = vmor %vm7400, %vm7401
        %v7403 = vsel %vm7402, %v7394, %v7399
        %v7404 = vrsqrt.pop %v7343
        %v7405 = vmul.f32 %v7404, %v7343
        %v7406 = vmul.f32 %v7405, %v7404
        %v7407 = vmul.f32 0.5, %v7406
        %v7408 = vsub.f32 1.5, %v7407
        %v7409 = vmul.f32 %v7404, %v7408
        %vm7410 = vweird.f32 %v7343
        %vm7411 = vweird.f32 %v7404
        %vm7412 = vmor %vm7410, %vm7411
        %v7413 = vsel %vm7412, %v7404, %v7409
        %v7414 = vrsqrt.pop %v7344
        %v7415 = vmul.f32 %v7414, %v7344
        %v7416 = vmul.f32 %v7415, %v7414
        %v7417 = vmul.f32 0.5, %v7416
        %v7418 = vsub.f32 1.5, %v7417
        %v7419 = vmul.f32 %v7414, %v7418
        %vm7420 = vweird.f32 %v7344
        %vm7421 = vweird.f32 %v7414
        %vm7422 = vmor %vm7420, %vm7421
        %v7423 = vsel %vm7422, %v7414, %v7419
        %v7424 = vrsqrt.pop %v7345
        %v7425 = vmul.f32 %v7424, %v7345
        %v7426 = vmul.f32 %v7425, %v7424
        %v7427 = vmul.f32 0.5, %v7426
        %v7428 = vsub.f32 1.5, %v7427
        %v7429 = vmul.f32 %v7424, %v7428
        %vm7430 = vweird.f32 %v7345
        %vm7431 = vweird.f32 %v7424
        %vm7432 = vmor %vm7430, %vm7431
        %v7433 = vsel %vm7432, %v7424, %v7429
        %v7434 = vrsqrt.pop %v7346
        %v7435 = vmul.f32 %v7434, %v7346
        %v7436 = vmul.f32 %v7435, %v7434
        %v7437 = vmul.f32 0.5, %v7436
        %v7438 = vsub.f32 1.5, %v7437
        %v7439 = vmul.f32 %v7434, %v7438
        %vm7440 = vweird.f32 %v7346
        %vm7441 = vweird.f32 %v7434
        %vm7442 = vmor %vm7440, %vm7441
        %v7443 = vsel %vm7442, %v7434, %v7439
        %v7444 = vrsqrt.pop %v7347
        %v7445 = vmul.f32 %v7444, %v7347
        %v7446 = vmul.f32 %v7445, %v7444
        %v7447 = vmul.f32 0.5, %v7446
        %v7448 = vsub.f32 1.5, %v7447
        %v7449 = vmul.f32 %v7444, %v7448
        %vm7450 = vweird.f32 %v7347
        %vm7451 = vweird.f32 %v7444
        %vm7452 = vmor %vm7450, %vm7451
        %v7453 = vsel %vm7452, %v7444, %v7449
        %v7454 = vrsqrt.pop %v7348
        %v7455 = vmul.f32 %v7454, %v7348
        %v7456 = vmul.f32 %v7455, %v7454
        %v7457 = vmul.f32 0.5, %v7456
        %v7458 = vsub.f32 1.5, %v7457
        %v7459 = vmul.f32 %v7454, %v7458
        %vm7460 = vweird.f32 %v7348
        %vm7461 = vweird.f32 %v7454
        %vm7462 = vmor %vm7460, %vm7461
        %v7463 = vsel %vm7462, %v7454, %v7459
        %v7464 = vrsqrt.pop %v7349
        %v7465 = vmul.f32 %v7464, %v7349
        %v7466 = vmul.f32 %v7465, %v7464
        %v7467 = vmul.f32 0.5, %v7466
        %v7468 = vsub.f32 1.5, %v7467
        %v7469 = vmul.f32 %v7464, %v7468
        %vm7470 = vweird.f32 %v7349
        %vm7471 = vweird.f32 %v7464
        %vm7472 = vmor %vm7470, %vm7471
        %v7473 = vsel %vm7472, %v7464, %v7469
        %v7474 = vrsqrt.pop %v7350
        %v7475 = vmul.f32 %v7474, %v7350
        %v7476 = vmul.f32 %v7475, %v7474
        %v7477 = vmul.f32 0.5, %v7476
        %v7478 = vsub.f32 1.5, %v7477
        %v7479 = vmul.f32 %v7474, %v7478
        %vm7480 = vweird.f32 %v7350
        %vm7481 = vweird.f32 %v7474
        %vm7482 = vmor %vm7480, %vm7481
        %v7483 = vsel %vm7482, %v7474, %v7479
        %v7484 = vrsqrt.pop %v7351
        %v7485 = vmul.f32 %v7484, %v7351
        %v7486 = vmul.f32 %v7485, %v7484
        %v7487 = vmul.f32 0.5, %v7486
        %v7488 = vsub.f32 1.5, %v7487
        %v7489 = vmul.f32 %v7484, %v7488
        %vm7490 = vweird.f32 %v7351
        %vm7491 = vweird.f32 %v7484
        %vm7492 = vmor %vm7490, %vm7491
        %v7493 = vsel %vm7492, %v7484, %v7489
        %v7494 = vrsqrt.pop %v7352
        %v7495 = vmul.f32 %v7494, %v7352
        %v7496 = vmul.f32 %v7495, %v7494
        %v7497 = vmul.f32 0.5, %v7496
        %v7498 = vsub.f32 1.5, %v7497
        %v7499 = vmul.f32 %v7494, %v7498
        %vm7500 = vweird.f32 %v7352
        %vm7501 = vweird.f32 %v7494
        %vm7502 = vmor %vm7500, %vm7501
        %v7503 = vsel %vm7502, %v7494, %v7499
        %v7504 = vrsqrt.pop %v7353
        %v7505 = vmul.f32 %v7504, %v7353
        %v7506 = vmul.f32 %v7505, %v7504
        %v7507 = vmul.f32 0.5, %v7506
        %v7508 = vsub.f32 1.5, %v7507
        %v7509 = vmul.f32 %v7504, %v7508
        %vm7510 = vweird.f32 %v7353
        %vm7511 = vweird.f32 %v7504
        %vm7512 = vmor %vm7510, %vm7511
        %v7513 = vsel %vm7512, %v7504, %v7509
        %v7514 = vmul.f32 %v7242, %v7363
        %v7515 = vmul.f32 %v7243, %v7373
        %v7516 = vmul.f32 %v7244, %v7383
        %v7517 = vmul.f32 %v7245, %v7393
        %v7518 = vmul.f32 %v7246, %v7403
        %v7519 = vmul.f32 %v7247, %v7413
        %v7520 = vmul.f32 %v7248, %v7423
        %v7521 = vmul.f32 %v7249, %v7433
        %v7522 = vmul.f32 %v7250, %v7443
        %v7523 = vmul.f32 %v7251, %v7453
        %v7524 = vmul.f32 %v7252, %v7463
        %v7525 = vmul.f32 %v7253, %v7473
        %v7526 = vmul.f32 %v7254, %v7483
        %v7527 = vmul.f32 %v7255, %v7493
        %v7528 = vmul.f32 %v7256, %v7503
        %v7529 = vmul.f32 %v7257, %v7513
        %v7531 = vperm.slane %v3225, 0
        %v7533 = vmul.f32 %v7514, %v7531
        %v7534 = vmul.f32 %v7515, %v7531
        %v7535 = vmul.f32 %v7516, %v7531
        %v7536 = vmul.f32 %v7517, %v7531
        %v7537 = vmul.f32 %v7518, %v7531
        %v7538 = vmul.f32 %v7519, %v7531
        %v7539 = vmul.f32 %v7520, %v7531
        %v7540 = vmul.f32 %v7521, %v7531
        %v7541 = vmul.f32 %v7522, %v7531
        %v7542 = vmul.f32 %v7523, %v7531
        %v7543 = vmul.f32 %v7524, %v7531
        %v7544 = vmul.f32 %v7525, %v7531
        %v7545 = vmul.f32 %v7526, %v7531
        %v7546 = vmul.f32 %v7527, %v7531
        %v7547 = vmul.f32 %v7528, %v7531
        %v7548 = vmul.f32 %v7529, %v7531
        %v7550 = vperm.slane %v3226, 0
        %v7552 = vadd.f32 %v7533, %v7550
        %v7553 = vadd.f32 %v7534, %v7550
        %v7554 = vadd.f32 %v7535, %v7550
        %v7555 = vadd.f32 %v7536, %v7550
        %v7556 = vadd.f32 %v7537, %v7550
        %v7557 = vadd.f32 %v7538, %v7550
        %v7558 = vadd.f32 %v7539, %v7550
        %v7559 = vadd.f32 %v7540, %v7550
        %v7560 = vadd.f32 %v7541, %v7550
        %v7561 = vadd.f32 %v7542, %v7550
        %v7562 = vadd.f32 %v7543, %v7550
        %v7563 = vadd.f32 %v7544, %v7550
        %v7564 = vadd.f32 %v7545, %v7550
        %v7565 = vadd.f32 %v7546, %v7550
        %v7566 = vadd.f32 %v7547, %v7550
        %v7567 = vadd.f32 %v7548, %v7550
        %7568 = vst.msk [vmem:[%s749] sm:$0xff] %vm3230, %v7552
        %7569 = vst.msk [vmem:[%s749 + $0x8] sm:$0xff] %vm3230, %v7553
        %7570 = vst.msk [vmem:[%s749 + $0x10] sm:$0xff] %vm3230, %v7554
        %7571 = vst.msk [vmem:[%s749 + $0x18] sm:$0xff] %vm3230, %v7555
        %7572 = vst.msk [vmem:[%s749 + $0x20] sm:$0xff] %vm3230, %v7556
        %7573 = vst.msk [vmem:[%s749 + $0x28] sm:$0xff] %vm3230, %v7557
        %7574 = vst.msk [vmem:[%s749 + $0x30] sm:$0xff] %vm3230, %v7558
        %7575 = vst.msk [vmem:[%s749 + $0x38] sm:$0xff] %vm3230, %v7559
        %7576 = vst.msk [vmem:[%s749 + $0x40] sm:$0xff] %vm3230, %v7560
        %7577 = vst.msk [vmem:[%s749 + $0x48] sm:$0xff] %vm3230, %v7561
        %7578 = vst.msk [vmem:[%s749 + $0x50] sm:$0xff] %vm3230, %v7562
        %7579 = vst.msk [vmem:[%s749 + $0x58] sm:$0xff] %vm3230, %v7563
        %7580 = vst.msk [vmem:[%s749 + $0x60] sm:$0xff] %vm3230, %v7564
        %7581 = vst.msk [vmem:[%s749 + $0x68] sm:$0xff] %vm3230, %v7565
        %7582 = vst.msk [vmem:[%s749 + $0x70] sm:$0xff] %vm3230, %v7566
        %7583 = vst.msk [vmem:[%s749 + $0x78] sm:$0xff] %vm3230, %v7567
        %v7584 = vld [vmem:[%s21] sm:$0x1]
        %v7585 = vld [vmem:[#allocation2] sm:$0x1]
        %7587 = vset.pattern.permute.xlu0 0
        %7588 = vperm.xlu0 %7587, %v7585
        %v7589 = vpop.permute.xlu0 %7588
        %v7591 = vperm.slane %v7589, 0
        %v7593 = vsel %vm3230, %v7584, 0
        %v7596 = vsel %vm3230, %v7552, 0
        %v7599 = vsel %vm3230, %v7553, 0
        %v7602 = vsel %vm3230, %v7554, 0
        %v7605 = vsel %vm3230, %v7555, 0
        %v7608 = vsel %vm3230, %v7556, 0
        %v7611 = vsel %vm3230, %v7557, 0
        %v7614 = vsel %vm3230, %v7558, 0
        %v7617 = vsel %vm3230, %v7559, 0
        %v7620 = vsel %vm3230, %v7560, 0
        %v7623 = vsel %vm3230, %v7561, 0
        %v7626 = vsel %vm3230, %v7562, 0
        %v7629 = vsel %vm3230, %v7563, 0
        %v7632 = vsel %vm3230, %v7564, 0
        %v7635 = vsel %vm3230, %v7565, 0
        %v7638 = vsel %vm3230, %v7566, 0
        %v7641 = vsel %vm3230, %v7567, 0
        %7643 = vmatpush.xpose.msra.mxu0 %v7641
        %7644 = vmatpush.xpose.msra.mxu0 %v7638
        %7645 = vmatpush.xpose.msra.mxu0 %v7635
        %7646 = vmatpush.xpose.msra.mxu0 %v7632
        %7647 = vmatpush.xpose.msra.mxu0 %v7629
        %7648 = vmatpush.xpose.msra.mxu0 %v7626
        %7649 = vmatpush.xpose.msra.mxu0 %v7623
        %7650 = vmatpush.xpose.msra.mxu0 %v7620
        %7651 = vmatpush.xpose.msra.mxu0 %v7617
        %7652 = vmatpush.xpose.msra.mxu0 %v7614
        %7653 = vmatpush.xpose.msra.mxu0 %v7611
        %7654 = vmatpush.xpose.msra.mxu0 %v7608
        %7655 = vmatpush.xpose.msra.mxu0 %v7605
        %7656 = vmatpush.xpose.msra.mxu0 %v7602
        %7657 = vmatpush.xpose.msra.mxu0 %v7599
        %7658 = vmatpush.xpose.msra.mxu0 %v7596
        %7659 = vmatmul.f32.gmra.mxu0 %v7593
        %v7660 = vpop.f32.mrf.mxu0
        %v7661 = vadd.f32 %v7591, %v7660
        %7662 = vdwg.mxu0
        %7663 = vst [vmem:[%s739] sm:$0x1] %v7661
        %p7664 = scmp.lt.s32.totalorder %s41, 1
        %s7665 = scalar_select %p7664, %s41, 1
        %s7666 = smul.addr %s7665, 16
        %s7667 = smul.addr %s7666, 8
        %s7668 = scalar_lea.vmem %s23, %s7667
        %s7669 = sand.u32 %s563, 1
        %s7670 = scalar_lea.sflag [#allocation4], %s7669
        %s7671 = sand.u32 %s563, 1
        %s7672 = scalar_lea.vmem [#allocation3], %s7671
        // Predicated region
        $region113: #{trajectory_model_forward.2} parent=111 // pred_check
          %p7673 = pneg %p547
        $region114: #{trajectory_model_forward.2} parent=111 // pred_check_branch
          %7675 = sbr.rel (%p7673) target = $region116
        $region115: #{trajectory_model_forward.2} parent=111 // pred_region
          _
        $region116: #{trajectory_model_forward.2} parent=111 // pred_fallthru
          _
        // Predicated region
        $region117: #{trajectory_model_forward.2} parent=111 // pred_check
          %p7676 = pneg %p573
        $region118: #{trajectory_model_forward.2} parent=111 // pred_check_branch
          %7678 = sbr.rel (%p7676) target = $region120
        $region119: #{trajectory_model_forward.2} parent=111 // pred_region
          %7680 = vsyncadd %s7670, 0
          %s7681 = scalar_lea.hbm %s24, %s41
          %s7683 = sshll.u32 %s7672, 4
          %s7684 = int_to_ptr.vmem [resolvable:$true] %s7683
          %s7685 = sshll.u32 %s7681, 4
          %s7686 = int_to_ptr.hbm [resolvable:$true] %s7685
          %7688 = dma.vmem_to_hbm [thread:$0]  %s7684, 16, %s7686, %s7670
        $region120: #{trajectory_model_forward.2} parent=111 // pred_fallthru
          _
      $region112: #{trajectory_model_forward.2} parent=5 // pred_fallthru
        _
      %p7689 = scmp.le.s32.totalorder 2, %s36
      // Predicated region
      $region121: #{trajectory_model_forward.2} parent=5 // pred_check
        %p7690 = pneg %p7689
      $region122: #{trajectory_model_forward.2} parent=5 // pred_check_branch
        %7692 = sbr.rel (%p7690) target = $region124
      $region123: #{trajectory_model_forward.2} parent=5 // pred_region
        %s7693 = ssub.s32 %s36, 2
        // Predicated region
        $region125: #{trajectory_model_forward.2} parent=123 // pred_check
          %p7694 = pneg %p553
        $region126: #{trajectory_model_forward.2} parent=123 // pred_check_branch
          %7696 = sbr.rel (%p7694) target = $region128
        $region127: #{trajectory_model_forward.2} parent=123 // pred_region
          %p7697 = scmp.lt.s32.totalorder %s42, 1
          %s7698 = scalar_select %p7697, %s42, 1
          %s7699 = smul.addr %s7698, 16
          %s7700 = smul.addr %s7699, 8
          %s7701 = scalar_lea.vmem %s23, %s7700
        $region128: #{trajectory_model_forward.2} parent=123 // pred_fallthru
          _
        // Predicated region
        $region129: #{trajectory_model_forward.2} parent=123 // pred_check
          %p7702 = pneg %p579
        $region130: #{trajectory_model_forward.2} parent=123 // pred_check_branch
          %7704 = sbr.rel (%p7702) target = $region132
        $region131: #{trajectory_model_forward.2} parent=123 // pred_region
          %s7705 = sand.u32 %s564, 1
          %s7706 = scalar_lea.sflag [#allocation4], %s7705
          %s7707 = sand.u32 %s564, 1
          %s7708 = scalar_lea.vmem [#allocation3], %s7707
          %7710 = dma.done %s7706, 16
        $region132: #{trajectory_model_forward.2} parent=123 // pred_fallthru
          _
      $region124: #{trajectory_model_forward.2} parent=5 // pred_fallthru
        _
    $region6: #{trajectory_model_forward.2} parent=1 // loop_footer
      %s40 = sadd.s32 1, %s36
    $region7: #{trajectory_model_forward.2} parent=1 // loop_footer_branch
      %35 = sbr.rel target = $region3
    $region8: #{trajectory_model_forward.2} parent=1 // loop_exit
      _
    %7711 = vsyncpa [#allocation4], 1
    %s7712 = scalar_lea.sflag [#allocation4], 1
    %7713 = vsyncpa %s7712, 1

</llo_original>
